<compile_context>
chip_gen: v6e
topology: v6e:2x2x1
jax: 0.10.0
libtpu: 0.0.40
codegen_flags: <defaults>
</compile_context>

<pallas_src>
import functools

import jax
import jax.numpy as jnp
from jax.experimental import pallas as pl
from jax.experimental.pallas import tpu as pltpu

EPS = 1e-5  # RevIN eps

VMEM_SPEC = pl.BlockSpec(memory_space=pltpu.MemorySpace.VMEM)


# ------------------------------ fused model kernel ------------------------------
def fused_lstm_kernel(x_ref, wih1_ref, whh1_ref, b1_ref,
                      wih2_ref, whh2_ref, b2_ref,
                      fcw_ref, fcb_ref, out_ref, *, col, hidden1, hidden2):
    # x_ref:   (L, B, N)  time-major normalized-input source (raw values)
    # wihX:    (D, 4H)    packed gate order i|f|g|o (PyTorch convention)
    # whhX:    (H, 4H)
    # bX:      (1, 4H)    b_ih + b_hh combined
    # fcw:     (H2, 1), fcb: (1, 1)
    # out_ref: (B, B)     RevIN-denormalized prediction (trailing 1-dim added in wrapper)
    L, B, _ = x_ref.shape
    x = x_ref[...]                                      # (L, B, N)

    # ---- RevIN 'norm': statistics over the time axis, then normalize ----
    mn = jnp.min(x, axis=0)                             # (B, N)
    mx = jnp.max(x, axis=0)                             # (B, N)
    xn = (x - mn[None, :, :]) / (mx[None, :, :] - mn[None, :, :] + EPS)

    def run_lstm(inputs, wih_ref_, whh_ref_, b_ref_, hidden):
        # inputs: Python list of L traced (B, D_in) values (static unroll).
        w_ih = wih_ref_[...]                            # (D, 4H)
        w_hh = whh_ref_[...]                            # (H, 4H)
        bias = jnp.broadcast_to(b_ref_[...], (B, 4 * hidden))   # hoisted broadcast

        # Hoisted input projection: independent of the recurrence, so these dots sit
        # off the serial chain once the loop is fully unrolled.
        xp = [jnp.dot(inp, w_ih, preferred_element_type=jnp.float32) + bias
              for inp in inputs]

        h = jnp.zeros((B, hidden), jnp.float32)
        c = jnp.zeros((B, hidden), jnp.float32)
        hs = []
        for t in range(L):                              # full static unroll (L small, fixed)
            z = xp[t] + jnp.dot(h, w_hh, preferred_element_type=jnp.float32)  # (B, 4H)
            i_g = jax.nn.sigmoid(z[:, 0 * hidden:1 * hidden])
            f_g = jax.nn.sigmoid(z[:, 1 * hidden:2 * hidden])
            g_g = jnp.tanh(z[:, 2 * hidden:3 * hidden])
            o_g = jax.nn.sigmoid(z[:, 3 * hidden:4 * hidden])
            c = f_g * c + i_g * g_g
            h = o_g * jnp.tanh(c)
            hs.append(h)
        return hs

    # ---- layer 1 (hidden=15); dropout is identity at inference time ----
    x_steps = [xn[t] for t in range(L)]                 # static time slices, each (B, N)
    h1_seq = run_lstm(x_steps, wih1_ref, whh1_ref, b1_ref, hidden1)

    # ---- layer 2 (hidden=7); only the last hidden state is needed downstream ----
    h2_seq = run_lstm(h1_seq, wih2_ref, whh2_ref, b2_ref, hidden2)
    h_last = h2_seq[-1]                                 # (B, H2)

    # ---- Linear head ----
    pred = jnp.dot(h_last, fcw_ref[...], preferred_element_type=jnp.float32) + fcb_ref[...]  # (B, 1)

    # ---- RevIN 'denorm' (reproduces PyTorch (1,B,1)*(B,1,1)+(B,1,1) broadcast quirk) ----
    cmin = mn[:, col:col + 1]                           # (B, 1)
    scale = mx[:, col:col + 1] - cmin                   # (B, 1)
    out_ref[...] = jnp.einsum('io,jo->ij', scale, pred,
                              preferred_element_type=jnp.float32) + cmin


# ------------------------------- parameter setup --------------------------------
def init_lstm_params(key, d_in, hidden):
    """Deterministic init with PyTorch nn.LSTM shapes, packed for the fused kernel."""
    k1, k2, k3, k4 = jax.random.split(key, 4)
    s = 1.0 / jnp.sqrt(hidden)
    w_ih = jax.random.uniform(k1, (4 * hidden, d_in), minval=-s, maxval=s)     # PyTorch shape
    w_hh = jax.random.uniform(k2, (4 * hidden, hidden), minval=-s, maxval=s)
    b_ih = jax.random.uniform(k3, (4 * hidden,), minval=-s, maxval=s)
    b_hh = jax.random.uniform(k4, (4 * hidden,), minval=-s, maxval=s)
    wih_packed = jnp.transpose(w_ih).astype(jnp.float32)                       # (D, 4H)
    whh_packed = jnp.transpose(w_hh).astype(jnp.float32)                       # (H, 4H)
    b_packed = (b_ih + b_hh).reshape(1, 4 * hidden).astype(jnp.float32)        # (1, 4H)
    return wih_packed, whh_packed, b_packed


# ---------------------------------- forward -------------------------------------
def lstm_model_forward(var_x, marker_x, params, indicators_list_01, pred_len):
    del marker_x  # unused in the reference forward
    x = var_x[..., 0].astype(jnp.float32)               # (B, L, N)
    B, L, N = x.shape
    x_tm = jnp.transpose(x, (1, 0, 2))                  # (L, B, N) time-major (tiny, one XLA op)

    col = sum(indicators_list_01[:-14]) + 4 - 1         # static Python int

    wih1, whh1, b1 = params['lstm1']
    wih2, whh2, b2 = params['lstm2']
    H1 = whh1.shape[0]
    H2 = whh2.shape[0]

    kernel = functools.partial(fused_lstm_kernel, col=col, hidden1=H1, hidden2=H2)
    out = pl.pallas_call(
        kernel,
        out_shape=jax.ShapeDtypeStruct((B, B), jnp.float32),
        in_specs=[VMEM_SPEC] * 9,
        out_specs=VMEM_SPEC,
    )(x_tm, wih1, whh1, b1, wih2, whh2, b2, params['fc_w'], params['fc_b'])

    prediction = out[:, :, None]                        # (B, B, 1) — matches PyTorch broadcast
    confidence = jnp.ones((B, pred_len, 1), jnp.float32)
    return prediction, confidence


if __name__ == "__main__":
    key = jax.random.PRNGKey(0)
    B, L, N = 2, 16, 8          # batch, hist_len, var_num
    pred_len = 4
    indicators_list_01 = [1, 0, 1] + [0] * 14   # col_index = sum([1,0,1]) + 3 = 5 < N

    k_x, k_m, k_l1, k_l2, k_fw, k_fb = jax.random.split(key, 6)
    var_x = jax.random.normal(k_x, (B, L, N, 1), dtype=jnp.float32)
    marker_x = jax.random.normal(k_m, (B, L, 4), dtype=jnp.float32)

    s = 1.0 / jnp.sqrt(7.0)
    fc_w_pt = jax.random.uniform(k_fw, (1, 7), minval=-s, maxval=s)   # PyTorch Linear weight shape
    fc_b_pt = jax.random.uniform(k_fb, (1,), minval=-s, maxval=s)

    params = {
        'lstm1': init_lstm_params(k_l1, N, 15),
        'lstm2': init_lstm_params(k_l2, 15, 7),
        'fc_w': jnp.transpose(fc_w_pt).astype(jnp.float32),   # (7, 1)
        'fc_b': fc_b_pt.reshape(1, 1).astype(jnp.float32),    # (1, 1)
    }

    fwd = jax.jit(functools.partial(lstm_model_forward, params=params,
                                    indicators_list_01=indicators_list_01,
                                    pred_len=pred_len))
    prediction, confidence = fwd(var_x, marker_x)
    jax.block_until_ready((prediction, confidence))
    assert prediction.shape == (B, B, 1)          # matches PyTorch broadcast in RevIN denorm
    assert confidence.shape == (B, pred_len, 1)
    print("KERNEL_OK")
</pallas_src>

<mosaic_0001>
module attributes {stable_mosaic.version = 11 : i64} {
  func.func @fused_lstm_kernel(%arg0: memref<16x2x8xf32, #tpu.memory_space<vmem>>, %arg1: memref<8x60xf32, #tpu.memory_space<vmem>>, %arg2: memref<15x60xf32, #tpu.memory_space<vmem>>, %arg3: memref<1x60xf32, #tpu.memory_space<vmem>>, %arg4: memref<15x28xf32, #tpu.memory_space<vmem>>, %arg5: memref<7x28xf32, #tpu.memory_space<vmem>>, %arg6: memref<1x28xf32, #tpu.memory_space<vmem>>, %arg7: memref<7x1xf32, #tpu.memory_space<vmem>>, %arg8: memref<1x1xf32, #tpu.memory_space<vmem>>, %arg9: memref<2x2xf32, #tpu.memory_space<vmem>>) attributes {dimension_semantics = [], scalar_prefetch = 0 : i64, scratch_operands = 0 : i64, tpu.core_type = #tpu.core_type<tc>} {
    %c0 = arith.constant 0 : index
    %c0_0 = arith.constant 0 : index
    %c0_1 = arith.constant 0 : index
    %0 = vector.load %arg0[%c0, %c0_0, %c0_1] : memref<16x2x8xf32, #tpu.memory_space<vmem>>, vector<16x2x8xf32>
    %cst = arith.constant dense<0x7F800000> : vector<2x8xf32>
    %1 = vector.multi_reduction <minimumf>, %0, %cst [0] : vector<16x2x8xf32> to vector<2x8xf32>
    %cst_2 = arith.constant dense<0xFF800000> : vector<2x8xf32>
    %2 = vector.multi_reduction <maximumf>, %0, %cst_2 [0] : vector<16x2x8xf32> to vector<2x8xf32>
    %3 = vector.shape_cast %1 : vector<2x8xf32> to vector<1x2x8xf32>
    %4 = vector.broadcast %3 : vector<1x2x8xf32> to vector<16x2x8xf32>
    %5 = arith.subf %0, %4 : vector<16x2x8xf32>
    %6 = vector.shape_cast %2 : vector<2x8xf32> to vector<1x2x8xf32>
    %7 = vector.shape_cast %1 : vector<2x8xf32> to vector<1x2x8xf32>
    %8 = arith.subf %6, %7 : vector<1x2x8xf32>
    %cst_3 = arith.constant 9.99999974E-6 : f32
    %9 = vector.broadcast %cst_3 : f32 to vector<1x2x8xf32>
    %10 = arith.addf %8, %9 : vector<1x2x8xf32>
    %11 = vector.broadcast %10 : vector<1x2x8xf32> to vector<16x2x8xf32>
    %12 = arith.divf %5, %11 : vector<16x2x8xf32>
    %13 = vector.extract_strided_slice %12 {offsets = [0, 0, 0], sizes = [1, 2, 8], strides = [1, 1, 1]} : vector<16x2x8xf32> to vector<1x2x8xf32>
    %14 = vector.shape_cast %13 : vector<1x2x8xf32> to vector<2x8xf32>
    %15 = vector.extract_strided_slice %12 {offsets = [1, 0, 0], sizes = [1, 2, 8], strides = [1, 1, 1]} : vector<16x2x8xf32> to vector<1x2x8xf32>
    %16 = vector.shape_cast %15 : vector<1x2x8xf32> to vector<2x8xf32>
    %17 = vector.extract_strided_slice %12 {offsets = [2, 0, 0], sizes = [1, 2, 8], strides = [1, 1, 1]} : vector<16x2x8xf32> to vector<1x2x8xf32>
    %18 = vector.shape_cast %17 : vector<1x2x8xf32> to vector<2x8xf32>
    %19 = vector.extract_strided_slice %12 {offsets = [3, 0, 0], sizes = [1, 2, 8], strides = [1, 1, 1]} : vector<16x2x8xf32> to vector<1x2x8xf32>
    %20 = vector.shape_cast %19 : vector<1x2x8xf32> to vector<2x8xf32>
    %21 = vector.extract_strided_slice %12 {offsets = [4, 0, 0], sizes = [1, 2, 8], strides = [1, 1, 1]} : vector<16x2x8xf32> to vector<1x2x8xf32>
    %22 = vector.shape_cast %21 : vector<1x2x8xf32> to vector<2x8xf32>
    %23 = vector.extract_strided_slice %12 {offsets = [5, 0, 0], sizes = [1, 2, 8], strides = [1, 1, 1]} : vector<16x2x8xf32> to vector<1x2x8xf32>
    %24 = vector.shape_cast %23 : vector<1x2x8xf32> to vector<2x8xf32>
    %25 = vector.extract_strided_slice %12 {offsets = [6, 0, 0], sizes = [1, 2, 8], strides = [1, 1, 1]} : vector<16x2x8xf32> to vector<1x2x8xf32>
    %26 = vector.shape_cast %25 : vector<1x2x8xf32> to vector<2x8xf32>
    %27 = vector.extract_strided_slice %12 {offsets = [7, 0, 0], sizes = [1, 2, 8], strides = [1, 1, 1]} : vector<16x2x8xf32> to vector<1x2x8xf32>
    %28 = vector.shape_cast %27 : vector<1x2x8xf32> to vector<2x8xf32>
    %29 = vector.extract_strided_slice %12 {offsets = [8, 0, 0], sizes = [1, 2, 8], strides = [1, 1, 1]} : vector<16x2x8xf32> to vector<1x2x8xf32>
    %30 = vector.shape_cast %29 : vector<1x2x8xf32> to vector<2x8xf32>
    %31 = vector.extract_strided_slice %12 {offsets = [9, 0, 0], sizes = [1, 2, 8], strides = [1, 1, 1]} : vector<16x2x8xf32> to vector<1x2x8xf32>
    %32 = vector.shape_cast %31 : vector<1x2x8xf32> to vector<2x8xf32>
    %33 = vector.extract_strided_slice %12 {offsets = [10, 0, 0], sizes = [1, 2, 8], strides = [1, 1, 1]} : vector<16x2x8xf32> to vector<1x2x8xf32>
    %34 = vector.shape_cast %33 : vector<1x2x8xf32> to vector<2x8xf32>
    %35 = vector.extract_strided_slice %12 {offsets = [11, 0, 0], sizes = [1, 2, 8], strides = [1, 1, 1]} : vector<16x2x8xf32> to vector<1x2x8xf32>
    %36 = vector.shape_cast %35 : vector<1x2x8xf32> to vector<2x8xf32>
    %37 = vector.extract_strided_slice %12 {offsets = [12, 0, 0], sizes = [1, 2, 8], strides = [1, 1, 1]} : vector<16x2x8xf32> to vector<1x2x8xf32>
    %38 = vector.shape_cast %37 : vector<1x2x8xf32> to vector<2x8xf32>
    %39 = vector.extract_strided_slice %12 {offsets = [13, 0, 0], sizes = [1, 2, 8], strides = [1, 1, 1]} : vector<16x2x8xf32> to vector<1x2x8xf32>
    %40 = vector.shape_cast %39 : vector<1x2x8xf32> to vector<2x8xf32>
    %41 = vector.extract_strided_slice %12 {offsets = [14, 0, 0], sizes = [1, 2, 8], strides = [1, 1, 1]} : vector<16x2x8xf32> to vector<1x2x8xf32>
    %42 = vector.shape_cast %41 : vector<1x2x8xf32> to vector<2x8xf32>
    %43 = vector.extract_strided_slice %12 {offsets = [15, 0, 0], sizes = [1, 2, 8], strides = [1, 1, 1]} : vector<16x2x8xf32> to vector<1x2x8xf32>
    %44 = vector.shape_cast %43 : vector<1x2x8xf32> to vector<2x8xf32>
    %c0_4 = arith.constant 0 : index
    %c0_5 = arith.constant 0 : index
    %45 = vector.load %arg1[%c0_4, %c0_5] : memref<8x60xf32, #tpu.memory_space<vmem>>, vector<8x60xf32>
    %c0_6 = arith.constant 0 : index
    %c0_7 = arith.constant 0 : index
    %46 = vector.load %arg2[%c0_6, %c0_7] : memref<15x60xf32, #tpu.memory_space<vmem>>, vector<15x60xf32>
    %c0_8 = arith.constant 0 : index
    %c0_9 = arith.constant 0 : index
    %47 = vector.load %arg3[%c0_8, %c0_9] : memref<1x60xf32, #tpu.memory_space<vmem>>, vector<1x60xf32>
    %48 = vector.shape_cast %47 : vector<1x60xf32> to vector<1x60xf32>
    %49 = vector.broadcast %48 : vector<1x60xf32> to vector<2x60xf32>
    %cst_10 = arith.constant dense<0.000000e+00> : vector<2x60xf32>
    %50 = tpu.matmul %14, %45, %cst_10 {dimension_numbers = #tpu.dot_dimension_numbers<[1], [0], [0], [1], [0, 0, 1, 1], [], []>} : vector<2x8xf32>, vector<8x60xf32>, vector<2x60xf32> -> vector<2x60xf32>
    %51 = arith.addf %50, %49 : vector<2x60xf32>
    %cst_11 = arith.constant dense<0.000000e+00> : vector<2x60xf32>
    %52 = tpu.matmul %16, %45, %cst_11 {dimension_numbers = #tpu.dot_dimension_numbers<[1], [0], [0], [1], [0, 0, 1, 1], [], []>} : vector<2x8xf32>, vector<8x60xf32>, vector<2x60xf32> -> vector<2x60xf32>
    %53 = arith.addf %52, %49 : vector<2x60xf32>
    %cst_12 = arith.constant dense<0.000000e+00> : vector<2x60xf32>
    %54 = tpu.matmul %18, %45, %cst_12 {dimension_numbers = #tpu.dot_dimension_numbers<[1], [0], [0], [1], [0, 0, 1, 1], [], []>} : vector<2x8xf32>, vector<8x60xf32>, vector<2x60xf32> -> vector<2x60xf32>
    %55 = arith.addf %54, %49 : vector<2x60xf32>
    %cst_13 = arith.constant dense<0.000000e+00> : vector<2x60xf32>
    %56 = tpu.matmul %20, %45, %cst_13 {dimension_numbers = #tpu.dot_dimension_numbers<[1], [0], [0], [1], [0, 0, 1, 1], [], []>} : vector<2x8xf32>, vector<8x60xf32>, vector<2x60xf32> -> vector<2x60xf32>
    %57 = arith.addf %56, %49 : vector<2x60xf32>
    %cst_14 = arith.constant dense<0.000000e+00> : vector<2x60xf32>
    %58 = tpu.matmul %22, %45, %cst_14 {dimension_numbers = #tpu.dot_dimension_numbers<[1], [0], [0], [1], [0, 0, 1, 1], [], []>} : vector<2x8xf32>, vector<8x60xf32>, vector<2x60xf32> -> vector<2x60xf32>
    %59 = arith.addf %58, %49 : vector<2x60xf32>
    %cst_15 = arith.constant dense<0.000000e+00> : vector<2x60xf32>
    %60 = tpu.matmul %24, %45, %cst_15 {dimension_numbers = #tpu.dot_dimension_numbers<[1], [0], [0], [1], [0, 0, 1, 1], [], []>} : vector<2x8xf32>, vector<8x60xf32>, vector<2x60xf32> -> vector<2x60xf32>
    %61 = arith.addf %60, %49 : vector<2x60xf32>
    %cst_16 = arith.constant dense<0.000000e+00> : vector<2x60xf32>
    %62 = tpu.matmul %26, %45, %cst_16 {dimension_numbers = #tpu.dot_dimension_numbers<[1], [0], [0], [1], [0, 0, 1, 1], [], []>} : vector<2x8xf32>, vector<8x60xf32>, vector<2x60xf32> -> vector<2x60xf32>
    %63 = arith.addf %62, %49 : vector<2x60xf32>
    %cst_17 = arith.constant dense<0.000000e+00> : vector<2x60xf32>
    %64 = tpu.matmul %28, %45, %cst_17 {dimension_numbers = #tpu.dot_dimension_numbers<[1], [0], [0], [1], [0, 0, 1, 1], [], []>} : vector<2x8xf32>, vector<8x60xf32>, vector<2x60xf32> -> vector<2x60xf32>
    %65 = arith.addf %64, %49 : vector<2x60xf32>
    %cst_18 = arith.constant dense<0.000000e+00> : vector<2x60xf32>
    %66 = tpu.matmul %30, %45, %cst_18 {dimension_numbers = #tpu.dot_dimension_numbers<[1], [0], [0], [1], [0, 0, 1, 1], [], []>} : vector<2x8xf32>, vector<8x60xf32>, vector<2x60xf32> -> vector<2x60xf32>
    %67 = arith.addf %66, %49 : vector<2x60xf32>
    %cst_19 = arith.constant dense<0.000000e+00> : vector<2x60xf32>
    %68 = tpu.matmul %32, %45, %cst_19 {dimension_numbers = #tpu.dot_dimension_numbers<[1], [0], [0], [1], [0, 0, 1, 1], [], []>} : vector<2x8xf32>, vector<8x60xf32>, vector<2x60xf32> -> vector<2x60xf32>
    %69 = arith.addf %68, %49 : vector<2x60xf32>
    %cst_20 = arith.constant dense<0.000000e+00> : vector<2x60xf32>
    %70 = tpu.matmul %34, %45, %cst_20 {dimension_numbers = #tpu.dot_dimension_numbers<[1], [0], [0], [1], [0, 0, 1, 1], [], []>} : vector<2x8xf32>, vector<8x60xf32>, vector<2x60xf32> -> vector<2x60xf32>
    %71 = arith.addf %70, %49 : vector<2x60xf32>
    %cst_21 = arith.constant dense<0.000000e+00> : vector<2x60xf32>
    %72 = tpu.matmul %36, %45, %cst_21 {dimension_numbers = #tpu.dot_dimension_numbers<[1], [0], [0], [1], [0, 0, 1, 1], [], []>} : vector<2x8xf32>, vector<8x60xf32>, vector<2x60xf32> -> vector<2x60xf32>
    %73 = arith.addf %72, %49 : vector<2x60xf32>
    %cst_22 = arith.constant dense<0.000000e+00> : vector<2x60xf32>
    %74 = tpu.matmul %38, %45, %cst_22 {dimension_numbers = #tpu.dot_dimension_numbers<[1], [0], [0], [1], [0, 0, 1, 1], [], []>} : vector<2x8xf32>, vector<8x60xf32>, vector<2x60xf32> -> vector<2x60xf32>
    %75 = arith.addf %74, %49 : vector<2x60xf32>
    %cst_23 = arith.constant dense<0.000000e+00> : vector<2x60xf32>
    %76 = tpu.matmul %40, %45, %cst_23 {dimension_numbers = #tpu.dot_dimension_numbers<[1], [0], [0], [1], [0, 0, 1, 1], [], []>} : vector<2x8xf32>, vector<8x60xf32>, vector<2x60xf32> -> vector<2x60xf32>
    %77 = arith.addf %76, %49 : vector<2x60xf32>
    %cst_24 = arith.constant dense<0.000000e+00> : vector<2x60xf32>
    %78 = tpu.matmul %42, %45, %cst_24 {dimension_numbers = #tpu.dot_dimension_numbers<[1], [0], [0], [1], [0, 0, 1, 1], [], []>} : vector<2x8xf32>, vector<8x60xf32>, vector<2x60xf32> -> vector<2x60xf32>
    %79 = arith.addf %78, %49 : vector<2x60xf32>
    %cst_25 = arith.constant dense<0.000000e+00> : vector<2x60xf32>
    %80 = tpu.matmul %44, %45, %cst_25 {dimension_numbers = #tpu.dot_dimension_numbers<[1], [0], [0], [1], [0, 0, 1, 1], [], []>} : vector<2x8xf32>, vector<8x60xf32>, vector<2x60xf32> -> vector<2x60xf32>
    %81 = arith.addf %80, %49 : vector<2x60xf32>
    %cst_26 = arith.constant 0.000000e+00 : f32
    %82 = vector.broadcast %cst_26 : f32 to vector<2x15xf32>
    %cst_27 = arith.constant 0.000000e+00 : f32
    %83 = vector.broadcast %cst_27 : f32 to vector<2x15xf32>
    %cst_28 = arith.constant dense<0.000000e+00> : vector<2x60xf32>
    %84 = tpu.matmul %82, %46, %cst_28 {dimension_numbers = #tpu.dot_dimension_numbers<[1], [0], [0], [1], [0, 0, 1, 1], [], []>} : vector<2x15xf32>, vector<15x60xf32>, vector<2x60xf32> -> vector<2x60xf32>
    %85 = arith.addf %51, %84 : vector<2x60xf32>
    %86 = vector.extract_strided_slice %85 {offsets = [0, 0], sizes = [2, 15], strides = [1, 1]} : vector<2x60xf32> to vector<2x15xf32>
    %87 = arith.negf %86 : vector<2x15xf32>
    %88 = math.exp %87 : vector<2x15xf32>
    %cst_29 = arith.constant 1.000000e+00 : f32
    %89 = vector.broadcast %cst_29 : f32 to vector<2x15xf32>
    %90 = arith.addf %89, %88 : vector<2x15xf32>
    %91 = arith.divf %89, %90 : vector<2x15xf32>
    %92 = vector.extract_strided_slice %85 {offsets = [0, 15], sizes = [2, 15], strides = [1, 1]} : vector<2x60xf32> to vector<2x15xf32>
    %93 = arith.negf %92 : vector<2x15xf32>
    %94 = math.exp %93 : vector<2x15xf32>
    %cst_30 = arith.constant 1.000000e+00 : f32
    %95 = vector.broadcast %cst_30 : f32 to vector<2x15xf32>
    %96 = arith.addf %95, %94 : vector<2x15xf32>
    %97 = arith.divf %95, %96 : vector<2x15xf32>
    %98 = vector.extract_strided_slice %85 {offsets = [0, 30], sizes = [2, 15], strides = [1, 1]} : vector<2x60xf32> to vector<2x15xf32>
    %99 = math.tanh %98 : vector<2x15xf32>
    %100 = vector.extract_strided_slice %85 {offsets = [0, 45], sizes = [2, 15], strides = [1, 1]} : vector<2x60xf32> to vector<2x15xf32>
    %101 = arith.negf %100 : vector<2x15xf32>
    %102 = math.exp %101 : vector<2x15xf32>
    %cst_31 = arith.constant 1.000000e+00 : f32
    %103 = vector.broadcast %cst_31 : f32 to vector<2x15xf32>
    %104 = arith.addf %103, %102 : vector<2x15xf32>
    %105 = arith.divf %103, %104 : vector<2x15xf32>
    %106 = arith.mulf %97, %83 : vector<2x15xf32>
    %107 = arith.mulf %91, %99 : vector<2x15xf32>
    %108 = arith.addf %106, %107 : vector<2x15xf32>
    %109 = math.tanh %108 : vector<2x15xf32>
    %110 = arith.mulf %105, %109 : vector<2x15xf32>
    %cst_32 = arith.constant dense<0.000000e+00> : vector<2x60xf32>
    %111 = tpu.matmul %110, %46, %cst_32 {dimension_numbers = #tpu.dot_dimension_numbers<[1], [0], [0], [1], [0, 0, 1, 1], [], []>} : vector<2x15xf32>, vector<15x60xf32>, vector<2x60xf32> -> vector<2x60xf32>
    %112 = arith.addf %53, %111 : vector<2x60xf32>
    %113 = vector.extract_strided_slice %112 {offsets = [0, 0], sizes = [2, 15], strides = [1, 1]} : vector<2x60xf32> to vector<2x15xf32>
    %114 = arith.negf %113 : vector<2x15xf32>
    %115 = math.exp %114 : vector<2x15xf32>
    %cst_33 = arith.constant 1.000000e+00 : f32
    %116 = vector.broadcast %cst_33 : f32 to vector<2x15xf32>
    %117 = arith.addf %116, %115 : vector<2x15xf32>
    %118 = arith.divf %116, %117 : vector<2x15xf32>
    %119 = vector.extract_strided_slice %112 {offsets = [0, 15], sizes = [2, 15], strides = [1, 1]} : vector<2x60xf32> to vector<2x15xf32>
    %120 = arith.negf %119 : vector<2x15xf32>
    %121 = math.exp %120 : vector<2x15xf32>
    %cst_34 = arith.constant 1.000000e+00 : f32
    %122 = vector.broadcast %cst_34 : f32 to vector<2x15xf32>
    %123 = arith.addf %122, %121 : vector<2x15xf32>
    %124 = arith.divf %122, %123 : vector<2x15xf32>
    %125 = vector.extract_strided_slice %112 {offsets = [0, 30], sizes = [2, 15], strides = [1, 1]} : vector<2x60xf32> to vector<2x15xf32>
    %126 = math.tanh %125 : vector<2x15xf32>
    %127 = vector.extract_strided_slice %112 {offsets = [0, 45], sizes = [2, 15], strides = [1, 1]} : vector<2x60xf32> to vector<2x15xf32>
    %128 = arith.negf %127 : vector<2x15xf32>
    %129 = math.exp %128 : vector<2x15xf32>
    %cst_35 = arith.constant 1.000000e+00 : f32
    %130 = vector.broadcast %cst_35 : f32 to vector<2x15xf32>
    %131 = arith.addf %130, %129 : vector<2x15xf32>
    %132 = arith.divf %130, %131 : vector<2x15xf32>
    %133 = arith.mulf %124, %108 : vector<2x15xf32>
    %134 = arith.mulf %118, %126 : vector<2x15xf32>
    %135 = arith.addf %133, %134 : vector<2x15xf32>
    %136 = math.tanh %135 : vector<2x15xf32>
    %137 = arith.mulf %132, %136 : vector<2x15xf32>
    %cst_36 = arith.constant dense<0.000000e+00> : vector<2x60xf32>
    %138 = tpu.matmul %137, %46, %cst_36 {dimension_numbers = #tpu.dot_dimension_numbers<[1], [0], [0], [1], [0, 0, 1, 1], [], []>} : vector<2x15xf32>, vector<15x60xf32>, vector<2x60xf32> -> vector<2x60xf32>
    %139 = arith.addf %55, %138 : vector<2x60xf32>
    %140 = vector.extract_strided_slice %139 {offsets = [0, 0], sizes = [2, 15], strides = [1, 1]} : vector<2x60xf32> to vector<2x15xf32>
    %141 = arith.negf %140 : vector<2x15xf32>
    %142 = math.exp %141 : vector<2x15xf32>
    %cst_37 = arith.constant 1.000000e+00 : f32
    %143 = vector.broadcast %cst_37 : f32 to vector<2x15xf32>
    %144 = arith.addf %143, %142 : vector<2x15xf32>
    %145 = arith.divf %143, %144 : vector<2x15xf32>
    %146 = vector.extract_strided_slice %139 {offsets = [0, 15], sizes = [2, 15], strides = [1, 1]} : vector<2x60xf32> to vector<2x15xf32>
    %147 = arith.negf %146 : vector<2x15xf32>
    %148 = math.exp %147 : vector<2x15xf32>
    %cst_38 = arith.constant 1.000000e+00 : f32
    %149 = vector.broadcast %cst_38 : f32 to vector<2x15xf32>
    %150 = arith.addf %149, %148 : vector<2x15xf32>
    %151 = arith.divf %149, %150 : vector<2x15xf32>
    %152 = vector.extract_strided_slice %139 {offsets = [0, 30], sizes = [2, 15], strides = [1, 1]} : vector<2x60xf32> to vector<2x15xf32>
    %153 = math.tanh %152 : vector<2x15xf32>
    %154 = vector.extract_strided_slice %139 {offsets = [0, 45], sizes = [2, 15], strides = [1, 1]} : vector<2x60xf32> to vector<2x15xf32>
    %155 = arith.negf %154 : vector<2x15xf32>
    %156 = math.exp %155 : vector<2x15xf32>
    %cst_39 = arith.constant 1.000000e+00 : f32
    %157 = vector.broadcast %cst_39 : f32 to vector<2x15xf32>
    %158 = arith.addf %157, %156 : vector<2x15xf32>
    %159 = arith.divf %157, %158 : vector<2x15xf32>
    %160 = arith.mulf %151, %135 : vector<2x15xf32>
    %161 = arith.mulf %145, %153 : vector<2x15xf32>
    %162 = arith.addf %160, %161 : vector<2x15xf32>
    %163 = math.tanh %162 : vector<2x15xf32>
    %164 = arith.mulf %159, %163 : vector<2x15xf32>
    %cst_40 = arith.constant dense<0.000000e+00> : vector<2x60xf32>
    %165 = tpu.matmul %164, %46, %cst_40 {dimension_numbers = #tpu.dot_dimension_numbers<[1], [0], [0], [1], [0, 0, 1, 1], [], []>} : vector<2x15xf32>, vector<15x60xf32>, vector<2x60xf32> -> vector<2x60xf32>
    %166 = arith.addf %57, %165 : vector<2x60xf32>
    %167 = vector.extract_strided_slice %166 {offsets = [0, 0], sizes = [2, 15], strides = [1, 1]} : vector<2x60xf32> to vector<2x15xf32>
    %168 = arith.negf %167 : vector<2x15xf32>
    %169 = math.exp %168 : vector<2x15xf32>
    %cst_41 = arith.constant 1.000000e+00 : f32
    %170 = vector.broadcast %cst_41 : f32 to vector<2x15xf32>
    %171 = arith.addf %170, %169 : vector<2x15xf32>
    %172 = arith.divf %170, %171 : vector<2x15xf32>
    %173 = vector.extract_strided_slice %166 {offsets = [0, 15], sizes = [2, 15], strides = [1, 1]} : vector<2x60xf32> to vector<2x15xf32>
    %174 = arith.negf %173 : vector<2x15xf32>
    %175 = math.exp %174 : vector<2x15xf32>
    %cst_42 = arith.constant 1.000000e+00 : f32
    %176 = vector.broadcast %cst_42 : f32 to vector<2x15xf32>
    %177 = arith.addf %176, %175 : vector<2x15xf32>
    %178 = arith.divf %176, %177 : vector<2x15xf32>
    %179 = vector.extract_strided_slice %166 {offsets = [0, 30], sizes = [2, 15], strides = [1, 1]} : vector<2x60xf32> to vector<2x15xf32>
    %180 = math.tanh %179 : vector<2x15xf32>
    %181 = vector.extract_strided_slice %166 {offsets = [0, 45], sizes = [2, 15], strides = [1, 1]} : vector<2x60xf32> to vector<2x15xf32>
    %182 = arith.negf %181 : vector<2x15xf32>
    %183 = math.exp %182 : vector<2x15xf32>
    %cst_43 = arith.constant 1.000000e+00 : f32
    %184 = vector.broadcast %cst_43 : f32 to vector<2x15xf32>
    %185 = arith.addf %184, %183 : vector<2x15xf32>
    %186 = arith.divf %184, %185 : vector<2x15xf32>
    %187 = arith.mulf %178, %162 : vector<2x15xf32>
    %188 = arith.mulf %172, %180 : vector<2x15xf32>
    %189 = arith.addf %187, %188 : vector<2x15xf32>
    %190 = math.tanh %189 : vector<2x15xf32>
    %191 = arith.mulf %186, %190 : vector<2x15xf32>
    %cst_44 = arith.constant dense<0.000000e+00> : vector<2x60xf32>
    %192 = tpu.matmul %191, %46, %cst_44 {dimension_numbers = #tpu.dot_dimension_numbers<[1], [0], [0], [1], [0, 0, 1, 1], [], []>} : vector<2x15xf32>, vector<15x60xf32>, vector<2x60xf32> -> vector<2x60xf32>
    %193 = arith.addf %59, %192 : vector<2x60xf32>
    %194 = vector.extract_strided_slice %193 {offsets = [0, 0], sizes = [2, 15], strides = [1, 1]} : vector<2x60xf32> to vector<2x15xf32>
    %195 = arith.negf %194 : vector<2x15xf32>
    %196 = math.exp %195 : vector<2x15xf32>
    %cst_45 = arith.constant 1.000000e+00 : f32
    %197 = vector.broadcast %cst_45 : f32 to vector<2x15xf32>
    %198 = arith.addf %197, %196 : vector<2x15xf32>
    %199 = arith.divf %197, %198 : vector<2x15xf32>
    %200 = vector.extract_strided_slice %193 {offsets = [0, 15], sizes = [2, 15], strides = [1, 1]} : vector<2x60xf32> to vector<2x15xf32>
    %201 = arith.negf %200 : vector<2x15xf32>
    %202 = math.exp %201 : vector<2x15xf32>
    %cst_46 = arith.constant 1.000000e+00 : f32
    %203 = vector.broadcast %cst_46 : f32 to vector<2x15xf32>
    %204 = arith.addf %203, %202 : vector<2x15xf32>
    %205 = arith.divf %203, %204 : vector<2x15xf32>
    %206 = vector.extract_strided_slice %193 {offsets = [0, 30], sizes = [2, 15], strides = [1, 1]} : vector<2x60xf32> to vector<2x15xf32>
    %207 = math.tanh %206 : vector<2x15xf32>
    %208 = vector.extract_strided_slice %193 {offsets = [0, 45], sizes = [2, 15], strides = [1, 1]} : vector<2x60xf32> to vector<2x15xf32>
    %209 = arith.negf %208 : vector<2x15xf32>
    %210 = math.exp %209 : vector<2x15xf32>
    %cst_47 = arith.constant 1.000000e+00 : f32
    %211 = vector.broadcast %cst_47 : f32 to vector<2x15xf32>
    %212 = arith.addf %211, %210 : vector<2x15xf32>
    %213 = arith.divf %211, %212 : vector<2x15xf32>
    %214 = arith.mulf %205, %189 : vector<2x15xf32>
    %215 = arith.mulf %199, %207 : vector<2x15xf32>
    %216 = arith.addf %214, %215 : vector<2x15xf32>
    %217 = math.tanh %216 : vector<2x15xf32>
    %218 = arith.mulf %213, %217 : vector<2x15xf32>
    %cst_48 = arith.constant dense<0.000000e+00> : vector<2x60xf32>
    %219 = tpu.matmul %218, %46, %cst_48 {dimension_numbers = #tpu.dot_dimension_numbers<[1], [0], [0], [1], [0, 0, 1, 1], [], []>} : vector<2x15xf32>, vector<15x60xf32>, vector<2x60xf32> -> vector<2x60xf32>
    %220 = arith.addf %61, %219 : vector<2x60xf32>
    %221 = vector.extract_strided_slice %220 {offsets = [0, 0], sizes = [2, 15], strides = [1, 1]} : vector<2x60xf32> to vector<2x15xf32>
    %222 = arith.negf %221 : vector<2x15xf32>
    %223 = math.exp %222 : vector<2x15xf32>
    %cst_49 = arith.constant 1.000000e+00 : f32
    %224 = vector.broadcast %cst_49 : f32 to vector<2x15xf32>
    %225 = arith.addf %224, %223 : vector<2x15xf32>
    %226 = arith.divf %224, %225 : vector<2x15xf32>
    %227 = vector.extract_strided_slice %220 {offsets = [0, 15], sizes = [2, 15], strides = [1, 1]} : vector<2x60xf32> to vector<2x15xf32>
    %228 = arith.negf %227 : vector<2x15xf32>
    %229 = math.exp %228 : vector<2x15xf32>
    %cst_50 = arith.constant 1.000000e+00 : f32
    %230 = vector.broadcast %cst_50 : f32 to vector<2x15xf32>
    %231 = arith.addf %230, %229 : vector<2x15xf32>
    %232 = arith.divf %230, %231 : vector<2x15xf32>
    %233 = vector.extract_strided_slice %220 {offsets = [0, 30], sizes = [2, 15], strides = [1, 1]} : vector<2x60xf32> to vector<2x15xf32>
    %234 = math.tanh %233 : vector<2x15xf32>
    %235 = vector.extract_strided_slice %220 {offsets = [0, 45], sizes = [2, 15], strides = [1, 1]} : vector<2x60xf32> to vector<2x15xf32>
    %236 = arith.negf %235 : vector<2x15xf32>
    %237 = math.exp %236 : vector<2x15xf32>
    %cst_51 = arith.constant 1.000000e+00 : f32
    %238 = vector.broadcast %cst_51 : f32 to vector<2x15xf32>
    %239 = arith.addf %238, %237 : vector<2x15xf32>
    %240 = arith.divf %238, %239 : vector<2x15xf32>
    %241 = arith.mulf %232, %216 : vector<2x15xf32>
    %242 = arith.mulf %226, %234 : vector<2x15xf32>
    %243 = arith.addf %241, %242 : vector<2x15xf32>
    %244 = math.tanh %243 : vector<2x15xf32>
    %245 = arith.mulf %240, %244 : vector<2x15xf32>
    %cst_52 = arith.constant dense<0.000000e+00> : vector<2x60xf32>
    %246 = tpu.matmul %245, %46, %cst_52 {dimension_numbers = #tpu.dot_dimension_numbers<[1], [0], [0], [1], [0, 0, 1, 1], [], []>} : vector<2x15xf32>, vector<15x60xf32>, vector<2x60xf32> -> vector<2x60xf32>
    %247 = arith.addf %63, %246 : vector<2x60xf32>
    %248 = vector.extract_strided_slice %247 {offsets = [0, 0], sizes = [2, 15], strides = [1, 1]} : vector<2x60xf32> to vector<2x15xf32>
    %249 = arith.negf %248 : vector<2x15xf32>
    %250 = math.exp %249 : vector<2x15xf32>
    %cst_53 = arith.constant 1.000000e+00 : f32
    %251 = vector.broadcast %cst_53 : f32 to vector<2x15xf32>
    %252 = arith.addf %251, %250 : vector<2x15xf32>
    %253 = arith.divf %251, %252 : vector<2x15xf32>
    %254 = vector.extract_strided_slice %247 {offsets = [0, 15], sizes = [2, 15], strides = [1, 1]} : vector<2x60xf32> to vector<2x15xf32>
    %255 = arith.negf %254 : vector<2x15xf32>
    %256 = math.exp %255 : vector<2x15xf32>
    %cst_54 = arith.constant 1.000000e+00 : f32
    %257 = vector.broadcast %cst_54 : f32 to vector<2x15xf32>
    %258 = arith.addf %257, %256 : vector<2x15xf32>
    %259 = arith.divf %257, %258 : vector<2x15xf32>
    %260 = vector.extract_strided_slice %247 {offsets = [0, 30], sizes = [2, 15], strides = [1, 1]} : vector<2x60xf32> to vector<2x15xf32>
    %261 = math.tanh %260 : vector<2x15xf32>
    %262 = vector.extract_strided_slice %247 {offsets = [0, 45], sizes = [2, 15], strides = [1, 1]} : vector<2x60xf32> to vector<2x15xf32>
    %263 = arith.negf %262 : vector<2x15xf32>
    %264 = math.exp %263 : vector<2x15xf32>
    %cst_55 = arith.constant 1.000000e+00 : f32
    %265 = vector.broadcast %cst_55 : f32 to vector<2x15xf32>
    %266 = arith.addf %265, %264 : vector<2x15xf32>
    %267 = arith.divf %265, %266 : vector<2x15xf32>
    %268 = arith.mulf %259, %243 : vector<2x15xf32>
    %269 = arith.mulf %253, %261 : vector<2x15xf32>
    %270 = arith.addf %268, %269 : vector<2x15xf32>
    %271 = math.tanh %270 : vector<2x15xf32>
    %272 = arith.mulf %267, %271 : vector<2x15xf32>
    %cst_56 = arith.constant dense<0.000000e+00> : vector<2x60xf32>
    %273 = tpu.matmul %272, %46, %cst_56 {dimension_numbers = #tpu.dot_dimension_numbers<[1], [0], [0], [1], [0, 0, 1, 1], [], []>} : vector<2x15xf32>, vector<15x60xf32>, vector<2x60xf32> -> vector<2x60xf32>
    %274 = arith.addf %65, %273 : vector<2x60xf32>
    %275 = vector.extract_strided_slice %274 {offsets = [0, 0], sizes = [2, 15], strides = [1, 1]} : vector<2x60xf32> to vector<2x15xf32>
    %276 = arith.negf %275 : vector<2x15xf32>
    %277 = math.exp %276 : vector<2x15xf32>
    %cst_57 = arith.constant 1.000000e+00 : f32
    %278 = vector.broadcast %cst_57 : f32 to vector<2x15xf32>
    %279 = arith.addf %278, %277 : vector<2x15xf32>
    %280 = arith.divf %278, %279 : vector<2x15xf32>
    %281 = vector.extract_strided_slice %274 {offsets = [0, 15], sizes = [2, 15], strides = [1, 1]} : vector<2x60xf32> to vector<2x15xf32>
    %282 = arith.negf %281 : vector<2x15xf32>
    %283 = math.exp %282 : vector<2x15xf32>
    %cst_58 = arith.constant 1.000000e+00 : f32
    %284 = vector.broadcast %cst_58 : f32 to vector<2x15xf32>
    %285 = arith.addf %284, %283 : vector<2x15xf32>
    %286 = arith.divf %284, %285 : vector<2x15xf32>
    %287 = vector.extract_strided_slice %274 {offsets = [0, 30], sizes = [2, 15], strides = [1, 1]} : vector<2x60xf32> to vector<2x15xf32>
    %288 = math.tanh %287 : vector<2x15xf32>
    %289 = vector.extract_strided_slice %274 {offsets = [0, 45], sizes = [2, 15], strides = [1, 1]} : vector<2x60xf32> to vector<2x15xf32>
    %290 = arith.negf %289 : vector<2x15xf32>
    %291 = math.exp %290 : vector<2x15xf32>
    %cst_59 = arith.constant 1.000000e+00 : f32
    %292 = vector.broadcast %cst_59 : f32 to vector<2x15xf32>
    %293 = arith.addf %292, %291 : vector<2x15xf32>
    %294 = arith.divf %292, %293 : vector<2x15xf32>
    %295 = arith.mulf %286, %270 : vector<2x15xf32>
    %296 = arith.mulf %280, %288 : vector<2x15xf32>
    %297 = arith.addf %295, %296 : vector<2x15xf32>
    %298 = math.tanh %297 : vector<2x15xf32>
    %299 = arith.mulf %294, %298 : vector<2x15xf32>
    %cst_60 = arith.constant dense<0.000000e+00> : vector<2x60xf32>
    %300 = tpu.matmul %299, %46, %cst_60 {dimension_numbers = #tpu.dot_dimension_numbers<[1], [0], [0], [1], [0, 0, 1, 1], [], []>} : vector<2x15xf32>, vector<15x60xf32>, vector<2x60xf32> -> vector<2x60xf32>
    %301 = arith.addf %67, %300 : vector<2x60xf32>
    %302 = vector.extract_strided_slice %301 {offsets = [0, 0], sizes = [2, 15], strides = [1, 1]} : vector<2x60xf32> to vector<2x15xf32>
    %303 = arith.negf %302 : vector<2x15xf32>
    %304 = math.exp %303 : vector<2x15xf32>
    %cst_61 = arith.constant 1.000000e+00 : f32
    %305 = vector.broadcast %cst_61 : f32 to vector<2x15xf32>
    %306 = arith.addf %305, %304 : vector<2x15xf32>
    %307 = arith.divf %305, %306 : vector<2x15xf32>
    %308 = vector.extract_strided_slice %301 {offsets = [0, 15], sizes = [2, 15], strides = [1, 1]} : vector<2x60xf32> to vector<2x15xf32>
    %309 = arith.negf %308 : vector<2x15xf32>
    %310 = math.exp %309 : vector<2x15xf32>
    %cst_62 = arith.constant 1.000000e+00 : f32
    %311 = vector.broadcast %cst_62 : f32 to vector<2x15xf32>
    %312 = arith.addf %311, %310 : vector<2x15xf32>
    %313 = arith.divf %311, %312 : vector<2x15xf32>
    %314 = vector.extract_strided_slice %301 {offsets = [0, 30], sizes = [2, 15], strides = [1, 1]} : vector<2x60xf32> to vector<2x15xf32>
    %315 = math.tanh %314 : vector<2x15xf32>
    %316 = vector.extract_strided_slice %301 {offsets = [0, 45], sizes = [2, 15], strides = [1, 1]} : vector<2x60xf32> to vector<2x15xf32>
    %317 = arith.negf %316 : vector<2x15xf32>
    %318 = math.exp %317 : vector<2x15xf32>
    %cst_63 = arith.constant 1.000000e+00 : f32
    %319 = vector.broadcast %cst_63 : f32 to vector<2x15xf32>
    %320 = arith.addf %319, %318 : vector<2x15xf32>
    %321 = arith.divf %319, %320 : vector<2x15xf32>
    %322 = arith.mulf %313, %297 : vector<2x15xf32>
    %323 = arith.mulf %307, %315 : vector<2x15xf32>
    %324 = arith.addf %322, %323 : vector<2x15xf32>
    %325 = math.tanh %324 : vector<2x15xf32>
    %326 = arith.mulf %321, %325 : vector<2x15xf32>
    %cst_64 = arith.constant dense<0.000000e+00> : vector<2x60xf32>
    %327 = tpu.matmul %326, %46, %cst_64 {dimension_numbers = #tpu.dot_dimension_numbers<[1], [0], [0], [1], [0, 0, 1, 1], [], []>} : vector<2x15xf32>, vector<15x60xf32>, vector<2x60xf32> -> vector<2x60xf32>
    %328 = arith.addf %69, %327 : vector<2x60xf32>
    %329 = vector.extract_strided_slice %328 {offsets = [0, 0], sizes = [2, 15], strides = [1, 1]} : vector<2x60xf32> to vector<2x15xf32>
    %330 = arith.negf %329 : vector<2x15xf32>
    %331 = math.exp %330 : vector<2x15xf32>
    %cst_65 = arith.constant 1.000000e+00 : f32
    %332 = vector.broadcast %cst_65 : f32 to vector<2x15xf32>
    %333 = arith.addf %332, %331 : vector<2x15xf32>
    %334 = arith.divf %332, %333 : vector<2x15xf32>
    %335 = vector.extract_strided_slice %328 {offsets = [0, 15], sizes = [2, 15], strides = [1, 1]} : vector<2x60xf32> to vector<2x15xf32>
    %336 = arith.negf %335 : vector<2x15xf32>
    %337 = math.exp %336 : vector<2x15xf32>
    %cst_66 = arith.constant 1.000000e+00 : f32
    %338 = vector.broadcast %cst_66 : f32 to vector<2x15xf32>
    %339 = arith.addf %338, %337 : vector<2x15xf32>
    %340 = arith.divf %338, %339 : vector<2x15xf32>
    %341 = vector.extract_strided_slice %328 {offsets = [0, 30], sizes = [2, 15], strides = [1, 1]} : vector<2x60xf32> to vector<2x15xf32>
    %342 = math.tanh %341 : vector<2x15xf32>
    %343 = vector.extract_strided_slice %328 {offsets = [0, 45], sizes = [2, 15], strides = [1, 1]} : vector<2x60xf32> to vector<2x15xf32>
    %344 = arith.negf %343 : vector<2x15xf32>
    %345 = math.exp %344 : vector<2x15xf32>
    %cst_67 = arith.constant 1.000000e+00 : f32
    %346 = vector.broadcast %cst_67 : f32 to vector<2x15xf32>
    %347 = arith.addf %346, %345 : vector<2x15xf32>
    %348 = arith.divf %346, %347 : vector<2x15xf32>
    %349 = arith.mulf %340, %324 : vector<2x15xf32>
    %350 = arith.mulf %334, %342 : vector<2x15xf32>
    %351 = arith.addf %349, %350 : vector<2x15xf32>
    %352 = math.tanh %351 : vector<2x15xf32>
    %353 = arith.mulf %348, %352 : vector<2x15xf32>
    %cst_68 = arith.constant dense<0.000000e+00> : vector<2x60xf32>
    %354 = tpu.matmul %353, %46, %cst_68 {dimension_numbers = #tpu.dot_dimension_numbers<[1], [0], [0], [1], [0, 0, 1, 1], [], []>} : vector<2x15xf32>, vector<15x60xf32>, vector<2x60xf32> -> vector<2x60xf32>
    %355 = arith.addf %71, %354 : vector<2x60xf32>
    %356 = vector.extract_strided_slice %355 {offsets = [0, 0], sizes = [2, 15], strides = [1, 1]} : vector<2x60xf32> to vector<2x15xf32>
    %357 = arith.negf %356 : vector<2x15xf32>
    %358 = math.exp %357 : vector<2x15xf32>
    %cst_69 = arith.constant 1.000000e+00 : f32
    %359 = vector.broadcast %cst_69 : f32 to vector<2x15xf32>
    %360 = arith.addf %359, %358 : vector<2x15xf32>
    %361 = arith.divf %359, %360 : vector<2x15xf32>
    %362 = vector.extract_strided_slice %355 {offsets = [0, 15], sizes = [2, 15], strides = [1, 1]} : vector<2x60xf32> to vector<2x15xf32>
    %363 = arith.negf %362 : vector<2x15xf32>
    %364 = math.exp %363 : vector<2x15xf32>
    %cst_70 = arith.constant 1.000000e+00 : f32
    %365 = vector.broadcast %cst_70 : f32 to vector<2x15xf32>
    %366 = arith.addf %365, %364 : vector<2x15xf32>
    %367 = arith.divf %365, %366 : vector<2x15xf32>
    %368 = vector.extract_strided_slice %355 {offsets = [0, 30], sizes = [2, 15], strides = [1, 1]} : vector<2x60xf32> to vector<2x15xf32>
    %369 = math.tanh %368 : vector<2x15xf32>
    %370 = vector.extract_strided_slice %355 {offsets = [0, 45], sizes = [2, 15], strides = [1, 1]} : vector<2x60xf32> to vector<2x15xf32>
    %371 = arith.negf %370 : vector<2x15xf32>
    %372 = math.exp %371 : vector<2x15xf32>
    %cst_71 = arith.constant 1.000000e+00 : f32
    %373 = vector.broadcast %cst_71 : f32 to vector<2x15xf32>
    %374 = arith.addf %373, %372 : vector<2x15xf32>
    %375 = arith.divf %373, %374 : vector<2x15xf32>
    %376 = arith.mulf %367, %351 : vector<2x15xf32>
    %377 = arith.mulf %361, %369 : vector<2x15xf32>
    %378 = arith.addf %376, %377 : vector<2x15xf32>
    %379 = math.tanh %378 : vector<2x15xf32>
    %380 = arith.mulf %375, %379 : vector<2x15xf32>
    %cst_72 = arith.constant dense<0.000000e+00> : vector<2x60xf32>
    %381 = tpu.matmul %380, %46, %cst_72 {dimension_numbers = #tpu.dot_dimension_numbers<[1], [0], [0], [1], [0, 0, 1, 1], [], []>} : vector<2x15xf32>, vector<15x60xf32>, vector<2x60xf32> -> vector<2x60xf32>
    %382 = arith.addf %73, %381 : vector<2x60xf32>
    %383 = vector.extract_strided_slice %382 {offsets = [0, 0], sizes = [2, 15], strides = [1, 1]} : vector<2x60xf32> to vector<2x15xf32>
    %384 = arith.negf %383 : vector<2x15xf32>
    %385 = math.exp %384 : vector<2x15xf32>
    %cst_73 = arith.constant 1.000000e+00 : f32
    %386 = vector.broadcast %cst_73 : f32 to vector<2x15xf32>
    %387 = arith.addf %386, %385 : vector<2x15xf32>
    %388 = arith.divf %386, %387 : vector<2x15xf32>
    %389 = vector.extract_strided_slice %382 {offsets = [0, 15], sizes = [2, 15], strides = [1, 1]} : vector<2x60xf32> to vector<2x15xf32>
    %390 = arith.negf %389 : vector<2x15xf32>
    %391 = math.exp %390 : vector<2x15xf32>
    %cst_74 = arith.constant 1.000000e+00 : f32
    %392 = vector.broadcast %cst_74 : f32 to vector<2x15xf32>
    %393 = arith.addf %392, %391 : vector<2x15xf32>
    %394 = arith.divf %392, %393 : vector<2x15xf32>
    %395 = vector.extract_strided_slice %382 {offsets = [0, 30], sizes = [2, 15], strides = [1, 1]} : vector<2x60xf32> to vector<2x15xf32>
    %396 = math.tanh %395 : vector<2x15xf32>
    %397 = vector.extract_strided_slice %382 {offsets = [0, 45], sizes = [2, 15], strides = [1, 1]} : vector<2x60xf32> to vector<2x15xf32>
    %398 = arith.negf %397 : vector<2x15xf32>
    %399 = math.exp %398 : vector<2x15xf32>
    %cst_75 = arith.constant 1.000000e+00 : f32
    %400 = vector.broadcast %cst_75 : f32 to vector<2x15xf32>
    %401 = arith.addf %400, %399 : vector<2x15xf32>
    %402 = arith.divf %400, %401 : vector<2x15xf32>
    %403 = arith.mulf %394, %378 : vector<2x15xf32>
    %404 = arith.mulf %388, %396 : vector<2x15xf32>
    %405 = arith.addf %403, %404 : vector<2x15xf32>
    %406 = math.tanh %405 : vector<2x15xf32>
    %407 = arith.mulf %402, %406 : vector<2x15xf32>
    %cst_76 = arith.constant dense<0.000000e+00> : vector<2x60xf32>
    %408 = tpu.matmul %407, %46, %cst_76 {dimension_numbers = #tpu.dot_dimension_numbers<[1], [0], [0], [1], [0, 0, 1, 1], [], []>} : vector<2x15xf32>, vector<15x60xf32>, vector<2x60xf32> -> vector<2x60xf32>
    %409 = arith.addf %75, %408 : vector<2x60xf32>
    %410 = vector.extract_strided_slice %409 {offsets = [0, 0], sizes = [2, 15], strides = [1, 1]} : vector<2x60xf32> to vector<2x15xf32>
    %411 = arith.negf %410 : vector<2x15xf32>
    %412 = math.exp %411 : vector<2x15xf32>
    %cst_77 = arith.constant 1.000000e+00 : f32
    %413 = vector.broadcast %cst_77 : f32 to vector<2x15xf32>
    %414 = arith.addf %413, %412 : vector<2x15xf32>
    %415 = arith.divf %413, %414 : vector<2x15xf32>
    %416 = vector.extract_strided_slice %409 {offsets = [0, 15], sizes = [2, 15], strides = [1, 1]} : vector<2x60xf32> to vector<2x15xf32>
    %417 = arith.negf %416 : vector<2x15xf32>
    %418 = math.exp %417 : vector<2x15xf32>
    %cst_78 = arith.constant 1.000000e+00 : f32
    %419 = vector.broadcast %cst_78 : f32 to vector<2x15xf32>
    %420 = arith.addf %419, %418 : vector<2x15xf32>
    %421 = arith.divf %419, %420 : vector<2x15xf32>
    %422 = vector.extract_strided_slice %409 {offsets = [0, 30], sizes = [2, 15], strides = [1, 1]} : vector<2x60xf32> to vector<2x15xf32>
    %423 = math.tanh %422 : vector<2x15xf32>
    %424 = vector.extract_strided_slice %409 {offsets = [0, 45], sizes = [2, 15], strides = [1, 1]} : vector<2x60xf32> to vector<2x15xf32>
    %425 = arith.negf %424 : vector<2x15xf32>
    %426 = math.exp %425 : vector<2x15xf32>
    %cst_79 = arith.constant 1.000000e+00 : f32
    %427 = vector.broadcast %cst_79 : f32 to vector<2x15xf32>
    %428 = arith.addf %427, %426 : vector<2x15xf32>
    %429 = arith.divf %427, %428 : vector<2x15xf32>
    %430 = arith.mulf %421, %405 : vector<2x15xf32>
    %431 = arith.mulf %415, %423 : vector<2x15xf32>
    %432 = arith.addf %430, %431 : vector<2x15xf32>
    %433 = math.tanh %432 : vector<2x15xf32>
    %434 = arith.mulf %429, %433 : vector<2x15xf32>
    %cst_80 = arith.constant dense<0.000000e+00> : vector<2x60xf32>
    %435 = tpu.matmul %434, %46, %cst_80 {dimension_numbers = #tpu.dot_dimension_numbers<[1], [0], [0], [1], [0, 0, 1, 1], [], []>} : vector<2x15xf32>, vector<15x60xf32>, vector<2x60xf32> -> vector<2x60xf32>
    %436 = arith.addf %77, %435 : vector<2x60xf32>
    %437 = vector.extract_strided_slice %436 {offsets = [0, 0], sizes = [2, 15], strides = [1, 1]} : vector<2x60xf32> to vector<2x15xf32>
    %438 = arith.negf %437 : vector<2x15xf32>
    %439 = math.exp %438 : vector<2x15xf32>
    %cst_81 = arith.constant 1.000000e+00 : f32
    %440 = vector.broadcast %cst_81 : f32 to vector<2x15xf32>
    %441 = arith.addf %440, %439 : vector<2x15xf32>
    %442 = arith.divf %440, %441 : vector<2x15xf32>
    %443 = vector.extract_strided_slice %436 {offsets = [0, 15], sizes = [2, 15], strides = [1, 1]} : vector<2x60xf32> to vector<2x15xf32>
    %444 = arith.negf %443 : vector<2x15xf32>
    %445 = math.exp %444 : vector<2x15xf32>
    %cst_82 = arith.constant 1.000000e+00 : f32
    %446 = vector.broadcast %cst_82 : f32 to vector<2x15xf32>
    %447 = arith.addf %446, %445 : vector<2x15xf32>
    %448 = arith.divf %446, %447 : vector<2x15xf32>
    %449 = vector.extract_strided_slice %436 {offsets = [0, 30], sizes = [2, 15], strides = [1, 1]} : vector<2x60xf32> to vector<2x15xf32>
    %450 = math.tanh %449 : vector<2x15xf32>
    %451 = vector.extract_strided_slice %436 {offsets = [0, 45], sizes = [2, 15], strides = [1, 1]} : vector<2x60xf32> to vector<2x15xf32>
    %452 = arith.negf %451 : vector<2x15xf32>
    %453 = math.exp %452 : vector<2x15xf32>
    %cst_83 = arith.constant 1.000000e+00 : f32
    %454 = vector.broadcast %cst_83 : f32 to vector<2x15xf32>
    %455 = arith.addf %454, %453 : vector<2x15xf32>
    %456 = arith.divf %454, %455 : vector<2x15xf32>
    %457 = arith.mulf %448, %432 : vector<2x15xf32>
    %458 = arith.mulf %442, %450 : vector<2x15xf32>
    %459 = arith.addf %457, %458 : vector<2x15xf32>
    %460 = math.tanh %459 : vector<2x15xf32>
    %461 = arith.mulf %456, %460 : vector<2x15xf32>
    %cst_84 = arith.constant dense<0.000000e+00> : vector<2x60xf32>
    %462 = tpu.matmul %461, %46, %cst_84 {dimension_numbers = #tpu.dot_dimension_numbers<[1], [0], [0], [1], [0, 0, 1, 1], [], []>} : vector<2x15xf32>, vector<15x60xf32>, vector<2x60xf32> -> vector<2x60xf32>
    %463 = arith.addf %79, %462 : vector<2x60xf32>
    %464 = vector.extract_strided_slice %463 {offsets = [0, 0], sizes = [2, 15], strides = [1, 1]} : vector<2x60xf32> to vector<2x15xf32>
    %465 = arith.negf %464 : vector<2x15xf32>
    %466 = math.exp %465 : vector<2x15xf32>
    %cst_85 = arith.constant 1.000000e+00 : f32
    %467 = vector.broadcast %cst_85 : f32 to vector<2x15xf32>
    %468 = arith.addf %467, %466 : vector<2x15xf32>
    %469 = arith.divf %467, %468 : vector<2x15xf32>
    %470 = vector.extract_strided_slice %463 {offsets = [0, 15], sizes = [2, 15], strides = [1, 1]} : vector<2x60xf32> to vector<2x15xf32>
    %471 = arith.negf %470 : vector<2x15xf32>
    %472 = math.exp %471 : vector<2x15xf32>
    %cst_86 = arith.constant 1.000000e+00 : f32
    %473 = vector.broadcast %cst_86 : f32 to vector<2x15xf32>
    %474 = arith.addf %473, %472 : vector<2x15xf32>
    %475 = arith.divf %473, %474 : vector<2x15xf32>
    %476 = vector.extract_strided_slice %463 {offsets = [0, 30], sizes = [2, 15], strides = [1, 1]} : vector<2x60xf32> to vector<2x15xf32>
    %477 = math.tanh %476 : vector<2x15xf32>
    %478 = vector.extract_strided_slice %463 {offsets = [0, 45], sizes = [2, 15], strides = [1, 1]} : vector<2x60xf32> to vector<2x15xf32>
    %479 = arith.negf %478 : vector<2x15xf32>
    %480 = math.exp %479 : vector<2x15xf32>
    %cst_87 = arith.constant 1.000000e+00 : f32
    %481 = vector.broadcast %cst_87 : f32 to vector<2x15xf32>
    %482 = arith.addf %481, %480 : vector<2x15xf32>
    %483 = arith.divf %481, %482 : vector<2x15xf32>
    %484 = arith.mulf %475, %459 : vector<2x15xf32>
    %485 = arith.mulf %469, %477 : vector<2x15xf32>
    %486 = arith.addf %484, %485 : vector<2x15xf32>
    %487 = math.tanh %486 : vector<2x15xf32>
    %488 = arith.mulf %483, %487 : vector<2x15xf32>
    %cst_88 = arith.constant dense<0.000000e+00> : vector<2x60xf32>
    %489 = tpu.matmul %488, %46, %cst_88 {dimension_numbers = #tpu.dot_dimension_numbers<[1], [0], [0], [1], [0, 0, 1, 1], [], []>} : vector<2x15xf32>, vector<15x60xf32>, vector<2x60xf32> -> vector<2x60xf32>
    %490 = arith.addf %81, %489 : vector<2x60xf32>
    %491 = vector.extract_strided_slice %490 {offsets = [0, 0], sizes = [2, 15], strides = [1, 1]} : vector<2x60xf32> to vector<2x15xf32>
    %492 = arith.negf %491 : vector<2x15xf32>
    %493 = math.exp %492 : vector<2x15xf32>
    %cst_89 = arith.constant 1.000000e+00 : f32
    %494 = vector.broadcast %cst_89 : f32 to vector<2x15xf32>
    %495 = arith.addf %494, %493 : vector<2x15xf32>
    %496 = arith.divf %494, %495 : vector<2x15xf32>
    %497 = vector.extract_strided_slice %490 {offsets = [0, 15], sizes = [2, 15], strides = [1, 1]} : vector<2x60xf32> to vector<2x15xf32>
    %498 = arith.negf %497 : vector<2x15xf32>
    %499 = math.exp %498 : vector<2x15xf32>
    %cst_90 = arith.constant 1.000000e+00 : f32
    %500 = vector.broadcast %cst_90 : f32 to vector<2x15xf32>
    %501 = arith.addf %500, %499 : vector<2x15xf32>
    %502 = arith.divf %500, %501 : vector<2x15xf32>
    %503 = vector.extract_strided_slice %490 {offsets = [0, 30], sizes = [2, 15], strides = [1, 1]} : vector<2x60xf32> to vector<2x15xf32>
    %504 = math.tanh %503 : vector<2x15xf32>
    %505 = vector.extract_strided_slice %490 {offsets = [0, 45], sizes = [2, 15], strides = [1, 1]} : vector<2x60xf32> to vector<2x15xf32>
    %506 = arith.negf %505 : vector<2x15xf32>
    %507 = math.exp %506 : vector<2x15xf32>
    %cst_91 = arith.constant 1.000000e+00 : f32
    %508 = vector.broadcast %cst_91 : f32 to vector<2x15xf32>
    %509 = arith.addf %508, %507 : vector<2x15xf32>
    %510 = arith.divf %508, %509 : vector<2x15xf32>
    %511 = arith.mulf %502, %486 : vector<2x15xf32>
    %512 = arith.mulf %496, %504 : vector<2x15xf32>
    %513 = arith.addf %511, %512 : vector<2x15xf32>
    %514 = math.tanh %513 : vector<2x15xf32>
    %515 = arith.mulf %510, %514 : vector<2x15xf32>
    %c0_92 = arith.constant 0 : index
    %c0_93 = arith.constant 0 : index
    %516 = vector.load %arg4[%c0_92, %c0_93] : memref<15x28xf32, #tpu.memory_space<vmem>>, vector<15x28xf32>
    %c0_94 = arith.constant 0 : index
    %c0_95 = arith.constant 0 : index
    %517 = vector.load %arg5[%c0_94, %c0_95] : memref<7x28xf32, #tpu.memory_space<vmem>>, vector<7x28xf32>
    %c0_96 = arith.constant 0 : index
    %c0_97 = arith.constant 0 : index
    %518 = vector.load %arg6[%c0_96, %c0_97] : memref<1x28xf32, #tpu.memory_space<vmem>>, vector<1x28xf32>
    %519 = vector.shape_cast %518 : vector<1x28xf32> to vector<1x28xf32>
    %520 = vector.broadcast %519 : vector<1x28xf32> to vector<2x28xf32>
    %cst_98 = arith.constant dense<0.000000e+00> : vector<2x28xf32>
    %521 = tpu.matmul %110, %516, %cst_98 {dimension_numbers = #tpu.dot_dimension_numbers<[1], [0], [0], [1], [0, 0, 1, 1], [], []>} : vector<2x15xf32>, vector<15x28xf32>, vector<2x28xf32> -> vector<2x28xf32>
    %522 = arith.addf %521, %520 : vector<2x28xf32>
    %cst_99 = arith.constant dense<0.000000e+00> : vector<2x28xf32>
    %523 = tpu.matmul %137, %516, %cst_99 {dimension_numbers = #tpu.dot_dimension_numbers<[1], [0], [0], [1], [0, 0, 1, 1], [], []>} : vector<2x15xf32>, vector<15x28xf32>, vector<2x28xf32> -> vector<2x28xf32>
    %524 = arith.addf %523, %520 : vector<2x28xf32>
    %cst_100 = arith.constant dense<0.000000e+00> : vector<2x28xf32>
    %525 = tpu.matmul %164, %516, %cst_100 {dimension_numbers = #tpu.dot_dimension_numbers<[1], [0], [0], [1], [0, 0, 1, 1], [], []>} : vector<2x15xf32>, vector<15x28xf32>, vector<2x28xf32> -> vector<2x28xf32>
    %526 = arith.addf %525, %520 : vector<2x28xf32>
    %cst_101 = arith.constant dense<0.000000e+00> : vector<2x28xf32>
    %527 = tpu.matmul %191, %516, %cst_101 {dimension_numbers = #tpu.dot_dimension_numbers<[1], [0], [0], [1], [0, 0, 1, 1], [], []>} : vector<2x15xf32>, vector<15x28xf32>, vector<2x28xf32> -> vector<2x28xf32>
    %528 = arith.addf %527, %520 : vector<2x28xf32>
    %cst_102 = arith.constant dense<0.000000e+00> : vector<2x28xf32>
    %529 = tpu.matmul %218, %516, %cst_102 {dimension_numbers = #tpu.dot_dimension_numbers<[1], [0], [0], [1], [0, 0, 1, 1], [], []>} : vector<2x15xf32>, vector<15x28xf32>, vector<2x28xf32> -> vector<2x28xf32>
    %530 = arith.addf %529, %520 : vector<2x28xf32>
    %cst_103 = arith.constant dense<0.000000e+00> : vector<2x28xf32>
    %531 = tpu.matmul %245, %516, %cst_103 {dimension_numbers = #tpu.dot_dimension_numbers<[1], [0], [0], [1], [0, 0, 1, 1], [], []>} : vector<2x15xf32>, vector<15x28xf32>, vector<2x28xf32> -> vector<2x28xf32>
    %532 = arith.addf %531, %520 : vector<2x28xf32>
    %cst_104 = arith.constant dense<0.000000e+00> : vector<2x28xf32>
    %533 = tpu.matmul %272, %516, %cst_104 {dimension_numbers = #tpu.dot_dimension_numbers<[1], [0], [0], [1], [0, 0, 1, 1], [], []>} : vector<2x15xf32>, vector<15x28xf32>, vector<2x28xf32> -> vector<2x28xf32>
    %534 = arith.addf %533, %520 : vector<2x28xf32>
    %cst_105 = arith.constant dense<0.000000e+00> : vector<2x28xf32>
    %535 = tpu.matmul %299, %516, %cst_105 {dimension_numbers = #tpu.dot_dimension_numbers<[1], [0], [0], [1], [0, 0, 1, 1], [], []>} : vector<2x15xf32>, vector<15x28xf32>, vector<2x28xf32> -> vector<2x28xf32>
    %536 = arith.addf %535, %520 : vector<2x28xf32>
    %cst_106 = arith.constant dense<0.000000e+00> : vector<2x28xf32>
    %537 = tpu.matmul %326, %516, %cst_106 {dimension_numbers = #tpu.dot_dimension_numbers<[1], [0], [0], [1], [0, 0, 1, 1], [], []>} : vector<2x15xf32>, vector<15x28xf32>, vector<2x28xf32> -> vector<2x28xf32>
    %538 = arith.addf %537, %520 : vector<2x28xf32>
    %cst_107 = arith.constant dense<0.000000e+00> : vector<2x28xf32>
    %539 = tpu.matmul %353, %516, %cst_107 {dimension_numbers = #tpu.dot_dimension_numbers<[1], [0], [0], [1], [0, 0, 1, 1], [], []>} : vector<2x15xf32>, vector<15x28xf32>, vector<2x28xf32> -> vector<2x28xf32>
    %540 = arith.addf %539, %520 : vector<2x28xf32>
    %cst_108 = arith.constant dense<0.000000e+00> : vector<2x28xf32>
    %541 = tpu.matmul %380, %516, %cst_108 {dimension_numbers = #tpu.dot_dimension_numbers<[1], [0], [0], [1], [0, 0, 1, 1], [], []>} : vector<2x15xf32>, vector<15x28xf32>, vector<2x28xf32> -> vector<2x28xf32>
    %542 = arith.addf %541, %520 : vector<2x28xf32>
    %cst_109 = arith.constant dense<0.000000e+00> : vector<2x28xf32>
    %543 = tpu.matmul %407, %516, %cst_109 {dimension_numbers = #tpu.dot_dimension_numbers<[1], [0], [0], [1], [0, 0, 1, 1], [], []>} : vector<2x15xf32>, vector<15x28xf32>, vector<2x28xf32> -> vector<2x28xf32>
    %544 = arith.addf %543, %520 : vector<2x28xf32>
    %cst_110 = arith.constant dense<0.000000e+00> : vector<2x28xf32>
    %545 = tpu.matmul %434, %516, %cst_110 {dimension_numbers = #tpu.dot_dimension_numbers<[1], [0], [0], [1], [0, 0, 1, 1], [], []>} : vector<2x15xf32>, vector<15x28xf32>, vector<2x28xf32> -> vector<2x28xf32>
    %546 = arith.addf %545, %520 : vector<2x28xf32>
    %cst_111 = arith.constant dense<0.000000e+00> : vector<2x28xf32>
    %547 = tpu.matmul %461, %516, %cst_111 {dimension_numbers = #tpu.dot_dimension_numbers<[1], [0], [0], [1], [0, 0, 1, 1], [], []>} : vector<2x15xf32>, vector<15x28xf32>, vector<2x28xf32> -> vector<2x28xf32>
    %548 = arith.addf %547, %520 : vector<2x28xf32>
    %cst_112 = arith.constant dense<0.000000e+00> : vector<2x28xf32>
    %549 = tpu.matmul %488, %516, %cst_112 {dimension_numbers = #tpu.dot_dimension_numbers<[1], [0], [0], [1], [0, 0, 1, 1], [], []>} : vector<2x15xf32>, vector<15x28xf32>, vector<2x28xf32> -> vector<2x28xf32>
    %550 = arith.addf %549, %520 : vector<2x28xf32>
    %cst_113 = arith.constant dense<0.000000e+00> : vector<2x28xf32>
    %551 = tpu.matmul %515, %516, %cst_113 {dimension_numbers = #tpu.dot_dimension_numbers<[1], [0], [0], [1], [0, 0, 1, 1], [], []>} : vector<2x15xf32>, vector<15x28xf32>, vector<2x28xf32> -> vector<2x28xf32>
    %552 = arith.addf %551, %520 : vector<2x28xf32>
    %cst_114 = arith.constant 0.000000e+00 : f32
    %553 = vector.broadcast %cst_114 : f32 to vector<2x7xf32>
    %cst_115 = arith.constant 0.000000e+00 : f32
    %554 = vector.broadcast %cst_115 : f32 to vector<2x7xf32>
    %cst_116 = arith.constant dense<0.000000e+00> : vector<2x28xf32>
    %555 = tpu.matmul %553, %517, %cst_116 {dimension_numbers = #tpu.dot_dimension_numbers<[1], [0], [0], [1], [0, 0, 1, 1], [], []>} : vector<2x7xf32>, vector<7x28xf32>, vector<2x28xf32> -> vector<2x28xf32>
    %556 = arith.addf %522, %555 : vector<2x28xf32>
    %557 = vector.extract_strided_slice %556 {offsets = [0, 0], sizes = [2, 7], strides = [1, 1]} : vector<2x28xf32> to vector<2x7xf32>
    %558 = arith.negf %557 : vector<2x7xf32>
    %559 = math.exp %558 : vector<2x7xf32>
    %cst_117 = arith.constant 1.000000e+00 : f32
    %560 = vector.broadcast %cst_117 : f32 to vector<2x7xf32>
    %561 = arith.addf %560, %559 : vector<2x7xf32>
    %562 = arith.divf %560, %561 : vector<2x7xf32>
    %563 = vector.extract_strided_slice %556 {offsets = [0, 7], sizes = [2, 7], strides = [1, 1]} : vector<2x28xf32> to vector<2x7xf32>
    %564 = arith.negf %563 : vector<2x7xf32>
    %565 = math.exp %564 : vector<2x7xf32>
    %cst_118 = arith.constant 1.000000e+00 : f32
    %566 = vector.broadcast %cst_118 : f32 to vector<2x7xf32>
    %567 = arith.addf %566, %565 : vector<2x7xf32>
    %568 = arith.divf %566, %567 : vector<2x7xf32>
    %569 = vector.extract_strided_slice %556 {offsets = [0, 14], sizes = [2, 7], strides = [1, 1]} : vector<2x28xf32> to vector<2x7xf32>
    %570 = math.tanh %569 : vector<2x7xf32>
    %571 = vector.extract_strided_slice %556 {offsets = [0, 21], sizes = [2, 7], strides = [1, 1]} : vector<2x28xf32> to vector<2x7xf32>
    %572 = arith.negf %571 : vector<2x7xf32>
    %573 = math.exp %572 : vector<2x7xf32>
    %cst_119 = arith.constant 1.000000e+00 : f32
    %574 = vector.broadcast %cst_119 : f32 to vector<2x7xf32>
    %575 = arith.addf %574, %573 : vector<2x7xf32>
    %576 = arith.divf %574, %575 : vector<2x7xf32>
    %577 = arith.mulf %568, %554 : vector<2x7xf32>
    %578 = arith.mulf %562, %570 : vector<2x7xf32>
    %579 = arith.addf %577, %578 : vector<2x7xf32>
    %580 = math.tanh %579 : vector<2x7xf32>
    %581 = arith.mulf %576, %580 : vector<2x7xf32>
    %cst_120 = arith.constant dense<0.000000e+00> : vector<2x28xf32>
    %582 = tpu.matmul %581, %517, %cst_120 {dimension_numbers = #tpu.dot_dimension_numbers<[1], [0], [0], [1], [0, 0, 1, 1], [], []>} : vector<2x7xf32>, vector<7x28xf32>, vector<2x28xf32> -> vector<2x28xf32>
    %583 = arith.addf %524, %582 : vector<2x28xf32>
    %584 = vector.extract_strided_slice %583 {offsets = [0, 0], sizes = [2, 7], strides = [1, 1]} : vector<2x28xf32> to vector<2x7xf32>
    %585 = arith.negf %584 : vector<2x7xf32>
    %586 = math.exp %585 : vector<2x7xf32>
    %cst_121 = arith.constant 1.000000e+00 : f32
    %587 = vector.broadcast %cst_121 : f32 to vector<2x7xf32>
    %588 = arith.addf %587, %586 : vector<2x7xf32>
    %589 = arith.divf %587, %588 : vector<2x7xf32>
    %590 = vector.extract_strided_slice %583 {offsets = [0, 7], sizes = [2, 7], strides = [1, 1]} : vector<2x28xf32> to vector<2x7xf32>
    %591 = arith.negf %590 : vector<2x7xf32>
    %592 = math.exp %591 : vector<2x7xf32>
    %cst_122 = arith.constant 1.000000e+00 : f32
    %593 = vector.broadcast %cst_122 : f32 to vector<2x7xf32>
    %594 = arith.addf %593, %592 : vector<2x7xf32>
    %595 = arith.divf %593, %594 : vector<2x7xf32>
    %596 = vector.extract_strided_slice %583 {offsets = [0, 14], sizes = [2, 7], strides = [1, 1]} : vector<2x28xf32> to vector<2x7xf32>
    %597 = math.tanh %596 : vector<2x7xf32>
    %598 = vector.extract_strided_slice %583 {offsets = [0, 21], sizes = [2, 7], strides = [1, 1]} : vector<2x28xf32> to vector<2x7xf32>
    %599 = arith.negf %598 : vector<2x7xf32>
    %600 = math.exp %599 : vector<2x7xf32>
    %cst_123 = arith.constant 1.000000e+00 : f32
    %601 = vector.broadcast %cst_123 : f32 to vector<2x7xf32>
    %602 = arith.addf %601, %600 : vector<2x7xf32>
    %603 = arith.divf %601, %602 : vector<2x7xf32>
    %604 = arith.mulf %595, %579 : vector<2x7xf32>
    %605 = arith.mulf %589, %597 : vector<2x7xf32>
    %606 = arith.addf %604, %605 : vector<2x7xf32>
    %607 = math.tanh %606 : vector<2x7xf32>
    %608 = arith.mulf %603, %607 : vector<2x7xf32>
    %cst_124 = arith.constant dense<0.000000e+00> : vector<2x28xf32>
    %609 = tpu.matmul %608, %517, %cst_124 {dimension_numbers = #tpu.dot_dimension_numbers<[1], [0], [0], [1], [0, 0, 1, 1], [], []>} : vector<2x7xf32>, vector<7x28xf32>, vector<2x28xf32> -> vector<2x28xf32>
    %610 = arith.addf %526, %609 : vector<2x28xf32>
    %611 = vector.extract_strided_slice %610 {offsets = [0, 0], sizes = [2, 7], strides = [1, 1]} : vector<2x28xf32> to vector<2x7xf32>
    %612 = arith.negf %611 : vector<2x7xf32>
    %613 = math.exp %612 : vector<2x7xf32>
    %cst_125 = arith.constant 1.000000e+00 : f32
    %614 = vector.broadcast %cst_125 : f32 to vector<2x7xf32>
    %615 = arith.addf %614, %613 : vector<2x7xf32>
    %616 = arith.divf %614, %615 : vector<2x7xf32>
    %617 = vector.extract_strided_slice %610 {offsets = [0, 7], sizes = [2, 7], strides = [1, 1]} : vector<2x28xf32> to vector<2x7xf32>
    %618 = arith.negf %617 : vector<2x7xf32>
    %619 = math.exp %618 : vector<2x7xf32>
    %cst_126 = arith.constant 1.000000e+00 : f32
    %620 = vector.broadcast %cst_126 : f32 to vector<2x7xf32>
    %621 = arith.addf %620, %619 : vector<2x7xf32>
    %622 = arith.divf %620, %621 : vector<2x7xf32>
    %623 = vector.extract_strided_slice %610 {offsets = [0, 14], sizes = [2, 7], strides = [1, 1]} : vector<2x28xf32> to vector<2x7xf32>
    %624 = math.tanh %623 : vector<2x7xf32>
    %625 = vector.extract_strided_slice %610 {offsets = [0, 21], sizes = [2, 7], strides = [1, 1]} : vector<2x28xf32> to vector<2x7xf32>
    %626 = arith.negf %625 : vector<2x7xf32>
    %627 = math.exp %626 : vector<2x7xf32>
    %cst_127 = arith.constant 1.000000e+00 : f32
    %628 = vector.broadcast %cst_127 : f32 to vector<2x7xf32>
    %629 = arith.addf %628, %627 : vector<2x7xf32>
    %630 = arith.divf %628, %629 : vector<2x7xf32>
    %631 = arith.mulf %622, %606 : vector<2x7xf32>
    %632 = arith.mulf %616, %624 : vector<2x7xf32>
    %633 = arith.addf %631, %632 : vector<2x7xf32>
    %634 = math.tanh %633 : vector<2x7xf32>
    %635 = arith.mulf %630, %634 : vector<2x7xf32>
    %cst_128 = arith.constant dense<0.000000e+00> : vector<2x28xf32>
    %636 = tpu.matmul %635, %517, %cst_128 {dimension_numbers = #tpu.dot_dimension_numbers<[1], [0], [0], [1], [0, 0, 1, 1], [], []>} : vector<2x7xf32>, vector<7x28xf32>, vector<2x28xf32> -> vector<2x28xf32>
    %637 = arith.addf %528, %636 : vector<2x28xf32>
    %638 = vector.extract_strided_slice %637 {offsets = [0, 0], sizes = [2, 7], strides = [1, 1]} : vector<2x28xf32> to vector<2x7xf32>
    %639 = arith.negf %638 : vector<2x7xf32>
    %640 = math.exp %639 : vector<2x7xf32>
    %cst_129 = arith.constant 1.000000e+00 : f32
    %641 = vector.broadcast %cst_129 : f32 to vector<2x7xf32>
    %642 = arith.addf %641, %640 : vector<2x7xf32>
    %643 = arith.divf %641, %642 : vector<2x7xf32>
    %644 = vector.extract_strided_slice %637 {offsets = [0, 7], sizes = [2, 7], strides = [1, 1]} : vector<2x28xf32> to vector<2x7xf32>
    %645 = arith.negf %644 : vector<2x7xf32>
    %646 = math.exp %645 : vector<2x7xf32>
    %cst_130 = arith.constant 1.000000e+00 : f32
    %647 = vector.broadcast %cst_130 : f32 to vector<2x7xf32>
    %648 = arith.addf %647, %646 : vector<2x7xf32>
    %649 = arith.divf %647, %648 : vector<2x7xf32>
    %650 = vector.extract_strided_slice %637 {offsets = [0, 14], sizes = [2, 7], strides = [1, 1]} : vector<2x28xf32> to vector<2x7xf32>
    %651 = math.tanh %650 : vector<2x7xf32>
    %652 = vector.extract_strided_slice %637 {offsets = [0, 21], sizes = [2, 7], strides = [1, 1]} : vector<2x28xf32> to vector<2x7xf32>
    %653 = arith.negf %652 : vector<2x7xf32>
    %654 = math.exp %653 : vector<2x7xf32>
    %cst_131 = arith.constant 1.000000e+00 : f32
    %655 = vector.broadcast %cst_131 : f32 to vector<2x7xf32>
    %656 = arith.addf %655, %654 : vector<2x7xf32>
    %657 = arith.divf %655, %656 : vector<2x7xf32>
    %658 = arith.mulf %649, %633 : vector<2x7xf32>
    %659 = arith.mulf %643, %651 : vector<2x7xf32>
    %660 = arith.addf %658, %659 : vector<2x7xf32>
    %661 = math.tanh %660 : vector<2x7xf32>
    %662 = arith.mulf %657, %661 : vector<2x7xf32>
    %cst_132 = arith.constant dense<0.000000e+00> : vector<2x28xf32>
    %663 = tpu.matmul %662, %517, %cst_132 {dimension_numbers = #tpu.dot_dimension_numbers<[1], [0], [0], [1], [0, 0, 1, 1], [], []>} : vector<2x7xf32>, vector<7x28xf32>, vector<2x28xf32> -> vector<2x28xf32>
    %664 = arith.addf %530, %663 : vector<2x28xf32>
    %665 = vector.extract_strided_slice %664 {offsets = [0, 0], sizes = [2, 7], strides = [1, 1]} : vector<2x28xf32> to vector<2x7xf32>
    %666 = arith.negf %665 : vector<2x7xf32>
    %667 = math.exp %666 : vector<2x7xf32>
    %cst_133 = arith.constant 1.000000e+00 : f32
    %668 = vector.broadcast %cst_133 : f32 to vector<2x7xf32>
    %669 = arith.addf %668, %667 : vector<2x7xf32>
    %670 = arith.divf %668, %669 : vector<2x7xf32>
    %671 = vector.extract_strided_slice %664 {offsets = [0, 7], sizes = [2, 7], strides = [1, 1]} : vector<2x28xf32> to vector<2x7xf32>
    %672 = arith.negf %671 : vector<2x7xf32>
    %673 = math.exp %672 : vector<2x7xf32>
    %cst_134 = arith.constant 1.000000e+00 : f32
    %674 = vector.broadcast %cst_134 : f32 to vector<2x7xf32>
    %675 = arith.addf %674, %673 : vector<2x7xf32>
    %676 = arith.divf %674, %675 : vector<2x7xf32>
    %677 = vector.extract_strided_slice %664 {offsets = [0, 14], sizes = [2, 7], strides = [1, 1]} : vector<2x28xf32> to vector<2x7xf32>
    %678 = math.tanh %677 : vector<2x7xf32>
    %679 = vector.extract_strided_slice %664 {offsets = [0, 21], sizes = [2, 7], strides = [1, 1]} : vector<2x28xf32> to vector<2x7xf32>
    %680 = arith.negf %679 : vector<2x7xf32>
    %681 = math.exp %680 : vector<2x7xf32>
    %cst_135 = arith.constant 1.000000e+00 : f32
    %682 = vector.broadcast %cst_135 : f32 to vector<2x7xf32>
    %683 = arith.addf %682, %681 : vector<2x7xf32>
    %684 = arith.divf %682, %683 : vector<2x7xf32>
    %685 = arith.mulf %676, %660 : vector<2x7xf32>
    %686 = arith.mulf %670, %678 : vector<2x7xf32>
    %687 = arith.addf %685, %686 : vector<2x7xf32>
    %688 = math.tanh %687 : vector<2x7xf32>
    %689 = arith.mulf %684, %688 : vector<2x7xf32>
    %cst_136 = arith.constant dense<0.000000e+00> : vector<2x28xf32>
    %690 = tpu.matmul %689, %517, %cst_136 {dimension_numbers = #tpu.dot_dimension_numbers<[1], [0], [0], [1], [0, 0, 1, 1], [], []>} : vector<2x7xf32>, vector<7x28xf32>, vector<2x28xf32> -> vector<2x28xf32>
    %691 = arith.addf %532, %690 : vector<2x28xf32>
    %692 = vector.extract_strided_slice %691 {offsets = [0, 0], sizes = [2, 7], strides = [1, 1]} : vector<2x28xf32> to vector<2x7xf32>
    %693 = arith.negf %692 : vector<2x7xf32>
    %694 = math.exp %693 : vector<2x7xf32>
    %cst_137 = arith.constant 1.000000e+00 : f32
    %695 = vector.broadcast %cst_137 : f32 to vector<2x7xf32>
    %696 = arith.addf %695, %694 : vector<2x7xf32>
    %697 = arith.divf %695, %696 : vector<2x7xf32>
    %698 = vector.extract_strided_slice %691 {offsets = [0, 7], sizes = [2, 7], strides = [1, 1]} : vector<2x28xf32> to vector<2x7xf32>
    %699 = arith.negf %698 : vector<2x7xf32>
    %700 = math.exp %699 : vector<2x7xf32>
    %cst_138 = arith.constant 1.000000e+00 : f32
    %701 = vector.broadcast %cst_138 : f32 to vector<2x7xf32>
    %702 = arith.addf %701, %700 : vector<2x7xf32>
    %703 = arith.divf %701, %702 : vector<2x7xf32>
    %704 = vector.extract_strided_slice %691 {offsets = [0, 14], sizes = [2, 7], strides = [1, 1]} : vector<2x28xf32> to vector<2x7xf32>
    %705 = math.tanh %704 : vector<2x7xf32>
    %706 = vector.extract_strided_slice %691 {offsets = [0, 21], sizes = [2, 7], strides = [1, 1]} : vector<2x28xf32> to vector<2x7xf32>
    %707 = arith.negf %706 : vector<2x7xf32>
    %708 = math.exp %707 : vector<2x7xf32>
    %cst_139 = arith.constant 1.000000e+00 : f32
    %709 = vector.broadcast %cst_139 : f32 to vector<2x7xf32>
    %710 = arith.addf %709, %708 : vector<2x7xf32>
    %711 = arith.divf %709, %710 : vector<2x7xf32>
    %712 = arith.mulf %703, %687 : vector<2x7xf32>
    %713 = arith.mulf %697, %705 : vector<2x7xf32>
    %714 = arith.addf %712, %713 : vector<2x7xf32>
    %715 = math.tanh %714 : vector<2x7xf32>
    %716 = arith.mulf %711, %715 : vector<2x7xf32>
    %cst_140 = arith.constant dense<0.000000e+00> : vector<2x28xf32>
    %717 = tpu.matmul %716, %517, %cst_140 {dimension_numbers = #tpu.dot_dimension_numbers<[1], [0], [0], [1], [0, 0, 1, 1], [], []>} : vector<2x7xf32>, vector<7x28xf32>, vector<2x28xf32> -> vector<2x28xf32>
    %718 = arith.addf %534, %717 : vector<2x28xf32>
    %719 = vector.extract_strided_slice %718 {offsets = [0, 0], sizes = [2, 7], strides = [1, 1]} : vector<2x28xf32> to vector<2x7xf32>
    %720 = arith.negf %719 : vector<2x7xf32>
    %721 = math.exp %720 : vector<2x7xf32>
    %cst_141 = arith.constant 1.000000e+00 : f32
    %722 = vector.broadcast %cst_141 : f32 to vector<2x7xf32>
    %723 = arith.addf %722, %721 : vector<2x7xf32>
    %724 = arith.divf %722, %723 : vector<2x7xf32>
    %725 = vector.extract_strided_slice %718 {offsets = [0, 7], sizes = [2, 7], strides = [1, 1]} : vector<2x28xf32> to vector<2x7xf32>
    %726 = arith.negf %725 : vector<2x7xf32>
    %727 = math.exp %726 : vector<2x7xf32>
    %cst_142 = arith.constant 1.000000e+00 : f32
    %728 = vector.broadcast %cst_142 : f32 to vector<2x7xf32>
    %729 = arith.addf %728, %727 : vector<2x7xf32>
    %730 = arith.divf %728, %729 : vector<2x7xf32>
    %731 = vector.extract_strided_slice %718 {offsets = [0, 14], sizes = [2, 7], strides = [1, 1]} : vector<2x28xf32> to vector<2x7xf32>
    %732 = math.tanh %731 : vector<2x7xf32>
    %733 = vector.extract_strided_slice %718 {offsets = [0, 21], sizes = [2, 7], strides = [1, 1]} : vector<2x28xf32> to vector<2x7xf32>
    %734 = arith.negf %733 : vector<2x7xf32>
    %735 = math.exp %734 : vector<2x7xf32>
    %cst_143 = arith.constant 1.000000e+00 : f32
    %736 = vector.broadcast %cst_143 : f32 to vector<2x7xf32>
    %737 = arith.addf %736, %735 : vector<2x7xf32>
    %738 = arith.divf %736, %737 : vector<2x7xf32>
    %739 = arith.mulf %730, %714 : vector<2x7xf32>
    %740 = arith.mulf %724, %732 : vector<2x7xf32>
    %741 = arith.addf %739, %740 : vector<2x7xf32>
    %742 = math.tanh %741 : vector<2x7xf32>
    %743 = arith.mulf %738, %742 : vector<2x7xf32>
    %cst_144 = arith.constant dense<0.000000e+00> : vector<2x28xf32>
    %744 = tpu.matmul %743, %517, %cst_144 {dimension_numbers = #tpu.dot_dimension_numbers<[1], [0], [0], [1], [0, 0, 1, 1], [], []>} : vector<2x7xf32>, vector<7x28xf32>, vector<2x28xf32> -> vector<2x28xf32>
    %745 = arith.addf %536, %744 : vector<2x28xf32>
    %746 = vector.extract_strided_slice %745 {offsets = [0, 0], sizes = [2, 7], strides = [1, 1]} : vector<2x28xf32> to vector<2x7xf32>
    %747 = arith.negf %746 : vector<2x7xf32>
    %748 = math.exp %747 : vector<2x7xf32>
    %cst_145 = arith.constant 1.000000e+00 : f32
    %749 = vector.broadcast %cst_145 : f32 to vector<2x7xf32>
    %750 = arith.addf %749, %748 : vector<2x7xf32>
    %751 = arith.divf %749, %750 : vector<2x7xf32>
    %752 = vector.extract_strided_slice %745 {offsets = [0, 7], sizes = [2, 7], strides = [1, 1]} : vector<2x28xf32> to vector<2x7xf32>
    %753 = arith.negf %752 : vector<2x7xf32>
    %754 = math.exp %753 : vector<2x7xf32>
    %cst_146 = arith.constant 1.000000e+00 : f32
    %755 = vector.broadcast %cst_146 : f32 to vector<2x7xf32>
    %756 = arith.addf %755, %754 : vector<2x7xf32>
    %757 = arith.divf %755, %756 : vector<2x7xf32>
    %758 = vector.extract_strided_slice %745 {offsets = [0, 14], sizes = [2, 7], strides = [1, 1]} : vector<2x28xf32> to vector<2x7xf32>
    %759 = math.tanh %758 : vector<2x7xf32>
    %760 = vector.extract_strided_slice %745 {offsets = [0, 21], sizes = [2, 7], strides = [1, 1]} : vector<2x28xf32> to vector<2x7xf32>
    %761 = arith.negf %760 : vector<2x7xf32>
    %762 = math.exp %761 : vector<2x7xf32>
    %cst_147 = arith.constant 1.000000e+00 : f32
    %763 = vector.broadcast %cst_147 : f32 to vector<2x7xf32>
    %764 = arith.addf %763, %762 : vector<2x7xf32>
    %765 = arith.divf %763, %764 : vector<2x7xf32>
    %766 = arith.mulf %757, %741 : vector<2x7xf32>
    %767 = arith.mulf %751, %759 : vector<2x7xf32>
    %768 = arith.addf %766, %767 : vector<2x7xf32>
    %769 = math.tanh %768 : vector<2x7xf32>
    %770 = arith.mulf %765, %769 : vector<2x7xf32>
    %cst_148 = arith.constant dense<0.000000e+00> : vector<2x28xf32>
    %771 = tpu.matmul %770, %517, %cst_148 {dimension_numbers = #tpu.dot_dimension_numbers<[1], [0], [0], [1], [0, 0, 1, 1], [], []>} : vector<2x7xf32>, vector<7x28xf32>, vector<2x28xf32> -> vector<2x28xf32>
    %772 = arith.addf %538, %771 : vector<2x28xf32>
    %773 = vector.extract_strided_slice %772 {offsets = [0, 0], sizes = [2, 7], strides = [1, 1]} : vector<2x28xf32> to vector<2x7xf32>
    %774 = arith.negf %773 : vector<2x7xf32>
    %775 = math.exp %774 : vector<2x7xf32>
    %cst_149 = arith.constant 1.000000e+00 : f32
    %776 = vector.broadcast %cst_149 : f32 to vector<2x7xf32>
    %777 = arith.addf %776, %775 : vector<2x7xf32>
    %778 = arith.divf %776, %777 : vector<2x7xf32>
    %779 = vector.extract_strided_slice %772 {offsets = [0, 7], sizes = [2, 7], strides = [1, 1]} : vector<2x28xf32> to vector<2x7xf32>
    %780 = arith.negf %779 : vector<2x7xf32>
    %781 = math.exp %780 : vector<2x7xf32>
    %cst_150 = arith.constant 1.000000e+00 : f32
    %782 = vector.broadcast %cst_150 : f32 to vector<2x7xf32>
    %783 = arith.addf %782, %781 : vector<2x7xf32>
    %784 = arith.divf %782, %783 : vector<2x7xf32>
    %785 = vector.extract_strided_slice %772 {offsets = [0, 14], sizes = [2, 7], strides = [1, 1]} : vector<2x28xf32> to vector<2x7xf32>
    %786 = math.tanh %785 : vector<2x7xf32>
    %787 = vector.extract_strided_slice %772 {offsets = [0, 21], sizes = [2, 7], strides = [1, 1]} : vector<2x28xf32> to vector<2x7xf32>
    %788 = arith.negf %787 : vector<2x7xf32>
    %789 = math.exp %788 : vector<2x7xf32>
    %cst_151 = arith.constant 1.000000e+00 : f32
    %790 = vector.broadcast %cst_151 : f32 to vector<2x7xf32>
    %791 = arith.addf %790, %789 : vector<2x7xf32>
    %792 = arith.divf %790, %791 : vector<2x7xf32>
    %793 = arith.mulf %784, %768 : vector<2x7xf32>
    %794 = arith.mulf %778, %786 : vector<2x7xf32>
    %795 = arith.addf %793, %794 : vector<2x7xf32>
    %796 = math.tanh %795 : vector<2x7xf32>
    %797 = arith.mulf %792, %796 : vector<2x7xf32>
    %cst_152 = arith.constant dense<0.000000e+00> : vector<2x28xf32>
    %798 = tpu.matmul %797, %517, %cst_152 {dimension_numbers = #tpu.dot_dimension_numbers<[1], [0], [0], [1], [0, 0, 1, 1], [], []>} : vector<2x7xf32>, vector<7x28xf32>, vector<2x28xf32> -> vector<2x28xf32>
    %799 = arith.addf %540, %798 : vector<2x28xf32>
    %800 = vector.extract_strided_slice %799 {offsets = [0, 0], sizes = [2, 7], strides = [1, 1]} : vector<2x28xf32> to vector<2x7xf32>
    %801 = arith.negf %800 : vector<2x7xf32>
    %802 = math.exp %801 : vector<2x7xf32>
    %cst_153 = arith.constant 1.000000e+00 : f32
    %803 = vector.broadcast %cst_153 : f32 to vector<2x7xf32>
    %804 = arith.addf %803, %802 : vector<2x7xf32>
    %805 = arith.divf %803, %804 : vector<2x7xf32>
    %806 = vector.extract_strided_slice %799 {offsets = [0, 7], sizes = [2, 7], strides = [1, 1]} : vector<2x28xf32> to vector<2x7xf32>
    %807 = arith.negf %806 : vector<2x7xf32>
    %808 = math.exp %807 : vector<2x7xf32>
    %cst_154 = arith.constant 1.000000e+00 : f32
    %809 = vector.broadcast %cst_154 : f32 to vector<2x7xf32>
    %810 = arith.addf %809, %808 : vector<2x7xf32>
    %811 = arith.divf %809, %810 : vector<2x7xf32>
    %812 = vector.extract_strided_slice %799 {offsets = [0, 14], sizes = [2, 7], strides = [1, 1]} : vector<2x28xf32> to vector<2x7xf32>
    %813 = math.tanh %812 : vector<2x7xf32>
    %814 = vector.extract_strided_slice %799 {offsets = [0, 21], sizes = [2, 7], strides = [1, 1]} : vector<2x28xf32> to vector<2x7xf32>
    %815 = arith.negf %814 : vector<2x7xf32>
    %816 = math.exp %815 : vector<2x7xf32>
    %cst_155 = arith.constant 1.000000e+00 : f32
    %817 = vector.broadcast %cst_155 : f32 to vector<2x7xf32>
    %818 = arith.addf %817, %816 : vector<2x7xf32>
    %819 = arith.divf %817, %818 : vector<2x7xf32>
    %820 = arith.mulf %811, %795 : vector<2x7xf32>
    %821 = arith.mulf %805, %813 : vector<2x7xf32>
    %822 = arith.addf %820, %821 : vector<2x7xf32>
    %823 = math.tanh %822 : vector<2x7xf32>
    %824 = arith.mulf %819, %823 : vector<2x7xf32>
    %cst_156 = arith.constant dense<0.000000e+00> : vector<2x28xf32>
    %825 = tpu.matmul %824, %517, %cst_156 {dimension_numbers = #tpu.dot_dimension_numbers<[1], [0], [0], [1], [0, 0, 1, 1], [], []>} : vector<2x7xf32>, vector<7x28xf32>, vector<2x28xf32> -> vector<2x28xf32>
    %826 = arith.addf %542, %825 : vector<2x28xf32>
    %827 = vector.extract_strided_slice %826 {offsets = [0, 0], sizes = [2, 7], strides = [1, 1]} : vector<2x28xf32> to vector<2x7xf32>
    %828 = arith.negf %827 : vector<2x7xf32>
    %829 = math.exp %828 : vector<2x7xf32>
    %cst_157 = arith.constant 1.000000e+00 : f32
    %830 = vector.broadcast %cst_157 : f32 to vector<2x7xf32>
    %831 = arith.addf %830, %829 : vector<2x7xf32>
    %832 = arith.divf %830, %831 : vector<2x7xf32>
    %833 = vector.extract_strided_slice %826 {offsets = [0, 7], sizes = [2, 7], strides = [1, 1]} : vector<2x28xf32> to vector<2x7xf32>
    %834 = arith.negf %833 : vector<2x7xf32>
    %835 = math.exp %834 : vector<2x7xf32>
    %cst_158 = arith.constant 1.000000e+00 : f32
    %836 = vector.broadcast %cst_158 : f32 to vector<2x7xf32>
    %837 = arith.addf %836, %835 : vector<2x7xf32>
    %838 = arith.divf %836, %837 : vector<2x7xf32>
    %839 = vector.extract_strided_slice %826 {offsets = [0, 14], sizes = [2, 7], strides = [1, 1]} : vector<2x28xf32> to vector<2x7xf32>
    %840 = math.tanh %839 : vector<2x7xf32>
    %841 = vector.extract_strided_slice %826 {offsets = [0, 21], sizes = [2, 7], strides = [1, 1]} : vector<2x28xf32> to vector<2x7xf32>
    %842 = arith.negf %841 : vector<2x7xf32>
    %843 = math.exp %842 : vector<2x7xf32>
    %cst_159 = arith.constant 1.000000e+00 : f32
    %844 = vector.broadcast %cst_159 : f32 to vector<2x7xf32>
    %845 = arith.addf %844, %843 : vector<2x7xf32>
    %846 = arith.divf %844, %845 : vector<2x7xf32>
    %847 = arith.mulf %838, %822 : vector<2x7xf32>
    %848 = arith.mulf %832, %840 : vector<2x7xf32>
    %849 = arith.addf %847, %848 : vector<2x7xf32>
    %850 = math.tanh %849 : vector<2x7xf32>
    %851 = arith.mulf %846, %850 : vector<2x7xf32>
    %cst_160 = arith.constant dense<0.000000e+00> : vector<2x28xf32>
    %852 = tpu.matmul %851, %517, %cst_160 {dimension_numbers = #tpu.dot_dimension_numbers<[1], [0], [0], [1], [0, 0, 1, 1], [], []>} : vector<2x7xf32>, vector<7x28xf32>, vector<2x28xf32> -> vector<2x28xf32>
    %853 = arith.addf %544, %852 : vector<2x28xf32>
    %854 = vector.extract_strided_slice %853 {offsets = [0, 0], sizes = [2, 7], strides = [1, 1]} : vector<2x28xf32> to vector<2x7xf32>
    %855 = arith.negf %854 : vector<2x7xf32>
    %856 = math.exp %855 : vector<2x7xf32>
    %cst_161 = arith.constant 1.000000e+00 : f32
    %857 = vector.broadcast %cst_161 : f32 to vector<2x7xf32>
    %858 = arith.addf %857, %856 : vector<2x7xf32>
    %859 = arith.divf %857, %858 : vector<2x7xf32>
    %860 = vector.extract_strided_slice %853 {offsets = [0, 7], sizes = [2, 7], strides = [1, 1]} : vector<2x28xf32> to vector<2x7xf32>
    %861 = arith.negf %860 : vector<2x7xf32>
    %862 = math.exp %861 : vector<2x7xf32>
    %cst_162 = arith.constant 1.000000e+00 : f32
    %863 = vector.broadcast %cst_162 : f32 to vector<2x7xf32>
    %864 = arith.addf %863, %862 : vector<2x7xf32>
    %865 = arith.divf %863, %864 : vector<2x7xf32>
    %866 = vector.extract_strided_slice %853 {offsets = [0, 14], sizes = [2, 7], strides = [1, 1]} : vector<2x28xf32> to vector<2x7xf32>
    %867 = math.tanh %866 : vector<2x7xf32>
    %868 = vector.extract_strided_slice %853 {offsets = [0, 21], sizes = [2, 7], strides = [1, 1]} : vector<2x28xf32> to vector<2x7xf32>
    %869 = arith.negf %868 : vector<2x7xf32>
    %870 = math.exp %869 : vector<2x7xf32>
    %cst_163 = arith.constant 1.000000e+00 : f32
    %871 = vector.broadcast %cst_163 : f32 to vector<2x7xf32>
    %872 = arith.addf %871, %870 : vector<2x7xf32>
    %873 = arith.divf %871, %872 : vector<2x7xf32>
    %874 = arith.mulf %865, %849 : vector<2x7xf32>
    %875 = arith.mulf %859, %867 : vector<2x7xf32>
    %876 = arith.addf %874, %875 : vector<2x7xf32>
    %877 = math.tanh %876 : vector<2x7xf32>
    %878 = arith.mulf %873, %877 : vector<2x7xf32>
    %cst_164 = arith.constant dense<0.000000e+00> : vector<2x28xf32>
    %879 = tpu.matmul %878, %517, %cst_164 {dimension_numbers = #tpu.dot_dimension_numbers<[1], [0], [0], [1], [0, 0, 1, 1], [], []>} : vector<2x7xf32>, vector<7x28xf32>, vector<2x28xf32> -> vector<2x28xf32>
    %880 = arith.addf %546, %879 : vector<2x28xf32>
    %881 = vector.extract_strided_slice %880 {offsets = [0, 0], sizes = [2, 7], strides = [1, 1]} : vector<2x28xf32> to vector<2x7xf32>
    %882 = arith.negf %881 : vector<2x7xf32>
    %883 = math.exp %882 : vector<2x7xf32>
    %cst_165 = arith.constant 1.000000e+00 : f32
    %884 = vector.broadcast %cst_165 : f32 to vector<2x7xf32>
    %885 = arith.addf %884, %883 : vector<2x7xf32>
    %886 = arith.divf %884, %885 : vector<2x7xf32>
    %887 = vector.extract_strided_slice %880 {offsets = [0, 7], sizes = [2, 7], strides = [1, 1]} : vector<2x28xf32> to vector<2x7xf32>
    %888 = arith.negf %887 : vector<2x7xf32>
    %889 = math.exp %888 : vector<2x7xf32>
    %cst_166 = arith.constant 1.000000e+00 : f32
    %890 = vector.broadcast %cst_166 : f32 to vector<2x7xf32>
    %891 = arith.addf %890, %889 : vector<2x7xf32>
    %892 = arith.divf %890, %891 : vector<2x7xf32>
    %893 = vector.extract_strided_slice %880 {offsets = [0, 14], sizes = [2, 7], strides = [1, 1]} : vector<2x28xf32> to vector<2x7xf32>
    %894 = math.tanh %893 : vector<2x7xf32>
    %895 = vector.extract_strided_slice %880 {offsets = [0, 21], sizes = [2, 7], strides = [1, 1]} : vector<2x28xf32> to vector<2x7xf32>
    %896 = arith.negf %895 : vector<2x7xf32>
    %897 = math.exp %896 : vector<2x7xf32>
    %cst_167 = arith.constant 1.000000e+00 : f32
    %898 = vector.broadcast %cst_167 : f32 to vector<2x7xf32>
    %899 = arith.addf %898, %897 : vector<2x7xf32>
    %900 = arith.divf %898, %899 : vector<2x7xf32>
    %901 = arith.mulf %892, %876 : vector<2x7xf32>
    %902 = arith.mulf %886, %894 : vector<2x7xf32>
    %903 = arith.addf %901, %902 : vector<2x7xf32>
    %904 = math.tanh %903 : vector<2x7xf32>
    %905 = arith.mulf %900, %904 : vector<2x7xf32>
    %cst_168 = arith.constant dense<0.000000e+00> : vector<2x28xf32>
    %906 = tpu.matmul %905, %517, %cst_168 {dimension_numbers = #tpu.dot_dimension_numbers<[1], [0], [0], [1], [0, 0, 1, 1], [], []>} : vector<2x7xf32>, vector<7x28xf32>, vector<2x28xf32> -> vector<2x28xf32>
    %907 = arith.addf %548, %906 : vector<2x28xf32>
    %908 = vector.extract_strided_slice %907 {offsets = [0, 0], sizes = [2, 7], strides = [1, 1]} : vector<2x28xf32> to vector<2x7xf32>
    %909 = arith.negf %908 : vector<2x7xf32>
    %910 = math.exp %909 : vector<2x7xf32>
    %cst_169 = arith.constant 1.000000e+00 : f32
    %911 = vector.broadcast %cst_169 : f32 to vector<2x7xf32>
    %912 = arith.addf %911, %910 : vector<2x7xf32>
    %913 = arith.divf %911, %912 : vector<2x7xf32>
    %914 = vector.extract_strided_slice %907 {offsets = [0, 7], sizes = [2, 7], strides = [1, 1]} : vector<2x28xf32> to vector<2x7xf32>
    %915 = arith.negf %914 : vector<2x7xf32>
    %916 = math.exp %915 : vector<2x7xf32>
    %cst_170 = arith.constant 1.000000e+00 : f32
    %917 = vector.broadcast %cst_170 : f32 to vector<2x7xf32>
    %918 = arith.addf %917, %916 : vector<2x7xf32>
    %919 = arith.divf %917, %918 : vector<2x7xf32>
    %920 = vector.extract_strided_slice %907 {offsets = [0, 14], sizes = [2, 7], strides = [1, 1]} : vector<2x28xf32> to vector<2x7xf32>
    %921 = math.tanh %920 : vector<2x7xf32>
    %922 = vector.extract_strided_slice %907 {offsets = [0, 21], sizes = [2, 7], strides = [1, 1]} : vector<2x28xf32> to vector<2x7xf32>
    %923 = arith.negf %922 : vector<2x7xf32>
    %924 = math.exp %923 : vector<2x7xf32>
    %cst_171 = arith.constant 1.000000e+00 : f32
    %925 = vector.broadcast %cst_171 : f32 to vector<2x7xf32>
    %926 = arith.addf %925, %924 : vector<2x7xf32>
    %927 = arith.divf %925, %926 : vector<2x7xf32>
    %928 = arith.mulf %919, %903 : vector<2x7xf32>
    %929 = arith.mulf %913, %921 : vector<2x7xf32>
    %930 = arith.addf %928, %929 : vector<2x7xf32>
    %931 = math.tanh %930 : vector<2x7xf32>
    %932 = arith.mulf %927, %931 : vector<2x7xf32>
    %cst_172 = arith.constant dense<0.000000e+00> : vector<2x28xf32>
    %933 = tpu.matmul %932, %517, %cst_172 {dimension_numbers = #tpu.dot_dimension_numbers<[1], [0], [0], [1], [0, 0, 1, 1], [], []>} : vector<2x7xf32>, vector<7x28xf32>, vector<2x28xf32> -> vector<2x28xf32>
    %934 = arith.addf %550, %933 : vector<2x28xf32>
    %935 = vector.extract_strided_slice %934 {offsets = [0, 0], sizes = [2, 7], strides = [1, 1]} : vector<2x28xf32> to vector<2x7xf32>
    %936 = arith.negf %935 : vector<2x7xf32>
    %937 = math.exp %936 : vector<2x7xf32>
    %cst_173 = arith.constant 1.000000e+00 : f32
    %938 = vector.broadcast %cst_173 : f32 to vector<2x7xf32>
    %939 = arith.addf %938, %937 : vector<2x7xf32>
    %940 = arith.divf %938, %939 : vector<2x7xf32>
    %941 = vector.extract_strided_slice %934 {offsets = [0, 7], sizes = [2, 7], strides = [1, 1]} : vector<2x28xf32> to vector<2x7xf32>
    %942 = arith.negf %941 : vector<2x7xf32>
    %943 = math.exp %942 : vector<2x7xf32>
    %cst_174 = arith.constant 1.000000e+00 : f32
    %944 = vector.broadcast %cst_174 : f32 to vector<2x7xf32>
    %945 = arith.addf %944, %943 : vector<2x7xf32>
    %946 = arith.divf %944, %945 : vector<2x7xf32>
    %947 = vector.extract_strided_slice %934 {offsets = [0, 14], sizes = [2, 7], strides = [1, 1]} : vector<2x28xf32> to vector<2x7xf32>
    %948 = math.tanh %947 : vector<2x7xf32>
    %949 = vector.extract_strided_slice %934 {offsets = [0, 21], sizes = [2, 7], strides = [1, 1]} : vector<2x28xf32> to vector<2x7xf32>
    %950 = arith.negf %949 : vector<2x7xf32>
    %951 = math.exp %950 : vector<2x7xf32>
    %cst_175 = arith.constant 1.000000e+00 : f32
    %952 = vector.broadcast %cst_175 : f32 to vector<2x7xf32>
    %953 = arith.addf %952, %951 : vector<2x7xf32>
    %954 = arith.divf %952, %953 : vector<2x7xf32>
    %955 = arith.mulf %946, %930 : vector<2x7xf32>
    %956 = arith.mulf %940, %948 : vector<2x7xf32>
    %957 = arith.addf %955, %956 : vector<2x7xf32>
    %958 = math.tanh %957 : vector<2x7xf32>
    %959 = arith.mulf %954, %958 : vector<2x7xf32>
    %cst_176 = arith.constant dense<0.000000e+00> : vector<2x28xf32>
    %960 = tpu.matmul %959, %517, %cst_176 {dimension_numbers = #tpu.dot_dimension_numbers<[1], [0], [0], [1], [0, 0, 1, 1], [], []>} : vector<2x7xf32>, vector<7x28xf32>, vector<2x28xf32> -> vector<2x28xf32>
    %961 = arith.addf %552, %960 : vector<2x28xf32>
    %962 = vector.extract_strided_slice %961 {offsets = [0, 0], sizes = [2, 7], strides = [1, 1]} : vector<2x28xf32> to vector<2x7xf32>
    %963 = arith.negf %962 : vector<2x7xf32>
    %964 = math.exp %963 : vector<2x7xf32>
    %cst_177 = arith.constant 1.000000e+00 : f32
    %965 = vector.broadcast %cst_177 : f32 to vector<2x7xf32>
    %966 = arith.addf %965, %964 : vector<2x7xf32>
    %967 = arith.divf %965, %966 : vector<2x7xf32>
    %968 = vector.extract_strided_slice %961 {offsets = [0, 7], sizes = [2, 7], strides = [1, 1]} : vector<2x28xf32> to vector<2x7xf32>
    %969 = arith.negf %968 : vector<2x7xf32>
    %970 = math.exp %969 : vector<2x7xf32>
    %cst_178 = arith.constant 1.000000e+00 : f32
    %971 = vector.broadcast %cst_178 : f32 to vector<2x7xf32>
    %972 = arith.addf %971, %970 : vector<2x7xf32>
    %973 = arith.divf %971, %972 : vector<2x7xf32>
    %974 = vector.extract_strided_slice %961 {offsets = [0, 14], sizes = [2, 7], strides = [1, 1]} : vector<2x28xf32> to vector<2x7xf32>
    %975 = math.tanh %974 : vector<2x7xf32>
    %976 = vector.extract_strided_slice %961 {offsets = [0, 21], sizes = [2, 7], strides = [1, 1]} : vector<2x28xf32> to vector<2x7xf32>
    %977 = arith.negf %976 : vector<2x7xf32>
    %978 = math.exp %977 : vector<2x7xf32>
    %cst_179 = arith.constant 1.000000e+00 : f32
    %979 = vector.broadcast %cst_179 : f32 to vector<2x7xf32>
    %980 = arith.addf %979, %978 : vector<2x7xf32>
    %981 = arith.divf %979, %980 : vector<2x7xf32>
    %982 = arith.mulf %973, %957 : vector<2x7xf32>
    %983 = arith.mulf %967, %975 : vector<2x7xf32>
    %984 = arith.addf %982, %983 : vector<2x7xf32>
    %985 = math.tanh %984 : vector<2x7xf32>
    %986 = arith.mulf %981, %985 : vector<2x7xf32>
    %c0_180 = arith.constant 0 : index
    %c0_181 = arith.constant 0 : index
    %987 = vector.load %arg7[%c0_180, %c0_181] : memref<7x1xf32, #tpu.memory_space<vmem>>, vector<7x1xf32>
    %cst_182 = arith.constant dense<0.000000e+00> : vector<2x1xf32>
    %988 = tpu.matmul %986, %987, %cst_182 {dimension_numbers = #tpu.dot_dimension_numbers<[1], [0], [0], [1], [0, 0, 1, 1], [], []>} : vector<2x7xf32>, vector<7x1xf32>, vector<2x1xf32> -> vector<2x1xf32>
    %c0_183 = arith.constant 0 : index
    %c0_184 = arith.constant 0 : index
    %989 = vector.load %arg8[%c0_183, %c0_184] : memref<1x1xf32, #tpu.memory_space<vmem>>, vector<1x1xf32>
    %990 = vector.broadcast %989 : vector<1x1xf32> to vector<2x1xf32>
    %991 = arith.addf %988, %990 : vector<2x1xf32>
    %992 = vector.extract_strided_slice %1 {offsets = [0, 5], sizes = [2, 1], strides = [1, 1]} : vector<2x8xf32> to vector<2x1xf32>
    %993 = vector.extract_strided_slice %2 {offsets = [0, 5], sizes = [2, 1], strides = [1, 1]} : vector<2x8xf32> to vector<2x1xf32>
    %994 = arith.subf %993, %992 : vector<2x1xf32>
    "tpu.trace_start"() <{level = 10 : i32, message = "io,jo->ij"}> : () -> ()
    %cst_185 = arith.constant dense<0.000000e+00> : vector<2x2xf32>
    %995 = tpu.matmul %994, %991, %cst_185 {dimension_numbers = #tpu.dot_dimension_numbers<[1], [1], [0], [0], [0, 0, 1, 0], [], []>} : vector<2x1xf32>, vector<2x1xf32>, vector<2x2xf32> -> vector<2x2xf32>
    "tpu.trace_stop"() : () -> ()
    %996 = vector.broadcast %992 : vector<2x1xf32> to vector<2x2xf32>
    %997 = arith.addf %995, %996 : vector<2x2xf32>
    %c0_186 = arith.constant 0 : index
    %c0_187 = arith.constant 0 : index
    %998 = vector.load %arg9[%c0_186, %c0_187] : memref<2x2xf32, #tpu.memory_space<vmem>>, vector<2x2xf32>
    tpu.vector_store %arg9[%c0_186, %c0_187], %997 {strides = array<i32>} : memref<2x2xf32, #tpu.memory_space<vmem>>, vector<2x2xf32>,
    return
  }
}

</mosaic_0001>

<llo_original>
// kernel: lstm_model_forward.1
$region0: #{lstm_model_forward.1}
  #allocation0 [shape = 'u32[]', space=smem, size = 0x4, offset = 0x4, fixed_abs, tag = 'smem constant byte address 0x4 - core index']
  #allocation1 [shape = 'u32[144,128]{1,0:T(1,128)}', space=vmem, size = 0x12000, scoped, tag = 'internal scratch']
  #allocation2 [shape = 'f32[1,1]{1,0:T(1,128)S(1)}', space=vmem, size = 0x200, scoped, tag = 'scoped memory for lstm_model_forward.1']
  %s0 = inlined_call_operand.vmem [shape: f32[16,2,8], index: 0, kind: input, shape index: {}]
  %s1 = inlined_call_operand.vmem [shape: f32[8,60], index: 1, kind: input, shape index: {}]
  %s2 = inlined_call_operand.vmem [shape: f32[15,60], index: 2, kind: input, shape index: {}]
  %s3 = inlined_call_operand.vmem [shape: f32[1,60], index: 3, kind: input, shape index: {}]
  %s4 = inlined_call_operand.vmem [shape: f32[15,28], index: 4, kind: input, shape index: {}]
  %s5 = inlined_call_operand.vmem [shape: f32[7,28], index: 5, kind: input, shape index: {}]
  %s6 = inlined_call_operand.vmem [shape: f32[1,28], index: 6, kind: input, shape index: {}]
  %s7 = inlined_call_operand.hbm [shape: f32[7,1], index: 7, kind: input, shape index: {}]
  %s8 = inlined_call_operand.<no memory space> [shape: f32[1,1], index: 8, kind: input, shape index: {}]
  %s9 = inlined_call_operand.hbm [shape: f32[2,2], index: 9, kind: output, shape index: {}]
  %s10 = sld [smem:[#allocation0]]
  $region50: #{lstm_model_forward.1} parent=0
    _
  %s12 = ssub.s32 1, %s10
  %s13 = scalar_select 0, %s12, %s10
  %v14 = vstv %s8
  %15 = vst [vmem:[#allocation2] sm:$0x1] %v14
  $region1: #{lstm_model_forward.1} parent=0
    #allocation3 [shape = 'u8[4096]{0}', space=vmem, size = 0x1000, scoped, tag = 'input window, operand 7, single buffered']
    #allocation4 [shape = 's32[1]{0}', space=sflag, size = 0x4, scoped, tag = 'scoped memory for lstm_model_forward.1']
    #allocation5 [shape = 's32[1]{0}', space=sflag, size = 0x4, scoped, tag = 'scoped memory for lstm_model_forward.1']
    #allocation6 [shape = 'u8[1024]{0}', space=vmem, size = 0x400, scoped, tag = 'output window, operand 0, single buffered']
    %16 = vsyncpa [#allocation4], 0
    %17 = vsyncpa [#allocation5], 0
    // Predicated region
    $region2: #{lstm_model_forward.1} parent=1 // pred_check
      _
    $region3: #{lstm_model_forward.1} parent=1 // pred_check_branch
      %19 = sbr.rel (0) target = $region5
    $region4: #{lstm_model_forward.1} parent=1 // pred_region
      _
    $region5: #{lstm_model_forward.1} parent=1 // pred_fallthru
      _
    // Predicated region
    $region6: #{lstm_model_forward.1} parent=1 // pred_check
      _
    $region7: #{lstm_model_forward.1} parent=1 // pred_check_branch
      %21 = sbr.rel (0) target = $region9
    $region8: #{lstm_model_forward.1} parent=1 // pred_region
      _
    $region9: #{lstm_model_forward.1} parent=1 // pred_fallthru
      _
    // Predicated region
    $region10: #{lstm_model_forward.1} parent=1 // pred_check
      _
    $region11: #{lstm_model_forward.1} parent=1 // pred_check_branch
      %23 = sbr.rel (0) target = $region13
    $region12: #{lstm_model_forward.1} parent=1 // pred_region
      _
    $region13: #{lstm_model_forward.1} parent=1 // pred_fallthru
      _
    // Predicated region
    $region14: #{lstm_model_forward.1} parent=1 // pred_check
      _
    $region15: #{lstm_model_forward.1} parent=1 // pred_check_branch
      %25 = sbr.rel (0) target = $region17
    $region16: #{lstm_model_forward.1} parent=1 // pred_region
      _
    $region17: #{lstm_model_forward.1} parent=1 // pred_fallthru
      _
    // Predicated region
    $region18: #{lstm_model_forward.1} parent=1 // pred_check
      _
    $region19: #{lstm_model_forward.1} parent=1 // pred_check_branch
      %27 = sbr.rel (0) target = $region21
    $region20: #{lstm_model_forward.1} parent=1 // pred_region
      _
    $region21: #{lstm_model_forward.1} parent=1 // pred_fallthru
      _
    // Predicated region
    $region22: #{lstm_model_forward.1} parent=1 // pred_check
      _
    $region23: #{lstm_model_forward.1} parent=1 // pred_check_branch
      %29 = sbr.rel (0) target = $region25
    $region24: #{lstm_model_forward.1} parent=1 // pred_region
      _
    $region25: #{lstm_model_forward.1} parent=1 // pred_fallthru
      _
    // Predicated region
    $region26: #{lstm_model_forward.1} parent=1 // pred_check
      _
    $region27: #{lstm_model_forward.1} parent=1 // pred_check_branch
      %31 = sbr.rel (0) target = $region29
    $region28: #{lstm_model_forward.1} parent=1 // pred_region
      _
    $region29: #{lstm_model_forward.1} parent=1 // pred_fallthru
      _
    // Predicated region
    $region30: #{lstm_model_forward.1} parent=1 // pred_check
      _
    $region31: #{lstm_model_forward.1} parent=1 // pred_check_branch
      %33 = sbr.rel (0) target = $region33
    $region32: #{lstm_model_forward.1} parent=1 // pred_region
      %s35 = ssub.s32 128, 128
      %36 = vsyncadd [#allocation4], %s35
      %s38 = sshll.u32 [#allocation3], 4
      %s39 = int_to_ptr.vmem [resolvable:$true] %s38
      %41 = dma.hbm_to_vmem [thread:$0]  %s7, 128, %s39, [#allocation4]
    $region33: #{lstm_model_forward.1} parent=1 // pred_fallthru
      _
    // Predicated region
    $region34: #{lstm_model_forward.1} parent=1 // pred_check
      _
    $region35: #{lstm_model_forward.1} parent=1 // pred_check_branch
      %43 = sbr.rel (0) target = $region37
    $region36: #{lstm_model_forward.1} parent=1 // pred_region
      _
    $region37: #{lstm_model_forward.1} parent=1 // pred_fallthru
      _
    // Predicated region
    $region38: #{lstm_model_forward.1} parent=1 // pred_check
      _
    $region39: #{lstm_model_forward.1} parent=1 // pred_check_branch
      %45 = sbr.rel (0) target = $region41
    $region40: #{lstm_model_forward.1} parent=1 // pred_region
      %46 = dma.done [#allocation4], 128
    $region41: #{lstm_model_forward.1} parent=1 // pred_fallthru
      _
    %v47 = vld [vmem:[%s0] sm:$0x3]
    %v48 = vld [vmem:[%s0 + $0x2] sm:$0x3]
    %v49 = vld [vmem:[%s0 + $0x4] sm:$0x3]
    %v50 = vld [vmem:[%s0 + $0x6] sm:$0x3]
    %v51 = vld [vmem:[%s0 + $0x8] sm:$0x3]
    %v52 = vld [vmem:[%s0 + $0xa] sm:$0x3]
    %v53 = vld [vmem:[%s0 + $0xc] sm:$0x3]
    %v54 = vld [vmem:[%s0 + $0xe] sm:$0x3]
    %v55 = vld [vmem:[%s0 + $0x10] sm:$0x3]
    %v56 = vld [vmem:[%s0 + $0x12] sm:$0x3]
    %v57 = vld [vmem:[%s0 + $0x14] sm:$0x3]
    %v58 = vld [vmem:[%s0 + $0x16] sm:$0x3]
    %v59 = vld [vmem:[%s0 + $0x18] sm:$0x3]
    %v60 = vld [vmem:[%s0 + $0x1a] sm:$0x3]
    %v61 = vld [vmem:[%s0 + $0x1c] sm:$0x3]
    %v62 = vld [vmem:[%s0 + $0x1e] sm:$0x3]
    %vm63 = vcmask 58368
    %v64 = vsel %vm63, %v47, inf
    %v65 = vsel %vm63, %v48, inf
    %v66 = vsel %vm63, %v49, inf
    %v67 = vsel %vm63, %v50, inf
    %v68 = vsel %vm63, %v51, inf
    %v69 = vmin.f32 %v64, %v68
    %v70 = vsel %vm63, %v52, inf
    %v71 = vmin.f32 %v65, %v70
    %v72 = vsel %vm63, %v53, inf
    %v73 = vmin.f32 %v66, %v72
    %v74 = vsel %vm63, %v54, inf
    %v75 = vmin.f32 %v67, %v74
    %v76 = vsel %vm63, %v55, inf
    %v77 = vmin.f32 %v69, %v76
    %v78 = vsel %vm63, %v56, inf
    %v79 = vmin.f32 %v71, %v78
    %v80 = vsel %vm63, %v57, inf
    %v81 = vmin.f32 %v73, %v80
    %v82 = vsel %vm63, %v58, inf
    %v83 = vmin.f32 %v75, %v82
    %v84 = vsel %vm63, %v59, inf
    %v85 = vmin.f32 %v77, %v84
    %v86 = vsel %vm63, %v60, inf
    %v87 = vmin.f32 %v79, %v86
    %v88 = vsel %vm63, %v61, inf
    %v89 = vmin.f32 %v81, %v88
    %v90 = vsel %vm63, %v62, inf
    %v91 = vmin.f32 %v83, %v90
    %v92 = vmin.f32 %v85, %v87
    %v93 = vmin.f32 %v89, %v91
    %v94 = vmin.f32 %v92, %v93
    %v95 = vsel %vm63, %v47, -inf
    %v96 = vsel %vm63, %v48, -inf
    %v97 = vsel %vm63, %v49, -inf
    %v98 = vsel %vm63, %v50, -inf
    %v99 = vsel %vm63, %v51, -inf
    %v100 = vmax.f32 %v95, %v99
    %v101 = vsel %vm63, %v52, -inf
    %v102 = vmax.f32 %v96, %v101
    %v103 = vsel %vm63, %v53, -inf
    %v104 = vmax.f32 %v97, %v103
    %v105 = vsel %vm63, %v54, -inf
    %v106 = vmax.f32 %v98, %v105
    %v107 = vsel %vm63, %v55, -inf
    %v108 = vmax.f32 %v100, %v107
    %v109 = vsel %vm63, %v56, -inf
    %v110 = vmax.f32 %v102, %v109
    %v111 = vsel %vm63, %v57, -inf
    %v112 = vmax.f32 %v104, %v111
    %v113 = vsel %vm63, %v58, -inf
    %v114 = vmax.f32 %v106, %v113
    %v115 = vsel %vm63, %v59, -inf
    %v116 = vmax.f32 %v108, %v115
    %v117 = vsel %vm63, %v60, -inf
    %v118 = vmax.f32 %v110, %v117
    %v119 = vsel %vm63, %v61, -inf
    %v120 = vmax.f32 %v112, %v119
    %v121 = vsel %vm63, %v62, -inf
    %v122 = vmax.f32 %v114, %v121
    %v123 = vmax.f32 %v116, %v118
    %v124 = vmax.f32 %v120, %v122
    %v125 = vmax.f32 %v123, %v124
    %v126 = vsub.f32 %v47, %v94
    %v127 = vsub.f32 %v48, %v94
    %v128 = vsub.f32 %v49, %v94
    %v129 = vsub.f32 %v50, %v94
    %v130 = vsub.f32 %v51, %v94
    %v131 = vsub.f32 %v52, %v94
    %v132 = vsub.f32 %v53, %v94
    %v133 = vsub.f32 %v54, %v94
    %v134 = vsub.f32 %v55, %v94
    %v135 = vsub.f32 %v56, %v94
    %v136 = vsub.f32 %v57, %v94
    %v137 = vsub.f32 %v58, %v94
    %v138 = vsub.f32 %v59, %v94
    %v139 = vsub.f32 %v60, %v94
    %v140 = vsub.f32 %v61, %v94
    %v141 = vsub.f32 %v62, %v94
    %v142 = vsub.f32 %v125, %v94
    %v143 = vadd.f32 %v142, 1e-05
    %v144 = vrcp.pop %v143
    %v145 = vmul.f32 %v126, %v144
    %v146 = vmul.f32 %v127, %v144
    %v147 = vmul.f32 %v128, %v144
    %v148 = vmul.f32 %v129, %v144
    %v149 = vmul.f32 %v130, %v144
    %v150 = vmul.f32 %v131, %v144
    %v151 = vmul.f32 %v132, %v144
    %v152 = vmul.f32 %v133, %v144
    %v153 = vmul.f32 %v134, %v144
    %v154 = vmul.f32 %v135, %v144
    %v155 = vmul.f32 %v136, %v144
    %v156 = vmul.f32 %v137, %v144
    %v157 = vmul.f32 %v138, %v144
    %v158 = vmul.f32 %v139, %v144
    %v159 = vmul.f32 %v140, %v144
    %v160 = vmul.f32 %v141, %v144
    %v161 = vld [vmem:[%s1] sm:$0xff]
    %v162 = vld [vmem:[%s2] sm:$0xff]
    %v163 = vld [vmem:[%s2 + $0x8] sm:$0x7f]
    %v164 = vld [vmem:[%s3] sm:$0x1]
    %v166 = vlaneseq
    %v167 = vshrl.u32 %v166, 7
    %v168 = vsub.s32 0, %v167
    %v169 = vrot.slane %v164, %v168
    %vm171 = vcmask 64512
    %v173 = vsel %vm171, %v145, 0
    %175 = vmatprep.subr.mxu0 0.0
    %176 = vmatpush1.msra.mxu0 0.0
    %177 = vmatprep.subr.mxu0 0.0
    %178 = vmatpush1.msra.mxu0 0.0
    %179 = vmatprep.subr.mxu0 0.0
    %180 = vmatpush1.msra.mxu0 0.0
    %181 = vmatprep.subr.mxu0 0.0
    %182 = vmatpush1.msra.mxu0 0.0
    %183 = vmatprep.subr.mxu0 0.0
    %184 = vmatpush1.msra.mxu0 0.0
    %185 = vmatprep.subr.mxu0 0.0
    %186 = vmatpush1.msra.mxu0 0.0
    %187 = vmatprep.subr.mxu0 0.0
    %188 = vmatpush1.msra.mxu0 0.0
    %189 = vmatprep.subr.mxu0 0.0
    %190 = vmatpush1.msra.mxu0 0.0
    %191 = vmatprep.subr.mxu0 0.0
    %192 = vmatpush1.msra.mxu0 0.0
    %193 = vmatprep.subr.mxu0 0.0
    %194 = vmatpush1.msra.mxu0 0.0
    %195 = vmatprep.subr.mxu0 0.0
    %196 = vmatpush1.msra.mxu0 0.0
    %197 = vmatprep.subr.mxu0 0.0
    %198 = vmatpush1.msra.mxu0 0.0
    %199 = vmatprep.subr.mxu0 0.0
    %200 = vmatpush1.msra.mxu0 0.0
    %201 = vmatprep.subr.mxu0 0.0
    %202 = vmatpush1.msra.mxu0 0.0
    %203 = vmatprep.subr.mxu0 0.0
    %204 = vmatpush1.msra.mxu0 0.0
    %205 = vmatprep.subr.mxu0 0.0
    %206 = vmatpush1.msra.mxu0 %v161
    %207 = vmatprep.subr.mxu0 0.0
    %208 = vmatpush2.msra.mxu0 0.0
    %209 = vmatprep.subr.mxu0 0.0
    %210 = vmatpush2.msra.mxu0 0.0
    %211 = vmatprep.subr.mxu0 0.0
    %212 = vmatpush2.msra.mxu0 0.0
    %213 = vmatprep.subr.mxu0 0.0
    %214 = vmatpush2.msra.mxu0 0.0
    %215 = vmatprep.subr.mxu0 0.0
    %216 = vmatpush2.msra.mxu0 0.0
    %217 = vmatprep.subr.mxu0 0.0
    %218 = vmatpush2.msra.mxu0 0.0
    %219 = vmatprep.subr.mxu0 0.0
    %220 = vmatpush2.msra.mxu0 0.0
    %221 = vmatprep.subr.mxu0 0.0
    %222 = vmatpush2.msra.mxu0 0.0
    %223 = vmatprep.subr.mxu0 0.0
    %224 = vmatpush2.msra.mxu0 0.0
    %225 = vmatprep.subr.mxu0 0.0
    %226 = vmatpush2.msra.mxu0 0.0
    %227 = vmatprep.subr.mxu0 0.0
    %228 = vmatpush2.msra.mxu0 0.0
    %229 = vmatprep.subr.mxu0 0.0
    %230 = vmatpush2.msra.mxu0 0.0
    %231 = vmatprep.subr.mxu0 0.0
    %232 = vmatpush2.msra.mxu0 0.0
    %233 = vmatprep.subr.mxu0 0.0
    %234 = vmatpush2.msra.mxu0 0.0
    %235 = vmatprep.subr.mxu0 0.0
    %236 = vmatpush2.msra.mxu0 0.0
    %237 = vmatprep.subr.mxu0 0.0
    %238 = vmatpush2.msra.mxu0 0.0
    %239 = vmatprep.mubr.f32.mxu0 0.0
    %240 = vmatmul.mubr.f32.gmra.mxu0 %v173
    %v241 = vpop.f32.mrf.mxu0
    %v242 = vadd.f32 %v169, %v241
    %v243 = vpop.f32.mrf.mxu0
    %244 = vdwg.mxu0
    %v246 = vsel %vm171, %v146, 0
    %248 = vmatprep.subr.mxu0 0.0
    %249 = vmatpush1.msra.mxu0 0.0
    %250 = vmatprep.subr.mxu0 0.0
    %251 = vmatpush1.msra.mxu0 0.0
    %252 = vmatprep.subr.mxu0 0.0
    %253 = vmatpush1.msra.mxu0 0.0
    %254 = vmatprep.subr.mxu0 0.0
    %255 = vmatpush1.msra.mxu0 0.0
    %256 = vmatprep.subr.mxu0 0.0
    %257 = vmatpush1.msra.mxu0 0.0
    %258 = vmatprep.subr.mxu0 0.0
    %259 = vmatpush1.msra.mxu0 0.0
    %260 = vmatprep.subr.mxu0 0.0
    %261 = vmatpush1.msra.mxu0 0.0
    %262 = vmatprep.subr.mxu0 0.0
    %263 = vmatpush1.msra.mxu0 0.0
    %264 = vmatprep.subr.mxu0 0.0
    %265 = vmatpush1.msra.mxu0 0.0
    %266 = vmatprep.subr.mxu0 0.0
    %267 = vmatpush1.msra.mxu0 0.0
    %268 = vmatprep.subr.mxu0 0.0
    %269 = vmatpush1.msra.mxu0 0.0
    %270 = vmatprep.subr.mxu0 0.0
    %271 = vmatpush1.msra.mxu0 0.0
    %272 = vmatprep.subr.mxu0 0.0
    %273 = vmatpush1.msra.mxu0 0.0
    %274 = vmatprep.subr.mxu0 0.0
    %275 = vmatpush1.msra.mxu0 0.0
    %276 = vmatprep.subr.mxu0 0.0
    %277 = vmatpush1.msra.mxu0 0.0
    %278 = vmatprep.subr.mxu0 0.0
    %279 = vmatpush1.msra.mxu0 %v161
    %280 = vmatprep.subr.mxu0 0.0
    %281 = vmatpush2.msra.mxu0 0.0
    %282 = vmatprep.subr.mxu0 0.0
    %283 = vmatpush2.msra.mxu0 0.0
    %284 = vmatprep.subr.mxu0 0.0
    %285 = vmatpush2.msra.mxu0 0.0
    %286 = vmatprep.subr.mxu0 0.0
    %287 = vmatpush2.msra.mxu0 0.0
    %288 = vmatprep.subr.mxu0 0.0
    %289 = vmatpush2.msra.mxu0 0.0
    %290 = vmatprep.subr.mxu0 0.0
    %291 = vmatpush2.msra.mxu0 0.0
    %292 = vmatprep.subr.mxu0 0.0
    %293 = vmatpush2.msra.mxu0 0.0
    %294 = vmatprep.subr.mxu0 0.0
    %295 = vmatpush2.msra.mxu0 0.0
    %296 = vmatprep.subr.mxu0 0.0
    %297 = vmatpush2.msra.mxu0 0.0
    %298 = vmatprep.subr.mxu0 0.0
    %299 = vmatpush2.msra.mxu0 0.0
    %300 = vmatprep.subr.mxu0 0.0
    %301 = vmatpush2.msra.mxu0 0.0
    %302 = vmatprep.subr.mxu0 0.0
    %303 = vmatpush2.msra.mxu0 0.0
    %304 = vmatprep.subr.mxu0 0.0
    %305 = vmatpush2.msra.mxu0 0.0
    %306 = vmatprep.subr.mxu0 0.0
    %307 = vmatpush2.msra.mxu0 0.0
    %308 = vmatprep.subr.mxu0 0.0
    %309 = vmatpush2.msra.mxu0 0.0
    %310 = vmatprep.subr.mxu0 0.0
    %311 = vmatpush2.msra.mxu0 0.0
    %312 = vmatprep.mubr.f32.mxu0 0.0
    %313 = vmatmul.mubr.f32.gmra.mxu0 %v246
    %v314 = vpop.f32.mrf.mxu0
    %v315 = vadd.f32 %v169, %v314
    %v316 = vpop.f32.mrf.mxu0
    %317 = vdwg.mxu0
    %v319 = vsel %vm171, %v147, 0
    %321 = vmatprep.subr.mxu0 0.0
    %322 = vmatpush1.msra.mxu0 0.0
    %323 = vmatprep.subr.mxu0 0.0
    %324 = vmatpush1.msra.mxu0 0.0
    %325 = vmatprep.subr.mxu0 0.0
    %326 = vmatpush1.msra.mxu0 0.0
    %327 = vmatprep.subr.mxu0 0.0
    %328 = vmatpush1.msra.mxu0 0.0
    %329 = vmatprep.subr.mxu0 0.0
    %330 = vmatpush1.msra.mxu0 0.0
    %331 = vmatprep.subr.mxu0 0.0
    %332 = vmatpush1.msra.mxu0 0.0
    %333 = vmatprep.subr.mxu0 0.0
    %334 = vmatpush1.msra.mxu0 0.0
    %335 = vmatprep.subr.mxu0 0.0
    %336 = vmatpush1.msra.mxu0 0.0
    %337 = vmatprep.subr.mxu0 0.0
    %338 = vmatpush1.msra.mxu0 0.0
    %339 = vmatprep.subr.mxu0 0.0
    %340 = vmatpush1.msra.mxu0 0.0
    %341 = vmatprep.subr.mxu0 0.0
    %342 = vmatpush1.msra.mxu0 0.0
    %343 = vmatprep.subr.mxu0 0.0
    %344 = vmatpush1.msra.mxu0 0.0
    %345 = vmatprep.subr.mxu0 0.0
    %346 = vmatpush1.msra.mxu0 0.0
    %347 = vmatprep.subr.mxu0 0.0
    %348 = vmatpush1.msra.mxu0 0.0
    %349 = vmatprep.subr.mxu0 0.0
    %350 = vmatpush1.msra.mxu0 0.0
    %351 = vmatprep.subr.mxu0 0.0
    %352 = vmatpush1.msra.mxu0 %v161
    %353 = vmatprep.subr.mxu0 0.0
    %354 = vmatpush2.msra.mxu0 0.0
    %355 = vmatprep.subr.mxu0 0.0
    %356 = vmatpush2.msra.mxu0 0.0
    %357 = vmatprep.subr.mxu0 0.0
    %358 = vmatpush2.msra.mxu0 0.0
    %359 = vmatprep.subr.mxu0 0.0
    %360 = vmatpush2.msra.mxu0 0.0
    %361 = vmatprep.subr.mxu0 0.0
    %362 = vmatpush2.msra.mxu0 0.0
    %363 = vmatprep.subr.mxu0 0.0
    %364 = vmatpush2.msra.mxu0 0.0
    %365 = vmatprep.subr.mxu0 0.0
    %366 = vmatpush2.msra.mxu0 0.0
    %367 = vmatprep.subr.mxu0 0.0
    %368 = vmatpush2.msra.mxu0 0.0
    %369 = vmatprep.subr.mxu0 0.0
    %370 = vmatpush2.msra.mxu0 0.0
    %371 = vmatprep.subr.mxu0 0.0
    %372 = vmatpush2.msra.mxu0 0.0
    %373 = vmatprep.subr.mxu0 0.0
    %374 = vmatpush2.msra.mxu0 0.0
    %375 = vmatprep.subr.mxu0 0.0
    %376 = vmatpush2.msra.mxu0 0.0
    %377 = vmatprep.subr.mxu0 0.0
    %378 = vmatpush2.msra.mxu0 0.0
    %379 = vmatprep.subr.mxu0 0.0
    %380 = vmatpush2.msra.mxu0 0.0
    %381 = vmatprep.subr.mxu0 0.0
    %382 = vmatpush2.msra.mxu0 0.0
    %383 = vmatprep.subr.mxu0 0.0
    %384 = vmatpush2.msra.mxu0 0.0
    %385 = vmatprep.mubr.f32.mxu0 0.0
    %386 = vmatmul.mubr.f32.gmra.mxu0 %v319
    %v387 = vpop.f32.mrf.mxu0
    %v388 = vadd.f32 %v169, %v387
    %v389 = vpop.f32.mrf.mxu0
    %390 = vdwg.mxu0
    %v392 = vsel %vm171, %v148, 0
    %394 = vmatprep.subr.mxu0 0.0
    %395 = vmatpush1.msra.mxu0 0.0
    %396 = vmatprep.subr.mxu0 0.0
    %397 = vmatpush1.msra.mxu0 0.0
    %398 = vmatprep.subr.mxu0 0.0
    %399 = vmatpush1.msra.mxu0 0.0
    %400 = vmatprep.subr.mxu0 0.0
    %401 = vmatpush1.msra.mxu0 0.0
    %402 = vmatprep.subr.mxu0 0.0
    %403 = vmatpush1.msra.mxu0 0.0
    %404 = vmatprep.subr.mxu0 0.0
    %405 = vmatpush1.msra.mxu0 0.0
    %406 = vmatprep.subr.mxu0 0.0
    %407 = vmatpush1.msra.mxu0 0.0
    %408 = vmatprep.subr.mxu0 0.0
    %409 = vmatpush1.msra.mxu0 0.0
    %410 = vmatprep.subr.mxu0 0.0
    %411 = vmatpush1.msra.mxu0 0.0
    %412 = vmatprep.subr.mxu0 0.0
    %413 = vmatpush1.msra.mxu0 0.0
    %414 = vmatprep.subr.mxu0 0.0
    %415 = vmatpush1.msra.mxu0 0.0
    %416 = vmatprep.subr.mxu0 0.0
    %417 = vmatpush1.msra.mxu0 0.0
    %418 = vmatprep.subr.mxu0 0.0
    %419 = vmatpush1.msra.mxu0 0.0
    %420 = vmatprep.subr.mxu0 0.0
    %421 = vmatpush1.msra.mxu0 0.0
    %422 = vmatprep.subr.mxu0 0.0
    %423 = vmatpush1.msra.mxu0 0.0
    %424 = vmatprep.subr.mxu0 0.0
    %425 = vmatpush1.msra.mxu0 %v161
    %426 = vmatprep.subr.mxu0 0.0
    %427 = vmatpush2.msra.mxu0 0.0
    %428 = vmatprep.subr.mxu0 0.0
    %429 = vmatpush2.msra.mxu0 0.0
    %430 = vmatprep.subr.mxu0 0.0
    %431 = vmatpush2.msra.mxu0 0.0
    %432 = vmatprep.subr.mxu0 0.0
    %433 = vmatpush2.msra.mxu0 0.0
    %434 = vmatprep.subr.mxu0 0.0
    %435 = vmatpush2.msra.mxu0 0.0
    %436 = vmatprep.subr.mxu0 0.0
    %437 = vmatpush2.msra.mxu0 0.0
    %438 = vmatprep.subr.mxu0 0.0
    %439 = vmatpush2.msra.mxu0 0.0
    %440 = vmatprep.subr.mxu0 0.0
    %441 = vmatpush2.msra.mxu0 0.0
    %442 = vmatprep.subr.mxu0 0.0
    %443 = vmatpush2.msra.mxu0 0.0
    %444 = vmatprep.subr.mxu0 0.0
    %445 = vmatpush2.msra.mxu0 0.0
    %446 = vmatprep.subr.mxu0 0.0
    %447 = vmatpush2.msra.mxu0 0.0
    %448 = vmatprep.subr.mxu0 0.0
    %449 = vmatpush2.msra.mxu0 0.0
    %450 = vmatprep.subr.mxu0 0.0
    %451 = vmatpush2.msra.mxu0 0.0
    %452 = vmatprep.subr.mxu0 0.0
    %453 = vmatpush2.msra.mxu0 0.0
    %454 = vmatprep.subr.mxu0 0.0
    %455 = vmatpush2.msra.mxu0 0.0
    %456 = vmatprep.subr.mxu0 0.0
    %457 = vmatpush2.msra.mxu0 0.0
    %458 = vmatprep.mubr.f32.mxu0 0.0
    %459 = vmatmul.mubr.f32.gmra.mxu0 %v392
    %v460 = vpop.f32.mrf.mxu0
    %v461 = vadd.f32 %v169, %v460
    %v462 = vpop.f32.mrf.mxu0
    %463 = vdwg.mxu0
    %v465 = vsel %vm171, %v149, 0
    %467 = vmatprep.subr.mxu0 0.0
    %468 = vmatpush1.msra.mxu0 0.0
    %469 = vmatprep.subr.mxu0 0.0
    %470 = vmatpush1.msra.mxu0 0.0
    %471 = vmatprep.subr.mxu0 0.0
    %472 = vmatpush1.msra.mxu0 0.0
    %473 = vmatprep.subr.mxu0 0.0
    %474 = vmatpush1.msra.mxu0 0.0
    %475 = vmatprep.subr.mxu0 0.0
    %476 = vmatpush1.msra.mxu0 0.0
    %477 = vmatprep.subr.mxu0 0.0
    %478 = vmatpush1.msra.mxu0 0.0
    %479 = vmatprep.subr.mxu0 0.0
    %480 = vmatpush1.msra.mxu0 0.0
    %481 = vmatprep.subr.mxu0 0.0
    %482 = vmatpush1.msra.mxu0 0.0
    %483 = vmatprep.subr.mxu0 0.0
    %484 = vmatpush1.msra.mxu0 0.0
    %485 = vmatprep.subr.mxu0 0.0
    %486 = vmatpush1.msra.mxu0 0.0
    %487 = vmatprep.subr.mxu0 0.0
    %488 = vmatpush1.msra.mxu0 0.0
    %489 = vmatprep.subr.mxu0 0.0
    %490 = vmatpush1.msra.mxu0 0.0
    %491 = vmatprep.subr.mxu0 0.0
    %492 = vmatpush1.msra.mxu0 0.0
    %493 = vmatprep.subr.mxu0 0.0
    %494 = vmatpush1.msra.mxu0 0.0
    %495 = vmatprep.subr.mxu0 0.0
    %496 = vmatpush1.msra.mxu0 0.0
    %497 = vmatprep.subr.mxu0 0.0
    %498 = vmatpush1.msra.mxu0 %v161
    %499 = vmatprep.subr.mxu0 0.0
    %500 = vmatpush2.msra.mxu0 0.0
    %501 = vmatprep.subr.mxu0 0.0
    %502 = vmatpush2.msra.mxu0 0.0
    %503 = vmatprep.subr.mxu0 0.0
    %504 = vmatpush2.msra.mxu0 0.0
    %505 = vmatprep.subr.mxu0 0.0
    %506 = vmatpush2.msra.mxu0 0.0
    %507 = vmatprep.subr.mxu0 0.0
    %508 = vmatpush2.msra.mxu0 0.0
    %509 = vmatprep.subr.mxu0 0.0
    %510 = vmatpush2.msra.mxu0 0.0
    %511 = vmatprep.subr.mxu0 0.0
    %512 = vmatpush2.msra.mxu0 0.0
    %513 = vmatprep.subr.mxu0 0.0
    %514 = vmatpush2.msra.mxu0 0.0
    %515 = vmatprep.subr.mxu0 0.0
    %516 = vmatpush2.msra.mxu0 0.0
    %517 = vmatprep.subr.mxu0 0.0
    %518 = vmatpush2.msra.mxu0 0.0
    %519 = vmatprep.subr.mxu0 0.0
    %520 = vmatpush2.msra.mxu0 0.0
    %521 = vmatprep.subr.mxu0 0.0
    %522 = vmatpush2.msra.mxu0 0.0
    %523 = vmatprep.subr.mxu0 0.0
    %524 = vmatpush2.msra.mxu0 0.0
    %525 = vmatprep.subr.mxu0 0.0
    %526 = vmatpush2.msra.mxu0 0.0
    %527 = vmatprep.subr.mxu0 0.0
    %528 = vmatpush2.msra.mxu0 0.0
    %529 = vmatprep.subr.mxu0 0.0
    %530 = vmatpush2.msra.mxu0 0.0
    %531 = vmatprep.mubr.f32.mxu0 0.0
    %532 = vmatmul.mubr.f32.gmra.mxu0 %v465
    %v533 = vpop.f32.mrf.mxu0
    %v534 = vadd.f32 %v169, %v533
    %v535 = vpop.f32.mrf.mxu0
    %536 = vdwg.mxu0
    %v538 = vsel %vm171, %v150, 0
    %540 = vmatprep.subr.mxu0 0.0
    %541 = vmatpush1.msra.mxu0 0.0
    %542 = vmatprep.subr.mxu0 0.0
    %543 = vmatpush1.msra.mxu0 0.0
    %544 = vmatprep.subr.mxu0 0.0
    %545 = vmatpush1.msra.mxu0 0.0
    %546 = vmatprep.subr.mxu0 0.0
    %547 = vmatpush1.msra.mxu0 0.0
    %548 = vmatprep.subr.mxu0 0.0
    %549 = vmatpush1.msra.mxu0 0.0
    %550 = vmatprep.subr.mxu0 0.0
    %551 = vmatpush1.msra.mxu0 0.0
    %552 = vmatprep.subr.mxu0 0.0
    %553 = vmatpush1.msra.mxu0 0.0
    %554 = vmatprep.subr.mxu0 0.0
    %555 = vmatpush1.msra.mxu0 0.0
    %556 = vmatprep.subr.mxu0 0.0
    %557 = vmatpush1.msra.mxu0 0.0
    %558 = vmatprep.subr.mxu0 0.0
    %559 = vmatpush1.msra.mxu0 0.0
    %560 = vmatprep.subr.mxu0 0.0
    %561 = vmatpush1.msra.mxu0 0.0
    %562 = vmatprep.subr.mxu0 0.0
    %563 = vmatpush1.msra.mxu0 0.0
    %564 = vmatprep.subr.mxu0 0.0
    %565 = vmatpush1.msra.mxu0 0.0
    %566 = vmatprep.subr.mxu0 0.0
    %567 = vmatpush1.msra.mxu0 0.0
    %568 = vmatprep.subr.mxu0 0.0
    %569 = vmatpush1.msra.mxu0 0.0
    %570 = vmatprep.subr.mxu0 0.0
    %571 = vmatpush1.msra.mxu0 %v161
    %572 = vmatprep.subr.mxu0 0.0
    %573 = vmatpush2.msra.mxu0 0.0
    %574 = vmatprep.subr.mxu0 0.0
    %575 = vmatpush2.msra.mxu0 0.0
    %576 = vmatprep.subr.mxu0 0.0
    %577 = vmatpush2.msra.mxu0 0.0
    %578 = vmatprep.subr.mxu0 0.0
    %579 = vmatpush2.msra.mxu0 0.0
    %580 = vmatprep.subr.mxu0 0.0
    %581 = vmatpush2.msra.mxu0 0.0
    %582 = vmatprep.subr.mxu0 0.0
    %583 = vmatpush2.msra.mxu0 0.0
    %584 = vmatprep.subr.mxu0 0.0
    %585 = vmatpush2.msra.mxu0 0.0
    %586 = vmatprep.subr.mxu0 0.0
    %587 = vmatpush2.msra.mxu0 0.0
    %588 = vmatprep.subr.mxu0 0.0
    %589 = vmatpush2.msra.mxu0 0.0
    %590 = vmatprep.subr.mxu0 0.0
    %591 = vmatpush2.msra.mxu0 0.0
    %592 = vmatprep.subr.mxu0 0.0
    %593 = vmatpush2.msra.mxu0 0.0
    %594 = vmatprep.subr.mxu0 0.0
    %595 = vmatpush2.msra.mxu0 0.0
    %596 = vmatprep.subr.mxu0 0.0
    %597 = vmatpush2.msra.mxu0 0.0
    %598 = vmatprep.subr.mxu0 0.0
    %599 = vmatpush2.msra.mxu0 0.0
    %600 = vmatprep.subr.mxu0 0.0
    %601 = vmatpush2.msra.mxu0 0.0
    %602 = vmatprep.subr.mxu0 0.0
    %603 = vmatpush2.msra.mxu0 0.0
    %604 = vmatprep.mubr.f32.mxu0 0.0
    %605 = vmatmul.mubr.f32.gmra.mxu0 %v538
    %v606 = vpop.f32.mrf.mxu0
    %v607 = vadd.f32 %v169, %v606
    %v608 = vpop.f32.mrf.mxu0
    %609 = vdwg.mxu0
    %v611 = vsel %vm171, %v151, 0
    %613 = vmatprep.subr.mxu0 0.0
    %614 = vmatpush1.msra.mxu0 0.0
    %615 = vmatprep.subr.mxu0 0.0
    %616 = vmatpush1.msra.mxu0 0.0
    %617 = vmatprep.subr.mxu0 0.0
    %618 = vmatpush1.msra.mxu0 0.0
    %619 = vmatprep.subr.mxu0 0.0
    %620 = vmatpush1.msra.mxu0 0.0
    %621 = vmatprep.subr.mxu0 0.0
    %622 = vmatpush1.msra.mxu0 0.0
    %623 = vmatprep.subr.mxu0 0.0
    %624 = vmatpush1.msra.mxu0 0.0
    %625 = vmatprep.subr.mxu0 0.0
    %626 = vmatpush1.msra.mxu0 0.0
    %627 = vmatprep.subr.mxu0 0.0
    %628 = vmatpush1.msra.mxu0 0.0
    %629 = vmatprep.subr.mxu0 0.0
    %630 = vmatpush1.msra.mxu0 0.0
    %631 = vmatprep.subr.mxu0 0.0
    %632 = vmatpush1.msra.mxu0 0.0
    %633 = vmatprep.subr.mxu0 0.0
    %634 = vmatpush1.msra.mxu0 0.0
    %635 = vmatprep.subr.mxu0 0.0
    %636 = vmatpush1.msra.mxu0 0.0
    %637 = vmatprep.subr.mxu0 0.0
    %638 = vmatpush1.msra.mxu0 0.0
    %639 = vmatprep.subr.mxu0 0.0
    %640 = vmatpush1.msra.mxu0 0.0
    %641 = vmatprep.subr.mxu0 0.0
    %642 = vmatpush1.msra.mxu0 0.0
    %643 = vmatprep.subr.mxu0 0.0
    %644 = vmatpush1.msra.mxu0 %v161
    %645 = vmatprep.subr.mxu0 0.0
    %646 = vmatpush2.msra.mxu0 0.0
    %647 = vmatprep.subr.mxu0 0.0
    %648 = vmatpush2.msra.mxu0 0.0
    %649 = vmatprep.subr.mxu0 0.0
    %650 = vmatpush2.msra.mxu0 0.0
    %651 = vmatprep.subr.mxu0 0.0
    %652 = vmatpush2.msra.mxu0 0.0
    %653 = vmatprep.subr.mxu0 0.0
    %654 = vmatpush2.msra.mxu0 0.0
    %655 = vmatprep.subr.mxu0 0.0
    %656 = vmatpush2.msra.mxu0 0.0
    %657 = vmatprep.subr.mxu0 0.0
    %658 = vmatpush2.msra.mxu0 0.0
    %659 = vmatprep.subr.mxu0 0.0
    %660 = vmatpush2.msra.mxu0 0.0
    %661 = vmatprep.subr.mxu0 0.0
    %662 = vmatpush2.msra.mxu0 0.0
    %663 = vmatprep.subr.mxu0 0.0
    %664 = vmatpush2.msra.mxu0 0.0
    %665 = vmatprep.subr.mxu0 0.0
    %666 = vmatpush2.msra.mxu0 0.0
    %667 = vmatprep.subr.mxu0 0.0
    %668 = vmatpush2.msra.mxu0 0.0
    %669 = vmatprep.subr.mxu0 0.0
    %670 = vmatpush2.msra.mxu0 0.0
    %671 = vmatprep.subr.mxu0 0.0
    %672 = vmatpush2.msra.mxu0 0.0
    %673 = vmatprep.subr.mxu0 0.0
    %674 = vmatpush2.msra.mxu0 0.0
    %675 = vmatprep.subr.mxu0 0.0
    %676 = vmatpush2.msra.mxu0 0.0
    %677 = vmatprep.mubr.f32.mxu0 0.0
    %678 = vmatmul.mubr.f32.gmra.mxu0 %v611
    %v679 = vpop.f32.mrf.mxu0
    %v680 = vadd.f32 %v169, %v679
    %v681 = vpop.f32.mrf.mxu0
    %682 = vdwg.mxu0
    %v684 = vsel %vm171, %v152, 0
    %686 = vmatprep.subr.mxu0 0.0
    %687 = vmatpush1.msra.mxu0 0.0
    %688 = vmatprep.subr.mxu0 0.0
    %689 = vmatpush1.msra.mxu0 0.0
    %690 = vmatprep.subr.mxu0 0.0
    %691 = vmatpush1.msra.mxu0 0.0
    %692 = vmatprep.subr.mxu0 0.0
    %693 = vmatpush1.msra.mxu0 0.0
    %694 = vmatprep.subr.mxu0 0.0
    %695 = vmatpush1.msra.mxu0 0.0
    %696 = vmatprep.subr.mxu0 0.0
    %697 = vmatpush1.msra.mxu0 0.0
    %698 = vmatprep.subr.mxu0 0.0
    %699 = vmatpush1.msra.mxu0 0.0
    %700 = vmatprep.subr.mxu0 0.0
    %701 = vmatpush1.msra.mxu0 0.0
    %702 = vmatprep.subr.mxu0 0.0
    %703 = vmatpush1.msra.mxu0 0.0
    %704 = vmatprep.subr.mxu0 0.0
    %705 = vmatpush1.msra.mxu0 0.0
    %706 = vmatprep.subr.mxu0 0.0
    %707 = vmatpush1.msra.mxu0 0.0
    %708 = vmatprep.subr.mxu0 0.0
    %709 = vmatpush1.msra.mxu0 0.0
    %710 = vmatprep.subr.mxu0 0.0
    %711 = vmatpush1.msra.mxu0 0.0
    %712 = vmatprep.subr.mxu0 0.0
    %713 = vmatpush1.msra.mxu0 0.0
    %714 = vmatprep.subr.mxu0 0.0
    %715 = vmatpush1.msra.mxu0 0.0
    %716 = vmatprep.subr.mxu0 0.0
    %717 = vmatpush1.msra.mxu0 %v161
    %718 = vmatprep.subr.mxu0 0.0
    %719 = vmatpush2.msra.mxu0 0.0
    %720 = vmatprep.subr.mxu0 0.0
    %721 = vmatpush2.msra.mxu0 0.0
    %722 = vmatprep.subr.mxu0 0.0
    %723 = vmatpush2.msra.mxu0 0.0
    %724 = vmatprep.subr.mxu0 0.0
    %725 = vmatpush2.msra.mxu0 0.0
    %726 = vmatprep.subr.mxu0 0.0
    %727 = vmatpush2.msra.mxu0 0.0
    %728 = vmatprep.subr.mxu0 0.0
    %729 = vmatpush2.msra.mxu0 0.0
    %730 = vmatprep.subr.mxu0 0.0
    %731 = vmatpush2.msra.mxu0 0.0
    %732 = vmatprep.subr.mxu0 0.0
    %733 = vmatpush2.msra.mxu0 0.0
    %734 = vmatprep.subr.mxu0 0.0
    %735 = vmatpush2.msra.mxu0 0.0
    %736 = vmatprep.subr.mxu0 0.0
    %737 = vmatpush2.msra.mxu0 0.0
    %738 = vmatprep.subr.mxu0 0.0
    %739 = vmatpush2.msra.mxu0 0.0
    %740 = vmatprep.subr.mxu0 0.0
    %741 = vmatpush2.msra.mxu0 0.0
    %742 = vmatprep.subr.mxu0 0.0
    %743 = vmatpush2.msra.mxu0 0.0
    %744 = vmatprep.subr.mxu0 0.0
    %745 = vmatpush2.msra.mxu0 0.0
    %746 = vmatprep.subr.mxu0 0.0
    %747 = vmatpush2.msra.mxu0 0.0
    %748 = vmatprep.subr.mxu0 0.0
    %749 = vmatpush2.msra.mxu0 0.0
    %750 = vmatprep.mubr.f32.mxu0 0.0
    %751 = vmatmul.mubr.f32.gmra.mxu0 %v684
    %v752 = vpop.f32.mrf.mxu0
    %v753 = vadd.f32 %v169, %v752
    %v754 = vpop.f32.mrf.mxu0
    %755 = vdwg.mxu0
    %v757 = vsel %vm171, %v153, 0
    %759 = vmatprep.subr.mxu0 0.0
    %760 = vmatpush1.msra.mxu0 0.0
    %761 = vmatprep.subr.mxu0 0.0
    %762 = vmatpush1.msra.mxu0 0.0
    %763 = vmatprep.subr.mxu0 0.0
    %764 = vmatpush1.msra.mxu0 0.0
    %765 = vmatprep.subr.mxu0 0.0
    %766 = vmatpush1.msra.mxu0 0.0
    %767 = vmatprep.subr.mxu0 0.0
    %768 = vmatpush1.msra.mxu0 0.0
    %769 = vmatprep.subr.mxu0 0.0
    %770 = vmatpush1.msra.mxu0 0.0
    %771 = vmatprep.subr.mxu0 0.0
    %772 = vmatpush1.msra.mxu0 0.0
    %773 = vmatprep.subr.mxu0 0.0
    %774 = vmatpush1.msra.mxu0 0.0
    %775 = vmatprep.subr.mxu0 0.0
    %776 = vmatpush1.msra.mxu0 0.0
    %777 = vmatprep.subr.mxu0 0.0
    %778 = vmatpush1.msra.mxu0 0.0
    %779 = vmatprep.subr.mxu0 0.0
    %780 = vmatpush1.msra.mxu0 0.0
    %781 = vmatprep.subr.mxu0 0.0
    %782 = vmatpush1.msra.mxu0 0.0
    %783 = vmatprep.subr.mxu0 0.0
    %784 = vmatpush1.msra.mxu0 0.0
    %785 = vmatprep.subr.mxu0 0.0
    %786 = vmatpush1.msra.mxu0 0.0
    %787 = vmatprep.subr.mxu0 0.0
    %788 = vmatpush1.msra.mxu0 0.0
    %789 = vmatprep.subr.mxu0 0.0
    %790 = vmatpush1.msra.mxu0 %v161
    %791 = vmatprep.subr.mxu0 0.0
    %792 = vmatpush2.msra.mxu0 0.0
    %793 = vmatprep.subr.mxu0 0.0
    %794 = vmatpush2.msra.mxu0 0.0
    %795 = vmatprep.subr.mxu0 0.0
    %796 = vmatpush2.msra.mxu0 0.0
    %797 = vmatprep.subr.mxu0 0.0
    %798 = vmatpush2.msra.mxu0 0.0
    %799 = vmatprep.subr.mxu0 0.0
    %800 = vmatpush2.msra.mxu0 0.0
    %801 = vmatprep.subr.mxu0 0.0
    %802 = vmatpush2.msra.mxu0 0.0
    %803 = vmatprep.subr.mxu0 0.0
    %804 = vmatpush2.msra.mxu0 0.0
    %805 = vmatprep.subr.mxu0 0.0
    %806 = vmatpush2.msra.mxu0 0.0
    %807 = vmatprep.subr.mxu0 0.0
    %808 = vmatpush2.msra.mxu0 0.0
    %809 = vmatprep.subr.mxu0 0.0
    %810 = vmatpush2.msra.mxu0 0.0
    %811 = vmatprep.subr.mxu0 0.0
    %812 = vmatpush2.msra.mxu0 0.0
    %813 = vmatprep.subr.mxu0 0.0
    %814 = vmatpush2.msra.mxu0 0.0
    %815 = vmatprep.subr.mxu0 0.0
    %816 = vmatpush2.msra.mxu0 0.0
    %817 = vmatprep.subr.mxu0 0.0
    %818 = vmatpush2.msra.mxu0 0.0
    %819 = vmatprep.subr.mxu0 0.0
    %820 = vmatpush2.msra.mxu0 0.0
    %821 = vmatprep.subr.mxu0 0.0
    %822 = vmatpush2.msra.mxu0 0.0
    %823 = vmatprep.mubr.f32.mxu0 0.0
    %824 = vmatmul.mubr.f32.gmra.mxu0 %v757
    %v825 = vpop.f32.mrf.mxu0
    %v826 = vadd.f32 %v169, %v825
    %v827 = vpop.f32.mrf.mxu0
    %828 = vdwg.mxu0
    %v830 = vsel %vm171, %v154, 0
    %832 = vmatprep.subr.mxu0 0.0
    %833 = vmatpush1.msra.mxu0 0.0
    %834 = vmatprep.subr.mxu0 0.0
    %835 = vmatpush1.msra.mxu0 0.0
    %836 = vmatprep.subr.mxu0 0.0
    %837 = vmatpush1.msra.mxu0 0.0
    %838 = vmatprep.subr.mxu0 0.0
    %839 = vmatpush1.msra.mxu0 0.0
    %840 = vmatprep.subr.mxu0 0.0
    %841 = vmatpush1.msra.mxu0 0.0
    %842 = vmatprep.subr.mxu0 0.0
    %843 = vmatpush1.msra.mxu0 0.0
    %844 = vmatprep.subr.mxu0 0.0
    %845 = vmatpush1.msra.mxu0 0.0
    %846 = vmatprep.subr.mxu0 0.0
    %847 = vmatpush1.msra.mxu0 0.0
    %848 = vmatprep.subr.mxu0 0.0
    %849 = vmatpush1.msra.mxu0 0.0
    %850 = vmatprep.subr.mxu0 0.0
    %851 = vmatpush1.msra.mxu0 0.0
    %852 = vmatprep.subr.mxu0 0.0
    %853 = vmatpush1.msra.mxu0 0.0
    %854 = vmatprep.subr.mxu0 0.0
    %855 = vmatpush1.msra.mxu0 0.0
    %856 = vmatprep.subr.mxu0 0.0
    %857 = vmatpush1.msra.mxu0 0.0
    %858 = vmatprep.subr.mxu0 0.0
    %859 = vmatpush1.msra.mxu0 0.0
    %860 = vmatprep.subr.mxu0 0.0
    %861 = vmatpush1.msra.mxu0 0.0
    %862 = vmatprep.subr.mxu0 0.0
    %863 = vmatpush1.msra.mxu0 %v161
    %864 = vmatprep.subr.mxu0 0.0
    %865 = vmatpush2.msra.mxu0 0.0
    %866 = vmatprep.subr.mxu0 0.0
    %867 = vmatpush2.msra.mxu0 0.0
    %868 = vmatprep.subr.mxu0 0.0
    %869 = vmatpush2.msra.mxu0 0.0
    %870 = vmatprep.subr.mxu0 0.0
    %871 = vmatpush2.msra.mxu0 0.0
    %872 = vmatprep.subr.mxu0 0.0
    %873 = vmatpush2.msra.mxu0 0.0
    %874 = vmatprep.subr.mxu0 0.0
    %875 = vmatpush2.msra.mxu0 0.0
    %876 = vmatprep.subr.mxu0 0.0
    %877 = vmatpush2.msra.mxu0 0.0
    %878 = vmatprep.subr.mxu0 0.0
    %879 = vmatpush2.msra.mxu0 0.0
    %880 = vmatprep.subr.mxu0 0.0
    %881 = vmatpush2.msra.mxu0 0.0
    %882 = vmatprep.subr.mxu0 0.0
    %883 = vmatpush2.msra.mxu0 0.0
    %884 = vmatprep.subr.mxu0 0.0
    %885 = vmatpush2.msra.mxu0 0.0
    %886 = vmatprep.subr.mxu0 0.0
    %887 = vmatpush2.msra.mxu0 0.0
    %888 = vmatprep.subr.mxu0 0.0
    %889 = vmatpush2.msra.mxu0 0.0
    %890 = vmatprep.subr.mxu0 0.0
    %891 = vmatpush2.msra.mxu0 0.0
    %892 = vmatprep.subr.mxu0 0.0
    %893 = vmatpush2.msra.mxu0 0.0
    %894 = vmatprep.subr.mxu0 0.0
    %895 = vmatpush2.msra.mxu0 0.0
    %896 = vmatprep.mubr.f32.mxu0 0.0
    %897 = vmatmul.mubr.f32.gmra.mxu0 %v830
    %v898 = vpop.f32.mrf.mxu0
    %v899 = vadd.f32 %v169, %v898
    %v900 = vpop.f32.mrf.mxu0
    %901 = vdwg.mxu0
    %v903 = vsel %vm171, %v155, 0
    %905 = vmatprep.subr.mxu0 0.0
    %906 = vmatpush1.msra.mxu0 0.0
    %907 = vmatprep.subr.mxu0 0.0
    %908 = vmatpush1.msra.mxu0 0.0
    %909 = vmatprep.subr.mxu0 0.0
    %910 = vmatpush1.msra.mxu0 0.0
    %911 = vmatprep.subr.mxu0 0.0
    %912 = vmatpush1.msra.mxu0 0.0
    %913 = vmatprep.subr.mxu0 0.0
    %914 = vmatpush1.msra.mxu0 0.0
    %915 = vmatprep.subr.mxu0 0.0
    %916 = vmatpush1.msra.mxu0 0.0
    %917 = vmatprep.subr.mxu0 0.0
    %918 = vmatpush1.msra.mxu0 0.0
    %919 = vmatprep.subr.mxu0 0.0
    %920 = vmatpush1.msra.mxu0 0.0
    %921 = vmatprep.subr.mxu0 0.0
    %922 = vmatpush1.msra.mxu0 0.0
    %923 = vmatprep.subr.mxu0 0.0
    %924 = vmatpush1.msra.mxu0 0.0
    %925 = vmatprep.subr.mxu0 0.0
    %926 = vmatpush1.msra.mxu0 0.0
    %927 = vmatprep.subr.mxu0 0.0
    %928 = vmatpush1.msra.mxu0 0.0
    %929 = vmatprep.subr.mxu0 0.0
    %930 = vmatpush1.msra.mxu0 0.0
    %931 = vmatprep.subr.mxu0 0.0
    %932 = vmatpush1.msra.mxu0 0.0
    %933 = vmatprep.subr.mxu0 0.0
    %934 = vmatpush1.msra.mxu0 0.0
    %935 = vmatprep.subr.mxu0 0.0
    %936 = vmatpush1.msra.mxu0 %v161
    %937 = vmatprep.subr.mxu0 0.0
    %938 = vmatpush2.msra.mxu0 0.0
    %939 = vmatprep.subr.mxu0 0.0
    %940 = vmatpush2.msra.mxu0 0.0
    %941 = vmatprep.subr.mxu0 0.0
    %942 = vmatpush2.msra.mxu0 0.0
    %943 = vmatprep.subr.mxu0 0.0
    %944 = vmatpush2.msra.mxu0 0.0
    %945 = vmatprep.subr.mxu0 0.0
    %946 = vmatpush2.msra.mxu0 0.0
    %947 = vmatprep.subr.mxu0 0.0
    %948 = vmatpush2.msra.mxu0 0.0
    %949 = vmatprep.subr.mxu0 0.0
    %950 = vmatpush2.msra.mxu0 0.0
    %951 = vmatprep.subr.mxu0 0.0
    %952 = vmatpush2.msra.mxu0 0.0
    %953 = vmatprep.subr.mxu0 0.0
    %954 = vmatpush2.msra.mxu0 0.0
    %955 = vmatprep.subr.mxu0 0.0
    %956 = vmatpush2.msra.mxu0 0.0
    %957 = vmatprep.subr.mxu0 0.0
    %958 = vmatpush2.msra.mxu0 0.0
    %959 = vmatprep.subr.mxu0 0.0
    %960 = vmatpush2.msra.mxu0 0.0
    %961 = vmatprep.subr.mxu0 0.0
    %962 = vmatpush2.msra.mxu0 0.0
    %963 = vmatprep.subr.mxu0 0.0
    %964 = vmatpush2.msra.mxu0 0.0
    %965 = vmatprep.subr.mxu0 0.0
    %966 = vmatpush2.msra.mxu0 0.0
    %967 = vmatprep.subr.mxu0 0.0
    %968 = vmatpush2.msra.mxu0 0.0
    %969 = vmatprep.mubr.f32.mxu0 0.0
    %970 = vmatmul.mubr.f32.gmra.mxu0 %v903
    %v971 = vpop.f32.mrf.mxu0
    %v972 = vadd.f32 %v169, %v971
    %v973 = vpop.f32.mrf.mxu0
    %974 = vdwg.mxu0
    %v976 = vsel %vm171, %v156, 0
    %978 = vmatprep.subr.mxu0 0.0
    %979 = vmatpush1.msra.mxu0 0.0
    %980 = vmatprep.subr.mxu0 0.0
    %981 = vmatpush1.msra.mxu0 0.0
    %982 = vmatprep.subr.mxu0 0.0
    %983 = vmatpush1.msra.mxu0 0.0
    %984 = vmatprep.subr.mxu0 0.0
    %985 = vmatpush1.msra.mxu0 0.0
    %986 = vmatprep.subr.mxu0 0.0
    %987 = vmatpush1.msra.mxu0 0.0
    %988 = vmatprep.subr.mxu0 0.0
    %989 = vmatpush1.msra.mxu0 0.0
    %990 = vmatprep.subr.mxu0 0.0
    %991 = vmatpush1.msra.mxu0 0.0
    %992 = vmatprep.subr.mxu0 0.0
    %993 = vmatpush1.msra.mxu0 0.0
    %994 = vmatprep.subr.mxu0 0.0
    %995 = vmatpush1.msra.mxu0 0.0
    %996 = vmatprep.subr.mxu0 0.0
    %997 = vmatpush1.msra.mxu0 0.0
    %998 = vmatprep.subr.mxu0 0.0
    %999 = vmatpush1.msra.mxu0 0.0
    %1000 = vmatprep.subr.mxu0 0.0
    %1001 = vmatpush1.msra.mxu0 0.0
    %1002 = vmatprep.subr.mxu0 0.0
    %1003 = vmatpush1.msra.mxu0 0.0
    %1004 = vmatprep.subr.mxu0 0.0
    %1005 = vmatpush1.msra.mxu0 0.0
    %1006 = vmatprep.subr.mxu0 0.0
    %1007 = vmatpush1.msra.mxu0 0.0
    %1008 = vmatprep.subr.mxu0 0.0
    %1009 = vmatpush1.msra.mxu0 %v161
    %1010 = vmatprep.subr.mxu0 0.0
    %1011 = vmatpush2.msra.mxu0 0.0
    %1012 = vmatprep.subr.mxu0 0.0
    %1013 = vmatpush2.msra.mxu0 0.0
    %1014 = vmatprep.subr.mxu0 0.0
    %1015 = vmatpush2.msra.mxu0 0.0
    %1016 = vmatprep.subr.mxu0 0.0
    %1017 = vmatpush2.msra.mxu0 0.0
    %1018 = vmatprep.subr.mxu0 0.0
    %1019 = vmatpush2.msra.mxu0 0.0
    %1020 = vmatprep.subr.mxu0 0.0
    %1021 = vmatpush2.msra.mxu0 0.0
    %1022 = vmatprep.subr.mxu0 0.0
    %1023 = vmatpush2.msra.mxu0 0.0
    %1024 = vmatprep.subr.mxu0 0.0
    %1025 = vmatpush2.msra.mxu0 0.0
    %1026 = vmatprep.subr.mxu0 0.0
    %1027 = vmatpush2.msra.mxu0 0.0
    %1028 = vmatprep.subr.mxu0 0.0
    %1029 = vmatpush2.msra.mxu0 0.0
    %1030 = vmatprep.subr.mxu0 0.0
    %1031 = vmatpush2.msra.mxu0 0.0
    %1032 = vmatprep.subr.mxu0 0.0
    %1033 = vmatpush2.msra.mxu0 0.0
    %1034 = vmatprep.subr.mxu0 0.0
    %1035 = vmatpush2.msra.mxu0 0.0
    %1036 = vmatprep.subr.mxu0 0.0
    %1037 = vmatpush2.msra.mxu0 0.0
    %1038 = vmatprep.subr.mxu0 0.0
    %1039 = vmatpush2.msra.mxu0 0.0
    %1040 = vmatprep.subr.mxu0 0.0
    %1041 = vmatpush2.msra.mxu0 0.0
    %1042 = vmatprep.mubr.f32.mxu0 0.0
    %1043 = vmatmul.mubr.f32.gmra.mxu0 %v976
    %v1044 = vpop.f32.mrf.mxu0
    %v1045 = vadd.f32 %v169, %v1044
    %v1046 = vpop.f32.mrf.mxu0
    %1047 = vdwg.mxu0
    %v1049 = vsel %vm171, %v157, 0
    %1051 = vmatprep.subr.mxu0 0.0
    %1052 = vmatpush1.msra.mxu0 0.0
    %1053 = vmatprep.subr.mxu0 0.0
    %1054 = vmatpush1.msra.mxu0 0.0
    %1055 = vmatprep.subr.mxu0 0.0
    %1056 = vmatpush1.msra.mxu0 0.0
    %1057 = vmatprep.subr.mxu0 0.0
    %1058 = vmatpush1.msra.mxu0 0.0
    %1059 = vmatprep.subr.mxu0 0.0
    %1060 = vmatpush1.msra.mxu0 0.0
    %1061 = vmatprep.subr.mxu0 0.0
    %1062 = vmatpush1.msra.mxu0 0.0
    %1063 = vmatprep.subr.mxu0 0.0
    %1064 = vmatpush1.msra.mxu0 0.0
    %1065 = vmatprep.subr.mxu0 0.0
    %1066 = vmatpush1.msra.mxu0 0.0
    %1067 = vmatprep.subr.mxu0 0.0
    %1068 = vmatpush1.msra.mxu0 0.0
    %1069 = vmatprep.subr.mxu0 0.0
    %1070 = vmatpush1.msra.mxu0 0.0
    %1071 = vmatprep.subr.mxu0 0.0
    %1072 = vmatpush1.msra.mxu0 0.0
    %1073 = vmatprep.subr.mxu0 0.0
    %1074 = vmatpush1.msra.mxu0 0.0
    %1075 = vmatprep.subr.mxu0 0.0
    %1076 = vmatpush1.msra.mxu0 0.0
    %1077 = vmatprep.subr.mxu0 0.0
    %1078 = vmatpush1.msra.mxu0 0.0
    %1079 = vmatprep.subr.mxu0 0.0
    %1080 = vmatpush1.msra.mxu0 0.0
    %1081 = vmatprep.subr.mxu0 0.0
    %1082 = vmatpush1.msra.mxu0 %v161
    %1083 = vmatprep.subr.mxu0 0.0
    %1084 = vmatpush2.msra.mxu0 0.0
    %1085 = vmatprep.subr.mxu0 0.0
    %1086 = vmatpush2.msra.mxu0 0.0
    %1087 = vmatprep.subr.mxu0 0.0
    %1088 = vmatpush2.msra.mxu0 0.0
    %1089 = vmatprep.subr.mxu0 0.0
    %1090 = vmatpush2.msra.mxu0 0.0
    %1091 = vmatprep.subr.mxu0 0.0
    %1092 = vmatpush2.msra.mxu0 0.0
    %1093 = vmatprep.subr.mxu0 0.0
    %1094 = vmatpush2.msra.mxu0 0.0
    %1095 = vmatprep.subr.mxu0 0.0
    %1096 = vmatpush2.msra.mxu0 0.0
    %1097 = vmatprep.subr.mxu0 0.0
    %1098 = vmatpush2.msra.mxu0 0.0
    %1099 = vmatprep.subr.mxu0 0.0
    %1100 = vmatpush2.msra.mxu0 0.0
    %1101 = vmatprep.subr.mxu0 0.0
    %1102 = vmatpush2.msra.mxu0 0.0
    %1103 = vmatprep.subr.mxu0 0.0
    %1104 = vmatpush2.msra.mxu0 0.0
    %1105 = vmatprep.subr.mxu0 0.0
    %1106 = vmatpush2.msra.mxu0 0.0
    %1107 = vmatprep.subr.mxu0 0.0
    %1108 = vmatpush2.msra.mxu0 0.0
    %1109 = vmatprep.subr.mxu0 0.0
    %1110 = vmatpush2.msra.mxu0 0.0
    %1111 = vmatprep.subr.mxu0 0.0
    %1112 = vmatpush2.msra.mxu0 0.0
    %1113 = vmatprep.subr.mxu0 0.0
    %1114 = vmatpush2.msra.mxu0 0.0
    %1115 = vmatprep.mubr.f32.mxu0 0.0
    %1116 = vmatmul.mubr.f32.gmra.mxu0 %v1049
    %v1117 = vpop.f32.mrf.mxu0
    %v1118 = vadd.f32 %v169, %v1117
    %v1119 = vpop.f32.mrf.mxu0
    %1120 = vdwg.mxu0
    %v1122 = vsel %vm171, %v158, 0
    %1124 = vmatprep.subr.mxu0 0.0
    %1125 = vmatpush1.msra.mxu0 0.0
    %1126 = vmatprep.subr.mxu0 0.0
    %1127 = vmatpush1.msra.mxu0 0.0
    %1128 = vmatprep.subr.mxu0 0.0
    %1129 = vmatpush1.msra.mxu0 0.0
    %1130 = vmatprep.subr.mxu0 0.0
    %1131 = vmatpush1.msra.mxu0 0.0
    %1132 = vmatprep.subr.mxu0 0.0
    %1133 = vmatpush1.msra.mxu0 0.0
    %1134 = vmatprep.subr.mxu0 0.0
    %1135 = vmatpush1.msra.mxu0 0.0
    %1136 = vmatprep.subr.mxu0 0.0
    %1137 = vmatpush1.msra.mxu0 0.0
    %1138 = vmatprep.subr.mxu0 0.0
    %1139 = vmatpush1.msra.mxu0 0.0
    %1140 = vmatprep.subr.mxu0 0.0
    %1141 = vmatpush1.msra.mxu0 0.0
    %1142 = vmatprep.subr.mxu0 0.0
    %1143 = vmatpush1.msra.mxu0 0.0
    %1144 = vmatprep.subr.mxu0 0.0
    %1145 = vmatpush1.msra.mxu0 0.0
    %1146 = vmatprep.subr.mxu0 0.0
    %1147 = vmatpush1.msra.mxu0 0.0
    %1148 = vmatprep.subr.mxu0 0.0
    %1149 = vmatpush1.msra.mxu0 0.0
    %1150 = vmatprep.subr.mxu0 0.0
    %1151 = vmatpush1.msra.mxu0 0.0
    %1152 = vmatprep.subr.mxu0 0.0
    %1153 = vmatpush1.msra.mxu0 0.0
    %1154 = vmatprep.subr.mxu0 0.0
    %1155 = vmatpush1.msra.mxu0 %v161
    %1156 = vmatprep.subr.mxu0 0.0
    %1157 = vmatpush2.msra.mxu0 0.0
    %1158 = vmatprep.subr.mxu0 0.0
    %1159 = vmatpush2.msra.mxu0 0.0
    %1160 = vmatprep.subr.mxu0 0.0
    %1161 = vmatpush2.msra.mxu0 0.0
    %1162 = vmatprep.subr.mxu0 0.0
    %1163 = vmatpush2.msra.mxu0 0.0
    %1164 = vmatprep.subr.mxu0 0.0
    %1165 = vmatpush2.msra.mxu0 0.0
    %1166 = vmatprep.subr.mxu0 0.0
    %1167 = vmatpush2.msra.mxu0 0.0
    %1168 = vmatprep.subr.mxu0 0.0
    %1169 = vmatpush2.msra.mxu0 0.0
    %1170 = vmatprep.subr.mxu0 0.0
    %1171 = vmatpush2.msra.mxu0 0.0
    %1172 = vmatprep.subr.mxu0 0.0
    %1173 = vmatpush2.msra.mxu0 0.0
    %1174 = vmatprep.subr.mxu0 0.0
    %1175 = vmatpush2.msra.mxu0 0.0
    %1176 = vmatprep.subr.mxu0 0.0
    %1177 = vmatpush2.msra.mxu0 0.0
    %1178 = vmatprep.subr.mxu0 0.0
    %1179 = vmatpush2.msra.mxu0 0.0
    %1180 = vmatprep.subr.mxu0 0.0
    %1181 = vmatpush2.msra.mxu0 0.0
    %1182 = vmatprep.subr.mxu0 0.0
    %1183 = vmatpush2.msra.mxu0 0.0
    %1184 = vmatprep.subr.mxu0 0.0
    %1185 = vmatpush2.msra.mxu0 0.0
    %1186 = vmatprep.subr.mxu0 0.0
    %1187 = vmatpush2.msra.mxu0 0.0
    %1188 = vmatprep.mubr.f32.mxu0 0.0
    %1189 = vmatmul.mubr.f32.gmra.mxu0 %v1122
    %v1190 = vpop.f32.mrf.mxu0
    %v1191 = vadd.f32 %v169, %v1190
    %v1192 = vpop.f32.mrf.mxu0
    %1193 = vdwg.mxu0
    %v1195 = vsel %vm171, %v159, 0
    %1197 = vmatprep.subr.mxu0 0.0
    %1198 = vmatpush1.msra.mxu0 0.0
    %1199 = vmatprep.subr.mxu0 0.0
    %1200 = vmatpush1.msra.mxu0 0.0
    %1201 = vmatprep.subr.mxu0 0.0
    %1202 = vmatpush1.msra.mxu0 0.0
    %1203 = vmatprep.subr.mxu0 0.0
    %1204 = vmatpush1.msra.mxu0 0.0
    %1205 = vmatprep.subr.mxu0 0.0
    %1206 = vmatpush1.msra.mxu0 0.0
    %1207 = vmatprep.subr.mxu0 0.0
    %1208 = vmatpush1.msra.mxu0 0.0
    %1209 = vmatprep.subr.mxu0 0.0
    %1210 = vmatpush1.msra.mxu0 0.0
    %1211 = vmatprep.subr.mxu0 0.0
    %1212 = vmatpush1.msra.mxu0 0.0
    %1213 = vmatprep.subr.mxu0 0.0
    %1214 = vmatpush1.msra.mxu0 0.0
    %1215 = vmatprep.subr.mxu0 0.0
    %1216 = vmatpush1.msra.mxu0 0.0
    %1217 = vmatprep.subr.mxu0 0.0
    %1218 = vmatpush1.msra.mxu0 0.0
    %1219 = vmatprep.subr.mxu0 0.0
    %1220 = vmatpush1.msra.mxu0 0.0
    %1221 = vmatprep.subr.mxu0 0.0
    %1222 = vmatpush1.msra.mxu0 0.0
    %1223 = vmatprep.subr.mxu0 0.0
    %1224 = vmatpush1.msra.mxu0 0.0
    %1225 = vmatprep.subr.mxu0 0.0
    %1226 = vmatpush1.msra.mxu0 0.0
    %1227 = vmatprep.subr.mxu0 0.0
    %1228 = vmatpush1.msra.mxu0 %v161
    %1229 = vmatprep.subr.mxu0 0.0
    %1230 = vmatpush2.msra.mxu0 0.0
    %1231 = vmatprep.subr.mxu0 0.0
    %1232 = vmatpush2.msra.mxu0 0.0
    %1233 = vmatprep.subr.mxu0 0.0
    %1234 = vmatpush2.msra.mxu0 0.0
    %1235 = vmatprep.subr.mxu0 0.0
    %1236 = vmatpush2.msra.mxu0 0.0
    %1237 = vmatprep.subr.mxu0 0.0
    %1238 = vmatpush2.msra.mxu0 0.0
    %1239 = vmatprep.subr.mxu0 0.0
    %1240 = vmatpush2.msra.mxu0 0.0
    %1241 = vmatprep.subr.mxu0 0.0
    %1242 = vmatpush2.msra.mxu0 0.0
    %1243 = vmatprep.subr.mxu0 0.0
    %1244 = vmatpush2.msra.mxu0 0.0
    %1245 = vmatprep.subr.mxu0 0.0
    %1246 = vmatpush2.msra.mxu0 0.0
    %1247 = vmatprep.subr.mxu0 0.0
    %1248 = vmatpush2.msra.mxu0 0.0
    %1249 = vmatprep.subr.mxu0 0.0
    %1250 = vmatpush2.msra.mxu0 0.0
    %1251 = vmatprep.subr.mxu0 0.0
    %1252 = vmatpush2.msra.mxu0 0.0
    %1253 = vmatprep.subr.mxu0 0.0
    %1254 = vmatpush2.msra.mxu0 0.0
    %1255 = vmatprep.subr.mxu0 0.0
    %1256 = vmatpush2.msra.mxu0 0.0
    %1257 = vmatprep.subr.mxu0 0.0
    %1258 = vmatpush2.msra.mxu0 0.0
    %1259 = vmatprep.subr.mxu0 0.0
    %1260 = vmatpush2.msra.mxu0 0.0
    %1261 = vmatprep.mubr.f32.mxu0 0.0
    %1262 = vmatmul.mubr.f32.gmra.mxu0 %v1195
    %v1263 = vpop.f32.mrf.mxu0
    %v1264 = vadd.f32 %v169, %v1263
    %v1265 = vpop.f32.mrf.mxu0
    %1266 = vdwg.mxu0
    %v1268 = vsel %vm171, %v160, 0
    %1270 = vmatprep.subr.mxu0 0.0
    %1271 = vmatpush1.msra.mxu0 0.0
    %1272 = vmatprep.subr.mxu0 0.0
    %1273 = vmatpush1.msra.mxu0 0.0
    %1274 = vmatprep.subr.mxu0 0.0
    %1275 = vmatpush1.msra.mxu0 0.0
    %1276 = vmatprep.subr.mxu0 0.0
    %1277 = vmatpush1.msra.mxu0 0.0
    %1278 = vmatprep.subr.mxu0 0.0
    %1279 = vmatpush1.msra.mxu0 0.0
    %1280 = vmatprep.subr.mxu0 0.0
    %1281 = vmatpush1.msra.mxu0 0.0
    %1282 = vmatprep.subr.mxu0 0.0
    %1283 = vmatpush1.msra.mxu0 0.0
    %1284 = vmatprep.subr.mxu0 0.0
    %1285 = vmatpush1.msra.mxu0 0.0
    %1286 = vmatprep.subr.mxu0 0.0
    %1287 = vmatpush1.msra.mxu0 0.0
    %1288 = vmatprep.subr.mxu0 0.0
    %1289 = vmatpush1.msra.mxu0 0.0
    %1290 = vmatprep.subr.mxu0 0.0
    %1291 = vmatpush1.msra.mxu0 0.0
    %1292 = vmatprep.subr.mxu0 0.0
    %1293 = vmatpush1.msra.mxu0 0.0
    %1294 = vmatprep.subr.mxu0 0.0
    %1295 = vmatpush1.msra.mxu0 0.0
    %1296 = vmatprep.subr.mxu0 0.0
    %1297 = vmatpush1.msra.mxu0 0.0
    %1298 = vmatprep.subr.mxu0 0.0
    %1299 = vmatpush1.msra.mxu0 0.0
    %1300 = vmatprep.subr.mxu0 0.0
    %1301 = vmatpush1.msra.mxu0 %v161
    %1302 = vmatprep.subr.mxu0 0.0
    %1303 = vmatpush2.msra.mxu0 0.0
    %1304 = vmatprep.subr.mxu0 0.0
    %1305 = vmatpush2.msra.mxu0 0.0
    %1306 = vmatprep.subr.mxu0 0.0
    %1307 = vmatpush2.msra.mxu0 0.0
    %1308 = vmatprep.subr.mxu0 0.0
    %1309 = vmatpush2.msra.mxu0 0.0
    %1310 = vmatprep.subr.mxu0 0.0
    %1311 = vmatpush2.msra.mxu0 0.0
    %1312 = vmatprep.subr.mxu0 0.0
    %1313 = vmatpush2.msra.mxu0 0.0
    %1314 = vmatprep.subr.mxu0 0.0
    %1315 = vmatpush2.msra.mxu0 0.0
    %1316 = vmatprep.subr.mxu0 0.0
    %1317 = vmatpush2.msra.mxu0 0.0
    %1318 = vmatprep.subr.mxu0 0.0
    %1319 = vmatpush2.msra.mxu0 0.0
    %1320 = vmatprep.subr.mxu0 0.0
    %1321 = vmatpush2.msra.mxu0 0.0
    %1322 = vmatprep.subr.mxu0 0.0
    %1323 = vmatpush2.msra.mxu0 0.0
    %1324 = vmatprep.subr.mxu0 0.0
    %1325 = vmatpush2.msra.mxu0 0.0
    %1326 = vmatprep.subr.mxu0 0.0
    %1327 = vmatpush2.msra.mxu0 0.0
    %1328 = vmatprep.subr.mxu0 0.0
    %1329 = vmatpush2.msra.mxu0 0.0
    %1330 = vmatprep.subr.mxu0 0.0
    %1331 = vmatpush2.msra.mxu0 0.0
    %1332 = vmatprep.subr.mxu0 0.0
    %1333 = vmatpush2.msra.mxu0 0.0
    %1334 = vmatprep.mubr.f32.mxu0 0.0
    %1335 = vmatmul.mubr.f32.gmra.mxu0 %v1268
    %v1336 = vpop.f32.mrf.mxu0
    %v1337 = vadd.f32 %v169, %v1336
    %v1338 = vpop.f32.mrf.mxu0
    %1339 = vdwg.mxu0
    %vm1340 = vcmask 121856
    %v1342 = vsel %vm1340, 0.0, 0
    %vm1344 = vcmask 1046528
    %v1346 = vsel %vm1344, %v163, 0
    %1348 = vmatprep.subr.mxu0 0.0
    %1349 = vmatpush1.msra.mxu0 0.0
    %1350 = vmatprep.subr.mxu0 0.0
    %1351 = vmatpush1.msra.mxu0 0.0
    %1352 = vmatprep.subr.mxu0 0.0
    %1353 = vmatpush1.msra.mxu0 0.0
    %1354 = vmatprep.subr.mxu0 0.0
    %1355 = vmatpush1.msra.mxu0 0.0
    %1356 = vmatprep.subr.mxu0 0.0
    %1357 = vmatpush1.msra.mxu0 0.0
    %1358 = vmatprep.subr.mxu0 0.0
    %1359 = vmatpush1.msra.mxu0 0.0
    %1360 = vmatprep.subr.mxu0 0.0
    %1361 = vmatpush1.msra.mxu0 0.0
    %1362 = vmatprep.subr.mxu0 0.0
    %1363 = vmatpush1.msra.mxu0 0.0
    %1364 = vmatprep.subr.mxu0 0.0
    %1365 = vmatpush1.msra.mxu0 0.0
    %1366 = vmatprep.subr.mxu0 0.0
    %1367 = vmatpush1.msra.mxu0 0.0
    %1368 = vmatprep.subr.mxu0 0.0
    %1369 = vmatpush1.msra.mxu0 0.0
    %1370 = vmatprep.subr.mxu0 0.0
    %1371 = vmatpush1.msra.mxu0 0.0
    %1372 = vmatprep.subr.mxu0 0.0
    %1373 = vmatpush1.msra.mxu0 0.0
    %1374 = vmatprep.subr.mxu0 0.0
    %1375 = vmatpush1.msra.mxu0 0.0
    %1376 = vmatprep.subr.mxu0 0.0
    %1377 = vmatpush1.msra.mxu0 %v1346
    %1378 = vmatprep.subr.mxu0 0.0
    %1379 = vmatpush1.msra.mxu0 %v162
    %1380 = vmatprep.subr.mxu0 0.0
    %1381 = vmatpush2.msra.mxu0 0.0
    %1382 = vmatprep.subr.mxu0 0.0
    %1383 = vmatpush2.msra.mxu0 0.0
    %1384 = vmatprep.subr.mxu0 0.0
    %1385 = vmatpush2.msra.mxu0 0.0
    %1386 = vmatprep.subr.mxu0 0.0
    %1387 = vmatpush2.msra.mxu0 0.0
    %1388 = vmatprep.subr.mxu0 0.0
    %1389 = vmatpush2.msra.mxu0 0.0
    %1390 = vmatprep.subr.mxu0 0.0
    %1391 = vmatpush2.msra.mxu0 0.0
    %1392 = vmatprep.subr.mxu0 0.0
    %1393 = vmatpush2.msra.mxu0 0.0
    %1394 = vmatprep.subr.mxu0 0.0
    %1395 = vmatpush2.msra.mxu0 0.0
    %1396 = vmatprep.subr.mxu0 0.0
    %1397 = vmatpush2.msra.mxu0 0.0
    %1398 = vmatprep.subr.mxu0 0.0
    %1399 = vmatpush2.msra.mxu0 0.0
    %1400 = vmatprep.subr.mxu0 0.0
    %1401 = vmatpush2.msra.mxu0 0.0
    %1402 = vmatprep.subr.mxu0 0.0
    %1403 = vmatpush2.msra.mxu0 0.0
    %1404 = vmatprep.subr.mxu0 0.0
    %1405 = vmatpush2.msra.mxu0 0.0
    %1406 = vmatprep.subr.mxu0 0.0
    %1407 = vmatpush2.msra.mxu0 0.0
    %1408 = vmatprep.subr.mxu0 0.0
    %1409 = vmatpush2.msra.mxu0 0.0
    %1410 = vmatprep.subr.mxu0 0.0
    %1411 = vmatpush2.msra.mxu0 0.0
    %1412 = vmatprep.mubr.f32.mxu0 0.0
    %1413 = vmatmul.mubr.f32.gmra.mxu0 %v1342
    %v1414 = vpop.f32.mrf.mxu0
    %v1415 = vadd.f32 0.0, %v1414
    %v1416 = vpop.f32.mrf.mxu0
    %1417 = vdwg.mxu0
    %v1418 = vadd.f32 %v242, %v1415
    %v1419 = vxor.u32 %v1418, 2147483648
    %v1420 = vmul.f32 %v1419, 1.442695
    %v1421 = vpow.pop %v1420
    %v1422 = vadd.f32 %v1421, 1.0
    %v1423 = vrcp.pop %v1422
    %v1424 = vmul.f32 1.0, %v1423
    %v1425 = vtanh.pop %v1418
    %v1426 = vmul.f32 %v1424, 0.0
    %1428 = vrot.lane.b32.xlu0 %v1425, 98
    %v1429 = vpop.permute.xlu0 %1428
    %v1431 = vmul.f32 %v1424, %v1429
    %1433 = vrot.lane.b32.xlu0 %v1431, 15
    %v1434 = vpop.permute.xlu0 %1433
    %v1436 = vadd.f32 %v1426, %v1434
    %v1437 = vtanh.pop %v1436
    %1439 = vrot.lane.b32.xlu0 %v1437, 30
    %v1440 = vpop.permute.xlu0 %1439
    %v1442 = vmul.f32 %v1424, %v1440
    %1444 = vrot.lane.b32.xlu0 %v1442, 83
    %v1445 = vpop.permute.xlu0 %1444
    %v1446 = vsel %vm1340, %v1445, 0
    %1448 = vmatprep.subr.mxu0 0.0
    %1449 = vmatpush1.msra.mxu0 0.0
    %1450 = vmatprep.subr.mxu0 0.0
    %1451 = vmatpush1.msra.mxu0 0.0
    %1452 = vmatprep.subr.mxu0 0.0
    %1453 = vmatpush1.msra.mxu0 0.0
    %1454 = vmatprep.subr.mxu0 0.0
    %1455 = vmatpush1.msra.mxu0 0.0
    %1456 = vmatprep.subr.mxu0 0.0
    %1457 = vmatpush1.msra.mxu0 0.0
    %1458 = vmatprep.subr.mxu0 0.0
    %1459 = vmatpush1.msra.mxu0 0.0
    %1460 = vmatprep.subr.mxu0 0.0
    %1461 = vmatpush1.msra.mxu0 0.0
    %1462 = vmatprep.subr.mxu0 0.0
    %1463 = vmatpush1.msra.mxu0 0.0
    %1464 = vmatprep.subr.mxu0 0.0
    %1465 = vmatpush1.msra.mxu0 0.0
    %1466 = vmatprep.subr.mxu0 0.0
    %1467 = vmatpush1.msra.mxu0 0.0
    %1468 = vmatprep.subr.mxu0 0.0
    %1469 = vmatpush1.msra.mxu0 0.0
    %1470 = vmatprep.subr.mxu0 0.0
    %1471 = vmatpush1.msra.mxu0 0.0
    %1472 = vmatprep.subr.mxu0 0.0
    %1473 = vmatpush1.msra.mxu0 0.0
    %1474 = vmatprep.subr.mxu0 0.0
    %1475 = vmatpush1.msra.mxu0 0.0
    %1476 = vmatprep.subr.mxu0 0.0
    %1477 = vmatpush1.msra.mxu0 %v1346
    %1478 = vmatprep.subr.mxu0 0.0
    %1479 = vmatpush1.msra.mxu0 %v162
    %1480 = vmatprep.subr.mxu0 0.0
    %1481 = vmatpush2.msra.mxu0 0.0
    %1482 = vmatprep.subr.mxu0 0.0
    %1483 = vmatpush2.msra.mxu0 0.0
    %1484 = vmatprep.subr.mxu0 0.0
    %1485 = vmatpush2.msra.mxu0 0.0
    %1486 = vmatprep.subr.mxu0 0.0
    %1487 = vmatpush2.msra.mxu0 0.0
    %1488 = vmatprep.subr.mxu0 0.0
    %1489 = vmatpush2.msra.mxu0 0.0
    %1490 = vmatprep.subr.mxu0 0.0
    %1491 = vmatpush2.msra.mxu0 0.0
    %1492 = vmatprep.subr.mxu0 0.0
    %1493 = vmatpush2.msra.mxu0 0.0
    %1494 = vmatprep.subr.mxu0 0.0
    %1495 = vmatpush2.msra.mxu0 0.0
    %1496 = vmatprep.subr.mxu0 0.0
    %1497 = vmatpush2.msra.mxu0 0.0
    %1498 = vmatprep.subr.mxu0 0.0
    %1499 = vmatpush2.msra.mxu0 0.0
    %1500 = vmatprep.subr.mxu0 0.0
    %1501 = vmatpush2.msra.mxu0 0.0
    %1502 = vmatprep.subr.mxu0 0.0
    %1503 = vmatpush2.msra.mxu0 0.0
    %1504 = vmatprep.subr.mxu0 0.0
    %1505 = vmatpush2.msra.mxu0 0.0
    %1506 = vmatprep.subr.mxu0 0.0
    %1507 = vmatpush2.msra.mxu0 0.0
    %1508 = vmatprep.subr.mxu0 0.0
    %1509 = vmatpush2.msra.mxu0 0.0
    %1510 = vmatprep.subr.mxu0 0.0
    %1511 = vmatpush2.msra.mxu0 0.0
    %1512 = vmatprep.mubr.f32.mxu0 0.0
    %1513 = vmatmul.mubr.f32.gmra.mxu0 %v1446
    %v1514 = vpop.f32.mrf.mxu0
    %v1515 = vadd.f32 0.0, %v1514
    %v1516 = vpop.f32.mrf.mxu0
    %1517 = vdwg.mxu0
    %v1518 = vadd.f32 %v315, %v1515
    %v1519 = vxor.u32 %v1518, 2147483648
    %v1520 = vmul.f32 %v1519, 1.442695
    %v1521 = vpow.pop %v1520
    %v1522 = vadd.f32 %v1521, 1.0
    %v1523 = vrcp.pop %v1522
    %v1524 = vmul.f32 1.0, %v1523
    %v1525 = vtanh.pop %v1518
    %v1526 = vmul.f32 %v1524, %v1436
    %1528 = vrot.lane.b32.xlu0 %v1525, 98
    %v1529 = vpop.permute.xlu0 %1528
    %v1531 = vmul.f32 %v1524, %v1529
    %1533 = vrot.lane.b32.xlu0 %v1531, 15
    %v1534 = vpop.permute.xlu0 %1533
    %v1536 = vadd.f32 %v1526, %v1534
    %v1537 = vtanh.pop %v1536
    %1539 = vrot.lane.b32.xlu0 %v1537, 30
    %v1540 = vpop.permute.xlu0 %1539
    %v1542 = vmul.f32 %v1524, %v1540
    %1544 = vrot.lane.b32.xlu0 %v1542, 83
    %v1545 = vpop.permute.xlu0 %1544
    %v1546 = vsel %vm1340, %v1545, 0
    %1548 = vmatprep.subr.mxu0 0.0
    %1549 = vmatpush1.msra.mxu0 0.0
    %1550 = vmatprep.subr.mxu0 0.0
    %1551 = vmatpush1.msra.mxu0 0.0
    %1552 = vmatprep.subr.mxu0 0.0
    %1553 = vmatpush1.msra.mxu0 0.0
    %1554 = vmatprep.subr.mxu0 0.0
    %1555 = vmatpush1.msra.mxu0 0.0
    %1556 = vmatprep.subr.mxu0 0.0
    %1557 = vmatpush1.msra.mxu0 0.0
    %1558 = vmatprep.subr.mxu0 0.0
    %1559 = vmatpush1.msra.mxu0 0.0
    %1560 = vmatprep.subr.mxu0 0.0
    %1561 = vmatpush1.msra.mxu0 0.0
    %1562 = vmatprep.subr.mxu0 0.0
    %1563 = vmatpush1.msra.mxu0 0.0
    %1564 = vmatprep.subr.mxu0 0.0
    %1565 = vmatpush1.msra.mxu0 0.0
    %1566 = vmatprep.subr.mxu0 0.0
    %1567 = vmatpush1.msra.mxu0 0.0
    %1568 = vmatprep.subr.mxu0 0.0
    %1569 = vmatpush1.msra.mxu0 0.0
    %1570 = vmatprep.subr.mxu0 0.0
    %1571 = vmatpush1.msra.mxu0 0.0
    %1572 = vmatprep.subr.mxu0 0.0
    %1573 = vmatpush1.msra.mxu0 0.0
    %1574 = vmatprep.subr.mxu0 0.0
    %1575 = vmatpush1.msra.mxu0 0.0
    %1576 = vmatprep.subr.mxu0 0.0
    %1577 = vmatpush1.msra.mxu0 %v1346
    %1578 = vmatprep.subr.mxu0 0.0
    %1579 = vmatpush1.msra.mxu0 %v162
    %1580 = vmatprep.subr.mxu0 0.0
    %1581 = vmatpush2.msra.mxu0 0.0
    %1582 = vmatprep.subr.mxu0 0.0
    %1583 = vmatpush2.msra.mxu0 0.0
    %1584 = vmatprep.subr.mxu0 0.0
    %1585 = vmatpush2.msra.mxu0 0.0
    %1586 = vmatprep.subr.mxu0 0.0
    %1587 = vmatpush2.msra.mxu0 0.0
    %1588 = vmatprep.subr.mxu0 0.0
    %1589 = vmatpush2.msra.mxu0 0.0
    %1590 = vmatprep.subr.mxu0 0.0
    %1591 = vmatpush2.msra.mxu0 0.0
    %1592 = vmatprep.subr.mxu0 0.0
    %1593 = vmatpush2.msra.mxu0 0.0
    %1594 = vmatprep.subr.mxu0 0.0
    %1595 = vmatpush2.msra.mxu0 0.0
    %1596 = vmatprep.subr.mxu0 0.0
    %1597 = vmatpush2.msra.mxu0 0.0
    %1598 = vmatprep.subr.mxu0 0.0
    %1599 = vmatpush2.msra.mxu0 0.0
    %1600 = vmatprep.subr.mxu0 0.0
    %1601 = vmatpush2.msra.mxu0 0.0
    %1602 = vmatprep.subr.mxu0 0.0
    %1603 = vmatpush2.msra.mxu0 0.0
    %1604 = vmatprep.subr.mxu0 0.0
    %1605 = vmatpush2.msra.mxu0 0.0
    %1606 = vmatprep.subr.mxu0 0.0
    %1607 = vmatpush2.msra.mxu0 0.0
    %1608 = vmatprep.subr.mxu0 0.0
    %1609 = vmatpush2.msra.mxu0 0.0
    %1610 = vmatprep.subr.mxu0 0.0
    %1611 = vmatpush2.msra.mxu0 0.0
    %1612 = vmatprep.mubr.f32.mxu0 0.0
    %1613 = vmatmul.mubr.f32.gmra.mxu0 %v1546
    %v1614 = vpop.f32.mrf.mxu0
    %v1615 = vadd.f32 0.0, %v1614
    %v1616 = vpop.f32.mrf.mxu0
    %1617 = vdwg.mxu0
    %v1618 = vadd.f32 %v388, %v1615
    %v1619 = vxor.u32 %v1618, 2147483648
    %v1620 = vmul.f32 %v1619, 1.442695
    %v1621 = vpow.pop %v1620
    %v1622 = vadd.f32 %v1621, 1.0
    %v1623 = vrcp.pop %v1622
    %v1624 = vmul.f32 1.0, %v1623
    %v1625 = vtanh.pop %v1618
    %v1626 = vmul.f32 %v1624, %v1536
    %1628 = vrot.lane.b32.xlu0 %v1625, 98
    %v1629 = vpop.permute.xlu0 %1628
    %v1631 = vmul.f32 %v1624, %v1629
    %1633 = vrot.lane.b32.xlu0 %v1631, 15
    %v1634 = vpop.permute.xlu0 %1633
    %v1636 = vadd.f32 %v1626, %v1634
    %v1637 = vtanh.pop %v1636
    %1639 = vrot.lane.b32.xlu0 %v1637, 30
    %v1640 = vpop.permute.xlu0 %1639
    %v1642 = vmul.f32 %v1624, %v1640
    %1644 = vrot.lane.b32.xlu0 %v1642, 83
    %v1645 = vpop.permute.xlu0 %1644
    %v1646 = vsel %vm1340, %v1645, 0
    %1648 = vmatprep.subr.mxu0 0.0
    %1649 = vmatpush1.msra.mxu0 0.0
    %1650 = vmatprep.subr.mxu0 0.0
    %1651 = vmatpush1.msra.mxu0 0.0
    %1652 = vmatprep.subr.mxu0 0.0
    %1653 = vmatpush1.msra.mxu0 0.0
    %1654 = vmatprep.subr.mxu0 0.0
    %1655 = vmatpush1.msra.mxu0 0.0
    %1656 = vmatprep.subr.mxu0 0.0
    %1657 = vmatpush1.msra.mxu0 0.0
    %1658 = vmatprep.subr.mxu0 0.0
    %1659 = vmatpush1.msra.mxu0 0.0
    %1660 = vmatprep.subr.mxu0 0.0
    %1661 = vmatpush1.msra.mxu0 0.0
    %1662 = vmatprep.subr.mxu0 0.0
    %1663 = vmatpush1.msra.mxu0 0.0
    %1664 = vmatprep.subr.mxu0 0.0
    %1665 = vmatpush1.msra.mxu0 0.0
    %1666 = vmatprep.subr.mxu0 0.0
    %1667 = vmatpush1.msra.mxu0 0.0
    %1668 = vmatprep.subr.mxu0 0.0
    %1669 = vmatpush1.msra.mxu0 0.0
    %1670 = vmatprep.subr.mxu0 0.0
    %1671 = vmatpush1.msra.mxu0 0.0
    %1672 = vmatprep.subr.mxu0 0.0
    %1673 = vmatpush1.msra.mxu0 0.0
    %1674 = vmatprep.subr.mxu0 0.0
    %1675 = vmatpush1.msra.mxu0 0.0
    %1676 = vmatprep.subr.mxu0 0.0
    %1677 = vmatpush1.msra.mxu0 %v1346
    %1678 = vmatprep.subr.mxu0 0.0
    %1679 = vmatpush1.msra.mxu0 %v162
    %1680 = vmatprep.subr.mxu0 0.0
    %1681 = vmatpush2.msra.mxu0 0.0
    %1682 = vmatprep.subr.mxu0 0.0
    %1683 = vmatpush2.msra.mxu0 0.0
    %1684 = vmatprep.subr.mxu0 0.0
    %1685 = vmatpush2.msra.mxu0 0.0
    %1686 = vmatprep.subr.mxu0 0.0
    %1687 = vmatpush2.msra.mxu0 0.0
    %1688 = vmatprep.subr.mxu0 0.0
    %1689 = vmatpush2.msra.mxu0 0.0
    %1690 = vmatprep.subr.mxu0 0.0
    %1691 = vmatpush2.msra.mxu0 0.0
    %1692 = vmatprep.subr.mxu0 0.0
    %1693 = vmatpush2.msra.mxu0 0.0
    %1694 = vmatprep.subr.mxu0 0.0
    %1695 = vmatpush2.msra.mxu0 0.0
    %1696 = vmatprep.subr.mxu0 0.0
    %1697 = vmatpush2.msra.mxu0 0.0
    %1698 = vmatprep.subr.mxu0 0.0
    %1699 = vmatpush2.msra.mxu0 0.0
    %1700 = vmatprep.subr.mxu0 0.0
    %1701 = vmatpush2.msra.mxu0 0.0
    %1702 = vmatprep.subr.mxu0 0.0
    %1703 = vmatpush2.msra.mxu0 0.0
    %1704 = vmatprep.subr.mxu0 0.0
    %1705 = vmatpush2.msra.mxu0 0.0
    %1706 = vmatprep.subr.mxu0 0.0
    %1707 = vmatpush2.msra.mxu0 0.0
    %1708 = vmatprep.subr.mxu0 0.0
    %1709 = vmatpush2.msra.mxu0 0.0
    %1710 = vmatprep.subr.mxu0 0.0
    %1711 = vmatpush2.msra.mxu0 0.0
    %1712 = vmatprep.mubr.f32.mxu0 0.0
    %1713 = vmatmul.mubr.f32.gmra.mxu0 %v1646
    %v1714 = vpop.f32.mrf.mxu0
    %v1715 = vadd.f32 0.0, %v1714
    %v1716 = vpop.f32.mrf.mxu0
    %1717 = vdwg.mxu0
    %v1718 = vadd.f32 %v461, %v1715
    %v1719 = vxor.u32 %v1718, 2147483648
    %v1720 = vmul.f32 %v1719, 1.442695
    %v1721 = vpow.pop %v1720
    %v1722 = vadd.f32 %v1721, 1.0
    %v1723 = vrcp.pop %v1722
    %v1724 = vmul.f32 1.0, %v1723
    %v1725 = vtanh.pop %v1718
    %v1726 = vmul.f32 %v1724, %v1636
    %1728 = vrot.lane.b32.xlu0 %v1725, 98
    %v1729 = vpop.permute.xlu0 %1728
    %v1731 = vmul.f32 %v1724, %v1729
    %1733 = vrot.lane.b32.xlu0 %v1731, 15
    %v1734 = vpop.permute.xlu0 %1733
    %v1736 = vadd.f32 %v1726, %v1734
    %v1737 = vtanh.pop %v1736
    %1739 = vrot.lane.b32.xlu0 %v1737, 30
    %v1740 = vpop.permute.xlu0 %1739
    %v1742 = vmul.f32 %v1724, %v1740
    %1744 = vrot.lane.b32.xlu0 %v1742, 83
    %v1745 = vpop.permute.xlu0 %1744
    %v1746 = vsel %vm1340, %v1745, 0
    %1748 = vmatprep.subr.mxu0 0.0
    %1749 = vmatpush1.msra.mxu0 0.0
    %1750 = vmatprep.subr.mxu0 0.0
    %1751 = vmatpush1.msra.mxu0 0.0
    %1752 = vmatprep.subr.mxu0 0.0
    %1753 = vmatpush1.msra.mxu0 0.0
    %1754 = vmatprep.subr.mxu0 0.0
    %1755 = vmatpush1.msra.mxu0 0.0
    %1756 = vmatprep.subr.mxu0 0.0
    %1757 = vmatpush1.msra.mxu0 0.0
    %1758 = vmatprep.subr.mxu0 0.0
    %1759 = vmatpush1.msra.mxu0 0.0
    %1760 = vmatprep.subr.mxu0 0.0
    %1761 = vmatpush1.msra.mxu0 0.0
    %1762 = vmatprep.subr.mxu0 0.0
    %1763 = vmatpush1.msra.mxu0 0.0
    %1764 = vmatprep.subr.mxu0 0.0
    %1765 = vmatpush1.msra.mxu0 0.0
    %1766 = vmatprep.subr.mxu0 0.0
    %1767 = vmatpush1.msra.mxu0 0.0
    %1768 = vmatprep.subr.mxu0 0.0
    %1769 = vmatpush1.msra.mxu0 0.0
    %1770 = vmatprep.subr.mxu0 0.0
    %1771 = vmatpush1.msra.mxu0 0.0
    %1772 = vmatprep.subr.mxu0 0.0
    %1773 = vmatpush1.msra.mxu0 0.0
    %1774 = vmatprep.subr.mxu0 0.0
    %1775 = vmatpush1.msra.mxu0 0.0
    %1776 = vmatprep.subr.mxu0 0.0
    %1777 = vmatpush1.msra.mxu0 %v1346
    %1778 = vmatprep.subr.mxu0 0.0
    %1779 = vmatpush1.msra.mxu0 %v162
    %1780 = vmatprep.subr.mxu0 0.0
    %1781 = vmatpush2.msra.mxu0 0.0
    %1782 = vmatprep.subr.mxu0 0.0
    %1783 = vmatpush2.msra.mxu0 0.0
    %1784 = vmatprep.subr.mxu0 0.0
    %1785 = vmatpush2.msra.mxu0 0.0
    %1786 = vmatprep.subr.mxu0 0.0
    %1787 = vmatpush2.msra.mxu0 0.0
    %1788 = vmatprep.subr.mxu0 0.0
    %1789 = vmatpush2.msra.mxu0 0.0
    %1790 = vmatprep.subr.mxu0 0.0
    %1791 = vmatpush2.msra.mxu0 0.0
    %1792 = vmatprep.subr.mxu0 0.0
    %1793 = vmatpush2.msra.mxu0 0.0
    %1794 = vmatprep.subr.mxu0 0.0
    %1795 = vmatpush2.msra.mxu0 0.0
    %1796 = vmatprep.subr.mxu0 0.0
    %1797 = vmatpush2.msra.mxu0 0.0
    %1798 = vmatprep.subr.mxu0 0.0
    %1799 = vmatpush2.msra.mxu0 0.0
    %1800 = vmatprep.subr.mxu0 0.0
    %1801 = vmatpush2.msra.mxu0 0.0
    %1802 = vmatprep.subr.mxu0 0.0
    %1803 = vmatpush2.msra.mxu0 0.0
    %1804 = vmatprep.subr.mxu0 0.0
    %1805 = vmatpush2.msra.mxu0 0.0
    %1806 = vmatprep.subr.mxu0 0.0
    %1807 = vmatpush2.msra.mxu0 0.0
    %1808 = vmatprep.subr.mxu0 0.0
    %1809 = vmatpush2.msra.mxu0 0.0
    %1810 = vmatprep.subr.mxu0 0.0
    %1811 = vmatpush2.msra.mxu0 0.0
    %1812 = vmatprep.mubr.f32.mxu0 0.0
    %1813 = vmatmul.mubr.f32.gmra.mxu0 %v1746
    %v1814 = vpop.f32.mrf.mxu0
    %v1815 = vadd.f32 0.0, %v1814
    %v1816 = vpop.f32.mrf.mxu0
    %1817 = vdwg.mxu0
    %v1818 = vadd.f32 %v534, %v1815
    %v1819 = vxor.u32 %v1818, 2147483648
    %v1820 = vmul.f32 %v1819, 1.442695
    %v1821 = vpow.pop %v1820
    %v1822 = vadd.f32 %v1821, 1.0
    %v1823 = vrcp.pop %v1822
    %v1824 = vmul.f32 1.0, %v1823
    %v1825 = vtanh.pop %v1818
    %v1826 = vmul.f32 %v1824, %v1736
    %1828 = vrot.lane.b32.xlu0 %v1825, 98
    %v1829 = vpop.permute.xlu0 %1828
    %v1831 = vmul.f32 %v1824, %v1829
    %1833 = vrot.lane.b32.xlu0 %v1831, 15
    %v1834 = vpop.permute.xlu0 %1833
    %v1836 = vadd.f32 %v1826, %v1834
    %v1837 = vtanh.pop %v1836
    %1839 = vrot.lane.b32.xlu0 %v1837, 30
    %v1840 = vpop.permute.xlu0 %1839
    %v1842 = vmul.f32 %v1824, %v1840
    %1844 = vrot.lane.b32.xlu0 %v1842, 83
    %v1845 = vpop.permute.xlu0 %1844
    %v1846 = vsel %vm1340, %v1845, 0
    %1848 = vmatprep.subr.mxu0 0.0
    %1849 = vmatpush1.msra.mxu0 0.0
    %1850 = vmatprep.subr.mxu0 0.0
    %1851 = vmatpush1.msra.mxu0 0.0
    %1852 = vmatprep.subr.mxu0 0.0
    %1853 = vmatpush1.msra.mxu0 0.0
    %1854 = vmatprep.subr.mxu0 0.0
    %1855 = vmatpush1.msra.mxu0 0.0
    %1856 = vmatprep.subr.mxu0 0.0
    %1857 = vmatpush1.msra.mxu0 0.0
    %1858 = vmatprep.subr.mxu0 0.0
    %1859 = vmatpush1.msra.mxu0 0.0
    %1860 = vmatprep.subr.mxu0 0.0
    %1861 = vmatpush1.msra.mxu0 0.0
    %1862 = vmatprep.subr.mxu0 0.0
    %1863 = vmatpush1.msra.mxu0 0.0
    %1864 = vmatprep.subr.mxu0 0.0
    %1865 = vmatpush1.msra.mxu0 0.0
    %1866 = vmatprep.subr.mxu0 0.0
    %1867 = vmatpush1.msra.mxu0 0.0
    %1868 = vmatprep.subr.mxu0 0.0
    %1869 = vmatpush1.msra.mxu0 0.0
    %1870 = vmatprep.subr.mxu0 0.0
    %1871 = vmatpush1.msra.mxu0 0.0
    %1872 = vmatprep.subr.mxu0 0.0
    %1873 = vmatpush1.msra.mxu0 0.0
    %1874 = vmatprep.subr.mxu0 0.0
    %1875 = vmatpush1.msra.mxu0 0.0
    %1876 = vmatprep.subr.mxu0 0.0
    %1877 = vmatpush1.msra.mxu0 %v1346
    %1878 = vmatprep.subr.mxu0 0.0
    %1879 = vmatpush1.msra.mxu0 %v162
    %1880 = vmatprep.subr.mxu0 0.0
    %1881 = vmatpush2.msra.mxu0 0.0
    %1882 = vmatprep.subr.mxu0 0.0
    %1883 = vmatpush2.msra.mxu0 0.0
    %1884 = vmatprep.subr.mxu0 0.0
    %1885 = vmatpush2.msra.mxu0 0.0
    %1886 = vmatprep.subr.mxu0 0.0
    %1887 = vmatpush2.msra.mxu0 0.0
    %1888 = vmatprep.subr.mxu0 0.0
    %1889 = vmatpush2.msra.mxu0 0.0
    %1890 = vmatprep.subr.mxu0 0.0
    %1891 = vmatpush2.msra.mxu0 0.0
    %1892 = vmatprep.subr.mxu0 0.0
    %1893 = vmatpush2.msra.mxu0 0.0
    %1894 = vmatprep.subr.mxu0 0.0
    %1895 = vmatpush2.msra.mxu0 0.0
    %1896 = vmatprep.subr.mxu0 0.0
    %1897 = vmatpush2.msra.mxu0 0.0
    %1898 = vmatprep.subr.mxu0 0.0
    %1899 = vmatpush2.msra.mxu0 0.0
    %1900 = vmatprep.subr.mxu0 0.0
    %1901 = vmatpush2.msra.mxu0 0.0
    %1902 = vmatprep.subr.mxu0 0.0
    %1903 = vmatpush2.msra.mxu0 0.0
    %1904 = vmatprep.subr.mxu0 0.0
    %1905 = vmatpush2.msra.mxu0 0.0
    %1906 = vmatprep.subr.mxu0 0.0
    %1907 = vmatpush2.msra.mxu0 0.0
    %1908 = vmatprep.subr.mxu0 0.0
    %1909 = vmatpush2.msra.mxu0 0.0
    %1910 = vmatprep.subr.mxu0 0.0
    %1911 = vmatpush2.msra.mxu0 0.0
    %1912 = vmatprep.mubr.f32.mxu0 0.0
    %1913 = vmatmul.mubr.f32.gmra.mxu0 %v1846
    %v1914 = vpop.f32.mrf.mxu0
    %v1915 = vadd.f32 0.0, %v1914
    %v1916 = vpop.f32.mrf.mxu0
    %1917 = vdwg.mxu0
    %v1918 = vadd.f32 %v607, %v1915
    %v1919 = vxor.u32 %v1918, 2147483648
    %v1920 = vmul.f32 %v1919, 1.442695
    %v1921 = vpow.pop %v1920
    %v1922 = vadd.f32 %v1921, 1.0
    %v1923 = vrcp.pop %v1922
    %v1924 = vmul.f32 1.0, %v1923
    %v1925 = vtanh.pop %v1918
    %v1926 = vmul.f32 %v1924, %v1836
    %1928 = vrot.lane.b32.xlu0 %v1925, 98
    %v1929 = vpop.permute.xlu0 %1928
    %v1931 = vmul.f32 %v1924, %v1929
    %1933 = vrot.lane.b32.xlu0 %v1931, 15
    %v1934 = vpop.permute.xlu0 %1933
    %v1936 = vadd.f32 %v1926, %v1934
    %v1937 = vtanh.pop %v1936
    %1939 = vrot.lane.b32.xlu0 %v1937, 30
    %v1940 = vpop.permute.xlu0 %1939
    %v1942 = vmul.f32 %v1924, %v1940
    %1944 = vrot.lane.b32.xlu0 %v1942, 83
    %v1945 = vpop.permute.xlu0 %1944
    %v1946 = vsel %vm1340, %v1945, 0
    %1948 = vmatprep.subr.mxu0 0.0
    %1949 = vmatpush1.msra.mxu0 0.0
    %1950 = vmatprep.subr.mxu0 0.0
    %1951 = vmatpush1.msra.mxu0 0.0
    %1952 = vmatprep.subr.mxu0 0.0
    %1953 = vmatpush1.msra.mxu0 0.0
    %1954 = vmatprep.subr.mxu0 0.0
    %1955 = vmatpush1.msra.mxu0 0.0
    %1956 = vmatprep.subr.mxu0 0.0
    %1957 = vmatpush1.msra.mxu0 0.0
    %1958 = vmatprep.subr.mxu0 0.0
    %1959 = vmatpush1.msra.mxu0 0.0
    %1960 = vmatprep.subr.mxu0 0.0
    %1961 = vmatpush1.msra.mxu0 0.0
    %1962 = vmatprep.subr.mxu0 0.0
    %1963 = vmatpush1.msra.mxu0 0.0
    %1964 = vmatprep.subr.mxu0 0.0
    %1965 = vmatpush1.msra.mxu0 0.0
    %1966 = vmatprep.subr.mxu0 0.0
    %1967 = vmatpush1.msra.mxu0 0.0
    %1968 = vmatprep.subr.mxu0 0.0
    %1969 = vmatpush1.msra.mxu0 0.0
    %1970 = vmatprep.subr.mxu0 0.0
    %1971 = vmatpush1.msra.mxu0 0.0
    %1972 = vmatprep.subr.mxu0 0.0
    %1973 = vmatpush1.msra.mxu0 0.0
    %1974 = vmatprep.subr.mxu0 0.0
    %1975 = vmatpush1.msra.mxu0 0.0
    %1976 = vmatprep.subr.mxu0 0.0
    %1977 = vmatpush1.msra.mxu0 %v1346
    %1978 = vmatprep.subr.mxu0 0.0
    %1979 = vmatpush1.msra.mxu0 %v162
    %1980 = vmatprep.subr.mxu0 0.0
    %1981 = vmatpush2.msra.mxu0 0.0
    %1982 = vmatprep.subr.mxu0 0.0
    %1983 = vmatpush2.msra.mxu0 0.0
    %1984 = vmatprep.subr.mxu0 0.0
    %1985 = vmatpush2.msra.mxu0 0.0
    %1986 = vmatprep.subr.mxu0 0.0
    %1987 = vmatpush2.msra.mxu0 0.0
    %1988 = vmatprep.subr.mxu0 0.0
    %1989 = vmatpush2.msra.mxu0 0.0
    %1990 = vmatprep.subr.mxu0 0.0
    %1991 = vmatpush2.msra.mxu0 0.0
    %1992 = vmatprep.subr.mxu0 0.0
    %1993 = vmatpush2.msra.mxu0 0.0
    %1994 = vmatprep.subr.mxu0 0.0
    %1995 = vmatpush2.msra.mxu0 0.0
    %1996 = vmatprep.subr.mxu0 0.0
    %1997 = vmatpush2.msra.mxu0 0.0
    %1998 = vmatprep.subr.mxu0 0.0
    %1999 = vmatpush2.msra.mxu0 0.0
    %2000 = vmatprep.subr.mxu0 0.0
    %2001 = vmatpush2.msra.mxu0 0.0
    %2002 = vmatprep.subr.mxu0 0.0
    %2003 = vmatpush2.msra.mxu0 0.0
    %2004 = vmatprep.subr.mxu0 0.0
    %2005 = vmatpush2.msra.mxu0 0.0
    %2006 = vmatprep.subr.mxu0 0.0
    %2007 = vmatpush2.msra.mxu0 0.0
    %2008 = vmatprep.subr.mxu0 0.0
    %2009 = vmatpush2.msra.mxu0 0.0
    %2010 = vmatprep.subr.mxu0 0.0
    %2011 = vmatpush2.msra.mxu0 0.0
    %2012 = vmatprep.mubr.f32.mxu0 0.0
    %2013 = vmatmul.mubr.f32.gmra.mxu0 %v1946
    %v2014 = vpop.f32.mrf.mxu0
    %v2015 = vadd.f32 0.0, %v2014
    %v2016 = vpop.f32.mrf.mxu0
    %2017 = vdwg.mxu0
    %v2018 = vadd.f32 %v680, %v2015
    %v2019 = vxor.u32 %v2018, 2147483648
    %v2020 = vmul.f32 %v2019, 1.442695
    %v2021 = vpow.pop %v2020
    %v2022 = vadd.f32 %v2021, 1.0
    %v2023 = vrcp.pop %v2022
    %v2024 = vmul.f32 1.0, %v2023
    %v2025 = vtanh.pop %v2018
    %v2026 = vmul.f32 %v2024, %v1936
    %2028 = vrot.lane.b32.xlu0 %v2025, 98
    %v2029 = vpop.permute.xlu0 %2028
    %v2031 = vmul.f32 %v2024, %v2029
    %2033 = vrot.lane.b32.xlu0 %v2031, 15
    %v2034 = vpop.permute.xlu0 %2033
    %v2036 = vadd.f32 %v2026, %v2034
    %v2037 = vtanh.pop %v2036
    %2039 = vrot.lane.b32.xlu0 %v2037, 30
    %v2040 = vpop.permute.xlu0 %2039
    %v2042 = vmul.f32 %v2024, %v2040
    %2044 = vrot.lane.b32.xlu0 %v2042, 83
    %v2045 = vpop.permute.xlu0 %2044
    %v2046 = vsel %vm1340, %v2045, 0
    %2048 = vmatprep.subr.mxu0 0.0
    %2049 = vmatpush1.msra.mxu0 0.0
    %2050 = vmatprep.subr.mxu0 0.0
    %2051 = vmatpush1.msra.mxu0 0.0
    %2052 = vmatprep.subr.mxu0 0.0
    %2053 = vmatpush1.msra.mxu0 0.0
    %2054 = vmatprep.subr.mxu0 0.0
    %2055 = vmatpush1.msra.mxu0 0.0
    %2056 = vmatprep.subr.mxu0 0.0
    %2057 = vmatpush1.msra.mxu0 0.0
    %2058 = vmatprep.subr.mxu0 0.0
    %2059 = vmatpush1.msra.mxu0 0.0
    %2060 = vmatprep.subr.mxu0 0.0
    %2061 = vmatpush1.msra.mxu0 0.0
    %2062 = vmatprep.subr.mxu0 0.0
    %2063 = vmatpush1.msra.mxu0 0.0
    %2064 = vmatprep.subr.mxu0 0.0
    %2065 = vmatpush1.msra.mxu0 0.0
    %2066 = vmatprep.subr.mxu0 0.0
    %2067 = vmatpush1.msra.mxu0 0.0
    %2068 = vmatprep.subr.mxu0 0.0
    %2069 = vmatpush1.msra.mxu0 0.0
    %2070 = vmatprep.subr.mxu0 0.0
    %2071 = vmatpush1.msra.mxu0 0.0
    %2072 = vmatprep.subr.mxu0 0.0
    %2073 = vmatpush1.msra.mxu0 0.0
    %2074 = vmatprep.subr.mxu0 0.0
    %2075 = vmatpush1.msra.mxu0 0.0
    %2076 = vmatprep.subr.mxu0 0.0
    %2077 = vmatpush1.msra.mxu0 %v1346
    %2078 = vmatprep.subr.mxu0 0.0
    %2079 = vmatpush1.msra.mxu0 %v162
    %2080 = vmatprep.subr.mxu0 0.0
    %2081 = vmatpush2.msra.mxu0 0.0
    %2082 = vmatprep.subr.mxu0 0.0
    %2083 = vmatpush2.msra.mxu0 0.0
    %2084 = vmatprep.subr.mxu0 0.0
    %2085 = vmatpush2.msra.mxu0 0.0
    %2086 = vmatprep.subr.mxu0 0.0
    %2087 = vmatpush2.msra.mxu0 0.0
    %2088 = vmatprep.subr.mxu0 0.0
    %2089 = vmatpush2.msra.mxu0 0.0
    %2090 = vmatprep.subr.mxu0 0.0
    %2091 = vmatpush2.msra.mxu0 0.0
    %2092 = vmatprep.subr.mxu0 0.0
    %2093 = vmatpush2.msra.mxu0 0.0
    %2094 = vmatprep.subr.mxu0 0.0
    %2095 = vmatpush2.msra.mxu0 0.0
    %2096 = vmatprep.subr.mxu0 0.0
    %2097 = vmatpush2.msra.mxu0 0.0
    %2098 = vmatprep.subr.mxu0 0.0
    %2099 = vmatpush2.msra.mxu0 0.0
    %2100 = vmatprep.subr.mxu0 0.0
    %2101 = vmatpush2.msra.mxu0 0.0
    %2102 = vmatprep.subr.mxu0 0.0
    %2103 = vmatpush2.msra.mxu0 0.0
    %2104 = vmatprep.subr.mxu0 0.0
    %2105 = vmatpush2.msra.mxu0 0.0
    %2106 = vmatprep.subr.mxu0 0.0
    %2107 = vmatpush2.msra.mxu0 0.0
    %2108 = vmatprep.subr.mxu0 0.0
    %2109 = vmatpush2.msra.mxu0 0.0
    %2110 = vmatprep.subr.mxu0 0.0
    %2111 = vmatpush2.msra.mxu0 0.0
    %2112 = vmatprep.mubr.f32.mxu0 0.0
    %2113 = vmatmul.mubr.f32.gmra.mxu0 %v2046
    %v2114 = vpop.f32.mrf.mxu0
    %v2115 = vadd.f32 0.0, %v2114
    %v2116 = vpop.f32.mrf.mxu0
    %2117 = vdwg.mxu0
    %v2118 = vadd.f32 %v753, %v2115
    %v2119 = vxor.u32 %v2118, 2147483648
    %v2120 = vmul.f32 %v2119, 1.442695
    %v2121 = vpow.pop %v2120
    %v2122 = vadd.f32 %v2121, 1.0
    %v2123 = vrcp.pop %v2122
    %v2124 = vmul.f32 1.0, %v2123
    %v2125 = vtanh.pop %v2118
    %v2126 = vmul.f32 %v2124, %v2036
    %2128 = vrot.lane.b32.xlu0 %v2125, 98
    %v2129 = vpop.permute.xlu0 %2128
    %v2131 = vmul.f32 %v2124, %v2129
    %2133 = vrot.lane.b32.xlu0 %v2131, 15
    %v2134 = vpop.permute.xlu0 %2133
    %v2136 = vadd.f32 %v2126, %v2134
    %v2137 = vtanh.pop %v2136
    %2139 = vrot.lane.b32.xlu0 %v2137, 30
    %v2140 = vpop.permute.xlu0 %2139
    %v2142 = vmul.f32 %v2124, %v2140
    %2144 = vrot.lane.b32.xlu0 %v2142, 83
    %v2145 = vpop.permute.xlu0 %2144
    %v2146 = vsel %vm1340, %v2145, 0
    %2148 = vmatprep.subr.mxu0 0.0
    %2149 = vmatpush1.msra.mxu0 0.0
    %2150 = vmatprep.subr.mxu0 0.0
    %2151 = vmatpush1.msra.mxu0 0.0
    %2152 = vmatprep.subr.mxu0 0.0
    %2153 = vmatpush1.msra.mxu0 0.0
    %2154 = vmatprep.subr.mxu0 0.0
    %2155 = vmatpush1.msra.mxu0 0.0
    %2156 = vmatprep.subr.mxu0 0.0
    %2157 = vmatpush1.msra.mxu0 0.0
    %2158 = vmatprep.subr.mxu0 0.0
    %2159 = vmatpush1.msra.mxu0 0.0
    %2160 = vmatprep.subr.mxu0 0.0
    %2161 = vmatpush1.msra.mxu0 0.0
    %2162 = vmatprep.subr.mxu0 0.0
    %2163 = vmatpush1.msra.mxu0 0.0
    %2164 = vmatprep.subr.mxu0 0.0
    %2165 = vmatpush1.msra.mxu0 0.0
    %2166 = vmatprep.subr.mxu0 0.0
    %2167 = vmatpush1.msra.mxu0 0.0
    %2168 = vmatprep.subr.mxu0 0.0
    %2169 = vmatpush1.msra.mxu0 0.0
    %2170 = vmatprep.subr.mxu0 0.0
    %2171 = vmatpush1.msra.mxu0 0.0
    %2172 = vmatprep.subr.mxu0 0.0
    %2173 = vmatpush1.msra.mxu0 0.0
    %2174 = vmatprep.subr.mxu0 0.0
    %2175 = vmatpush1.msra.mxu0 0.0
    %2176 = vmatprep.subr.mxu0 0.0
    %2177 = vmatpush1.msra.mxu0 %v1346
    %2178 = vmatprep.subr.mxu0 0.0
    %2179 = vmatpush1.msra.mxu0 %v162
    %2180 = vmatprep.subr.mxu0 0.0
    %2181 = vmatpush2.msra.mxu0 0.0
    %2182 = vmatprep.subr.mxu0 0.0
    %2183 = vmatpush2.msra.mxu0 0.0
    %2184 = vmatprep.subr.mxu0 0.0
    %2185 = vmatpush2.msra.mxu0 0.0
    %2186 = vmatprep.subr.mxu0 0.0
    %2187 = vmatpush2.msra.mxu0 0.0
    %2188 = vmatprep.subr.mxu0 0.0
    %2189 = vmatpush2.msra.mxu0 0.0
    %2190 = vmatprep.subr.mxu0 0.0
    %2191 = vmatpush2.msra.mxu0 0.0
    %2192 = vmatprep.subr.mxu0 0.0
    %2193 = vmatpush2.msra.mxu0 0.0
    %2194 = vmatprep.subr.mxu0 0.0
    %2195 = vmatpush2.msra.mxu0 0.0
    %2196 = vmatprep.subr.mxu0 0.0
    %2197 = vmatpush2.msra.mxu0 0.0
    %2198 = vmatprep.subr.mxu0 0.0
    %2199 = vmatpush2.msra.mxu0 0.0
    %2200 = vmatprep.subr.mxu0 0.0
    %2201 = vmatpush2.msra.mxu0 0.0
    %2202 = vmatprep.subr.mxu0 0.0
    %2203 = vmatpush2.msra.mxu0 0.0
    %2204 = vmatprep.subr.mxu0 0.0
    %2205 = vmatpush2.msra.mxu0 0.0
    %2206 = vmatprep.subr.mxu0 0.0
    %2207 = vmatpush2.msra.mxu0 0.0
    %2208 = vmatprep.subr.mxu0 0.0
    %2209 = vmatpush2.msra.mxu0 0.0
    %2210 = vmatprep.subr.mxu0 0.0
    %2211 = vmatpush2.msra.mxu0 0.0
    %2212 = vmatprep.mubr.f32.mxu0 0.0
    %2213 = vmatmul.mubr.f32.gmra.mxu0 %v2146
    %v2214 = vpop.f32.mrf.mxu0
    %v2215 = vadd.f32 0.0, %v2214
    %v2216 = vpop.f32.mrf.mxu0
    %2217 = vdwg.mxu0
    %v2218 = vadd.f32 %v826, %v2215
    %v2219 = vxor.u32 %v2218, 2147483648
    %v2220 = vmul.f32 %v2219, 1.442695
    %v2221 = vpow.pop %v2220
    %v2222 = vadd.f32 %v2221, 1.0
    %v2223 = vrcp.pop %v2222
    %v2224 = vmul.f32 1.0, %v2223
    %v2225 = vtanh.pop %v2218
    %v2226 = vmul.f32 %v2224, %v2136
    %2228 = vrot.lane.b32.xlu0 %v2225, 98
    %v2229 = vpop.permute.xlu0 %2228
    %v2231 = vmul.f32 %v2224, %v2229
    %2233 = vrot.lane.b32.xlu0 %v2231, 15
    %v2234 = vpop.permute.xlu0 %2233
    %v2236 = vadd.f32 %v2226, %v2234
    %v2237 = vtanh.pop %v2236
    %2239 = vrot.lane.b32.xlu0 %v2237, 30
    %v2240 = vpop.permute.xlu0 %2239
    %v2242 = vmul.f32 %v2224, %v2240
    %2244 = vrot.lane.b32.xlu0 %v2242, 83
    %v2245 = vpop.permute.xlu0 %2244
    %v2246 = vsel %vm1340, %v2245, 0
    %2248 = vmatprep.subr.mxu0 0.0
    %2249 = vmatpush1.msra.mxu0 0.0
    %2250 = vmatprep.subr.mxu0 0.0
    %2251 = vmatpush1.msra.mxu0 0.0
    %2252 = vmatprep.subr.mxu0 0.0
    %2253 = vmatpush1.msra.mxu0 0.0
    %2254 = vmatprep.subr.mxu0 0.0
    %2255 = vmatpush1.msra.mxu0 0.0
    %2256 = vmatprep.subr.mxu0 0.0
    %2257 = vmatpush1.msra.mxu0 0.0
    %2258 = vmatprep.subr.mxu0 0.0
    %2259 = vmatpush1.msra.mxu0 0.0
    %2260 = vmatprep.subr.mxu0 0.0
    %2261 = vmatpush1.msra.mxu0 0.0
    %2262 = vmatprep.subr.mxu0 0.0
    %2263 = vmatpush1.msra.mxu0 0.0
    %2264 = vmatprep.subr.mxu0 0.0
    %2265 = vmatpush1.msra.mxu0 0.0
    %2266 = vmatprep.subr.mxu0 0.0
    %2267 = vmatpush1.msra.mxu0 0.0
    %2268 = vmatprep.subr.mxu0 0.0
    %2269 = vmatpush1.msra.mxu0 0.0
    %2270 = vmatprep.subr.mxu0 0.0
    %2271 = vmatpush1.msra.mxu0 0.0
    %2272 = vmatprep.subr.mxu0 0.0
    %2273 = vmatpush1.msra.mxu0 0.0
    %2274 = vmatprep.subr.mxu0 0.0
    %2275 = vmatpush1.msra.mxu0 0.0
    %2276 = vmatprep.subr.mxu0 0.0
    %2277 = vmatpush1.msra.mxu0 %v1346
    %2278 = vmatprep.subr.mxu0 0.0
    %2279 = vmatpush1.msra.mxu0 %v162
    %2280 = vmatprep.subr.mxu0 0.0
    %2281 = vmatpush2.msra.mxu0 0.0
    %2282 = vmatprep.subr.mxu0 0.0
    %2283 = vmatpush2.msra.mxu0 0.0
    %2284 = vmatprep.subr.mxu0 0.0
    %2285 = vmatpush2.msra.mxu0 0.0
    %2286 = vmatprep.subr.mxu0 0.0
    %2287 = vmatpush2.msra.mxu0 0.0
    %2288 = vmatprep.subr.mxu0 0.0
    %2289 = vmatpush2.msra.mxu0 0.0
    %2290 = vmatprep.subr.mxu0 0.0
    %2291 = vmatpush2.msra.mxu0 0.0
    %2292 = vmatprep.subr.mxu0 0.0
    %2293 = vmatpush2.msra.mxu0 0.0
    %2294 = vmatprep.subr.mxu0 0.0
    %2295 = vmatpush2.msra.mxu0 0.0
    %2296 = vmatprep.subr.mxu0 0.0
    %2297 = vmatpush2.msra.mxu0 0.0
    %2298 = vmatprep.subr.mxu0 0.0
    %2299 = vmatpush2.msra.mxu0 0.0
    %2300 = vmatprep.subr.mxu0 0.0
    %2301 = vmatpush2.msra.mxu0 0.0
    %2302 = vmatprep.subr.mxu0 0.0
    %2303 = vmatpush2.msra.mxu0 0.0
    %2304 = vmatprep.subr.mxu0 0.0
    %2305 = vmatpush2.msra.mxu0 0.0
    %2306 = vmatprep.subr.mxu0 0.0
    %2307 = vmatpush2.msra.mxu0 0.0
    %2308 = vmatprep.subr.mxu0 0.0
    %2309 = vmatpush2.msra.mxu0 0.0
    %2310 = vmatprep.subr.mxu0 0.0
    %2311 = vmatpush2.msra.mxu0 0.0
    %2312 = vmatprep.mubr.f32.mxu0 0.0
    %2313 = vmatmul.mubr.f32.gmra.mxu0 %v2246
    %v2314 = vpop.f32.mrf.mxu0
    %v2315 = vadd.f32 0.0, %v2314
    %v2316 = vpop.f32.mrf.mxu0
    %2317 = vdwg.mxu0
    %v2318 = vadd.f32 %v899, %v2315
    %v2319 = vxor.u32 %v2318, 2147483648
    %v2320 = vmul.f32 %v2319, 1.442695
    %v2321 = vpow.pop %v2320
    %v2322 = vadd.f32 %v2321, 1.0
    %v2323 = vrcp.pop %v2322
    %v2324 = vmul.f32 1.0, %v2323
    %v2325 = vtanh.pop %v2318
    %v2326 = vmul.f32 %v2324, %v2236
    %2328 = vrot.lane.b32.xlu0 %v2325, 98
    %v2329 = vpop.permute.xlu0 %2328
    %v2331 = vmul.f32 %v2324, %v2329
    %2333 = vrot.lane.b32.xlu0 %v2331, 15
    %v2334 = vpop.permute.xlu0 %2333
    %v2336 = vadd.f32 %v2326, %v2334
    %v2337 = vtanh.pop %v2336
    %2339 = vrot.lane.b32.xlu0 %v2337, 30
    %v2340 = vpop.permute.xlu0 %2339
    %v2342 = vmul.f32 %v2324, %v2340
    %2344 = vrot.lane.b32.xlu0 %v2342, 83
    %v2345 = vpop.permute.xlu0 %2344
    %v2346 = vsel %vm1340, %v2345, 0
    %2348 = vmatprep.subr.mxu0 0.0
    %2349 = vmatpush1.msra.mxu0 0.0
    %2350 = vmatprep.subr.mxu0 0.0
    %2351 = vmatpush1.msra.mxu0 0.0
    %2352 = vmatprep.subr.mxu0 0.0
    %2353 = vmatpush1.msra.mxu0 0.0
    %2354 = vmatprep.subr.mxu0 0.0
    %2355 = vmatpush1.msra.mxu0 0.0
    %2356 = vmatprep.subr.mxu0 0.0
    %2357 = vmatpush1.msra.mxu0 0.0
    %2358 = vmatprep.subr.mxu0 0.0
    %2359 = vmatpush1.msra.mxu0 0.0
    %2360 = vmatprep.subr.mxu0 0.0
    %2361 = vmatpush1.msra.mxu0 0.0
    %2362 = vmatprep.subr.mxu0 0.0
    %2363 = vmatpush1.msra.mxu0 0.0
    %2364 = vmatprep.subr.mxu0 0.0
    %2365 = vmatpush1.msra.mxu0 0.0
    %2366 = vmatprep.subr.mxu0 0.0
    %2367 = vmatpush1.msra.mxu0 0.0
    %2368 = vmatprep.subr.mxu0 0.0
    %2369 = vmatpush1.msra.mxu0 0.0
    %2370 = vmatprep.subr.mxu0 0.0
    %2371 = vmatpush1.msra.mxu0 0.0
    %2372 = vmatprep.subr.mxu0 0.0
    %2373 = vmatpush1.msra.mxu0 0.0
    %2374 = vmatprep.subr.mxu0 0.0
    %2375 = vmatpush1.msra.mxu0 0.0
    %2376 = vmatprep.subr.mxu0 0.0
    %2377 = vmatpush1.msra.mxu0 %v1346
    %2378 = vmatprep.subr.mxu0 0.0
    %2379 = vmatpush1.msra.mxu0 %v162
    %2380 = vmatprep.subr.mxu0 0.0
    %2381 = vmatpush2.msra.mxu0 0.0
    %2382 = vmatprep.subr.mxu0 0.0
    %2383 = vmatpush2.msra.mxu0 0.0
    %2384 = vmatprep.subr.mxu0 0.0
    %2385 = vmatpush2.msra.mxu0 0.0
    %2386 = vmatprep.subr.mxu0 0.0
    %2387 = vmatpush2.msra.mxu0 0.0
    %2388 = vmatprep.subr.mxu0 0.0
    %2389 = vmatpush2.msra.mxu0 0.0
    %2390 = vmatprep.subr.mxu0 0.0
    %2391 = vmatpush2.msra.mxu0 0.0
    %2392 = vmatprep.subr.mxu0 0.0
    %2393 = vmatpush2.msra.mxu0 0.0
    %2394 = vmatprep.subr.mxu0 0.0
    %2395 = vmatpush2.msra.mxu0 0.0
    %2396 = vmatprep.subr.mxu0 0.0
    %2397 = vmatpush2.msra.mxu0 0.0
    %2398 = vmatprep.subr.mxu0 0.0
    %2399 = vmatpush2.msra.mxu0 0.0
    %2400 = vmatprep.subr.mxu0 0.0
    %2401 = vmatpush2.msra.mxu0 0.0
    %2402 = vmatprep.subr.mxu0 0.0
    %2403 = vmatpush2.msra.mxu0 0.0
    %2404 = vmatprep.subr.mxu0 0.0
    %2405 = vmatpush2.msra.mxu0 0.0
    %2406 = vmatprep.subr.mxu0 0.0
    %2407 = vmatpush2.msra.mxu0 0.0
    %2408 = vmatprep.subr.mxu0 0.0
    %2409 = vmatpush2.msra.mxu0 0.0
    %2410 = vmatprep.subr.mxu0 0.0
    %2411 = vmatpush2.msra.mxu0 0.0
    %2412 = vmatprep.mubr.f32.mxu0 0.0
    %2413 = vmatmul.mubr.f32.gmra.mxu0 %v2346
    %v2414 = vpop.f32.mrf.mxu0
    %v2415 = vadd.f32 0.0, %v2414
    %v2416 = vpop.f32.mrf.mxu0
    %2417 = vdwg.mxu0
    %v2418 = vadd.f32 %v972, %v2415
    %v2419 = vxor.u32 %v2418, 2147483648
    %v2420 = vmul.f32 %v2419, 1.442695
    %v2421 = vpow.pop %v2420
    %v2422 = vadd.f32 %v2421, 1.0
    %v2423 = vrcp.pop %v2422
    %v2424 = vmul.f32 1.0, %v2423
    %v2425 = vtanh.pop %v2418
    %v2426 = vmul.f32 %v2424, %v2336
    %2428 = vrot.lane.b32.xlu0 %v2425, 98
    %v2429 = vpop.permute.xlu0 %2428
    %v2431 = vmul.f32 %v2424, %v2429
    %2433 = vrot.lane.b32.xlu0 %v2431, 15
    %v2434 = vpop.permute.xlu0 %2433
    %v2436 = vadd.f32 %v2426, %v2434
    %v2437 = vtanh.pop %v2436
    %2439 = vrot.lane.b32.xlu0 %v2437, 30
    %v2440 = vpop.permute.xlu0 %2439
    %v2442 = vmul.f32 %v2424, %v2440
    %2444 = vrot.lane.b32.xlu0 %v2442, 83
    %v2445 = vpop.permute.xlu0 %2444
    %v2446 = vsel %vm1340, %v2445, 0
    %2448 = vmatprep.subr.mxu0 0.0
    %2449 = vmatpush1.msra.mxu0 0.0
    %2450 = vmatprep.subr.mxu0 0.0
    %2451 = vmatpush1.msra.mxu0 0.0
    %2452 = vmatprep.subr.mxu0 0.0
    %2453 = vmatpush1.msra.mxu0 0.0
    %2454 = vmatprep.subr.mxu0 0.0
    %2455 = vmatpush1.msra.mxu0 0.0
    %2456 = vmatprep.subr.mxu0 0.0
    %2457 = vmatpush1.msra.mxu0 0.0
    %2458 = vmatprep.subr.mxu0 0.0
    %2459 = vmatpush1.msra.mxu0 0.0
    %2460 = vmatprep.subr.mxu0 0.0
    %2461 = vmatpush1.msra.mxu0 0.0
    %2462 = vmatprep.subr.mxu0 0.0
    %2463 = vmatpush1.msra.mxu0 0.0
    %2464 = vmatprep.subr.mxu0 0.0
    %2465 = vmatpush1.msra.mxu0 0.0
    %2466 = vmatprep.subr.mxu0 0.0
    %2467 = vmatpush1.msra.mxu0 0.0
    %2468 = vmatprep.subr.mxu0 0.0
    %2469 = vmatpush1.msra.mxu0 0.0
    %2470 = vmatprep.subr.mxu0 0.0
    %2471 = vmatpush1.msra.mxu0 0.0
    %2472 = vmatprep.subr.mxu0 0.0
    %2473 = vmatpush1.msra.mxu0 0.0
    %2474 = vmatprep.subr.mxu0 0.0
    %2475 = vmatpush1.msra.mxu0 0.0
    %2476 = vmatprep.subr.mxu0 0.0
    %2477 = vmatpush1.msra.mxu0 %v1346
    %2478 = vmatprep.subr.mxu0 0.0
    %2479 = vmatpush1.msra.mxu0 %v162
    %2480 = vmatprep.subr.mxu0 0.0
    %2481 = vmatpush2.msra.mxu0 0.0
    %2482 = vmatprep.subr.mxu0 0.0
    %2483 = vmatpush2.msra.mxu0 0.0
    %2484 = vmatprep.subr.mxu0 0.0
    %2485 = vmatpush2.msra.mxu0 0.0
    %2486 = vmatprep.subr.mxu0 0.0
    %2487 = vmatpush2.msra.mxu0 0.0
    %2488 = vmatprep.subr.mxu0 0.0
    %2489 = vmatpush2.msra.mxu0 0.0
    %2490 = vmatprep.subr.mxu0 0.0
    %2491 = vmatpush2.msra.mxu0 0.0
    %2492 = vmatprep.subr.mxu0 0.0
    %2493 = vmatpush2.msra.mxu0 0.0
    %2494 = vmatprep.subr.mxu0 0.0
    %2495 = vmatpush2.msra.mxu0 0.0
    %2496 = vmatprep.subr.mxu0 0.0
    %2497 = vmatpush2.msra.mxu0 0.0
    %2498 = vmatprep.subr.mxu0 0.0
    %2499 = vmatpush2.msra.mxu0 0.0
    %2500 = vmatprep.subr.mxu0 0.0
    %2501 = vmatpush2.msra.mxu0 0.0
    %2502 = vmatprep.subr.mxu0 0.0
    %2503 = vmatpush2.msra.mxu0 0.0
    %2504 = vmatprep.subr.mxu0 0.0
    %2505 = vmatpush2.msra.mxu0 0.0
    %2506 = vmatprep.subr.mxu0 0.0
    %2507 = vmatpush2.msra.mxu0 0.0
    %2508 = vmatprep.subr.mxu0 0.0
    %2509 = vmatpush2.msra.mxu0 0.0
    %2510 = vmatprep.subr.mxu0 0.0
    %2511 = vmatpush2.msra.mxu0 0.0
    %2512 = vmatprep.mubr.f32.mxu0 0.0
    %2513 = vmatmul.mubr.f32.gmra.mxu0 %v2446
    %v2514 = vpop.f32.mrf.mxu0
    %v2515 = vadd.f32 0.0, %v2514
    %v2516 = vpop.f32.mrf.mxu0
    %2517 = vdwg.mxu0
    %v2518 = vadd.f32 %v1045, %v2515
    %v2519 = vxor.u32 %v2518, 2147483648
    %v2520 = vmul.f32 %v2519, 1.442695
    %v2521 = vpow.pop %v2520
    %v2522 = vadd.f32 %v2521, 1.0
    %v2523 = vrcp.pop %v2522
    %v2524 = vmul.f32 1.0, %v2523
    %v2525 = vtanh.pop %v2518
    %v2526 = vmul.f32 %v2524, %v2436
    %2528 = vrot.lane.b32.xlu0 %v2525, 98
    %v2529 = vpop.permute.xlu0 %2528
    %v2531 = vmul.f32 %v2524, %v2529
    %2533 = vrot.lane.b32.xlu0 %v2531, 15
    %v2534 = vpop.permute.xlu0 %2533
    %v2536 = vadd.f32 %v2526, %v2534
    %v2537 = vtanh.pop %v2536
    %2539 = vrot.lane.b32.xlu0 %v2537, 30
    %v2540 = vpop.permute.xlu0 %2539
    %v2542 = vmul.f32 %v2524, %v2540
    %2544 = vrot.lane.b32.xlu0 %v2542, 83
    %v2545 = vpop.permute.xlu0 %2544
    %v2546 = vsel %vm1340, %v2545, 0
    %2548 = vmatprep.subr.mxu0 0.0
    %2549 = vmatpush1.msra.mxu0 0.0
    %2550 = vmatprep.subr.mxu0 0.0
    %2551 = vmatpush1.msra.mxu0 0.0
    %2552 = vmatprep.subr.mxu0 0.0
    %2553 = vmatpush1.msra.mxu0 0.0
    %2554 = vmatprep.subr.mxu0 0.0
    %2555 = vmatpush1.msra.mxu0 0.0
    %2556 = vmatprep.subr.mxu0 0.0
    %2557 = vmatpush1.msra.mxu0 0.0
    %2558 = vmatprep.subr.mxu0 0.0
    %2559 = vmatpush1.msra.mxu0 0.0
    %2560 = vmatprep.subr.mxu0 0.0
    %2561 = vmatpush1.msra.mxu0 0.0
    %2562 = vmatprep.subr.mxu0 0.0
    %2563 = vmatpush1.msra.mxu0 0.0
    %2564 = vmatprep.subr.mxu0 0.0
    %2565 = vmatpush1.msra.mxu0 0.0
    %2566 = vmatprep.subr.mxu0 0.0
    %2567 = vmatpush1.msra.mxu0 0.0
    %2568 = vmatprep.subr.mxu0 0.0
    %2569 = vmatpush1.msra.mxu0 0.0
    %2570 = vmatprep.subr.mxu0 0.0
    %2571 = vmatpush1.msra.mxu0 0.0
    %2572 = vmatprep.subr.mxu0 0.0
    %2573 = vmatpush1.msra.mxu0 0.0
    %2574 = vmatprep.subr.mxu0 0.0
    %2575 = vmatpush1.msra.mxu0 0.0
    %2576 = vmatprep.subr.mxu0 0.0
    %2577 = vmatpush1.msra.mxu0 %v1346
    %2578 = vmatprep.subr.mxu0 0.0
    %2579 = vmatpush1.msra.mxu0 %v162
    %2580 = vmatprep.subr.mxu0 0.0
    %2581 = vmatpush2.msra.mxu0 0.0
    %2582 = vmatprep.subr.mxu0 0.0
    %2583 = vmatpush2.msra.mxu0 0.0
    %2584 = vmatprep.subr.mxu0 0.0
    %2585 = vmatpush2.msra.mxu0 0.0
    %2586 = vmatprep.subr.mxu0 0.0
    %2587 = vmatpush2.msra.mxu0 0.0
    %2588 = vmatprep.subr.mxu0 0.0
    %2589 = vmatpush2.msra.mxu0 0.0
    %2590 = vmatprep.subr.mxu0 0.0
    %2591 = vmatpush2.msra.mxu0 0.0
    %2592 = vmatprep.subr.mxu0 0.0
    %2593 = vmatpush2.msra.mxu0 0.0
    %2594 = vmatprep.subr.mxu0 0.0
    %2595 = vmatpush2.msra.mxu0 0.0
    %2596 = vmatprep.subr.mxu0 0.0
    %2597 = vmatpush2.msra.mxu0 0.0
    %2598 = vmatprep.subr.mxu0 0.0
    %2599 = vmatpush2.msra.mxu0 0.0
    %2600 = vmatprep.subr.mxu0 0.0
    %2601 = vmatpush2.msra.mxu0 0.0
    %2602 = vmatprep.subr.mxu0 0.0
    %2603 = vmatpush2.msra.mxu0 0.0
    %2604 = vmatprep.subr.mxu0 0.0
    %2605 = vmatpush2.msra.mxu0 0.0
    %2606 = vmatprep.subr.mxu0 0.0
    %2607 = vmatpush2.msra.mxu0 0.0
    %2608 = vmatprep.subr.mxu0 0.0
    %2609 = vmatpush2.msra.mxu0 0.0
    %2610 = vmatprep.subr.mxu0 0.0
    %2611 = vmatpush2.msra.mxu0 0.0
    %2612 = vmatprep.mubr.f32.mxu0 0.0
    %2613 = vmatmul.mubr.f32.gmra.mxu0 %v2546
    %v2614 = vpop.f32.mrf.mxu0
    %v2615 = vadd.f32 0.0, %v2614
    %v2616 = vpop.f32.mrf.mxu0
    %2617 = vdwg.mxu0
    %v2618 = vadd.f32 %v1118, %v2615
    %v2619 = vxor.u32 %v2618, 2147483648
    %v2620 = vmul.f32 %v2619, 1.442695
    %v2621 = vpow.pop %v2620
    %v2622 = vadd.f32 %v2621, 1.0
    %v2623 = vrcp.pop %v2622
    %v2624 = vmul.f32 1.0, %v2623
    %v2625 = vtanh.pop %v2618
    %v2626 = vmul.f32 %v2624, %v2536
    %2628 = vrot.lane.b32.xlu0 %v2625, 98
    %v2629 = vpop.permute.xlu0 %2628
    %v2631 = vmul.f32 %v2624, %v2629
    %2633 = vrot.lane.b32.xlu0 %v2631, 15
    %v2634 = vpop.permute.xlu0 %2633
    %v2636 = vadd.f32 %v2626, %v2634
    %v2637 = vtanh.pop %v2636
    %2639 = vrot.lane.b32.xlu0 %v2637, 30
    %v2640 = vpop.permute.xlu0 %2639
    %v2642 = vmul.f32 %v2624, %v2640
    %2644 = vrot.lane.b32.xlu0 %v2642, 83
    %v2645 = vpop.permute.xlu0 %2644
    %v2646 = vsel %vm1340, %v2645, 0
    %2648 = vmatprep.subr.mxu0 0.0
    %2649 = vmatpush1.msra.mxu0 0.0
    %2650 = vmatprep.subr.mxu0 0.0
    %2651 = vmatpush1.msra.mxu0 0.0
    %2652 = vmatprep.subr.mxu0 0.0
    %2653 = vmatpush1.msra.mxu0 0.0
    %2654 = vmatprep.subr.mxu0 0.0
    %2655 = vmatpush1.msra.mxu0 0.0
    %2656 = vmatprep.subr.mxu0 0.0
    %2657 = vmatpush1.msra.mxu0 0.0
    %2658 = vmatprep.subr.mxu0 0.0
    %2659 = vmatpush1.msra.mxu0 0.0
    %2660 = vmatprep.subr.mxu0 0.0
    %2661 = vmatpush1.msra.mxu0 0.0
    %2662 = vmatprep.subr.mxu0 0.0
    %2663 = vmatpush1.msra.mxu0 0.0
    %2664 = vmatprep.subr.mxu0 0.0
    %2665 = vmatpush1.msra.mxu0 0.0
    %2666 = vmatprep.subr.mxu0 0.0
    %2667 = vmatpush1.msra.mxu0 0.0
    %2668 = vmatprep.subr.mxu0 0.0
    %2669 = vmatpush1.msra.mxu0 0.0
    %2670 = vmatprep.subr.mxu0 0.0
    %2671 = vmatpush1.msra.mxu0 0.0
    %2672 = vmatprep.subr.mxu0 0.0
    %2673 = vmatpush1.msra.mxu0 0.0
    %2674 = vmatprep.subr.mxu0 0.0
    %2675 = vmatpush1.msra.mxu0 0.0
    %2676 = vmatprep.subr.mxu0 0.0
    %2677 = vmatpush1.msra.mxu0 %v1346
    %2678 = vmatprep.subr.mxu0 0.0
    %2679 = vmatpush1.msra.mxu0 %v162
    %2680 = vmatprep.subr.mxu0 0.0
    %2681 = vmatpush2.msra.mxu0 0.0
    %2682 = vmatprep.subr.mxu0 0.0
    %2683 = vmatpush2.msra.mxu0 0.0
    %2684 = vmatprep.subr.mxu0 0.0
    %2685 = vmatpush2.msra.mxu0 0.0
    %2686 = vmatprep.subr.mxu0 0.0
    %2687 = vmatpush2.msra.mxu0 0.0
    %2688 = vmatprep.subr.mxu0 0.0
    %2689 = vmatpush2.msra.mxu0 0.0
    %2690 = vmatprep.subr.mxu0 0.0
    %2691 = vmatpush2.msra.mxu0 0.0
    %2692 = vmatprep.subr.mxu0 0.0
    %2693 = vmatpush2.msra.mxu0 0.0
    %2694 = vmatprep.subr.mxu0 0.0
    %2695 = vmatpush2.msra.mxu0 0.0
    %2696 = vmatprep.subr.mxu0 0.0
    %2697 = vmatpush2.msra.mxu0 0.0
    %2698 = vmatprep.subr.mxu0 0.0
    %2699 = vmatpush2.msra.mxu0 0.0
    %2700 = vmatprep.subr.mxu0 0.0
    %2701 = vmatpush2.msra.mxu0 0.0
    %2702 = vmatprep.subr.mxu0 0.0
    %2703 = vmatpush2.msra.mxu0 0.0
    %2704 = vmatprep.subr.mxu0 0.0
    %2705 = vmatpush2.msra.mxu0 0.0
    %2706 = vmatprep.subr.mxu0 0.0
    %2707 = vmatpush2.msra.mxu0 0.0
    %2708 = vmatprep.subr.mxu0 0.0
    %2709 = vmatpush2.msra.mxu0 0.0
    %2710 = vmatprep.subr.mxu0 0.0
    %2711 = vmatpush2.msra.mxu0 0.0
    %2712 = vmatprep.mubr.f32.mxu0 0.0
    %2713 = vmatmul.mubr.f32.gmra.mxu0 %v2646
    %v2714 = vpop.f32.mrf.mxu0
    %v2715 = vadd.f32 0.0, %v2714
    %v2716 = vpop.f32.mrf.mxu0
    %2717 = vdwg.mxu0
    %v2718 = vadd.f32 %v1191, %v2715
    %v2719 = vxor.u32 %v2718, 2147483648
    %v2720 = vmul.f32 %v2719, 1.442695
    %v2721 = vpow.pop %v2720
    %v2722 = vadd.f32 %v2721, 1.0
    %v2723 = vrcp.pop %v2722
    %v2724 = vmul.f32 1.0, %v2723
    %v2725 = vtanh.pop %v2718
    %v2726 = vmul.f32 %v2724, %v2636
    %2728 = vrot.lane.b32.xlu0 %v2725, 98
    %v2729 = vpop.permute.xlu0 %2728
    %v2731 = vmul.f32 %v2724, %v2729
    %2733 = vrot.lane.b32.xlu0 %v2731, 15
    %v2734 = vpop.permute.xlu0 %2733
    %v2736 = vadd.f32 %v2726, %v2734
    %v2737 = vtanh.pop %v2736
    %2739 = vrot.lane.b32.xlu0 %v2737, 30
    %v2740 = vpop.permute.xlu0 %2739
    %v2742 = vmul.f32 %v2724, %v2740
    %2744 = vrot.lane.b32.xlu0 %v2742, 83
    %v2745 = vpop.permute.xlu0 %2744
    %v2746 = vsel %vm1340, %v2745, 0
    %2748 = vmatprep.subr.mxu0 0.0
    %2749 = vmatpush1.msra.mxu0 0.0
    %2750 = vmatprep.subr.mxu0 0.0
    %2751 = vmatpush1.msra.mxu0 0.0
    %2752 = vmatprep.subr.mxu0 0.0
    %2753 = vmatpush1.msra.mxu0 0.0
    %2754 = vmatprep.subr.mxu0 0.0
    %2755 = vmatpush1.msra.mxu0 0.0
    %2756 = vmatprep.subr.mxu0 0.0
    %2757 = vmatpush1.msra.mxu0 0.0
    %2758 = vmatprep.subr.mxu0 0.0
    %2759 = vmatpush1.msra.mxu0 0.0
    %2760 = vmatprep.subr.mxu0 0.0
    %2761 = vmatpush1.msra.mxu0 0.0
    %2762 = vmatprep.subr.mxu0 0.0
    %2763 = vmatpush1.msra.mxu0 0.0
    %2764 = vmatprep.subr.mxu0 0.0
    %2765 = vmatpush1.msra.mxu0 0.0
    %2766 = vmatprep.subr.mxu0 0.0
    %2767 = vmatpush1.msra.mxu0 0.0
    %2768 = vmatprep.subr.mxu0 0.0
    %2769 = vmatpush1.msra.mxu0 0.0
    %2770 = vmatprep.subr.mxu0 0.0
    %2771 = vmatpush1.msra.mxu0 0.0
    %2772 = vmatprep.subr.mxu0 0.0
    %2773 = vmatpush1.msra.mxu0 0.0
    %2774 = vmatprep.subr.mxu0 0.0
    %2775 = vmatpush1.msra.mxu0 0.0
    %2776 = vmatprep.subr.mxu0 0.0
    %2777 = vmatpush1.msra.mxu0 %v1346
    %2778 = vmatprep.subr.mxu0 0.0
    %2779 = vmatpush1.msra.mxu0 %v162
    %2780 = vmatprep.subr.mxu0 0.0
    %2781 = vmatpush2.msra.mxu0 0.0
    %2782 = vmatprep.subr.mxu0 0.0
    %2783 = vmatpush2.msra.mxu0 0.0
    %2784 = vmatprep.subr.mxu0 0.0
    %2785 = vmatpush2.msra.mxu0 0.0
    %2786 = vmatprep.subr.mxu0 0.0
    %2787 = vmatpush2.msra.mxu0 0.0
    %2788 = vmatprep.subr.mxu0 0.0
    %2789 = vmatpush2.msra.mxu0 0.0
    %2790 = vmatprep.subr.mxu0 0.0
    %2791 = vmatpush2.msra.mxu0 0.0
    %2792 = vmatprep.subr.mxu0 0.0
    %2793 = vmatpush2.msra.mxu0 0.0
    %2794 = vmatprep.subr.mxu0 0.0
    %2795 = vmatpush2.msra.mxu0 0.0
    %2796 = vmatprep.subr.mxu0 0.0
    %2797 = vmatpush2.msra.mxu0 0.0
    %2798 = vmatprep.subr.mxu0 0.0
    %2799 = vmatpush2.msra.mxu0 0.0
    %2800 = vmatprep.subr.mxu0 0.0
    %2801 = vmatpush2.msra.mxu0 0.0
    %2802 = vmatprep.subr.mxu0 0.0
    %2803 = vmatpush2.msra.mxu0 0.0
    %2804 = vmatprep.subr.mxu0 0.0
    %2805 = vmatpush2.msra.mxu0 0.0
    %2806 = vmatprep.subr.mxu0 0.0
    %2807 = vmatpush2.msra.mxu0 0.0
    %2808 = vmatprep.subr.mxu0 0.0
    %2809 = vmatpush2.msra.mxu0 0.0
    %2810 = vmatprep.subr.mxu0 0.0
    %2811 = vmatpush2.msra.mxu0 0.0
    %2812 = vmatprep.mubr.f32.mxu0 0.0
    %2813 = vmatmul.mubr.f32.gmra.mxu0 %v2746
    %v2814 = vpop.f32.mrf.mxu0
    %v2815 = vadd.f32 0.0, %v2814
    %v2816 = vpop.f32.mrf.mxu0
    %2817 = vdwg.mxu0
    %v2818 = vadd.f32 %v1264, %v2815
    %v2819 = vxor.u32 %v2818, 2147483648
    %v2820 = vmul.f32 %v2819, 1.442695
    %v2821 = vpow.pop %v2820
    %v2822 = vadd.f32 %v2821, 1.0
    %v2823 = vrcp.pop %v2822
    %v2824 = vmul.f32 1.0, %v2823
    %v2825 = vtanh.pop %v2818
    %v2826 = vmul.f32 %v2824, %v2736
    %2828 = vrot.lane.b32.xlu0 %v2825, 98
    %v2829 = vpop.permute.xlu0 %2828
    %v2831 = vmul.f32 %v2824, %v2829
    %2833 = vrot.lane.b32.xlu0 %v2831, 15
    %v2834 = vpop.permute.xlu0 %2833
    %v2836 = vadd.f32 %v2826, %v2834
    %v2837 = vtanh.pop %v2836
    %2839 = vrot.lane.b32.xlu0 %v2837, 30
    %v2840 = vpop.permute.xlu0 %2839
    %v2842 = vmul.f32 %v2824, %v2840
    %2844 = vrot.lane.b32.xlu0 %v2842, 83
    %v2845 = vpop.permute.xlu0 %2844
    %v2846 = vsel %vm1340, %v2845, 0
    %2848 = vmatprep.subr.mxu0 0.0
    %2849 = vmatpush1.msra.mxu0 0.0
    %2850 = vmatprep.subr.mxu0 0.0
    %2851 = vmatpush1.msra.mxu0 0.0
    %2852 = vmatprep.subr.mxu0 0.0
    %2853 = vmatpush1.msra.mxu0 0.0
    %2854 = vmatprep.subr.mxu0 0.0
    %2855 = vmatpush1.msra.mxu0 0.0
    %2856 = vmatprep.subr.mxu0 0.0
    %2857 = vmatpush1.msra.mxu0 0.0
    %2858 = vmatprep.subr.mxu0 0.0
    %2859 = vmatpush1.msra.mxu0 0.0
    %2860 = vmatprep.subr.mxu0 0.0
    %2861 = vmatpush1.msra.mxu0 0.0
    %2862 = vmatprep.subr.mxu0 0.0
    %2863 = vmatpush1.msra.mxu0 0.0
    %2864 = vmatprep.subr.mxu0 0.0
    %2865 = vmatpush1.msra.mxu0 0.0
    %2866 = vmatprep.subr.mxu0 0.0
    %2867 = vmatpush1.msra.mxu0 0.0
    %2868 = vmatprep.subr.mxu0 0.0
    %2869 = vmatpush1.msra.mxu0 0.0
    %2870 = vmatprep.subr.mxu0 0.0
    %2871 = vmatpush1.msra.mxu0 0.0
    %2872 = vmatprep.subr.mxu0 0.0
    %2873 = vmatpush1.msra.mxu0 0.0
    %2874 = vmatprep.subr.mxu0 0.0
    %2875 = vmatpush1.msra.mxu0 0.0
    %2876 = vmatprep.subr.mxu0 0.0
    %2877 = vmatpush1.msra.mxu0 %v1346
    %2878 = vmatprep.subr.mxu0 0.0
    %2879 = vmatpush1.msra.mxu0 %v162
    %2880 = vmatprep.subr.mxu0 0.0
    %2881 = vmatpush2.msra.mxu0 0.0
    %2882 = vmatprep.subr.mxu0 0.0
    %2883 = vmatpush2.msra.mxu0 0.0
    %2884 = vmatprep.subr.mxu0 0.0
    %2885 = vmatpush2.msra.mxu0 0.0
    %2886 = vmatprep.subr.mxu0 0.0
    %2887 = vmatpush2.msra.mxu0 0.0
    %2888 = vmatprep.subr.mxu0 0.0
    %2889 = vmatpush2.msra.mxu0 0.0
    %2890 = vmatprep.subr.mxu0 0.0
    %2891 = vmatpush2.msra.mxu0 0.0
    %2892 = vmatprep.subr.mxu0 0.0
    %2893 = vmatpush2.msra.mxu0 0.0
    %2894 = vmatprep.subr.mxu0 0.0
    %2895 = vmatpush2.msra.mxu0 0.0
    %2896 = vmatprep.subr.mxu0 0.0
    %2897 = vmatpush2.msra.mxu0 0.0
    %2898 = vmatprep.subr.mxu0 0.0
    %2899 = vmatpush2.msra.mxu0 0.0
    %2900 = vmatprep.subr.mxu0 0.0
    %2901 = vmatpush2.msra.mxu0 0.0
    %2902 = vmatprep.subr.mxu0 0.0
    %2903 = vmatpush2.msra.mxu0 0.0
    %2904 = vmatprep.subr.mxu0 0.0
    %2905 = vmatpush2.msra.mxu0 0.0
    %2906 = vmatprep.subr.mxu0 0.0
    %2907 = vmatpush2.msra.mxu0 0.0
    %2908 = vmatprep.subr.mxu0 0.0
    %2909 = vmatpush2.msra.mxu0 0.0
    %2910 = vmatprep.subr.mxu0 0.0
    %2911 = vmatpush2.msra.mxu0 0.0
    %2912 = vmatprep.mubr.f32.mxu0 0.0
    %2913 = vmatmul.mubr.f32.gmra.mxu0 %v2846
    %v2914 = vpop.f32.mrf.mxu0
    %v2915 = vadd.f32 0.0, %v2914
    %v2916 = vpop.f32.mrf.mxu0
    %2917 = vdwg.mxu0
    %v2918 = vadd.f32 %v1337, %v2915
    %v2919 = vxor.u32 %v2918, 2147483648
    %v2920 = vmul.f32 %v2919, 1.442695
    %v2921 = vpow.pop %v2920
    %v2922 = vadd.f32 %v2921, 1.0
    %v2923 = vrcp.pop %v2922
    %v2924 = vmul.f32 1.0, %v2923
    %v2925 = vtanh.pop %v2918
    %v2926 = vmul.f32 %v2924, %v2836
    %2928 = vrot.lane.b32.xlu0 %v2925, 98
    %v2929 = vpop.permute.xlu0 %2928
    %v2931 = vmul.f32 %v2924, %v2929
    %2933 = vrot.lane.b32.xlu0 %v2931, 15
    %v2934 = vpop.permute.xlu0 %2933
    %v2936 = vadd.f32 %v2926, %v2934
    %v2937 = vtanh.pop %v2936
    %2939 = vrot.lane.b32.xlu0 %v2937, 30
    %v2940 = vpop.permute.xlu0 %2939
    %v2942 = vmul.f32 %v2924, %v2940
    %v2943 = vld [vmem:[%s4] sm:$0xff]
    %v2944 = vld [vmem:[%s4 + $0x8] sm:$0x7f]
    %v2945 = vld [vmem:[%s5] sm:$0x7f]
    %v2946 = vld [vmem:[%s6] sm:$0x1]
    %v2948 = vlaneseq
    %v2949 = vshrl.u32 %v2948, 7
    %v2950 = vsub.s32 0, %v2949
    %v2951 = vrot.slane %v2946, %v2950
    %v2954 = vsel %vm1344, %v2944, 0
    %2956 = vmatprep.subr.mxu0 0.0
    %2957 = vmatpush1.msra.mxu0 0.0
    %2958 = vmatprep.subr.mxu0 0.0
    %2959 = vmatpush1.msra.mxu0 0.0
    %2960 = vmatprep.subr.mxu0 0.0
    %2961 = vmatpush1.msra.mxu0 0.0
    %2962 = vmatprep.subr.mxu0 0.0
    %2963 = vmatpush1.msra.mxu0 0.0
    %2964 = vmatprep.subr.mxu0 0.0
    %2965 = vmatpush1.msra.mxu0 0.0
    %2966 = vmatprep.subr.mxu0 0.0
    %2967 = vmatpush1.msra.mxu0 0.0
    %2968 = vmatprep.subr.mxu0 0.0
    %2969 = vmatpush1.msra.mxu0 0.0
    %2970 = vmatprep.subr.mxu0 0.0
    %2971 = vmatpush1.msra.mxu0 0.0
    %2972 = vmatprep.subr.mxu0 0.0
    %2973 = vmatpush1.msra.mxu0 0.0
    %2974 = vmatprep.subr.mxu0 0.0
    %2975 = vmatpush1.msra.mxu0 0.0
    %2976 = vmatprep.subr.mxu0 0.0
    %2977 = vmatpush1.msra.mxu0 0.0
    %2978 = vmatprep.subr.mxu0 0.0
    %2979 = vmatpush1.msra.mxu0 0.0
    %2980 = vmatprep.subr.mxu0 0.0
    %2981 = vmatpush1.msra.mxu0 0.0
    %2982 = vmatprep.subr.mxu0 0.0
    %2983 = vmatpush1.msra.mxu0 0.0
    %2984 = vmatprep.subr.mxu0 0.0
    %2985 = vmatpush1.msra.mxu0 %v2954
    %2986 = vmatprep.subr.mxu0 0.0
    %2987 = vmatpush1.msra.mxu0 %v2943
    %2988 = vmatprep.subr.mxu0 0.0
    %2989 = vmatpush2.msra.mxu0 0.0
    %2990 = vmatprep.subr.mxu0 0.0
    %2991 = vmatpush2.msra.mxu0 0.0
    %2992 = vmatprep.subr.mxu0 0.0
    %2993 = vmatpush2.msra.mxu0 0.0
    %2994 = vmatprep.subr.mxu0 0.0
    %2995 = vmatpush2.msra.mxu0 0.0
    %2996 = vmatprep.subr.mxu0 0.0
    %2997 = vmatpush2.msra.mxu0 0.0
    %2998 = vmatprep.subr.mxu0 0.0
    %2999 = vmatpush2.msra.mxu0 0.0
    %3000 = vmatprep.subr.mxu0 0.0
    %3001 = vmatpush2.msra.mxu0 0.0
    %3002 = vmatprep.subr.mxu0 0.0
    %3003 = vmatpush2.msra.mxu0 0.0
    %3004 = vmatprep.subr.mxu0 0.0
    %3005 = vmatpush2.msra.mxu0 0.0
    %3006 = vmatprep.subr.mxu0 0.0
    %3007 = vmatpush2.msra.mxu0 0.0
    %3008 = vmatprep.subr.mxu0 0.0
    %3009 = vmatpush2.msra.mxu0 0.0
    %3010 = vmatprep.subr.mxu0 0.0
    %3011 = vmatpush2.msra.mxu0 0.0
    %3012 = vmatprep.subr.mxu0 0.0
    %3013 = vmatpush2.msra.mxu0 0.0
    %3014 = vmatprep.subr.mxu0 0.0
    %3015 = vmatpush2.msra.mxu0 0.0
    %3016 = vmatprep.subr.mxu0 0.0
    %3017 = vmatpush2.msra.mxu0 0.0
    %3018 = vmatprep.subr.mxu0 0.0
    %3019 = vmatpush2.msra.mxu0 0.0
    %3020 = vmatprep.mubr.f32.mxu0 0.0
    %3021 = vmatmul.mubr.f32.gmra.mxu0 %v1446
    %v3022 = vpop.f32.mrf.mxu0
    %v3023 = vadd.f32 %v2951, %v3022
    %v3024 = vpop.f32.mrf.mxu0
    %3025 = vdwg.mxu0
    %3026 = vmatprep.subr.mxu0 0.0
    %3027 = vmatpush1.msra.mxu0 0.0
    %3028 = vmatprep.subr.mxu0 0.0
    %3029 = vmatpush1.msra.mxu0 0.0
    %3030 = vmatprep.subr.mxu0 0.0
    %3031 = vmatpush1.msra.mxu0 0.0
    %3032 = vmatprep.subr.mxu0 0.0
    %3033 = vmatpush1.msra.mxu0 0.0
    %3034 = vmatprep.subr.mxu0 0.0
    %3035 = vmatpush1.msra.mxu0 0.0
    %3036 = vmatprep.subr.mxu0 0.0
    %3037 = vmatpush1.msra.mxu0 0.0
    %3038 = vmatprep.subr.mxu0 0.0
    %3039 = vmatpush1.msra.mxu0 0.0
    %3040 = vmatprep.subr.mxu0 0.0
    %3041 = vmatpush1.msra.mxu0 0.0
    %3042 = vmatprep.subr.mxu0 0.0
    %3043 = vmatpush1.msra.mxu0 0.0
    %3044 = vmatprep.subr.mxu0 0.0
    %3045 = vmatpush1.msra.mxu0 0.0
    %3046 = vmatprep.subr.mxu0 0.0
    %3047 = vmatpush1.msra.mxu0 0.0
    %3048 = vmatprep.subr.mxu0 0.0
    %3049 = vmatpush1.msra.mxu0 0.0
    %3050 = vmatprep.subr.mxu0 0.0
    %3051 = vmatpush1.msra.mxu0 0.0
    %3052 = vmatprep.subr.mxu0 0.0
    %3053 = vmatpush1.msra.mxu0 0.0
    %3054 = vmatprep.subr.mxu0 0.0
    %3055 = vmatpush1.msra.mxu0 %v2954
    %3056 = vmatprep.subr.mxu0 0.0
    %3057 = vmatpush1.msra.mxu0 %v2943
    %3058 = vmatprep.subr.mxu0 0.0
    %3059 = vmatpush2.msra.mxu0 0.0
    %3060 = vmatprep.subr.mxu0 0.0
    %3061 = vmatpush2.msra.mxu0 0.0
    %3062 = vmatprep.subr.mxu0 0.0
    %3063 = vmatpush2.msra.mxu0 0.0
    %3064 = vmatprep.subr.mxu0 0.0
    %3065 = vmatpush2.msra.mxu0 0.0
    %3066 = vmatprep.subr.mxu0 0.0
    %3067 = vmatpush2.msra.mxu0 0.0
    %3068 = vmatprep.subr.mxu0 0.0
    %3069 = vmatpush2.msra.mxu0 0.0
    %3070 = vmatprep.subr.mxu0 0.0
    %3071 = vmatpush2.msra.mxu0 0.0
    %3072 = vmatprep.subr.mxu0 0.0
    %3073 = vmatpush2.msra.mxu0 0.0
    %3074 = vmatprep.subr.mxu0 0.0
    %3075 = vmatpush2.msra.mxu0 0.0
    %3076 = vmatprep.subr.mxu0 0.0
    %3077 = vmatpush2.msra.mxu0 0.0
    %3078 = vmatprep.subr.mxu0 0.0
    %3079 = vmatpush2.msra.mxu0 0.0
    %3080 = vmatprep.subr.mxu0 0.0
    %3081 = vmatpush2.msra.mxu0 0.0
    %3082 = vmatprep.subr.mxu0 0.0
    %3083 = vmatpush2.msra.mxu0 0.0
    %3084 = vmatprep.subr.mxu0 0.0
    %3085 = vmatpush2.msra.mxu0 0.0
    %3086 = vmatprep.subr.mxu0 0.0
    %3087 = vmatpush2.msra.mxu0 0.0
    %3088 = vmatprep.subr.mxu0 0.0
    %3089 = vmatpush2.msra.mxu0 0.0
    %3090 = vmatprep.mubr.f32.mxu0 0.0
    %3091 = vmatmul.mubr.f32.gmra.mxu0 %v1546
    %v3092 = vpop.f32.mrf.mxu0
    %v3093 = vadd.f32 %v2951, %v3092
    %v3094 = vpop.f32.mrf.mxu0
    %3095 = vdwg.mxu0
    %3096 = vmatprep.subr.mxu0 0.0
    %3097 = vmatpush1.msra.mxu0 0.0
    %3098 = vmatprep.subr.mxu0 0.0
    %3099 = vmatpush1.msra.mxu0 0.0
    %3100 = vmatprep.subr.mxu0 0.0
    %3101 = vmatpush1.msra.mxu0 0.0
    %3102 = vmatprep.subr.mxu0 0.0
    %3103 = vmatpush1.msra.mxu0 0.0
    %3104 = vmatprep.subr.mxu0 0.0
    %3105 = vmatpush1.msra.mxu0 0.0
    %3106 = vmatprep.subr.mxu0 0.0
    %3107 = vmatpush1.msra.mxu0 0.0
    %3108 = vmatprep.subr.mxu0 0.0
    %3109 = vmatpush1.msra.mxu0 0.0
    %3110 = vmatprep.subr.mxu0 0.0
    %3111 = vmatpush1.msra.mxu0 0.0
    %3112 = vmatprep.subr.mxu0 0.0
    %3113 = vmatpush1.msra.mxu0 0.0
    %3114 = vmatprep.subr.mxu0 0.0
    %3115 = vmatpush1.msra.mxu0 0.0
    %3116 = vmatprep.subr.mxu0 0.0
    %3117 = vmatpush1.msra.mxu0 0.0
    %3118 = vmatprep.subr.mxu0 0.0
    %3119 = vmatpush1.msra.mxu0 0.0
    %3120 = vmatprep.subr.mxu0 0.0
    %3121 = vmatpush1.msra.mxu0 0.0
    %3122 = vmatprep.subr.mxu0 0.0
    %3123 = vmatpush1.msra.mxu0 0.0
    %3124 = vmatprep.subr.mxu0 0.0
    %3125 = vmatpush1.msra.mxu0 %v2954
    %3126 = vmatprep.subr.mxu0 0.0
    %3127 = vmatpush1.msra.mxu0 %v2943
    %3128 = vmatprep.subr.mxu0 0.0
    %3129 = vmatpush2.msra.mxu0 0.0
    %3130 = vmatprep.subr.mxu0 0.0
    %3131 = vmatpush2.msra.mxu0 0.0
    %3132 = vmatprep.subr.mxu0 0.0
    %3133 = vmatpush2.msra.mxu0 0.0
    %3134 = vmatprep.subr.mxu0 0.0
    %3135 = vmatpush2.msra.mxu0 0.0
    %3136 = vmatprep.subr.mxu0 0.0
    %3137 = vmatpush2.msra.mxu0 0.0
    %3138 = vmatprep.subr.mxu0 0.0
    %3139 = vmatpush2.msra.mxu0 0.0
    %3140 = vmatprep.subr.mxu0 0.0
    %3141 = vmatpush2.msra.mxu0 0.0
    %3142 = vmatprep.subr.mxu0 0.0
    %3143 = vmatpush2.msra.mxu0 0.0
    %3144 = vmatprep.subr.mxu0 0.0
    %3145 = vmatpush2.msra.mxu0 0.0
    %3146 = vmatprep.subr.mxu0 0.0
    %3147 = vmatpush2.msra.mxu0 0.0
    %3148 = vmatprep.subr.mxu0 0.0
    %3149 = vmatpush2.msra.mxu0 0.0
    %3150 = vmatprep.subr.mxu0 0.0
    %3151 = vmatpush2.msra.mxu0 0.0
    %3152 = vmatprep.subr.mxu0 0.0
    %3153 = vmatpush2.msra.mxu0 0.0
    %3154 = vmatprep.subr.mxu0 0.0
    %3155 = vmatpush2.msra.mxu0 0.0
    %3156 = vmatprep.subr.mxu0 0.0
    %3157 = vmatpush2.msra.mxu0 0.0
    %3158 = vmatprep.subr.mxu0 0.0
    %3159 = vmatpush2.msra.mxu0 0.0
    %3160 = vmatprep.mubr.f32.mxu0 0.0
    %3161 = vmatmul.mubr.f32.gmra.mxu0 %v1646
    %v3162 = vpop.f32.mrf.mxu0
    %v3163 = vadd.f32 %v2951, %v3162
    %v3164 = vpop.f32.mrf.mxu0
    %3165 = vdwg.mxu0
    %3166 = vmatprep.subr.mxu0 0.0
    %3167 = vmatpush1.msra.mxu0 0.0
    %3168 = vmatprep.subr.mxu0 0.0
    %3169 = vmatpush1.msra.mxu0 0.0
    %3170 = vmatprep.subr.mxu0 0.0
    %3171 = vmatpush1.msra.mxu0 0.0
    %3172 = vmatprep.subr.mxu0 0.0
    %3173 = vmatpush1.msra.mxu0 0.0
    %3174 = vmatprep.subr.mxu0 0.0
    %3175 = vmatpush1.msra.mxu0 0.0
    %3176 = vmatprep.subr.mxu0 0.0
    %3177 = vmatpush1.msra.mxu0 0.0
    %3178 = vmatprep.subr.mxu0 0.0
    %3179 = vmatpush1.msra.mxu0 0.0
    %3180 = vmatprep.subr.mxu0 0.0
    %3181 = vmatpush1.msra.mxu0 0.0
    %3182 = vmatprep.subr.mxu0 0.0
    %3183 = vmatpush1.msra.mxu0 0.0
    %3184 = vmatprep.subr.mxu0 0.0
    %3185 = vmatpush1.msra.mxu0 0.0
    %3186 = vmatprep.subr.mxu0 0.0
    %3187 = vmatpush1.msra.mxu0 0.0
    %3188 = vmatprep.subr.mxu0 0.0
    %3189 = vmatpush1.msra.mxu0 0.0
    %3190 = vmatprep.subr.mxu0 0.0
    %3191 = vmatpush1.msra.mxu0 0.0
    %3192 = vmatprep.subr.mxu0 0.0
    %3193 = vmatpush1.msra.mxu0 0.0
    %3194 = vmatprep.subr.mxu0 0.0
    %3195 = vmatpush1.msra.mxu0 %v2954
    %3196 = vmatprep.subr.mxu0 0.0
    %3197 = vmatpush1.msra.mxu0 %v2943
    %3198 = vmatprep.subr.mxu0 0.0
    %3199 = vmatpush2.msra.mxu0 0.0
    %3200 = vmatprep.subr.mxu0 0.0
    %3201 = vmatpush2.msra.mxu0 0.0
    %3202 = vmatprep.subr.mxu0 0.0
    %3203 = vmatpush2.msra.mxu0 0.0
    %3204 = vmatprep.subr.mxu0 0.0
    %3205 = vmatpush2.msra.mxu0 0.0
    %3206 = vmatprep.subr.mxu0 0.0
    %3207 = vmatpush2.msra.mxu0 0.0
    %3208 = vmatprep.subr.mxu0 0.0
    %3209 = vmatpush2.msra.mxu0 0.0
    %3210 = vmatprep.subr.mxu0 0.0
    %3211 = vmatpush2.msra.mxu0 0.0
    %3212 = vmatprep.subr.mxu0 0.0
    %3213 = vmatpush2.msra.mxu0 0.0
    %3214 = vmatprep.subr.mxu0 0.0
    %3215 = vmatpush2.msra.mxu0 0.0
    %3216 = vmatprep.subr.mxu0 0.0
    %3217 = vmatpush2.msra.mxu0 0.0
    %3218 = vmatprep.subr.mxu0 0.0
    %3219 = vmatpush2.msra.mxu0 0.0
    %3220 = vmatprep.subr.mxu0 0.0
    %3221 = vmatpush2.msra.mxu0 0.0
    %3222 = vmatprep.subr.mxu0 0.0
    %3223 = vmatpush2.msra.mxu0 0.0
    %3224 = vmatprep.subr.mxu0 0.0
    %3225 = vmatpush2.msra.mxu0 0.0
    %3226 = vmatprep.subr.mxu0 0.0
    %3227 = vmatpush2.msra.mxu0 0.0
    %3228 = vmatprep.subr.mxu0 0.0
    %3229 = vmatpush2.msra.mxu0 0.0
    %3230 = vmatprep.mubr.f32.mxu0 0.0
    %3231 = vmatmul.mubr.f32.gmra.mxu0 %v1746
    %v3232 = vpop.f32.mrf.mxu0
    %v3233 = vadd.f32 %v2951, %v3232
    %v3234 = vpop.f32.mrf.mxu0
    %3235 = vdwg.mxu0
    %3236 = vmatprep.subr.mxu0 0.0
    %3237 = vmatpush1.msra.mxu0 0.0
    %3238 = vmatprep.subr.mxu0 0.0
    %3239 = vmatpush1.msra.mxu0 0.0
    %3240 = vmatprep.subr.mxu0 0.0
    %3241 = vmatpush1.msra.mxu0 0.0
    %3242 = vmatprep.subr.mxu0 0.0
    %3243 = vmatpush1.msra.mxu0 0.0
    %3244 = vmatprep.subr.mxu0 0.0
    %3245 = vmatpush1.msra.mxu0 0.0
    %3246 = vmatprep.subr.mxu0 0.0
    %3247 = vmatpush1.msra.mxu0 0.0
    %3248 = vmatprep.subr.mxu0 0.0
    %3249 = vmatpush1.msra.mxu0 0.0
    %3250 = vmatprep.subr.mxu0 0.0
    %3251 = vmatpush1.msra.mxu0 0.0
    %3252 = vmatprep.subr.mxu0 0.0
    %3253 = vmatpush1.msra.mxu0 0.0
    %3254 = vmatprep.subr.mxu0 0.0
    %3255 = vmatpush1.msra.mxu0 0.0
    %3256 = vmatprep.subr.mxu0 0.0
    %3257 = vmatpush1.msra.mxu0 0.0
    %3258 = vmatprep.subr.mxu0 0.0
    %3259 = vmatpush1.msra.mxu0 0.0
    %3260 = vmatprep.subr.mxu0 0.0
    %3261 = vmatpush1.msra.mxu0 0.0
    %3262 = vmatprep.subr.mxu0 0.0
    %3263 = vmatpush1.msra.mxu0 0.0
    %3264 = vmatprep.subr.mxu0 0.0
    %3265 = vmatpush1.msra.mxu0 %v2954
    %3266 = vmatprep.subr.mxu0 0.0
    %3267 = vmatpush1.msra.mxu0 %v2943
    %3268 = vmatprep.subr.mxu0 0.0
    %3269 = vmatpush2.msra.mxu0 0.0
    %3270 = vmatprep.subr.mxu0 0.0
    %3271 = vmatpush2.msra.mxu0 0.0
    %3272 = vmatprep.subr.mxu0 0.0
    %3273 = vmatpush2.msra.mxu0 0.0
    %3274 = vmatprep.subr.mxu0 0.0
    %3275 = vmatpush2.msra.mxu0 0.0
    %3276 = vmatprep.subr.mxu0 0.0
    %3277 = vmatpush2.msra.mxu0 0.0
    %3278 = vmatprep.subr.mxu0 0.0
    %3279 = vmatpush2.msra.mxu0 0.0
    %3280 = vmatprep.subr.mxu0 0.0
    %3281 = vmatpush2.msra.mxu0 0.0
    %3282 = vmatprep.subr.mxu0 0.0
    %3283 = vmatpush2.msra.mxu0 0.0
    %3284 = vmatprep.subr.mxu0 0.0
    %3285 = vmatpush2.msra.mxu0 0.0
    %3286 = vmatprep.subr.mxu0 0.0
    %3287 = vmatpush2.msra.mxu0 0.0
    %3288 = vmatprep.subr.mxu0 0.0
    %3289 = vmatpush2.msra.mxu0 0.0
    %3290 = vmatprep.subr.mxu0 0.0
    %3291 = vmatpush2.msra.mxu0 0.0
    %3292 = vmatprep.subr.mxu0 0.0
    %3293 = vmatpush2.msra.mxu0 0.0
    %3294 = vmatprep.subr.mxu0 0.0
    %3295 = vmatpush2.msra.mxu0 0.0
    %3296 = vmatprep.subr.mxu0 0.0
    %3297 = vmatpush2.msra.mxu0 0.0
    %3298 = vmatprep.subr.mxu0 0.0
    %3299 = vmatpush2.msra.mxu0 0.0
    %3300 = vmatprep.mubr.f32.mxu0 0.0
    %3301 = vmatmul.mubr.f32.gmra.mxu0 %v1846
    %v3302 = vpop.f32.mrf.mxu0
    %v3303 = vadd.f32 %v2951, %v3302
    %v3304 = vpop.f32.mrf.mxu0
    %3305 = vdwg.mxu0
    %3306 = vmatprep.subr.mxu0 0.0
    %3307 = vmatpush1.msra.mxu0 0.0
    %3308 = vmatprep.subr.mxu0 0.0
    %3309 = vmatpush1.msra.mxu0 0.0
    %3310 = vmatprep.subr.mxu0 0.0
    %3311 = vmatpush1.msra.mxu0 0.0
    %3312 = vmatprep.subr.mxu0 0.0
    %3313 = vmatpush1.msra.mxu0 0.0
    %3314 = vmatprep.subr.mxu0 0.0
    %3315 = vmatpush1.msra.mxu0 0.0
    %3316 = vmatprep.subr.mxu0 0.0
    %3317 = vmatpush1.msra.mxu0 0.0
    %3318 = vmatprep.subr.mxu0 0.0
    %3319 = vmatpush1.msra.mxu0 0.0
    %3320 = vmatprep.subr.mxu0 0.0
    %3321 = vmatpush1.msra.mxu0 0.0
    %3322 = vmatprep.subr.mxu0 0.0
    %3323 = vmatpush1.msra.mxu0 0.0
    %3324 = vmatprep.subr.mxu0 0.0
    %3325 = vmatpush1.msra.mxu0 0.0
    %3326 = vmatprep.subr.mxu0 0.0
    %3327 = vmatpush1.msra.mxu0 0.0
    %3328 = vmatprep.subr.mxu0 0.0
    %3329 = vmatpush1.msra.mxu0 0.0
    %3330 = vmatprep.subr.mxu0 0.0
    %3331 = vmatpush1.msra.mxu0 0.0
    %3332 = vmatprep.subr.mxu0 0.0
    %3333 = vmatpush1.msra.mxu0 0.0
    %3334 = vmatprep.subr.mxu0 0.0
    %3335 = vmatpush1.msra.mxu0 %v2954
    %3336 = vmatprep.subr.mxu0 0.0
    %3337 = vmatpush1.msra.mxu0 %v2943
    %3338 = vmatprep.subr.mxu0 0.0
    %3339 = vmatpush2.msra.mxu0 0.0
    %3340 = vmatprep.subr.mxu0 0.0
    %3341 = vmatpush2.msra.mxu0 0.0
    %3342 = vmatprep.subr.mxu0 0.0
    %3343 = vmatpush2.msra.mxu0 0.0
    %3344 = vmatprep.subr.mxu0 0.0
    %3345 = vmatpush2.msra.mxu0 0.0
    %3346 = vmatprep.subr.mxu0 0.0
    %3347 = vmatpush2.msra.mxu0 0.0
    %3348 = vmatprep.subr.mxu0 0.0
    %3349 = vmatpush2.msra.mxu0 0.0
    %3350 = vmatprep.subr.mxu0 0.0
    %3351 = vmatpush2.msra.mxu0 0.0
    %3352 = vmatprep.subr.mxu0 0.0
    %3353 = vmatpush2.msra.mxu0 0.0
    %3354 = vmatprep.subr.mxu0 0.0
    %3355 = vmatpush2.msra.mxu0 0.0
    %3356 = vmatprep.subr.mxu0 0.0
    %3357 = vmatpush2.msra.mxu0 0.0
    %3358 = vmatprep.subr.mxu0 0.0
    %3359 = vmatpush2.msra.mxu0 0.0
    %3360 = vmatprep.subr.mxu0 0.0
    %3361 = vmatpush2.msra.mxu0 0.0
    %3362 = vmatprep.subr.mxu0 0.0
    %3363 = vmatpush2.msra.mxu0 0.0
    %3364 = vmatprep.subr.mxu0 0.0
    %3365 = vmatpush2.msra.mxu0 0.0
    %3366 = vmatprep.subr.mxu0 0.0
    %3367 = vmatpush2.msra.mxu0 0.0
    %3368 = vmatprep.subr.mxu0 0.0
    %3369 = vmatpush2.msra.mxu0 0.0
    %3370 = vmatprep.mubr.f32.mxu0 0.0
    %3371 = vmatmul.mubr.f32.gmra.mxu0 %v1946
    %v3372 = vpop.f32.mrf.mxu0
    %v3373 = vadd.f32 %v2951, %v3372
    %v3374 = vpop.f32.mrf.mxu0
    %3375 = vdwg.mxu0
    %3376 = vmatprep.subr.mxu0 0.0
    %3377 = vmatpush1.msra.mxu0 0.0
    %3378 = vmatprep.subr.mxu0 0.0
    %3379 = vmatpush1.msra.mxu0 0.0
    %3380 = vmatprep.subr.mxu0 0.0
    %3381 = vmatpush1.msra.mxu0 0.0
    %3382 = vmatprep.subr.mxu0 0.0
    %3383 = vmatpush1.msra.mxu0 0.0
    %3384 = vmatprep.subr.mxu0 0.0
    %3385 = vmatpush1.msra.mxu0 0.0
    %3386 = vmatprep.subr.mxu0 0.0
    %3387 = vmatpush1.msra.mxu0 0.0
    %3388 = vmatprep.subr.mxu0 0.0
    %3389 = vmatpush1.msra.mxu0 0.0
    %3390 = vmatprep.subr.mxu0 0.0
    %3391 = vmatpush1.msra.mxu0 0.0
    %3392 = vmatprep.subr.mxu0 0.0
    %3393 = vmatpush1.msra.mxu0 0.0
    %3394 = vmatprep.subr.mxu0 0.0
    %3395 = vmatpush1.msra.mxu0 0.0
    %3396 = vmatprep.subr.mxu0 0.0
    %3397 = vmatpush1.msra.mxu0 0.0
    %3398 = vmatprep.subr.mxu0 0.0
    %3399 = vmatpush1.msra.mxu0 0.0
    %3400 = vmatprep.subr.mxu0 0.0
    %3401 = vmatpush1.msra.mxu0 0.0
    %3402 = vmatprep.subr.mxu0 0.0
    %3403 = vmatpush1.msra.mxu0 0.0
    %3404 = vmatprep.subr.mxu0 0.0
    %3405 = vmatpush1.msra.mxu0 %v2954
    %3406 = vmatprep.subr.mxu0 0.0
    %3407 = vmatpush1.msra.mxu0 %v2943
    %3408 = vmatprep.subr.mxu0 0.0
    %3409 = vmatpush2.msra.mxu0 0.0
    %3410 = vmatprep.subr.mxu0 0.0
    %3411 = vmatpush2.msra.mxu0 0.0
    %3412 = vmatprep.subr.mxu0 0.0
    %3413 = vmatpush2.msra.mxu0 0.0
    %3414 = vmatprep.subr.mxu0 0.0
    %3415 = vmatpush2.msra.mxu0 0.0
    %3416 = vmatprep.subr.mxu0 0.0
    %3417 = vmatpush2.msra.mxu0 0.0
    %3418 = vmatprep.subr.mxu0 0.0
    %3419 = vmatpush2.msra.mxu0 0.0
    %3420 = vmatprep.subr.mxu0 0.0
    %3421 = vmatpush2.msra.mxu0 0.0
    %3422 = vmatprep.subr.mxu0 0.0
    %3423 = vmatpush2.msra.mxu0 0.0
    %3424 = vmatprep.subr.mxu0 0.0
    %3425 = vmatpush2.msra.mxu0 0.0
    %3426 = vmatprep.subr.mxu0 0.0
    %3427 = vmatpush2.msra.mxu0 0.0
    %3428 = vmatprep.subr.mxu0 0.0
    %3429 = vmatpush2.msra.mxu0 0.0
    %3430 = vmatprep.subr.mxu0 0.0
    %3431 = vmatpush2.msra.mxu0 0.0
    %3432 = vmatprep.subr.mxu0 0.0
    %3433 = vmatpush2.msra.mxu0 0.0
    %3434 = vmatprep.subr.mxu0 0.0
    %3435 = vmatpush2.msra.mxu0 0.0
    %3436 = vmatprep.subr.mxu0 0.0
    %3437 = vmatpush2.msra.mxu0 0.0
    %3438 = vmatprep.subr.mxu0 0.0
    %3439 = vmatpush2.msra.mxu0 0.0
    %3440 = vmatprep.mubr.f32.mxu0 0.0
    %3441 = vmatmul.mubr.f32.gmra.mxu0 %v2046
    %v3442 = vpop.f32.mrf.mxu0
    %v3443 = vadd.f32 %v2951, %v3442
    %v3444 = vpop.f32.mrf.mxu0
    %3445 = vdwg.mxu0
    %3446 = vmatprep.subr.mxu0 0.0
    %3447 = vmatpush1.msra.mxu0 0.0
    %3448 = vmatprep.subr.mxu0 0.0
    %3449 = vmatpush1.msra.mxu0 0.0
    %3450 = vmatprep.subr.mxu0 0.0
    %3451 = vmatpush1.msra.mxu0 0.0
    %3452 = vmatprep.subr.mxu0 0.0
    %3453 = vmatpush1.msra.mxu0 0.0
    %3454 = vmatprep.subr.mxu0 0.0
    %3455 = vmatpush1.msra.mxu0 0.0
    %3456 = vmatprep.subr.mxu0 0.0
    %3457 = vmatpush1.msra.mxu0 0.0
    %3458 = vmatprep.subr.mxu0 0.0
    %3459 = vmatpush1.msra.mxu0 0.0
    %3460 = vmatprep.subr.mxu0 0.0
    %3461 = vmatpush1.msra.mxu0 0.0
    %3462 = vmatprep.subr.mxu0 0.0
    %3463 = vmatpush1.msra.mxu0 0.0
    %3464 = vmatprep.subr.mxu0 0.0
    %3465 = vmatpush1.msra.mxu0 0.0
    %3466 = vmatprep.subr.mxu0 0.0
    %3467 = vmatpush1.msra.mxu0 0.0
    %3468 = vmatprep.subr.mxu0 0.0
    %3469 = vmatpush1.msra.mxu0 0.0
    %3470 = vmatprep.subr.mxu0 0.0
    %3471 = vmatpush1.msra.mxu0 0.0
    %3472 = vmatprep.subr.mxu0 0.0
    %3473 = vmatpush1.msra.mxu0 0.0
    %3474 = vmatprep.subr.mxu0 0.0
    %3475 = vmatpush1.msra.mxu0 %v2954
    %3476 = vmatprep.subr.mxu0 0.0
    %3477 = vmatpush1.msra.mxu0 %v2943
    %3478 = vmatprep.subr.mxu0 0.0
    %3479 = vmatpush2.msra.mxu0 0.0
    %3480 = vmatprep.subr.mxu0 0.0
    %3481 = vmatpush2.msra.mxu0 0.0
    %3482 = vmatprep.subr.mxu0 0.0
    %3483 = vmatpush2.msra.mxu0 0.0
    %3484 = vmatprep.subr.mxu0 0.0
    %3485 = vmatpush2.msra.mxu0 0.0
    %3486 = vmatprep.subr.mxu0 0.0
    %3487 = vmatpush2.msra.mxu0 0.0
    %3488 = vmatprep.subr.mxu0 0.0
    %3489 = vmatpush2.msra.mxu0 0.0
    %3490 = vmatprep.subr.mxu0 0.0
    %3491 = vmatpush2.msra.mxu0 0.0
    %3492 = vmatprep.subr.mxu0 0.0
    %3493 = vmatpush2.msra.mxu0 0.0
    %3494 = vmatprep.subr.mxu0 0.0
    %3495 = vmatpush2.msra.mxu0 0.0
    %3496 = vmatprep.subr.mxu0 0.0
    %3497 = vmatpush2.msra.mxu0 0.0
    %3498 = vmatprep.subr.mxu0 0.0
    %3499 = vmatpush2.msra.mxu0 0.0
    %3500 = vmatprep.subr.mxu0 0.0
    %3501 = vmatpush2.msra.mxu0 0.0
    %3502 = vmatprep.subr.mxu0 0.0
    %3503 = vmatpush2.msra.mxu0 0.0
    %3504 = vmatprep.subr.mxu0 0.0
    %3505 = vmatpush2.msra.mxu0 0.0
    %3506 = vmatprep.subr.mxu0 0.0
    %3507 = vmatpush2.msra.mxu0 0.0
    %3508 = vmatprep.subr.mxu0 0.0
    %3509 = vmatpush2.msra.mxu0 0.0
    %3510 = vmatprep.mubr.f32.mxu0 0.0
    %3511 = vmatmul.mubr.f32.gmra.mxu0 %v2146
    %v3512 = vpop.f32.mrf.mxu0
    %v3513 = vadd.f32 %v2951, %v3512
    %v3514 = vpop.f32.mrf.mxu0
    %3515 = vdwg.mxu0
    %3516 = vmatprep.subr.mxu0 0.0
    %3517 = vmatpush1.msra.mxu0 0.0
    %3518 = vmatprep.subr.mxu0 0.0
    %3519 = vmatpush1.msra.mxu0 0.0
    %3520 = vmatprep.subr.mxu0 0.0
    %3521 = vmatpush1.msra.mxu0 0.0
    %3522 = vmatprep.subr.mxu0 0.0
    %3523 = vmatpush1.msra.mxu0 0.0
    %3524 = vmatprep.subr.mxu0 0.0
    %3525 = vmatpush1.msra.mxu0 0.0
    %3526 = vmatprep.subr.mxu0 0.0
    %3527 = vmatpush1.msra.mxu0 0.0
    %3528 = vmatprep.subr.mxu0 0.0
    %3529 = vmatpush1.msra.mxu0 0.0
    %3530 = vmatprep.subr.mxu0 0.0
    %3531 = vmatpush1.msra.mxu0 0.0
    %3532 = vmatprep.subr.mxu0 0.0
    %3533 = vmatpush1.msra.mxu0 0.0
    %3534 = vmatprep.subr.mxu0 0.0
    %3535 = vmatpush1.msra.mxu0 0.0
    %3536 = vmatprep.subr.mxu0 0.0
    %3537 = vmatpush1.msra.mxu0 0.0
    %3538 = vmatprep.subr.mxu0 0.0
    %3539 = vmatpush1.msra.mxu0 0.0
    %3540 = vmatprep.subr.mxu0 0.0
    %3541 = vmatpush1.msra.mxu0 0.0
    %3542 = vmatprep.subr.mxu0 0.0
    %3543 = vmatpush1.msra.mxu0 0.0
    %3544 = vmatprep.subr.mxu0 0.0
    %3545 = vmatpush1.msra.mxu0 %v2954
    %3546 = vmatprep.subr.mxu0 0.0
    %3547 = vmatpush1.msra.mxu0 %v2943
    %3548 = vmatprep.subr.mxu0 0.0
    %3549 = vmatpush2.msra.mxu0 0.0
    %3550 = vmatprep.subr.mxu0 0.0
    %3551 = vmatpush2.msra.mxu0 0.0
    %3552 = vmatprep.subr.mxu0 0.0
    %3553 = vmatpush2.msra.mxu0 0.0
    %3554 = vmatprep.subr.mxu0 0.0
    %3555 = vmatpush2.msra.mxu0 0.0
    %3556 = vmatprep.subr.mxu0 0.0
    %3557 = vmatpush2.msra.mxu0 0.0
    %3558 = vmatprep.subr.mxu0 0.0
    %3559 = vmatpush2.msra.mxu0 0.0
    %3560 = vmatprep.subr.mxu0 0.0
    %3561 = vmatpush2.msra.mxu0 0.0
    %3562 = vmatprep.subr.mxu0 0.0
    %3563 = vmatpush2.msra.mxu0 0.0
    %3564 = vmatprep.subr.mxu0 0.0
    %3565 = vmatpush2.msra.mxu0 0.0
    %3566 = vmatprep.subr.mxu0 0.0
    %3567 = vmatpush2.msra.mxu0 0.0
    %3568 = vmatprep.subr.mxu0 0.0
    %3569 = vmatpush2.msra.mxu0 0.0
    %3570 = vmatprep.subr.mxu0 0.0
    %3571 = vmatpush2.msra.mxu0 0.0
    %3572 = vmatprep.subr.mxu0 0.0
    %3573 = vmatpush2.msra.mxu0 0.0
    %3574 = vmatprep.subr.mxu0 0.0
    %3575 = vmatpush2.msra.mxu0 0.0
    %3576 = vmatprep.subr.mxu0 0.0
    %3577 = vmatpush2.msra.mxu0 0.0
    %3578 = vmatprep.subr.mxu0 0.0
    %3579 = vmatpush2.msra.mxu0 0.0
    %3580 = vmatprep.mubr.f32.mxu0 0.0
    %3581 = vmatmul.mubr.f32.gmra.mxu0 %v2246
    %v3582 = vpop.f32.mrf.mxu0
    %v3583 = vadd.f32 %v2951, %v3582
    %v3584 = vpop.f32.mrf.mxu0
    %3585 = vdwg.mxu0
    %3586 = vmatprep.subr.mxu0 0.0
    %3587 = vmatpush1.msra.mxu0 0.0
    %3588 = vmatprep.subr.mxu0 0.0
    %3589 = vmatpush1.msra.mxu0 0.0
    %3590 = vmatprep.subr.mxu0 0.0
    %3591 = vmatpush1.msra.mxu0 0.0
    %3592 = vmatprep.subr.mxu0 0.0
    %3593 = vmatpush1.msra.mxu0 0.0
    %3594 = vmatprep.subr.mxu0 0.0
    %3595 = vmatpush1.msra.mxu0 0.0
    %3596 = vmatprep.subr.mxu0 0.0
    %3597 = vmatpush1.msra.mxu0 0.0
    %3598 = vmatprep.subr.mxu0 0.0
    %3599 = vmatpush1.msra.mxu0 0.0
    %3600 = vmatprep.subr.mxu0 0.0
    %3601 = vmatpush1.msra.mxu0 0.0
    %3602 = vmatprep.subr.mxu0 0.0
    %3603 = vmatpush1.msra.mxu0 0.0
    %3604 = vmatprep.subr.mxu0 0.0
    %3605 = vmatpush1.msra.mxu0 0.0
    %3606 = vmatprep.subr.mxu0 0.0
    %3607 = vmatpush1.msra.mxu0 0.0
    %3608 = vmatprep.subr.mxu0 0.0
    %3609 = vmatpush1.msra.mxu0 0.0
    %3610 = vmatprep.subr.mxu0 0.0
    %3611 = vmatpush1.msra.mxu0 0.0
    %3612 = vmatprep.subr.mxu0 0.0
    %3613 = vmatpush1.msra.mxu0 0.0
    %3614 = vmatprep.subr.mxu0 0.0
    %3615 = vmatpush1.msra.mxu0 %v2954
    %3616 = vmatprep.subr.mxu0 0.0
    %3617 = vmatpush1.msra.mxu0 %v2943
    %3618 = vmatprep.subr.mxu0 0.0
    %3619 = vmatpush2.msra.mxu0 0.0
    %3620 = vmatprep.subr.mxu0 0.0
    %3621 = vmatpush2.msra.mxu0 0.0
    %3622 = vmatprep.subr.mxu0 0.0
    %3623 = vmatpush2.msra.mxu0 0.0
    %3624 = vmatprep.subr.mxu0 0.0
    %3625 = vmatpush2.msra.mxu0 0.0
    %3626 = vmatprep.subr.mxu0 0.0
    %3627 = vmatpush2.msra.mxu0 0.0
    %3628 = vmatprep.subr.mxu0 0.0
    %3629 = vmatpush2.msra.mxu0 0.0
    %3630 = vmatprep.subr.mxu0 0.0
    %3631 = vmatpush2.msra.mxu0 0.0
    %3632 = vmatprep.subr.mxu0 0.0
    %3633 = vmatpush2.msra.mxu0 0.0
    %3634 = vmatprep.subr.mxu0 0.0
    %3635 = vmatpush2.msra.mxu0 0.0
    %3636 = vmatprep.subr.mxu0 0.0
    %3637 = vmatpush2.msra.mxu0 0.0
    %3638 = vmatprep.subr.mxu0 0.0
    %3639 = vmatpush2.msra.mxu0 0.0
    %3640 = vmatprep.subr.mxu0 0.0
    %3641 = vmatpush2.msra.mxu0 0.0
    %3642 = vmatprep.subr.mxu0 0.0
    %3643 = vmatpush2.msra.mxu0 0.0
    %3644 = vmatprep.subr.mxu0 0.0
    %3645 = vmatpush2.msra.mxu0 0.0
    %3646 = vmatprep.subr.mxu0 0.0
    %3647 = vmatpush2.msra.mxu0 0.0
    %3648 = vmatprep.subr.mxu0 0.0
    %3649 = vmatpush2.msra.mxu0 0.0
    %3650 = vmatprep.mubr.f32.mxu0 0.0
    %3651 = vmatmul.mubr.f32.gmra.mxu0 %v2346
    %v3652 = vpop.f32.mrf.mxu0
    %v3653 = vadd.f32 %v2951, %v3652
    %v3654 = vpop.f32.mrf.mxu0
    %3655 = vdwg.mxu0
    %3656 = vmatprep.subr.mxu0 0.0
    %3657 = vmatpush1.msra.mxu0 0.0
    %3658 = vmatprep.subr.mxu0 0.0
    %3659 = vmatpush1.msra.mxu0 0.0
    %3660 = vmatprep.subr.mxu0 0.0
    %3661 = vmatpush1.msra.mxu0 0.0
    %3662 = vmatprep.subr.mxu0 0.0
    %3663 = vmatpush1.msra.mxu0 0.0
    %3664 = vmatprep.subr.mxu0 0.0
    %3665 = vmatpush1.msra.mxu0 0.0
    %3666 = vmatprep.subr.mxu0 0.0
    %3667 = vmatpush1.msra.mxu0 0.0
    %3668 = vmatprep.subr.mxu0 0.0
    %3669 = vmatpush1.msra.mxu0 0.0
    %3670 = vmatprep.subr.mxu0 0.0
    %3671 = vmatpush1.msra.mxu0 0.0
    %3672 = vmatprep.subr.mxu0 0.0
    %3673 = vmatpush1.msra.mxu0 0.0
    %3674 = vmatprep.subr.mxu0 0.0
    %3675 = vmatpush1.msra.mxu0 0.0
    %3676 = vmatprep.subr.mxu0 0.0
    %3677 = vmatpush1.msra.mxu0 0.0
    %3678 = vmatprep.subr.mxu0 0.0
    %3679 = vmatpush1.msra.mxu0 0.0
    %3680 = vmatprep.subr.mxu0 0.0
    %3681 = vmatpush1.msra.mxu0 0.0
    %3682 = vmatprep.subr.mxu0 0.0
    %3683 = vmatpush1.msra.mxu0 0.0
    %3684 = vmatprep.subr.mxu0 0.0
    %3685 = vmatpush1.msra.mxu0 %v2954
    %3686 = vmatprep.subr.mxu0 0.0
    %3687 = vmatpush1.msra.mxu0 %v2943
    %3688 = vmatprep.subr.mxu0 0.0
    %3689 = vmatpush2.msra.mxu0 0.0
    %3690 = vmatprep.subr.mxu0 0.0
    %3691 = vmatpush2.msra.mxu0 0.0
    %3692 = vmatprep.subr.mxu0 0.0
    %3693 = vmatpush2.msra.mxu0 0.0
    %3694 = vmatprep.subr.mxu0 0.0
    %3695 = vmatpush2.msra.mxu0 0.0
    %3696 = vmatprep.subr.mxu0 0.0
    %3697 = vmatpush2.msra.mxu0 0.0
    %3698 = vmatprep.subr.mxu0 0.0
    %3699 = vmatpush2.msra.mxu0 0.0
    %3700 = vmatprep.subr.mxu0 0.0
    %3701 = vmatpush2.msra.mxu0 0.0
    %3702 = vmatprep.subr.mxu0 0.0
    %3703 = vmatpush2.msra.mxu0 0.0
    %3704 = vmatprep.subr.mxu0 0.0
    %3705 = vmatpush2.msra.mxu0 0.0
    %3706 = vmatprep.subr.mxu0 0.0
    %3707 = vmatpush2.msra.mxu0 0.0
    %3708 = vmatprep.subr.mxu0 0.0
    %3709 = vmatpush2.msra.mxu0 0.0
    %3710 = vmatprep.subr.mxu0 0.0
    %3711 = vmatpush2.msra.mxu0 0.0
    %3712 = vmatprep.subr.mxu0 0.0
    %3713 = vmatpush2.msra.mxu0 0.0
    %3714 = vmatprep.subr.mxu0 0.0
    %3715 = vmatpush2.msra.mxu0 0.0
    %3716 = vmatprep.subr.mxu0 0.0
    %3717 = vmatpush2.msra.mxu0 0.0
    %3718 = vmatprep.subr.mxu0 0.0
    %3719 = vmatpush2.msra.mxu0 0.0
    %3720 = vmatprep.mubr.f32.mxu0 0.0
    %3721 = vmatmul.mubr.f32.gmra.mxu0 %v2446
    %v3722 = vpop.f32.mrf.mxu0
    %v3723 = vadd.f32 %v2951, %v3722
    %v3724 = vpop.f32.mrf.mxu0
    %3725 = vdwg.mxu0
    %3726 = vmatprep.subr.mxu0 0.0
    %3727 = vmatpush1.msra.mxu0 0.0
    %3728 = vmatprep.subr.mxu0 0.0
    %3729 = vmatpush1.msra.mxu0 0.0
    %3730 = vmatprep.subr.mxu0 0.0
    %3731 = vmatpush1.msra.mxu0 0.0
    %3732 = vmatprep.subr.mxu0 0.0
    %3733 = vmatpush1.msra.mxu0 0.0
    %3734 = vmatprep.subr.mxu0 0.0
    %3735 = vmatpush1.msra.mxu0 0.0
    %3736 = vmatprep.subr.mxu0 0.0
    %3737 = vmatpush1.msra.mxu0 0.0
    %3738 = vmatprep.subr.mxu0 0.0
    %3739 = vmatpush1.msra.mxu0 0.0
    %3740 = vmatprep.subr.mxu0 0.0
    %3741 = vmatpush1.msra.mxu0 0.0
    %3742 = vmatprep.subr.mxu0 0.0
    %3743 = vmatpush1.msra.mxu0 0.0
    %3744 = vmatprep.subr.mxu0 0.0
    %3745 = vmatpush1.msra.mxu0 0.0
    %3746 = vmatprep.subr.mxu0 0.0
    %3747 = vmatpush1.msra.mxu0 0.0
    %3748 = vmatprep.subr.mxu0 0.0
    %3749 = vmatpush1.msra.mxu0 0.0
    %3750 = vmatprep.subr.mxu0 0.0
    %3751 = vmatpush1.msra.mxu0 0.0
    %3752 = vmatprep.subr.mxu0 0.0
    %3753 = vmatpush1.msra.mxu0 0.0
    %3754 = vmatprep.subr.mxu0 0.0
    %3755 = vmatpush1.msra.mxu0 %v2954
    %3756 = vmatprep.subr.mxu0 0.0
    %3757 = vmatpush1.msra.mxu0 %v2943
    %3758 = vmatprep.subr.mxu0 0.0
    %3759 = vmatpush2.msra.mxu0 0.0
    %3760 = vmatprep.subr.mxu0 0.0
    %3761 = vmatpush2.msra.mxu0 0.0
    %3762 = vmatprep.subr.mxu0 0.0
    %3763 = vmatpush2.msra.mxu0 0.0
    %3764 = vmatprep.subr.mxu0 0.0
    %3765 = vmatpush2.msra.mxu0 0.0
    %3766 = vmatprep.subr.mxu0 0.0
    %3767 = vmatpush2.msra.mxu0 0.0
    %3768 = vmatprep.subr.mxu0 0.0
    %3769 = vmatpush2.msra.mxu0 0.0
    %3770 = vmatprep.subr.mxu0 0.0
    %3771 = vmatpush2.msra.mxu0 0.0
    %3772 = vmatprep.subr.mxu0 0.0
    %3773 = vmatpush2.msra.mxu0 0.0
    %3774 = vmatprep.subr.mxu0 0.0
    %3775 = vmatpush2.msra.mxu0 0.0
    %3776 = vmatprep.subr.mxu0 0.0
    %3777 = vmatpush2.msra.mxu0 0.0
    %3778 = vmatprep.subr.mxu0 0.0
    %3779 = vmatpush2.msra.mxu0 0.0
    %3780 = vmatprep.subr.mxu0 0.0
    %3781 = vmatpush2.msra.mxu0 0.0
    %3782 = vmatprep.subr.mxu0 0.0
    %3783 = vmatpush2.msra.mxu0 0.0
    %3784 = vmatprep.subr.mxu0 0.0
    %3785 = vmatpush2.msra.mxu0 0.0
    %3786 = vmatprep.subr.mxu0 0.0
    %3787 = vmatpush2.msra.mxu0 0.0
    %3788 = vmatprep.subr.mxu0 0.0
    %3789 = vmatpush2.msra.mxu0 0.0
    %3790 = vmatprep.mubr.f32.mxu0 0.0
    %3791 = vmatmul.mubr.f32.gmra.mxu0 %v2546
    %v3792 = vpop.f32.mrf.mxu0
    %v3793 = vadd.f32 %v2951, %v3792
    %v3794 = vpop.f32.mrf.mxu0
    %3795 = vdwg.mxu0
    %3796 = vmatprep.subr.mxu0 0.0
    %3797 = vmatpush1.msra.mxu0 0.0
    %3798 = vmatprep.subr.mxu0 0.0
    %3799 = vmatpush1.msra.mxu0 0.0
    %3800 = vmatprep.subr.mxu0 0.0
    %3801 = vmatpush1.msra.mxu0 0.0
    %3802 = vmatprep.subr.mxu0 0.0
    %3803 = vmatpush1.msra.mxu0 0.0
    %3804 = vmatprep.subr.mxu0 0.0
    %3805 = vmatpush1.msra.mxu0 0.0
    %3806 = vmatprep.subr.mxu0 0.0
    %3807 = vmatpush1.msra.mxu0 0.0
    %3808 = vmatprep.subr.mxu0 0.0
    %3809 = vmatpush1.msra.mxu0 0.0
    %3810 = vmatprep.subr.mxu0 0.0
    %3811 = vmatpush1.msra.mxu0 0.0
    %3812 = vmatprep.subr.mxu0 0.0
    %3813 = vmatpush1.msra.mxu0 0.0
    %3814 = vmatprep.subr.mxu0 0.0
    %3815 = vmatpush1.msra.mxu0 0.0
    %3816 = vmatprep.subr.mxu0 0.0
    %3817 = vmatpush1.msra.mxu0 0.0
    %3818 = vmatprep.subr.mxu0 0.0
    %3819 = vmatpush1.msra.mxu0 0.0
    %3820 = vmatprep.subr.mxu0 0.0
    %3821 = vmatpush1.msra.mxu0 0.0
    %3822 = vmatprep.subr.mxu0 0.0
    %3823 = vmatpush1.msra.mxu0 0.0
    %3824 = vmatprep.subr.mxu0 0.0
    %3825 = vmatpush1.msra.mxu0 %v2954
    %3826 = vmatprep.subr.mxu0 0.0
    %3827 = vmatpush1.msra.mxu0 %v2943
    %3828 = vmatprep.subr.mxu0 0.0
    %3829 = vmatpush2.msra.mxu0 0.0
    %3830 = vmatprep.subr.mxu0 0.0
    %3831 = vmatpush2.msra.mxu0 0.0
    %3832 = vmatprep.subr.mxu0 0.0
    %3833 = vmatpush2.msra.mxu0 0.0
    %3834 = vmatprep.subr.mxu0 0.0
    %3835 = vmatpush2.msra.mxu0 0.0
    %3836 = vmatprep.subr.mxu0 0.0
    %3837 = vmatpush2.msra.mxu0 0.0
    %3838 = vmatprep.subr.mxu0 0.0
    %3839 = vmatpush2.msra.mxu0 0.0
    %3840 = vmatprep.subr.mxu0 0.0
    %3841 = vmatpush2.msra.mxu0 0.0
    %3842 = vmatprep.subr.mxu0 0.0
    %3843 = vmatpush2.msra.mxu0 0.0
    %3844 = vmatprep.subr.mxu0 0.0
    %3845 = vmatpush2.msra.mxu0 0.0
    %3846 = vmatprep.subr.mxu0 0.0
    %3847 = vmatpush2.msra.mxu0 0.0
    %3848 = vmatprep.subr.mxu0 0.0
    %3849 = vmatpush2.msra.mxu0 0.0
    %3850 = vmatprep.subr.mxu0 0.0
    %3851 = vmatpush2.msra.mxu0 0.0
    %3852 = vmatprep.subr.mxu0 0.0
    %3853 = vmatpush2.msra.mxu0 0.0
    %3854 = vmatprep.subr.mxu0 0.0
    %3855 = vmatpush2.msra.mxu0 0.0
    %3856 = vmatprep.subr.mxu0 0.0
    %3857 = vmatpush2.msra.mxu0 0.0
    %3858 = vmatprep.subr.mxu0 0.0
    %3859 = vmatpush2.msra.mxu0 0.0
    %3860 = vmatprep.mubr.f32.mxu0 0.0
    %3861 = vmatmul.mubr.f32.gmra.mxu0 %v2646
    %v3862 = vpop.f32.mrf.mxu0
    %v3863 = vadd.f32 %v2951, %v3862
    %v3864 = vpop.f32.mrf.mxu0
    %3865 = vdwg.mxu0
    %3866 = vmatprep.subr.mxu0 0.0
    %3867 = vmatpush1.msra.mxu0 0.0
    %3868 = vmatprep.subr.mxu0 0.0
    %3869 = vmatpush1.msra.mxu0 0.0
    %3870 = vmatprep.subr.mxu0 0.0
    %3871 = vmatpush1.msra.mxu0 0.0
    %3872 = vmatprep.subr.mxu0 0.0
    %3873 = vmatpush1.msra.mxu0 0.0
    %3874 = vmatprep.subr.mxu0 0.0
    %3875 = vmatpush1.msra.mxu0 0.0
    %3876 = vmatprep.subr.mxu0 0.0
    %3877 = vmatpush1.msra.mxu0 0.0
    %3878 = vmatprep.subr.mxu0 0.0
    %3879 = vmatpush1.msra.mxu0 0.0
    %3880 = vmatprep.subr.mxu0 0.0
    %3881 = vmatpush1.msra.mxu0 0.0
    %3882 = vmatprep.subr.mxu0 0.0
    %3883 = vmatpush1.msra.mxu0 0.0
    %3884 = vmatprep.subr.mxu0 0.0
    %3885 = vmatpush1.msra.mxu0 0.0
    %3886 = vmatprep.subr.mxu0 0.0
    %3887 = vmatpush1.msra.mxu0 0.0
    %3888 = vmatprep.subr.mxu0 0.0
    %3889 = vmatpush1.msra.mxu0 0.0
    %3890 = vmatprep.subr.mxu0 0.0
    %3891 = vmatpush1.msra.mxu0 0.0
    %3892 = vmatprep.subr.mxu0 0.0
    %3893 = vmatpush1.msra.mxu0 0.0
    %3894 = vmatprep.subr.mxu0 0.0
    %3895 = vmatpush1.msra.mxu0 %v2954
    %3896 = vmatprep.subr.mxu0 0.0
    %3897 = vmatpush1.msra.mxu0 %v2943
    %3898 = vmatprep.subr.mxu0 0.0
    %3899 = vmatpush2.msra.mxu0 0.0
    %3900 = vmatprep.subr.mxu0 0.0
    %3901 = vmatpush2.msra.mxu0 0.0
    %3902 = vmatprep.subr.mxu0 0.0
    %3903 = vmatpush2.msra.mxu0 0.0
    %3904 = vmatprep.subr.mxu0 0.0
    %3905 = vmatpush2.msra.mxu0 0.0
    %3906 = vmatprep.subr.mxu0 0.0
    %3907 = vmatpush2.msra.mxu0 0.0
    %3908 = vmatprep.subr.mxu0 0.0
    %3909 = vmatpush2.msra.mxu0 0.0
    %3910 = vmatprep.subr.mxu0 0.0
    %3911 = vmatpush2.msra.mxu0 0.0
    %3912 = vmatprep.subr.mxu0 0.0
    %3913 = vmatpush2.msra.mxu0 0.0
    %3914 = vmatprep.subr.mxu0 0.0
    %3915 = vmatpush2.msra.mxu0 0.0
    %3916 = vmatprep.subr.mxu0 0.0
    %3917 = vmatpush2.msra.mxu0 0.0
    %3918 = vmatprep.subr.mxu0 0.0
    %3919 = vmatpush2.msra.mxu0 0.0
    %3920 = vmatprep.subr.mxu0 0.0
    %3921 = vmatpush2.msra.mxu0 0.0
    %3922 = vmatprep.subr.mxu0 0.0
    %3923 = vmatpush2.msra.mxu0 0.0
    %3924 = vmatprep.subr.mxu0 0.0
    %3925 = vmatpush2.msra.mxu0 0.0
    %3926 = vmatprep.subr.mxu0 0.0
    %3927 = vmatpush2.msra.mxu0 0.0
    %3928 = vmatprep.subr.mxu0 0.0
    %3929 = vmatpush2.msra.mxu0 0.0
    %3930 = vmatprep.mubr.f32.mxu0 0.0
    %3931 = vmatmul.mubr.f32.gmra.mxu0 %v2746
    %v3932 = vpop.f32.mrf.mxu0
    %v3933 = vadd.f32 %v2951, %v3932
    %v3934 = vpop.f32.mrf.mxu0
    %3935 = vdwg.mxu0
    %3936 = vmatprep.subr.mxu0 0.0
    %3937 = vmatpush1.msra.mxu0 0.0
    %3938 = vmatprep.subr.mxu0 0.0
    %3939 = vmatpush1.msra.mxu0 0.0
    %3940 = vmatprep.subr.mxu0 0.0
    %3941 = vmatpush1.msra.mxu0 0.0
    %3942 = vmatprep.subr.mxu0 0.0
    %3943 = vmatpush1.msra.mxu0 0.0
    %3944 = vmatprep.subr.mxu0 0.0
    %3945 = vmatpush1.msra.mxu0 0.0
    %3946 = vmatprep.subr.mxu0 0.0
    %3947 = vmatpush1.msra.mxu0 0.0
    %3948 = vmatprep.subr.mxu0 0.0
    %3949 = vmatpush1.msra.mxu0 0.0
    %3950 = vmatprep.subr.mxu0 0.0
    %3951 = vmatpush1.msra.mxu0 0.0
    %3952 = vmatprep.subr.mxu0 0.0
    %3953 = vmatpush1.msra.mxu0 0.0
    %3954 = vmatprep.subr.mxu0 0.0
    %3955 = vmatpush1.msra.mxu0 0.0
    %3956 = vmatprep.subr.mxu0 0.0
    %3957 = vmatpush1.msra.mxu0 0.0
    %3958 = vmatprep.subr.mxu0 0.0
    %3959 = vmatpush1.msra.mxu0 0.0
    %3960 = vmatprep.subr.mxu0 0.0
    %3961 = vmatpush1.msra.mxu0 0.0
    %3962 = vmatprep.subr.mxu0 0.0
    %3963 = vmatpush1.msra.mxu0 0.0
    %3964 = vmatprep.subr.mxu0 0.0
    %3965 = vmatpush1.msra.mxu0 %v2954
    %3966 = vmatprep.subr.mxu0 0.0
    %3967 = vmatpush1.msra.mxu0 %v2943
    %3968 = vmatprep.subr.mxu0 0.0
    %3969 = vmatpush2.msra.mxu0 0.0
    %3970 = vmatprep.subr.mxu0 0.0
    %3971 = vmatpush2.msra.mxu0 0.0
    %3972 = vmatprep.subr.mxu0 0.0
    %3973 = vmatpush2.msra.mxu0 0.0
    %3974 = vmatprep.subr.mxu0 0.0
    %3975 = vmatpush2.msra.mxu0 0.0
    %3976 = vmatprep.subr.mxu0 0.0
    %3977 = vmatpush2.msra.mxu0 0.0
    %3978 = vmatprep.subr.mxu0 0.0
    %3979 = vmatpush2.msra.mxu0 0.0
    %3980 = vmatprep.subr.mxu0 0.0
    %3981 = vmatpush2.msra.mxu0 0.0
    %3982 = vmatprep.subr.mxu0 0.0
    %3983 = vmatpush2.msra.mxu0 0.0
    %3984 = vmatprep.subr.mxu0 0.0
    %3985 = vmatpush2.msra.mxu0 0.0
    %3986 = vmatprep.subr.mxu0 0.0
    %3987 = vmatpush2.msra.mxu0 0.0
    %3988 = vmatprep.subr.mxu0 0.0
    %3989 = vmatpush2.msra.mxu0 0.0
    %3990 = vmatprep.subr.mxu0 0.0
    %3991 = vmatpush2.msra.mxu0 0.0
    %3992 = vmatprep.subr.mxu0 0.0
    %3993 = vmatpush2.msra.mxu0 0.0
    %3994 = vmatprep.subr.mxu0 0.0
    %3995 = vmatpush2.msra.mxu0 0.0
    %3996 = vmatprep.subr.mxu0 0.0
    %3997 = vmatpush2.msra.mxu0 0.0
    %3998 = vmatprep.subr.mxu0 0.0
    %3999 = vmatpush2.msra.mxu0 0.0
    %4000 = vmatprep.mubr.f32.mxu0 0.0
    %4001 = vmatmul.mubr.f32.gmra.mxu0 %v2846
    %v4002 = vpop.f32.mrf.mxu0
    %v4003 = vadd.f32 %v2951, %v4002
    %v4004 = vpop.f32.mrf.mxu0
    %4005 = vdwg.mxu0
    %4007 = vrot.lane.b32.xlu0 %v2942, 83
    %v4008 = vpop.permute.xlu0 %4007
    %v4009 = vsel %vm1340, %v4008, 0
    %4011 = vmatprep.subr.mxu0 0.0
    %4012 = vmatpush1.msra.mxu0 0.0
    %4013 = vmatprep.subr.mxu0 0.0
    %4014 = vmatpush1.msra.mxu0 0.0
    %4015 = vmatprep.subr.mxu0 0.0
    %4016 = vmatpush1.msra.mxu0 0.0
    %4017 = vmatprep.subr.mxu0 0.0
    %4018 = vmatpush1.msra.mxu0 0.0
    %4019 = vmatprep.subr.mxu0 0.0
    %4020 = vmatpush1.msra.mxu0 0.0
    %4021 = vmatprep.subr.mxu0 0.0
    %4022 = vmatpush1.msra.mxu0 0.0
    %4023 = vmatprep.subr.mxu0 0.0
    %4024 = vmatpush1.msra.mxu0 0.0
    %4025 = vmatprep.subr.mxu0 0.0
    %4026 = vmatpush1.msra.mxu0 0.0
    %4027 = vmatprep.subr.mxu0 0.0
    %4028 = vmatpush1.msra.mxu0 0.0
    %4029 = vmatprep.subr.mxu0 0.0
    %4030 = vmatpush1.msra.mxu0 0.0
    %4031 = vmatprep.subr.mxu0 0.0
    %4032 = vmatpush1.msra.mxu0 0.0
    %4033 = vmatprep.subr.mxu0 0.0
    %4034 = vmatpush1.msra.mxu0 0.0
    %4035 = vmatprep.subr.mxu0 0.0
    %4036 = vmatpush1.msra.mxu0 0.0
    %4037 = vmatprep.subr.mxu0 0.0
    %4038 = vmatpush1.msra.mxu0 0.0
    %4039 = vmatprep.subr.mxu0 0.0
    %4040 = vmatpush1.msra.mxu0 %v2954
    %4041 = vmatprep.subr.mxu0 0.0
    %4042 = vmatpush1.msra.mxu0 %v2943
    %4043 = vmatprep.subr.mxu0 0.0
    %4044 = vmatpush2.msra.mxu0 0.0
    %4045 = vmatprep.subr.mxu0 0.0
    %4046 = vmatpush2.msra.mxu0 0.0
    %4047 = vmatprep.subr.mxu0 0.0
    %4048 = vmatpush2.msra.mxu0 0.0
    %4049 = vmatprep.subr.mxu0 0.0
    %4050 = vmatpush2.msra.mxu0 0.0
    %4051 = vmatprep.subr.mxu0 0.0
    %4052 = vmatpush2.msra.mxu0 0.0
    %4053 = vmatprep.subr.mxu0 0.0
    %4054 = vmatpush2.msra.mxu0 0.0
    %4055 = vmatprep.subr.mxu0 0.0
    %4056 = vmatpush2.msra.mxu0 0.0
    %4057 = vmatprep.subr.mxu0 0.0
    %4058 = vmatpush2.msra.mxu0 0.0
    %4059 = vmatprep.subr.mxu0 0.0
    %4060 = vmatpush2.msra.mxu0 0.0
    %4061 = vmatprep.subr.mxu0 0.0
    %4062 = vmatpush2.msra.mxu0 0.0
    %4063 = vmatprep.subr.mxu0 0.0
    %4064 = vmatpush2.msra.mxu0 0.0
    %4065 = vmatprep.subr.mxu0 0.0
    %4066 = vmatpush2.msra.mxu0 0.0
    %4067 = vmatprep.subr.mxu0 0.0
    %4068 = vmatpush2.msra.mxu0 0.0
    %4069 = vmatprep.subr.mxu0 0.0
    %4070 = vmatpush2.msra.mxu0 0.0
    %4071 = vmatprep.subr.mxu0 0.0
    %4072 = vmatpush2.msra.mxu0 0.0
    %4073 = vmatprep.subr.mxu0 0.0
    %4074 = vmatpush2.msra.mxu0 0.0
    %4075 = vmatprep.mubr.f32.mxu0 0.0
    %4076 = vmatmul.mubr.f32.gmra.mxu0 %v4009
    %v4077 = vpop.f32.mrf.mxu0
    %v4078 = vadd.f32 %v2951, %v4077
    %v4079 = vpop.f32.mrf.mxu0
    %4080 = vdwg.mxu0
    %vm4081 = vcmask 56320
    %v4082 = vsel %vm4081, 0.0, 0
    %v4085 = vsel %vm1344, %v2945, 0
    %4087 = vmatprep.subr.mxu0 0.0
    %4088 = vmatpush1.msra.mxu0 0.0
    %4089 = vmatprep.subr.mxu0 0.0
    %4090 = vmatpush1.msra.mxu0 0.0
    %4091 = vmatprep.subr.mxu0 0.0
    %4092 = vmatpush1.msra.mxu0 0.0
    %4093 = vmatprep.subr.mxu0 0.0
    %4094 = vmatpush1.msra.mxu0 0.0
    %4095 = vmatprep.subr.mxu0 0.0
    %4096 = vmatpush1.msra.mxu0 0.0
    %4097 = vmatprep.subr.mxu0 0.0
    %4098 = vmatpush1.msra.mxu0 0.0
    %4099 = vmatprep.subr.mxu0 0.0
    %4100 = vmatpush1.msra.mxu0 0.0
    %4101 = vmatprep.subr.mxu0 0.0
    %4102 = vmatpush1.msra.mxu0 0.0
    %4103 = vmatprep.subr.mxu0 0.0
    %4104 = vmatpush1.msra.mxu0 0.0
    %4105 = vmatprep.subr.mxu0 0.0
    %4106 = vmatpush1.msra.mxu0 0.0
    %4107 = vmatprep.subr.mxu0 0.0
    %4108 = vmatpush1.msra.mxu0 0.0
    %4109 = vmatprep.subr.mxu0 0.0
    %4110 = vmatpush1.msra.mxu0 0.0
    %4111 = vmatprep.subr.mxu0 0.0
    %4112 = vmatpush1.msra.mxu0 0.0
    %4113 = vmatprep.subr.mxu0 0.0
    %4114 = vmatpush1.msra.mxu0 0.0
    %4115 = vmatprep.subr.mxu0 0.0
    %4116 = vmatpush1.msra.mxu0 0.0
    %4117 = vmatprep.subr.mxu0 0.0
    %4118 = vmatpush1.msra.mxu0 %v4085
    %4119 = vmatprep.subr.mxu0 0.0
    %4120 = vmatpush2.msra.mxu0 0.0
    %4121 = vmatprep.subr.mxu0 0.0
    %4122 = vmatpush2.msra.mxu0 0.0
    %4123 = vmatprep.subr.mxu0 0.0
    %4124 = vmatpush2.msra.mxu0 0.0
    %4125 = vmatprep.subr.mxu0 0.0
    %4126 = vmatpush2.msra.mxu0 0.0
    %4127 = vmatprep.subr.mxu0 0.0
    %4128 = vmatpush2.msra.mxu0 0.0
    %4129 = vmatprep.subr.mxu0 0.0
    %4130 = vmatpush2.msra.mxu0 0.0
    %4131 = vmatprep.subr.mxu0 0.0
    %4132 = vmatpush2.msra.mxu0 0.0
    %4133 = vmatprep.subr.mxu0 0.0
    %4134 = vmatpush2.msra.mxu0 0.0
    %4135 = vmatprep.subr.mxu0 0.0
    %4136 = vmatpush2.msra.mxu0 0.0
    %4137 = vmatprep.subr.mxu0 0.0
    %4138 = vmatpush2.msra.mxu0 0.0
    %4139 = vmatprep.subr.mxu0 0.0
    %4140 = vmatpush2.msra.mxu0 0.0
    %4141 = vmatprep.subr.mxu0 0.0
    %4142 = vmatpush2.msra.mxu0 0.0
    %4143 = vmatprep.subr.mxu0 0.0
    %4144 = vmatpush2.msra.mxu0 0.0
    %4145 = vmatprep.subr.mxu0 0.0
    %4146 = vmatpush2.msra.mxu0 0.0
    %4147 = vmatprep.subr.mxu0 0.0
    %4148 = vmatpush2.msra.mxu0 0.0
    %4149 = vmatprep.subr.mxu0 0.0
    %4150 = vmatpush2.msra.mxu0 0.0
    %4151 = vmatprep.mubr.f32.mxu0 0.0
    %4152 = vmatmul.mubr.f32.gmra.mxu0 %v4082
    %v4153 = vpop.f32.mrf.mxu0
    %v4154 = vadd.f32 0.0, %v4153
    %v4155 = vpop.f32.mrf.mxu0
    %4156 = vdwg.mxu0
    %v4157 = vadd.f32 %v3023, %v4154
    %v4158 = vxor.u32 %v4157, 2147483648
    %v4159 = vmul.f32 %v4158, 1.442695
    %v4160 = vpow.pop %v4159
    %v4161 = vadd.f32 %v4160, 1.0
    %v4162 = vrcp.pop %v4161
    %v4163 = vmul.f32 1.0, %v4162
    %v4164 = vtanh.pop %v4157
    %v4165 = vmul.f32 %v4163, 0.0
    %4167 = vrot.lane.b32.xlu0 %v4164, 114
    %v4168 = vpop.permute.xlu0 %4167
    %v4170 = vmul.f32 %v4163, %v4168
    %4172 = vrot.lane.b32.xlu0 %v4170, 7
    %v4173 = vpop.permute.xlu0 %4172
    %v4175 = vadd.f32 %v4165, %v4173
    %v4176 = vtanh.pop %v4175
    %4178 = vrot.lane.b32.xlu0 %v4176, 14
    %v4179 = vpop.permute.xlu0 %4178
    %v4181 = vmul.f32 %v4163, %v4179
    %4183 = vrot.lane.b32.xlu0 %v4181, 107
    %v4184 = vpop.permute.xlu0 %4183
    %v4185 = vsel %vm4081, %v4184, 0
    %4187 = vmatprep.subr.mxu0 0.0
    %4188 = vmatpush1.msra.mxu0 0.0
    %4189 = vmatprep.subr.mxu0 0.0
    %4190 = vmatpush1.msra.mxu0 0.0
    %4191 = vmatprep.subr.mxu0 0.0
    %4192 = vmatpush1.msra.mxu0 0.0
    %4193 = vmatprep.subr.mxu0 0.0
    %4194 = vmatpush1.msra.mxu0 0.0
    %4195 = vmatprep.subr.mxu0 0.0
    %4196 = vmatpush1.msra.mxu0 0.0
    %4197 = vmatprep.subr.mxu0 0.0
    %4198 = vmatpush1.msra.mxu0 0.0
    %4199 = vmatprep.subr.mxu0 0.0
    %4200 = vmatpush1.msra.mxu0 0.0
    %4201 = vmatprep.subr.mxu0 0.0
    %4202 = vmatpush1.msra.mxu0 0.0
    %4203 = vmatprep.subr.mxu0 0.0
    %4204 = vmatpush1.msra.mxu0 0.0
    %4205 = vmatprep.subr.mxu0 0.0
    %4206 = vmatpush1.msra.mxu0 0.0
    %4207 = vmatprep.subr.mxu0 0.0
    %4208 = vmatpush1.msra.mxu0 0.0
    %4209 = vmatprep.subr.mxu0 0.0
    %4210 = vmatpush1.msra.mxu0 0.0
    %4211 = vmatprep.subr.mxu0 0.0
    %4212 = vmatpush1.msra.mxu0 0.0
    %4213 = vmatprep.subr.mxu0 0.0
    %4214 = vmatpush1.msra.mxu0 0.0
    %4215 = vmatprep.subr.mxu0 0.0
    %4216 = vmatpush1.msra.mxu0 0.0
    %4217 = vmatprep.subr.mxu0 0.0
    %4218 = vmatpush1.msra.mxu0 %v4085
    %4219 = vmatprep.subr.mxu0 0.0
    %4220 = vmatpush2.msra.mxu0 0.0
    %4221 = vmatprep.subr.mxu0 0.0
    %4222 = vmatpush2.msra.mxu0 0.0
    %4223 = vmatprep.subr.mxu0 0.0
    %4224 = vmatpush2.msra.mxu0 0.0
    %4225 = vmatprep.subr.mxu0 0.0
    %4226 = vmatpush2.msra.mxu0 0.0
    %4227 = vmatprep.subr.mxu0 0.0
    %4228 = vmatpush2.msra.mxu0 0.0
    %4229 = vmatprep.subr.mxu0 0.0
    %4230 = vmatpush2.msra.mxu0 0.0
    %4231 = vmatprep.subr.mxu0 0.0
    %4232 = vmatpush2.msra.mxu0 0.0
    %4233 = vmatprep.subr.mxu0 0.0
    %4234 = vmatpush2.msra.mxu0 0.0
    %4235 = vmatprep.subr.mxu0 0.0
    %4236 = vmatpush2.msra.mxu0 0.0
    %4237 = vmatprep.subr.mxu0 0.0
    %4238 = vmatpush2.msra.mxu0 0.0
    %4239 = vmatprep.subr.mxu0 0.0
    %4240 = vmatpush2.msra.mxu0 0.0
    %4241 = vmatprep.subr.mxu0 0.0
    %4242 = vmatpush2.msra.mxu0 0.0
    %4243 = vmatprep.subr.mxu0 0.0
    %4244 = vmatpush2.msra.mxu0 0.0
    %4245 = vmatprep.subr.mxu0 0.0
    %4246 = vmatpush2.msra.mxu0 0.0
    %4247 = vmatprep.subr.mxu0 0.0
    %4248 = vmatpush2.msra.mxu0 0.0
    %4249 = vmatprep.subr.mxu0 0.0
    %4250 = vmatpush2.msra.mxu0 0.0
    %4251 = vmatprep.mubr.f32.mxu0 0.0
    %4252 = vmatmul.mubr.f32.gmra.mxu0 %v4185
    %v4253 = vpop.f32.mrf.mxu0
    %v4254 = vadd.f32 0.0, %v4253
    %v4255 = vpop.f32.mrf.mxu0
    %4256 = vdwg.mxu0
    %v4257 = vadd.f32 %v3093, %v4254
    %v4258 = vxor.u32 %v4257, 2147483648
    %v4259 = vmul.f32 %v4258, 1.442695
    %v4260 = vpow.pop %v4259
    %v4261 = vadd.f32 %v4260, 1.0
    %v4262 = vrcp.pop %v4261
    %v4263 = vmul.f32 1.0, %v4262
    %v4264 = vtanh.pop %v4257
    %v4265 = vmul.f32 %v4263, %v4175
    %4267 = vrot.lane.b32.xlu0 %v4264, 114
    %v4268 = vpop.permute.xlu0 %4267
    %v4270 = vmul.f32 %v4263, %v4268
    %4272 = vrot.lane.b32.xlu0 %v4270, 7
    %v4273 = vpop.permute.xlu0 %4272
    %v4275 = vadd.f32 %v4265, %v4273
    %v4276 = vtanh.pop %v4275
    %4278 = vrot.lane.b32.xlu0 %v4276, 14
    %v4279 = vpop.permute.xlu0 %4278
    %v4281 = vmul.f32 %v4263, %v4279
    %4283 = vrot.lane.b32.xlu0 %v4281, 107
    %v4284 = vpop.permute.xlu0 %4283
    %v4285 = vsel %vm4081, %v4284, 0
    %4287 = vmatprep.subr.mxu0 0.0
    %4288 = vmatpush1.msra.mxu0 0.0
    %4289 = vmatprep.subr.mxu0 0.0
    %4290 = vmatpush1.msra.mxu0 0.0
    %4291 = vmatprep.subr.mxu0 0.0
    %4292 = vmatpush1.msra.mxu0 0.0
    %4293 = vmatprep.subr.mxu0 0.0
    %4294 = vmatpush1.msra.mxu0 0.0
    %4295 = vmatprep.subr.mxu0 0.0
    %4296 = vmatpush1.msra.mxu0 0.0
    %4297 = vmatprep.subr.mxu0 0.0
    %4298 = vmatpush1.msra.mxu0 0.0
    %4299 = vmatprep.subr.mxu0 0.0
    %4300 = vmatpush1.msra.mxu0 0.0
    %4301 = vmatprep.subr.mxu0 0.0
    %4302 = vmatpush1.msra.mxu0 0.0
    %4303 = vmatprep.subr.mxu0 0.0
    %4304 = vmatpush1.msra.mxu0 0.0
    %4305 = vmatprep.subr.mxu0 0.0
    %4306 = vmatpush1.msra.mxu0 0.0
    %4307 = vmatprep.subr.mxu0 0.0
    %4308 = vmatpush1.msra.mxu0 0.0
    %4309 = vmatprep.subr.mxu0 0.0
    %4310 = vmatpush1.msra.mxu0 0.0
    %4311 = vmatprep.subr.mxu0 0.0
    %4312 = vmatpush1.msra.mxu0 0.0
    %4313 = vmatprep.subr.mxu0 0.0
    %4314 = vmatpush1.msra.mxu0 0.0
    %4315 = vmatprep.subr.mxu0 0.0
    %4316 = vmatpush1.msra.mxu0 0.0
    %4317 = vmatprep.subr.mxu0 0.0
    %4318 = vmatpush1.msra.mxu0 %v4085
    %4319 = vmatprep.subr.mxu0 0.0
    %4320 = vmatpush2.msra.mxu0 0.0
    %4321 = vmatprep.subr.mxu0 0.0
    %4322 = vmatpush2.msra.mxu0 0.0
    %4323 = vmatprep.subr.mxu0 0.0
    %4324 = vmatpush2.msra.mxu0 0.0
    %4325 = vmatprep.subr.mxu0 0.0
    %4326 = vmatpush2.msra.mxu0 0.0
    %4327 = vmatprep.subr.mxu0 0.0
    %4328 = vmatpush2.msra.mxu0 0.0
    %4329 = vmatprep.subr.mxu0 0.0
    %4330 = vmatpush2.msra.mxu0 0.0
    %4331 = vmatprep.subr.mxu0 0.0
    %4332 = vmatpush2.msra.mxu0 0.0
    %4333 = vmatprep.subr.mxu0 0.0
    %4334 = vmatpush2.msra.mxu0 0.0
    %4335 = vmatprep.subr.mxu0 0.0
    %4336 = vmatpush2.msra.mxu0 0.0
    %4337 = vmatprep.subr.mxu0 0.0
    %4338 = vmatpush2.msra.mxu0 0.0
    %4339 = vmatprep.subr.mxu0 0.0
    %4340 = vmatpush2.msra.mxu0 0.0
    %4341 = vmatprep.subr.mxu0 0.0
    %4342 = vmatpush2.msra.mxu0 0.0
    %4343 = vmatprep.subr.mxu0 0.0
    %4344 = vmatpush2.msra.mxu0 0.0
    %4345 = vmatprep.subr.mxu0 0.0
    %4346 = vmatpush2.msra.mxu0 0.0
    %4347 = vmatprep.subr.mxu0 0.0
    %4348 = vmatpush2.msra.mxu0 0.0
    %4349 = vmatprep.subr.mxu0 0.0
    %4350 = vmatpush2.msra.mxu0 0.0
    %4351 = vmatprep.mubr.f32.mxu0 0.0
    %4352 = vmatmul.mubr.f32.gmra.mxu0 %v4285
    %v4353 = vpop.f32.mrf.mxu0
    %v4354 = vadd.f32 0.0, %v4353
    %v4355 = vpop.f32.mrf.mxu0
    %4356 = vdwg.mxu0
    %v4357 = vadd.f32 %v3163, %v4354
    %v4358 = vxor.u32 %v4357, 2147483648
    %v4359 = vmul.f32 %v4358, 1.442695
    %v4360 = vpow.pop %v4359
    %v4361 = vadd.f32 %v4360, 1.0
    %v4362 = vrcp.pop %v4361
    %v4363 = vmul.f32 1.0, %v4362
    %v4364 = vtanh.pop %v4357
    %v4365 = vmul.f32 %v4363, %v4275
    %4367 = vrot.lane.b32.xlu0 %v4364, 114
    %v4368 = vpop.permute.xlu0 %4367
    %v4370 = vmul.f32 %v4363, %v4368
    %4372 = vrot.lane.b32.xlu0 %v4370, 7
    %v4373 = vpop.permute.xlu0 %4372
    %v4375 = vadd.f32 %v4365, %v4373
    %v4376 = vtanh.pop %v4375
    %4378 = vrot.lane.b32.xlu0 %v4376, 14
    %v4379 = vpop.permute.xlu0 %4378
    %v4381 = vmul.f32 %v4363, %v4379
    %4383 = vrot.lane.b32.xlu0 %v4381, 107
    %v4384 = vpop.permute.xlu0 %4383
    %v4385 = vsel %vm4081, %v4384, 0
    %4387 = vmatprep.subr.mxu0 0.0
    %4388 = vmatpush1.msra.mxu0 0.0
    %4389 = vmatprep.subr.mxu0 0.0
    %4390 = vmatpush1.msra.mxu0 0.0
    %4391 = vmatprep.subr.mxu0 0.0
    %4392 = vmatpush1.msra.mxu0 0.0
    %4393 = vmatprep.subr.mxu0 0.0
    %4394 = vmatpush1.msra.mxu0 0.0
    %4395 = vmatprep.subr.mxu0 0.0
    %4396 = vmatpush1.msra.mxu0 0.0
    %4397 = vmatprep.subr.mxu0 0.0
    %4398 = vmatpush1.msra.mxu0 0.0
    %4399 = vmatprep.subr.mxu0 0.0
    %4400 = vmatpush1.msra.mxu0 0.0
    %4401 = vmatprep.subr.mxu0 0.0
    %4402 = vmatpush1.msra.mxu0 0.0
    %4403 = vmatprep.subr.mxu0 0.0
    %4404 = vmatpush1.msra.mxu0 0.0
    %4405 = vmatprep.subr.mxu0 0.0
    %4406 = vmatpush1.msra.mxu0 0.0
    %4407 = vmatprep.subr.mxu0 0.0
    %4408 = vmatpush1.msra.mxu0 0.0
    %4409 = vmatprep.subr.mxu0 0.0
    %4410 = vmatpush1.msra.mxu0 0.0
    %4411 = vmatprep.subr.mxu0 0.0
    %4412 = vmatpush1.msra.mxu0 0.0
    %4413 = vmatprep.subr.mxu0 0.0
    %4414 = vmatpush1.msra.mxu0 0.0
    %4415 = vmatprep.subr.mxu0 0.0
    %4416 = vmatpush1.msra.mxu0 0.0
    %4417 = vmatprep.subr.mxu0 0.0
    %4418 = vmatpush1.msra.mxu0 %v4085
    %4419 = vmatprep.subr.mxu0 0.0
    %4420 = vmatpush2.msra.mxu0 0.0
    %4421 = vmatprep.subr.mxu0 0.0
    %4422 = vmatpush2.msra.mxu0 0.0
    %4423 = vmatprep.subr.mxu0 0.0
    %4424 = vmatpush2.msra.mxu0 0.0
    %4425 = vmatprep.subr.mxu0 0.0
    %4426 = vmatpush2.msra.mxu0 0.0
    %4427 = vmatprep.subr.mxu0 0.0
    %4428 = vmatpush2.msra.mxu0 0.0
    %4429 = vmatprep.subr.mxu0 0.0
    %4430 = vmatpush2.msra.mxu0 0.0
    %4431 = vmatprep.subr.mxu0 0.0
    %4432 = vmatpush2.msra.mxu0 0.0
    %4433 = vmatprep.subr.mxu0 0.0
    %4434 = vmatpush2.msra.mxu0 0.0
    %4435 = vmatprep.subr.mxu0 0.0
    %4436 = vmatpush2.msra.mxu0 0.0
    %4437 = vmatprep.subr.mxu0 0.0
    %4438 = vmatpush2.msra.mxu0 0.0
    %4439 = vmatprep.subr.mxu0 0.0
    %4440 = vmatpush2.msra.mxu0 0.0
    %4441 = vmatprep.subr.mxu0 0.0
    %4442 = vmatpush2.msra.mxu0 0.0
    %4443 = vmatprep.subr.mxu0 0.0
    %4444 = vmatpush2.msra.mxu0 0.0
    %4445 = vmatprep.subr.mxu0 0.0
    %4446 = vmatpush2.msra.mxu0 0.0
    %4447 = vmatprep.subr.mxu0 0.0
    %4448 = vmatpush2.msra.mxu0 0.0
    %4449 = vmatprep.subr.mxu0 0.0
    %4450 = vmatpush2.msra.mxu0 0.0
    %4451 = vmatprep.mubr.f32.mxu0 0.0
    %4452 = vmatmul.mubr.f32.gmra.mxu0 %v4385
    %v4453 = vpop.f32.mrf.mxu0
    %v4454 = vadd.f32 0.0, %v4453
    %v4455 = vpop.f32.mrf.mxu0
    %4456 = vdwg.mxu0
    %v4457 = vadd.f32 %v3233, %v4454
    %v4458 = vxor.u32 %v4457, 2147483648
    %v4459 = vmul.f32 %v4458, 1.442695
    %v4460 = vpow.pop %v4459
    %v4461 = vadd.f32 %v4460, 1.0
    %v4462 = vrcp.pop %v4461
    %v4463 = vmul.f32 1.0, %v4462
    %v4464 = vtanh.pop %v4457
    %v4465 = vmul.f32 %v4463, %v4375
    %4467 = vrot.lane.b32.xlu0 %v4464, 114
    %v4468 = vpop.permute.xlu0 %4467
    %v4470 = vmul.f32 %v4463, %v4468
    %4472 = vrot.lane.b32.xlu0 %v4470, 7
    %v4473 = vpop.permute.xlu0 %4472
    %v4475 = vadd.f32 %v4465, %v4473
    %v4476 = vtanh.pop %v4475
    %4478 = vrot.lane.b32.xlu0 %v4476, 14
    %v4479 = vpop.permute.xlu0 %4478
    %v4481 = vmul.f32 %v4463, %v4479
    %4483 = vrot.lane.b32.xlu0 %v4481, 107
    %v4484 = vpop.permute.xlu0 %4483
    %v4485 = vsel %vm4081, %v4484, 0
    %4487 = vmatprep.subr.mxu0 0.0
    %4488 = vmatpush1.msra.mxu0 0.0
    %4489 = vmatprep.subr.mxu0 0.0
    %4490 = vmatpush1.msra.mxu0 0.0
    %4491 = vmatprep.subr.mxu0 0.0
    %4492 = vmatpush1.msra.mxu0 0.0
    %4493 = vmatprep.subr.mxu0 0.0
    %4494 = vmatpush1.msra.mxu0 0.0
    %4495 = vmatprep.subr.mxu0 0.0
    %4496 = vmatpush1.msra.mxu0 0.0
    %4497 = vmatprep.subr.mxu0 0.0
    %4498 = vmatpush1.msra.mxu0 0.0
    %4499 = vmatprep.subr.mxu0 0.0
    %4500 = vmatpush1.msra.mxu0 0.0
    %4501 = vmatprep.subr.mxu0 0.0
    %4502 = vmatpush1.msra.mxu0 0.0
    %4503 = vmatprep.subr.mxu0 0.0
    %4504 = vmatpush1.msra.mxu0 0.0
    %4505 = vmatprep.subr.mxu0 0.0
    %4506 = vmatpush1.msra.mxu0 0.0
    %4507 = vmatprep.subr.mxu0 0.0
    %4508 = vmatpush1.msra.mxu0 0.0
    %4509 = vmatprep.subr.mxu0 0.0
    %4510 = vmatpush1.msra.mxu0 0.0
    %4511 = vmatprep.subr.mxu0 0.0
    %4512 = vmatpush1.msra.mxu0 0.0
    %4513 = vmatprep.subr.mxu0 0.0
    %4514 = vmatpush1.msra.mxu0 0.0
    %4515 = vmatprep.subr.mxu0 0.0
    %4516 = vmatpush1.msra.mxu0 0.0
    %4517 = vmatprep.subr.mxu0 0.0
    %4518 = vmatpush1.msra.mxu0 %v4085
    %4519 = vmatprep.subr.mxu0 0.0
    %4520 = vmatpush2.msra.mxu0 0.0
    %4521 = vmatprep.subr.mxu0 0.0
    %4522 = vmatpush2.msra.mxu0 0.0
    %4523 = vmatprep.subr.mxu0 0.0
    %4524 = vmatpush2.msra.mxu0 0.0
    %4525 = vmatprep.subr.mxu0 0.0
    %4526 = vmatpush2.msra.mxu0 0.0
    %4527 = vmatprep.subr.mxu0 0.0
    %4528 = vmatpush2.msra.mxu0 0.0
    %4529 = vmatprep.subr.mxu0 0.0
    %4530 = vmatpush2.msra.mxu0 0.0
    %4531 = vmatprep.subr.mxu0 0.0
    %4532 = vmatpush2.msra.mxu0 0.0
    %4533 = vmatprep.subr.mxu0 0.0
    %4534 = vmatpush2.msra.mxu0 0.0
    %4535 = vmatprep.subr.mxu0 0.0
    %4536 = vmatpush2.msra.mxu0 0.0
    %4537 = vmatprep.subr.mxu0 0.0
    %4538 = vmatpush2.msra.mxu0 0.0
    %4539 = vmatprep.subr.mxu0 0.0
    %4540 = vmatpush2.msra.mxu0 0.0
    %4541 = vmatprep.subr.mxu0 0.0
    %4542 = vmatpush2.msra.mxu0 0.0
    %4543 = vmatprep.subr.mxu0 0.0
    %4544 = vmatpush2.msra.mxu0 0.0
    %4545 = vmatprep.subr.mxu0 0.0
    %4546 = vmatpush2.msra.mxu0 0.0
    %4547 = vmatprep.subr.mxu0 0.0
    %4548 = vmatpush2.msra.mxu0 0.0
    %4549 = vmatprep.subr.mxu0 0.0
    %4550 = vmatpush2.msra.mxu0 0.0
    %4551 = vmatprep.mubr.f32.mxu0 0.0
    %4552 = vmatmul.mubr.f32.gmra.mxu0 %v4485
    %v4553 = vpop.f32.mrf.mxu0
    %v4554 = vadd.f32 0.0, %v4553
    %v4555 = vpop.f32.mrf.mxu0
    %4556 = vdwg.mxu0
    %v4557 = vadd.f32 %v3303, %v4554
    %v4558 = vxor.u32 %v4557, 2147483648
    %v4559 = vmul.f32 %v4558, 1.442695
    %v4560 = vpow.pop %v4559
    %v4561 = vadd.f32 %v4560, 1.0
    %v4562 = vrcp.pop %v4561
    %v4563 = vmul.f32 1.0, %v4562
    %v4564 = vtanh.pop %v4557
    %v4565 = vmul.f32 %v4563, %v4475
    %4567 = vrot.lane.b32.xlu0 %v4564, 114
    %v4568 = vpop.permute.xlu0 %4567
    %v4570 = vmul.f32 %v4563, %v4568
    %4572 = vrot.lane.b32.xlu0 %v4570, 7
    %v4573 = vpop.permute.xlu0 %4572
    %v4575 = vadd.f32 %v4565, %v4573
    %v4576 = vtanh.pop %v4575
    %4578 = vrot.lane.b32.xlu0 %v4576, 14
    %v4579 = vpop.permute.xlu0 %4578
    %v4581 = vmul.f32 %v4563, %v4579
    %4583 = vrot.lane.b32.xlu0 %v4581, 107
    %v4584 = vpop.permute.xlu0 %4583
    %v4585 = vsel %vm4081, %v4584, 0
    %4587 = vmatprep.subr.mxu0 0.0
    %4588 = vmatpush1.msra.mxu0 0.0
    %4589 = vmatprep.subr.mxu0 0.0
    %4590 = vmatpush1.msra.mxu0 0.0
    %4591 = vmatprep.subr.mxu0 0.0
    %4592 = vmatpush1.msra.mxu0 0.0
    %4593 = vmatprep.subr.mxu0 0.0
    %4594 = vmatpush1.msra.mxu0 0.0
    %4595 = vmatprep.subr.mxu0 0.0
    %4596 = vmatpush1.msra.mxu0 0.0
    %4597 = vmatprep.subr.mxu0 0.0
    %4598 = vmatpush1.msra.mxu0 0.0
    %4599 = vmatprep.subr.mxu0 0.0
    %4600 = vmatpush1.msra.mxu0 0.0
    %4601 = vmatprep.subr.mxu0 0.0
    %4602 = vmatpush1.msra.mxu0 0.0
    %4603 = vmatprep.subr.mxu0 0.0
    %4604 = vmatpush1.msra.mxu0 0.0
    %4605 = vmatprep.subr.mxu0 0.0
    %4606 = vmatpush1.msra.mxu0 0.0
    %4607 = vmatprep.subr.mxu0 0.0
    %4608 = vmatpush1.msra.mxu0 0.0
    %4609 = vmatprep.subr.mxu0 0.0
    %4610 = vmatpush1.msra.mxu0 0.0
    %4611 = vmatprep.subr.mxu0 0.0
    %4612 = vmatpush1.msra.mxu0 0.0
    %4613 = vmatprep.subr.mxu0 0.0
    %4614 = vmatpush1.msra.mxu0 0.0
    %4615 = vmatprep.subr.mxu0 0.0
    %4616 = vmatpush1.msra.mxu0 0.0
    %4617 = vmatprep.subr.mxu0 0.0
    %4618 = vmatpush1.msra.mxu0 %v4085
    %4619 = vmatprep.subr.mxu0 0.0
    %4620 = vmatpush2.msra.mxu0 0.0
    %4621 = vmatprep.subr.mxu0 0.0
    %4622 = vmatpush2.msra.mxu0 0.0
    %4623 = vmatprep.subr.mxu0 0.0
    %4624 = vmatpush2.msra.mxu0 0.0
    %4625 = vmatprep.subr.mxu0 0.0
    %4626 = vmatpush2.msra.mxu0 0.0
    %4627 = vmatprep.subr.mxu0 0.0
    %4628 = vmatpush2.msra.mxu0 0.0
    %4629 = vmatprep.subr.mxu0 0.0
    %4630 = vmatpush2.msra.mxu0 0.0
    %4631 = vmatprep.subr.mxu0 0.0
    %4632 = vmatpush2.msra.mxu0 0.0
    %4633 = vmatprep.subr.mxu0 0.0
    %4634 = vmatpush2.msra.mxu0 0.0
    %4635 = vmatprep.subr.mxu0 0.0
    %4636 = vmatpush2.msra.mxu0 0.0
    %4637 = vmatprep.subr.mxu0 0.0
    %4638 = vmatpush2.msra.mxu0 0.0
    %4639 = vmatprep.subr.mxu0 0.0
    %4640 = vmatpush2.msra.mxu0 0.0
    %4641 = vmatprep.subr.mxu0 0.0
    %4642 = vmatpush2.msra.mxu0 0.0
    %4643 = vmatprep.subr.mxu0 0.0
    %4644 = vmatpush2.msra.mxu0 0.0
    %4645 = vmatprep.subr.mxu0 0.0
    %4646 = vmatpush2.msra.mxu0 0.0
    %4647 = vmatprep.subr.mxu0 0.0
    %4648 = vmatpush2.msra.mxu0 0.0
    %4649 = vmatprep.subr.mxu0 0.0
    %4650 = vmatpush2.msra.mxu0 0.0
    %4651 = vmatprep.mubr.f32.mxu0 0.0
    %4652 = vmatmul.mubr.f32.gmra.mxu0 %v4585
    %v4653 = vpop.f32.mrf.mxu0
    %v4654 = vadd.f32 0.0, %v4653
    %v4655 = vpop.f32.mrf.mxu0
    %4656 = vdwg.mxu0
    %v4657 = vadd.f32 %v3373, %v4654
    %v4658 = vxor.u32 %v4657, 2147483648
    %v4659 = vmul.f32 %v4658, 1.442695
    %v4660 = vpow.pop %v4659
    %v4661 = vadd.f32 %v4660, 1.0
    %v4662 = vrcp.pop %v4661
    %v4663 = vmul.f32 1.0, %v4662
    %v4664 = vtanh.pop %v4657
    %v4665 = vmul.f32 %v4663, %v4575
    %4667 = vrot.lane.b32.xlu0 %v4664, 114
    %v4668 = vpop.permute.xlu0 %4667
    %v4670 = vmul.f32 %v4663, %v4668
    %4672 = vrot.lane.b32.xlu0 %v4670, 7
    %v4673 = vpop.permute.xlu0 %4672
    %v4675 = vadd.f32 %v4665, %v4673
    %v4676 = vtanh.pop %v4675
    %4678 = vrot.lane.b32.xlu0 %v4676, 14
    %v4679 = vpop.permute.xlu0 %4678
    %v4681 = vmul.f32 %v4663, %v4679
    %4683 = vrot.lane.b32.xlu0 %v4681, 107
    %v4684 = vpop.permute.xlu0 %4683
    %v4685 = vsel %vm4081, %v4684, 0
    %4687 = vmatprep.subr.mxu0 0.0
    %4688 = vmatpush1.msra.mxu0 0.0
    %4689 = vmatprep.subr.mxu0 0.0
    %4690 = vmatpush1.msra.mxu0 0.0
    %4691 = vmatprep.subr.mxu0 0.0
    %4692 = vmatpush1.msra.mxu0 0.0
    %4693 = vmatprep.subr.mxu0 0.0
    %4694 = vmatpush1.msra.mxu0 0.0
    %4695 = vmatprep.subr.mxu0 0.0
    %4696 = vmatpush1.msra.mxu0 0.0
    %4697 = vmatprep.subr.mxu0 0.0
    %4698 = vmatpush1.msra.mxu0 0.0
    %4699 = vmatprep.subr.mxu0 0.0
    %4700 = vmatpush1.msra.mxu0 0.0
    %4701 = vmatprep.subr.mxu0 0.0
    %4702 = vmatpush1.msra.mxu0 0.0
    %4703 = vmatprep.subr.mxu0 0.0
    %4704 = vmatpush1.msra.mxu0 0.0
    %4705 = vmatprep.subr.mxu0 0.0
    %4706 = vmatpush1.msra.mxu0 0.0
    %4707 = vmatprep.subr.mxu0 0.0
    %4708 = vmatpush1.msra.mxu0 0.0
    %4709 = vmatprep.subr.mxu0 0.0
    %4710 = vmatpush1.msra.mxu0 0.0
    %4711 = vmatprep.subr.mxu0 0.0
    %4712 = vmatpush1.msra.mxu0 0.0
    %4713 = vmatprep.subr.mxu0 0.0
    %4714 = vmatpush1.msra.mxu0 0.0
    %4715 = vmatprep.subr.mxu0 0.0
    %4716 = vmatpush1.msra.mxu0 0.0
    %4717 = vmatprep.subr.mxu0 0.0
    %4718 = vmatpush1.msra.mxu0 %v4085
    %4719 = vmatprep.subr.mxu0 0.0
    %4720 = vmatpush2.msra.mxu0 0.0
    %4721 = vmatprep.subr.mxu0 0.0
    %4722 = vmatpush2.msra.mxu0 0.0
    %4723 = vmatprep.subr.mxu0 0.0
    %4724 = vmatpush2.msra.mxu0 0.0
    %4725 = vmatprep.subr.mxu0 0.0
    %4726 = vmatpush2.msra.mxu0 0.0
    %4727 = vmatprep.subr.mxu0 0.0
    %4728 = vmatpush2.msra.mxu0 0.0
    %4729 = vmatprep.subr.mxu0 0.0
    %4730 = vmatpush2.msra.mxu0 0.0
    %4731 = vmatprep.subr.mxu0 0.0
    %4732 = vmatpush2.msra.mxu0 0.0
    %4733 = vmatprep.subr.mxu0 0.0
    %4734 = vmatpush2.msra.mxu0 0.0
    %4735 = vmatprep.subr.mxu0 0.0
    %4736 = vmatpush2.msra.mxu0 0.0
    %4737 = vmatprep.subr.mxu0 0.0
    %4738 = vmatpush2.msra.mxu0 0.0
    %4739 = vmatprep.subr.mxu0 0.0
    %4740 = vmatpush2.msra.mxu0 0.0
    %4741 = vmatprep.subr.mxu0 0.0
    %4742 = vmatpush2.msra.mxu0 0.0
    %4743 = vmatprep.subr.mxu0 0.0
    %4744 = vmatpush2.msra.mxu0 0.0
    %4745 = vmatprep.subr.mxu0 0.0
    %4746 = vmatpush2.msra.mxu0 0.0
    %4747 = vmatprep.subr.mxu0 0.0
    %4748 = vmatpush2.msra.mxu0 0.0
    %4749 = vmatprep.subr.mxu0 0.0
    %4750 = vmatpush2.msra.mxu0 0.0
    %4751 = vmatprep.mubr.f32.mxu0 0.0
    %4752 = vmatmul.mubr.f32.gmra.mxu0 %v4685
    %v4753 = vpop.f32.mrf.mxu0
    %v4754 = vadd.f32 0.0, %v4753
    %v4755 = vpop.f32.mrf.mxu0
    %4756 = vdwg.mxu0
    %v4757 = vadd.f32 %v3443, %v4754
    %v4758 = vxor.u32 %v4757, 2147483648
    %v4759 = vmul.f32 %v4758, 1.442695
    %v4760 = vpow.pop %v4759
    %v4761 = vadd.f32 %v4760, 1.0
    %v4762 = vrcp.pop %v4761
    %v4763 = vmul.f32 1.0, %v4762
    %v4764 = vtanh.pop %v4757
    %v4765 = vmul.f32 %v4763, %v4675
    %4767 = vrot.lane.b32.xlu0 %v4764, 114
    %v4768 = vpop.permute.xlu0 %4767
    %v4770 = vmul.f32 %v4763, %v4768
    %4772 = vrot.lane.b32.xlu0 %v4770, 7
    %v4773 = vpop.permute.xlu0 %4772
    %v4775 = vadd.f32 %v4765, %v4773
    %v4776 = vtanh.pop %v4775
    %4778 = vrot.lane.b32.xlu0 %v4776, 14
    %v4779 = vpop.permute.xlu0 %4778
    %v4781 = vmul.f32 %v4763, %v4779
    %4783 = vrot.lane.b32.xlu0 %v4781, 107
    %v4784 = vpop.permute.xlu0 %4783
    %v4785 = vsel %vm4081, %v4784, 0
    %4787 = vmatprep.subr.mxu0 0.0
    %4788 = vmatpush1.msra.mxu0 0.0
    %4789 = vmatprep.subr.mxu0 0.0
    %4790 = vmatpush1.msra.mxu0 0.0
    %4791 = vmatprep.subr.mxu0 0.0
    %4792 = vmatpush1.msra.mxu0 0.0
    %4793 = vmatprep.subr.mxu0 0.0
    %4794 = vmatpush1.msra.mxu0 0.0
    %4795 = vmatprep.subr.mxu0 0.0
    %4796 = vmatpush1.msra.mxu0 0.0
    %4797 = vmatprep.subr.mxu0 0.0
    %4798 = vmatpush1.msra.mxu0 0.0
    %4799 = vmatprep.subr.mxu0 0.0
    %4800 = vmatpush1.msra.mxu0 0.0
    %4801 = vmatprep.subr.mxu0 0.0
    %4802 = vmatpush1.msra.mxu0 0.0
    %4803 = vmatprep.subr.mxu0 0.0
    %4804 = vmatpush1.msra.mxu0 0.0
    %4805 = vmatprep.subr.mxu0 0.0
    %4806 = vmatpush1.msra.mxu0 0.0
    %4807 = vmatprep.subr.mxu0 0.0
    %4808 = vmatpush1.msra.mxu0 0.0
    %4809 = vmatprep.subr.mxu0 0.0
    %4810 = vmatpush1.msra.mxu0 0.0
    %4811 = vmatprep.subr.mxu0 0.0
    %4812 = vmatpush1.msra.mxu0 0.0
    %4813 = vmatprep.subr.mxu0 0.0
    %4814 = vmatpush1.msra.mxu0 0.0
    %4815 = vmatprep.subr.mxu0 0.0
    %4816 = vmatpush1.msra.mxu0 0.0
    %4817 = vmatprep.subr.mxu0 0.0
    %4818 = vmatpush1.msra.mxu0 %v4085
    %4819 = vmatprep.subr.mxu0 0.0
    %4820 = vmatpush2.msra.mxu0 0.0
    %4821 = vmatprep.subr.mxu0 0.0
    %4822 = vmatpush2.msra.mxu0 0.0
    %4823 = vmatprep.subr.mxu0 0.0
    %4824 = vmatpush2.msra.mxu0 0.0
    %4825 = vmatprep.subr.mxu0 0.0
    %4826 = vmatpush2.msra.mxu0 0.0
    %4827 = vmatprep.subr.mxu0 0.0
    %4828 = vmatpush2.msra.mxu0 0.0
    %4829 = vmatprep.subr.mxu0 0.0
    %4830 = vmatpush2.msra.mxu0 0.0
    %4831 = vmatprep.subr.mxu0 0.0
    %4832 = vmatpush2.msra.mxu0 0.0
    %4833 = vmatprep.subr.mxu0 0.0
    %4834 = vmatpush2.msra.mxu0 0.0
    %4835 = vmatprep.subr.mxu0 0.0
    %4836 = vmatpush2.msra.mxu0 0.0
    %4837 = vmatprep.subr.mxu0 0.0
    %4838 = vmatpush2.msra.mxu0 0.0
    %4839 = vmatprep.subr.mxu0 0.0
    %4840 = vmatpush2.msra.mxu0 0.0
    %4841 = vmatprep.subr.mxu0 0.0
    %4842 = vmatpush2.msra.mxu0 0.0
    %4843 = vmatprep.subr.mxu0 0.0
    %4844 = vmatpush2.msra.mxu0 0.0
    %4845 = vmatprep.subr.mxu0 0.0
    %4846 = vmatpush2.msra.mxu0 0.0
    %4847 = vmatprep.subr.mxu0 0.0
    %4848 = vmatpush2.msra.mxu0 0.0
    %4849 = vmatprep.subr.mxu0 0.0
    %4850 = vmatpush2.msra.mxu0 0.0
    %4851 = vmatprep.mubr.f32.mxu0 0.0
    %4852 = vmatmul.mubr.f32.gmra.mxu0 %v4785
    %v4853 = vpop.f32.mrf.mxu0
    %v4854 = vadd.f32 0.0, %v4853
    %v4855 = vpop.f32.mrf.mxu0
    %4856 = vdwg.mxu0
    %v4857 = vadd.f32 %v3513, %v4854
    %v4858 = vxor.u32 %v4857, 2147483648
    %v4859 = vmul.f32 %v4858, 1.442695
    %v4860 = vpow.pop %v4859
    %v4861 = vadd.f32 %v4860, 1.0
    %v4862 = vrcp.pop %v4861
    %v4863 = vmul.f32 1.0, %v4862
    %v4864 = vtanh.pop %v4857
    %v4865 = vmul.f32 %v4863, %v4775
    %4867 = vrot.lane.b32.xlu0 %v4864, 114
    %v4868 = vpop.permute.xlu0 %4867
    %v4870 = vmul.f32 %v4863, %v4868
    %4872 = vrot.lane.b32.xlu0 %v4870, 7
    %v4873 = vpop.permute.xlu0 %4872
    %v4875 = vadd.f32 %v4865, %v4873
    %v4876 = vtanh.pop %v4875
    %4878 = vrot.lane.b32.xlu0 %v4876, 14
    %v4879 = vpop.permute.xlu0 %4878
    %v4881 = vmul.f32 %v4863, %v4879
    %4883 = vrot.lane.b32.xlu0 %v4881, 107
    %v4884 = vpop.permute.xlu0 %4883
    %v4885 = vsel %vm4081, %v4884, 0
    %4887 = vmatprep.subr.mxu0 0.0
    %4888 = vmatpush1.msra.mxu0 0.0
    %4889 = vmatprep.subr.mxu0 0.0
    %4890 = vmatpush1.msra.mxu0 0.0
    %4891 = vmatprep.subr.mxu0 0.0
    %4892 = vmatpush1.msra.mxu0 0.0
    %4893 = vmatprep.subr.mxu0 0.0
    %4894 = vmatpush1.msra.mxu0 0.0
    %4895 = vmatprep.subr.mxu0 0.0
    %4896 = vmatpush1.msra.mxu0 0.0
    %4897 = vmatprep.subr.mxu0 0.0
    %4898 = vmatpush1.msra.mxu0 0.0
    %4899 = vmatprep.subr.mxu0 0.0
    %4900 = vmatpush1.msra.mxu0 0.0
    %4901 = vmatprep.subr.mxu0 0.0
    %4902 = vmatpush1.msra.mxu0 0.0
    %4903 = vmatprep.subr.mxu0 0.0
    %4904 = vmatpush1.msra.mxu0 0.0
    %4905 = vmatprep.subr.mxu0 0.0
    %4906 = vmatpush1.msra.mxu0 0.0
    %4907 = vmatprep.subr.mxu0 0.0
    %4908 = vmatpush1.msra.mxu0 0.0
    %4909 = vmatprep.subr.mxu0 0.0
    %4910 = vmatpush1.msra.mxu0 0.0
    %4911 = vmatprep.subr.mxu0 0.0
    %4912 = vmatpush1.msra.mxu0 0.0
    %4913 = vmatprep.subr.mxu0 0.0
    %4914 = vmatpush1.msra.mxu0 0.0
    %4915 = vmatprep.subr.mxu0 0.0
    %4916 = vmatpush1.msra.mxu0 0.0
    %4917 = vmatprep.subr.mxu0 0.0
    %4918 = vmatpush1.msra.mxu0 %v4085
    %4919 = vmatprep.subr.mxu0 0.0
    %4920 = vmatpush2.msra.mxu0 0.0
    %4921 = vmatprep.subr.mxu0 0.0
    %4922 = vmatpush2.msra.mxu0 0.0
    %4923 = vmatprep.subr.mxu0 0.0
    %4924 = vmatpush2.msra.mxu0 0.0
    %4925 = vmatprep.subr.mxu0 0.0
    %4926 = vmatpush2.msra.mxu0 0.0
    %4927 = vmatprep.subr.mxu0 0.0
    %4928 = vmatpush2.msra.mxu0 0.0
    %4929 = vmatprep.subr.mxu0 0.0
    %4930 = vmatpush2.msra.mxu0 0.0
    %4931 = vmatprep.subr.mxu0 0.0
    %4932 = vmatpush2.msra.mxu0 0.0
    %4933 = vmatprep.subr.mxu0 0.0
    %4934 = vmatpush2.msra.mxu0 0.0
    %4935 = vmatprep.subr.mxu0 0.0
    %4936 = vmatpush2.msra.mxu0 0.0
    %4937 = vmatprep.subr.mxu0 0.0
    %4938 = vmatpush2.msra.mxu0 0.0
    %4939 = vmatprep.subr.mxu0 0.0
    %4940 = vmatpush2.msra.mxu0 0.0
    %4941 = vmatprep.subr.mxu0 0.0
    %4942 = vmatpush2.msra.mxu0 0.0
    %4943 = vmatprep.subr.mxu0 0.0
    %4944 = vmatpush2.msra.mxu0 0.0
    %4945 = vmatprep.subr.mxu0 0.0
    %4946 = vmatpush2.msra.mxu0 0.0
    %4947 = vmatprep.subr.mxu0 0.0
    %4948 = vmatpush2.msra.mxu0 0.0
    %4949 = vmatprep.subr.mxu0 0.0
    %4950 = vmatpush2.msra.mxu0 0.0
    %4951 = vmatprep.mubr.f32.mxu0 0.0
    %4952 = vmatmul.mubr.f32.gmra.mxu0 %v4885
    %v4953 = vpop.f32.mrf.mxu0
    %v4954 = vadd.f32 0.0, %v4953
    %v4955 = vpop.f32.mrf.mxu0
    %4956 = vdwg.mxu0
    %v4957 = vadd.f32 %v3583, %v4954
    %v4958 = vxor.u32 %v4957, 2147483648
    %v4959 = vmul.f32 %v4958, 1.442695
    %v4960 = vpow.pop %v4959
    %v4961 = vadd.f32 %v4960, 1.0
    %v4962 = vrcp.pop %v4961
    %v4963 = vmul.f32 1.0, %v4962
    %v4964 = vtanh.pop %v4957
    %v4965 = vmul.f32 %v4963, %v4875
    %4967 = vrot.lane.b32.xlu0 %v4964, 114
    %v4968 = vpop.permute.xlu0 %4967
    %v4970 = vmul.f32 %v4963, %v4968
    %4972 = vrot.lane.b32.xlu0 %v4970, 7
    %v4973 = vpop.permute.xlu0 %4972
    %v4975 = vadd.f32 %v4965, %v4973
    %v4976 = vtanh.pop %v4975
    %4978 = vrot.lane.b32.xlu0 %v4976, 14
    %v4979 = vpop.permute.xlu0 %4978
    %v4981 = vmul.f32 %v4963, %v4979
    %4983 = vrot.lane.b32.xlu0 %v4981, 107
    %v4984 = vpop.permute.xlu0 %4983
    %v4985 = vsel %vm4081, %v4984, 0
    %4987 = vmatprep.subr.mxu0 0.0
    %4988 = vmatpush1.msra.mxu0 0.0
    %4989 = vmatprep.subr.mxu0 0.0
    %4990 = vmatpush1.msra.mxu0 0.0
    %4991 = vmatprep.subr.mxu0 0.0
    %4992 = vmatpush1.msra.mxu0 0.0
    %4993 = vmatprep.subr.mxu0 0.0
    %4994 = vmatpush1.msra.mxu0 0.0
    %4995 = vmatprep.subr.mxu0 0.0
    %4996 = vmatpush1.msra.mxu0 0.0
    %4997 = vmatprep.subr.mxu0 0.0
    %4998 = vmatpush1.msra.mxu0 0.0
    %4999 = vmatprep.subr.mxu0 0.0
    %5000 = vmatpush1.msra.mxu0 0.0
    %5001 = vmatprep.subr.mxu0 0.0
    %5002 = vmatpush1.msra.mxu0 0.0
    %5003 = vmatprep.subr.mxu0 0.0
    %5004 = vmatpush1.msra.mxu0 0.0
    %5005 = vmatprep.subr.mxu0 0.0
    %5006 = vmatpush1.msra.mxu0 0.0
    %5007 = vmatprep.subr.mxu0 0.0
    %5008 = vmatpush1.msra.mxu0 0.0
    %5009 = vmatprep.subr.mxu0 0.0
    %5010 = vmatpush1.msra.mxu0 0.0
    %5011 = vmatprep.subr.mxu0 0.0
    %5012 = vmatpush1.msra.mxu0 0.0
    %5013 = vmatprep.subr.mxu0 0.0
    %5014 = vmatpush1.msra.mxu0 0.0
    %5015 = vmatprep.subr.mxu0 0.0
    %5016 = vmatpush1.msra.mxu0 0.0
    %5017 = vmatprep.subr.mxu0 0.0
    %5018 = vmatpush1.msra.mxu0 %v4085
    %5019 = vmatprep.subr.mxu0 0.0
    %5020 = vmatpush2.msra.mxu0 0.0
    %5021 = vmatprep.subr.mxu0 0.0
    %5022 = vmatpush2.msra.mxu0 0.0
    %5023 = vmatprep.subr.mxu0 0.0
    %5024 = vmatpush2.msra.mxu0 0.0
    %5025 = vmatprep.subr.mxu0 0.0
    %5026 = vmatpush2.msra.mxu0 0.0
    %5027 = vmatprep.subr.mxu0 0.0
    %5028 = vmatpush2.msra.mxu0 0.0
    %5029 = vmatprep.subr.mxu0 0.0
    %5030 = vmatpush2.msra.mxu0 0.0
    %5031 = vmatprep.subr.mxu0 0.0
    %5032 = vmatpush2.msra.mxu0 0.0
    %5033 = vmatprep.subr.mxu0 0.0
    %5034 = vmatpush2.msra.mxu0 0.0
    %5035 = vmatprep.subr.mxu0 0.0
    %5036 = vmatpush2.msra.mxu0 0.0
    %5037 = vmatprep.subr.mxu0 0.0
    %5038 = vmatpush2.msra.mxu0 0.0
    %5039 = vmatprep.subr.mxu0 0.0
    %5040 = vmatpush2.msra.mxu0 0.0
    %5041 = vmatprep.subr.mxu0 0.0
    %5042 = vmatpush2.msra.mxu0 0.0
    %5043 = vmatprep.subr.mxu0 0.0
    %5044 = vmatpush2.msra.mxu0 0.0
    %5045 = vmatprep.subr.mxu0 0.0
    %5046 = vmatpush2.msra.mxu0 0.0
    %5047 = vmatprep.subr.mxu0 0.0
    %5048 = vmatpush2.msra.mxu0 0.0
    %5049 = vmatprep.subr.mxu0 0.0
    %5050 = vmatpush2.msra.mxu0 0.0
    %5051 = vmatprep.mubr.f32.mxu0 0.0
    %5052 = vmatmul.mubr.f32.gmra.mxu0 %v4985
    %v5053 = vpop.f32.mrf.mxu0
    %v5054 = vadd.f32 0.0, %v5053
    %v5055 = vpop.f32.mrf.mxu0
    %5056 = vdwg.mxu0
    %v5057 = vadd.f32 %v3653, %v5054
    %v5058 = vxor.u32 %v5057, 2147483648
    %v5059 = vmul.f32 %v5058, 1.442695
    %v5060 = vpow.pop %v5059
    %v5061 = vadd.f32 %v5060, 1.0
    %v5062 = vrcp.pop %v5061
    %v5063 = vmul.f32 1.0, %v5062
    %v5064 = vtanh.pop %v5057
    %v5065 = vmul.f32 %v5063, %v4975
    %5067 = vrot.lane.b32.xlu0 %v5064, 114
    %v5068 = vpop.permute.xlu0 %5067
    %v5070 = vmul.f32 %v5063, %v5068
    %5072 = vrot.lane.b32.xlu0 %v5070, 7
    %v5073 = vpop.permute.xlu0 %5072
    %v5075 = vadd.f32 %v5065, %v5073
    %v5076 = vtanh.pop %v5075
    %5078 = vrot.lane.b32.xlu0 %v5076, 14
    %v5079 = vpop.permute.xlu0 %5078
    %v5081 = vmul.f32 %v5063, %v5079
    %5083 = vrot.lane.b32.xlu0 %v5081, 107
    %v5084 = vpop.permute.xlu0 %5083
    %v5085 = vsel %vm4081, %v5084, 0
    %5087 = vmatprep.subr.mxu0 0.0
    %5088 = vmatpush1.msra.mxu0 0.0
    %5089 = vmatprep.subr.mxu0 0.0
    %5090 = vmatpush1.msra.mxu0 0.0
    %5091 = vmatprep.subr.mxu0 0.0
    %5092 = vmatpush1.msra.mxu0 0.0
    %5093 = vmatprep.subr.mxu0 0.0
    %5094 = vmatpush1.msra.mxu0 0.0
    %5095 = vmatprep.subr.mxu0 0.0
    %5096 = vmatpush1.msra.mxu0 0.0
    %5097 = vmatprep.subr.mxu0 0.0
    %5098 = vmatpush1.msra.mxu0 0.0
    %5099 = vmatprep.subr.mxu0 0.0
    %5100 = vmatpush1.msra.mxu0 0.0
    %5101 = vmatprep.subr.mxu0 0.0
    %5102 = vmatpush1.msra.mxu0 0.0
    %5103 = vmatprep.subr.mxu0 0.0
    %5104 = vmatpush1.msra.mxu0 0.0
    %5105 = vmatprep.subr.mxu0 0.0
    %5106 = vmatpush1.msra.mxu0 0.0
    %5107 = vmatprep.subr.mxu0 0.0
    %5108 = vmatpush1.msra.mxu0 0.0
    %5109 = vmatprep.subr.mxu0 0.0
    %5110 = vmatpush1.msra.mxu0 0.0
    %5111 = vmatprep.subr.mxu0 0.0
    %5112 = vmatpush1.msra.mxu0 0.0
    %5113 = vmatprep.subr.mxu0 0.0
    %5114 = vmatpush1.msra.mxu0 0.0
    %5115 = vmatprep.subr.mxu0 0.0
    %5116 = vmatpush1.msra.mxu0 0.0
    %5117 = vmatprep.subr.mxu0 0.0
    %5118 = vmatpush1.msra.mxu0 %v4085
    %5119 = vmatprep.subr.mxu0 0.0
    %5120 = vmatpush2.msra.mxu0 0.0
    %5121 = vmatprep.subr.mxu0 0.0
    %5122 = vmatpush2.msra.mxu0 0.0
    %5123 = vmatprep.subr.mxu0 0.0
    %5124 = vmatpush2.msra.mxu0 0.0
    %5125 = vmatprep.subr.mxu0 0.0
    %5126 = vmatpush2.msra.mxu0 0.0
    %5127 = vmatprep.subr.mxu0 0.0
    %5128 = vmatpush2.msra.mxu0 0.0
    %5129 = vmatprep.subr.mxu0 0.0
    %5130 = vmatpush2.msra.mxu0 0.0
    %5131 = vmatprep.subr.mxu0 0.0
    %5132 = vmatpush2.msra.mxu0 0.0
    %5133 = vmatprep.subr.mxu0 0.0
    %5134 = vmatpush2.msra.mxu0 0.0
    %5135 = vmatprep.subr.mxu0 0.0
    %5136 = vmatpush2.msra.mxu0 0.0
    %5137 = vmatprep.subr.mxu0 0.0
    %5138 = vmatpush2.msra.mxu0 0.0
    %5139 = vmatprep.subr.mxu0 0.0
    %5140 = vmatpush2.msra.mxu0 0.0
    %5141 = vmatprep.subr.mxu0 0.0
    %5142 = vmatpush2.msra.mxu0 0.0
    %5143 = vmatprep.subr.mxu0 0.0
    %5144 = vmatpush2.msra.mxu0 0.0
    %5145 = vmatprep.subr.mxu0 0.0
    %5146 = vmatpush2.msra.mxu0 0.0
    %5147 = vmatprep.subr.mxu0 0.0
    %5148 = vmatpush2.msra.mxu0 0.0
    %5149 = vmatprep.subr.mxu0 0.0
    %5150 = vmatpush2.msra.mxu0 0.0
    %5151 = vmatprep.mubr.f32.mxu0 0.0
    %5152 = vmatmul.mubr.f32.gmra.mxu0 %v5085
    %v5153 = vpop.f32.mrf.mxu0
    %v5154 = vadd.f32 0.0, %v5153
    %v5155 = vpop.f32.mrf.mxu0
    %5156 = vdwg.mxu0
    %v5157 = vadd.f32 %v3723, %v5154
    %v5158 = vxor.u32 %v5157, 2147483648
    %v5159 = vmul.f32 %v5158, 1.442695
    %v5160 = vpow.pop %v5159
    %v5161 = vadd.f32 %v5160, 1.0
    %v5162 = vrcp.pop %v5161
    %v5163 = vmul.f32 1.0, %v5162
    %v5164 = vtanh.pop %v5157
    %v5165 = vmul.f32 %v5163, %v5075
    %5167 = vrot.lane.b32.xlu0 %v5164, 114
    %v5168 = vpop.permute.xlu0 %5167
    %v5170 = vmul.f32 %v5163, %v5168
    %5172 = vrot.lane.b32.xlu0 %v5170, 7
    %v5173 = vpop.permute.xlu0 %5172
    %v5175 = vadd.f32 %v5165, %v5173
    %v5176 = vtanh.pop %v5175
    %5178 = vrot.lane.b32.xlu0 %v5176, 14
    %v5179 = vpop.permute.xlu0 %5178
    %v5181 = vmul.f32 %v5163, %v5179
    %5183 = vrot.lane.b32.xlu0 %v5181, 107
    %v5184 = vpop.permute.xlu0 %5183
    %v5185 = vsel %vm4081, %v5184, 0
    %5187 = vmatprep.subr.mxu0 0.0
    %5188 = vmatpush1.msra.mxu0 0.0
    %5189 = vmatprep.subr.mxu0 0.0
    %5190 = vmatpush1.msra.mxu0 0.0
    %5191 = vmatprep.subr.mxu0 0.0
    %5192 = vmatpush1.msra.mxu0 0.0
    %5193 = vmatprep.subr.mxu0 0.0
    %5194 = vmatpush1.msra.mxu0 0.0
    %5195 = vmatprep.subr.mxu0 0.0
    %5196 = vmatpush1.msra.mxu0 0.0
    %5197 = vmatprep.subr.mxu0 0.0
    %5198 = vmatpush1.msra.mxu0 0.0
    %5199 = vmatprep.subr.mxu0 0.0
    %5200 = vmatpush1.msra.mxu0 0.0
    %5201 = vmatprep.subr.mxu0 0.0
    %5202 = vmatpush1.msra.mxu0 0.0
    %5203 = vmatprep.subr.mxu0 0.0
    %5204 = vmatpush1.msra.mxu0 0.0
    %5205 = vmatprep.subr.mxu0 0.0
    %5206 = vmatpush1.msra.mxu0 0.0
    %5207 = vmatprep.subr.mxu0 0.0
    %5208 = vmatpush1.msra.mxu0 0.0
    %5209 = vmatprep.subr.mxu0 0.0
    %5210 = vmatpush1.msra.mxu0 0.0
    %5211 = vmatprep.subr.mxu0 0.0
    %5212 = vmatpush1.msra.mxu0 0.0
    %5213 = vmatprep.subr.mxu0 0.0
    %5214 = vmatpush1.msra.mxu0 0.0
    %5215 = vmatprep.subr.mxu0 0.0
    %5216 = vmatpush1.msra.mxu0 0.0
    %5217 = vmatprep.subr.mxu0 0.0
    %5218 = vmatpush1.msra.mxu0 %v4085
    %5219 = vmatprep.subr.mxu0 0.0
    %5220 = vmatpush2.msra.mxu0 0.0
    %5221 = vmatprep.subr.mxu0 0.0
    %5222 = vmatpush2.msra.mxu0 0.0
    %5223 = vmatprep.subr.mxu0 0.0
    %5224 = vmatpush2.msra.mxu0 0.0
    %5225 = vmatprep.subr.mxu0 0.0
    %5226 = vmatpush2.msra.mxu0 0.0
    %5227 = vmatprep.subr.mxu0 0.0
    %5228 = vmatpush2.msra.mxu0 0.0
    %5229 = vmatprep.subr.mxu0 0.0
    %5230 = vmatpush2.msra.mxu0 0.0
    %5231 = vmatprep.subr.mxu0 0.0
    %5232 = vmatpush2.msra.mxu0 0.0
    %5233 = vmatprep.subr.mxu0 0.0
    %5234 = vmatpush2.msra.mxu0 0.0
    %5235 = vmatprep.subr.mxu0 0.0
    %5236 = vmatpush2.msra.mxu0 0.0
    %5237 = vmatprep.subr.mxu0 0.0
    %5238 = vmatpush2.msra.mxu0 0.0
    %5239 = vmatprep.subr.mxu0 0.0
    %5240 = vmatpush2.msra.mxu0 0.0
    %5241 = vmatprep.subr.mxu0 0.0
    %5242 = vmatpush2.msra.mxu0 0.0
    %5243 = vmatprep.subr.mxu0 0.0
    %5244 = vmatpush2.msra.mxu0 0.0
    %5245 = vmatprep.subr.mxu0 0.0
    %5246 = vmatpush2.msra.mxu0 0.0
    %5247 = vmatprep.subr.mxu0 0.0
    %5248 = vmatpush2.msra.mxu0 0.0
    %5249 = vmatprep.subr.mxu0 0.0
    %5250 = vmatpush2.msra.mxu0 0.0
    %5251 = vmatprep.mubr.f32.mxu0 0.0
    %5252 = vmatmul.mubr.f32.gmra.mxu0 %v5185
    %v5253 = vpop.f32.mrf.mxu0
    %v5254 = vadd.f32 0.0, %v5253
    %v5255 = vpop.f32.mrf.mxu0
    %5256 = vdwg.mxu0
    %v5257 = vadd.f32 %v3793, %v5254
    %v5258 = vxor.u32 %v5257, 2147483648
    %v5259 = vmul.f32 %v5258, 1.442695
    %v5260 = vpow.pop %v5259
    %v5261 = vadd.f32 %v5260, 1.0
    %v5262 = vrcp.pop %v5261
    %v5263 = vmul.f32 1.0, %v5262
    %v5264 = vtanh.pop %v5257
    %v5265 = vmul.f32 %v5263, %v5175
    %5267 = vrot.lane.b32.xlu0 %v5264, 114
    %v5268 = vpop.permute.xlu0 %5267
    %v5270 = vmul.f32 %v5263, %v5268
    %5272 = vrot.lane.b32.xlu0 %v5270, 7
    %v5273 = vpop.permute.xlu0 %5272
    %v5275 = vadd.f32 %v5265, %v5273
    %v5276 = vtanh.pop %v5275
    %5278 = vrot.lane.b32.xlu0 %v5276, 14
    %v5279 = vpop.permute.xlu0 %5278
    %v5281 = vmul.f32 %v5263, %v5279
    %5283 = vrot.lane.b32.xlu0 %v5281, 107
    %v5284 = vpop.permute.xlu0 %5283
    %v5285 = vsel %vm4081, %v5284, 0
    %5287 = vmatprep.subr.mxu0 0.0
    %5288 = vmatpush1.msra.mxu0 0.0
    %5289 = vmatprep.subr.mxu0 0.0
    %5290 = vmatpush1.msra.mxu0 0.0
    %5291 = vmatprep.subr.mxu0 0.0
    %5292 = vmatpush1.msra.mxu0 0.0
    %5293 = vmatprep.subr.mxu0 0.0
    %5294 = vmatpush1.msra.mxu0 0.0
    %5295 = vmatprep.subr.mxu0 0.0
    %5296 = vmatpush1.msra.mxu0 0.0
    %5297 = vmatprep.subr.mxu0 0.0
    %5298 = vmatpush1.msra.mxu0 0.0
    %5299 = vmatprep.subr.mxu0 0.0
    %5300 = vmatpush1.msra.mxu0 0.0
    %5301 = vmatprep.subr.mxu0 0.0
    %5302 = vmatpush1.msra.mxu0 0.0
    %5303 = vmatprep.subr.mxu0 0.0
    %5304 = vmatpush1.msra.mxu0 0.0
    %5305 = vmatprep.subr.mxu0 0.0
    %5306 = vmatpush1.msra.mxu0 0.0
    %5307 = vmatprep.subr.mxu0 0.0
    %5308 = vmatpush1.msra.mxu0 0.0
    %5309 = vmatprep.subr.mxu0 0.0
    %5310 = vmatpush1.msra.mxu0 0.0
    %5311 = vmatprep.subr.mxu0 0.0
    %5312 = vmatpush1.msra.mxu0 0.0
    %5313 = vmatprep.subr.mxu0 0.0
    %5314 = vmatpush1.msra.mxu0 0.0
    %5315 = vmatprep.subr.mxu0 0.0
    %5316 = vmatpush1.msra.mxu0 0.0
    %5317 = vmatprep.subr.mxu0 0.0
    %5318 = vmatpush1.msra.mxu0 %v4085
    %5319 = vmatprep.subr.mxu0 0.0
    %5320 = vmatpush2.msra.mxu0 0.0
    %5321 = vmatprep.subr.mxu0 0.0
    %5322 = vmatpush2.msra.mxu0 0.0
    %5323 = vmatprep.subr.mxu0 0.0
    %5324 = vmatpush2.msra.mxu0 0.0
    %5325 = vmatprep.subr.mxu0 0.0
    %5326 = vmatpush2.msra.mxu0 0.0
    %5327 = vmatprep.subr.mxu0 0.0
    %5328 = vmatpush2.msra.mxu0 0.0
    %5329 = vmatprep.subr.mxu0 0.0
    %5330 = vmatpush2.msra.mxu0 0.0
    %5331 = vmatprep.subr.mxu0 0.0
    %5332 = vmatpush2.msra.mxu0 0.0
    %5333 = vmatprep.subr.mxu0 0.0
    %5334 = vmatpush2.msra.mxu0 0.0
    %5335 = vmatprep.subr.mxu0 0.0
    %5336 = vmatpush2.msra.mxu0 0.0
    %5337 = vmatprep.subr.mxu0 0.0
    %5338 = vmatpush2.msra.mxu0 0.0
    %5339 = vmatprep.subr.mxu0 0.0
    %5340 = vmatpush2.msra.mxu0 0.0
    %5341 = vmatprep.subr.mxu0 0.0
    %5342 = vmatpush2.msra.mxu0 0.0
    %5343 = vmatprep.subr.mxu0 0.0
    %5344 = vmatpush2.msra.mxu0 0.0
    %5345 = vmatprep.subr.mxu0 0.0
    %5346 = vmatpush2.msra.mxu0 0.0
    %5347 = vmatprep.subr.mxu0 0.0
    %5348 = vmatpush2.msra.mxu0 0.0
    %5349 = vmatprep.subr.mxu0 0.0
    %5350 = vmatpush2.msra.mxu0 0.0
    %5351 = vmatprep.mubr.f32.mxu0 0.0
    %5352 = vmatmul.mubr.f32.gmra.mxu0 %v5285
    %v5353 = vpop.f32.mrf.mxu0
    %v5354 = vadd.f32 0.0, %v5353
    %v5355 = vpop.f32.mrf.mxu0
    %5356 = vdwg.mxu0
    %v5357 = vadd.f32 %v3863, %v5354
    %v5358 = vxor.u32 %v5357, 2147483648
    %v5359 = vmul.f32 %v5358, 1.442695
    %v5360 = vpow.pop %v5359
    %v5361 = vadd.f32 %v5360, 1.0
    %v5362 = vrcp.pop %v5361
    %v5363 = vmul.f32 1.0, %v5362
    %v5364 = vtanh.pop %v5357
    %v5365 = vmul.f32 %v5363, %v5275
    %5367 = vrot.lane.b32.xlu0 %v5364, 114
    %v5368 = vpop.permute.xlu0 %5367
    %v5370 = vmul.f32 %v5363, %v5368
    %5372 = vrot.lane.b32.xlu0 %v5370, 7
    %v5373 = vpop.permute.xlu0 %5372
    %v5375 = vadd.f32 %v5365, %v5373
    %v5376 = vtanh.pop %v5375
    %5378 = vrot.lane.b32.xlu0 %v5376, 14
    %v5379 = vpop.permute.xlu0 %5378
    %v5381 = vmul.f32 %v5363, %v5379
    %5383 = vrot.lane.b32.xlu0 %v5381, 107
    %v5384 = vpop.permute.xlu0 %5383
    %v5385 = vsel %vm4081, %v5384, 0
    %5387 = vmatprep.subr.mxu0 0.0
    %5388 = vmatpush1.msra.mxu0 0.0
    %5389 = vmatprep.subr.mxu0 0.0
    %5390 = vmatpush1.msra.mxu0 0.0
    %5391 = vmatprep.subr.mxu0 0.0
    %5392 = vmatpush1.msra.mxu0 0.0
    %5393 = vmatprep.subr.mxu0 0.0
    %5394 = vmatpush1.msra.mxu0 0.0
    %5395 = vmatprep.subr.mxu0 0.0
    %5396 = vmatpush1.msra.mxu0 0.0
    %5397 = vmatprep.subr.mxu0 0.0
    %5398 = vmatpush1.msra.mxu0 0.0
    %5399 = vmatprep.subr.mxu0 0.0
    %5400 = vmatpush1.msra.mxu0 0.0
    %5401 = vmatprep.subr.mxu0 0.0
    %5402 = vmatpush1.msra.mxu0 0.0
    %5403 = vmatprep.subr.mxu0 0.0
    %5404 = vmatpush1.msra.mxu0 0.0
    %5405 = vmatprep.subr.mxu0 0.0
    %5406 = vmatpush1.msra.mxu0 0.0
    %5407 = vmatprep.subr.mxu0 0.0
    %5408 = vmatpush1.msra.mxu0 0.0
    %5409 = vmatprep.subr.mxu0 0.0
    %5410 = vmatpush1.msra.mxu0 0.0
    %5411 = vmatprep.subr.mxu0 0.0
    %5412 = vmatpush1.msra.mxu0 0.0
    %5413 = vmatprep.subr.mxu0 0.0
    %5414 = vmatpush1.msra.mxu0 0.0
    %5415 = vmatprep.subr.mxu0 0.0
    %5416 = vmatpush1.msra.mxu0 0.0
    %5417 = vmatprep.subr.mxu0 0.0
    %5418 = vmatpush1.msra.mxu0 %v4085
    %5419 = vmatprep.subr.mxu0 0.0
    %5420 = vmatpush2.msra.mxu0 0.0
    %5421 = vmatprep.subr.mxu0 0.0
    %5422 = vmatpush2.msra.mxu0 0.0
    %5423 = vmatprep.subr.mxu0 0.0
    %5424 = vmatpush2.msra.mxu0 0.0
    %5425 = vmatprep.subr.mxu0 0.0
    %5426 = vmatpush2.msra.mxu0 0.0
    %5427 = vmatprep.subr.mxu0 0.0
    %5428 = vmatpush2.msra.mxu0 0.0
    %5429 = vmatprep.subr.mxu0 0.0
    %5430 = vmatpush2.msra.mxu0 0.0
    %5431 = vmatprep.subr.mxu0 0.0
    %5432 = vmatpush2.msra.mxu0 0.0
    %5433 = vmatprep.subr.mxu0 0.0
    %5434 = vmatpush2.msra.mxu0 0.0
    %5435 = vmatprep.subr.mxu0 0.0
    %5436 = vmatpush2.msra.mxu0 0.0
    %5437 = vmatprep.subr.mxu0 0.0
    %5438 = vmatpush2.msra.mxu0 0.0
    %5439 = vmatprep.subr.mxu0 0.0
    %5440 = vmatpush2.msra.mxu0 0.0
    %5441 = vmatprep.subr.mxu0 0.0
    %5442 = vmatpush2.msra.mxu0 0.0
    %5443 = vmatprep.subr.mxu0 0.0
    %5444 = vmatpush2.msra.mxu0 0.0
    %5445 = vmatprep.subr.mxu0 0.0
    %5446 = vmatpush2.msra.mxu0 0.0
    %5447 = vmatprep.subr.mxu0 0.0
    %5448 = vmatpush2.msra.mxu0 0.0
    %5449 = vmatprep.subr.mxu0 0.0
    %5450 = vmatpush2.msra.mxu0 0.0
    %5451 = vmatprep.mubr.f32.mxu0 0.0
    %5452 = vmatmul.mubr.f32.gmra.mxu0 %v5385
    %v5453 = vpop.f32.mrf.mxu0
    %v5454 = vadd.f32 0.0, %v5453
    %v5455 = vpop.f32.mrf.mxu0
    %5456 = vdwg.mxu0
    %v5457 = vadd.f32 %v3933, %v5454
    %v5458 = vxor.u32 %v5457, 2147483648
    %v5459 = vmul.f32 %v5458, 1.442695
    %v5460 = vpow.pop %v5459
    %v5461 = vadd.f32 %v5460, 1.0
    %v5462 = vrcp.pop %v5461
    %v5463 = vmul.f32 1.0, %v5462
    %v5464 = vtanh.pop %v5457
    %v5465 = vmul.f32 %v5463, %v5375
    %5467 = vrot.lane.b32.xlu0 %v5464, 114
    %v5468 = vpop.permute.xlu0 %5467
    %v5470 = vmul.f32 %v5463, %v5468
    %5472 = vrot.lane.b32.xlu0 %v5470, 7
    %v5473 = vpop.permute.xlu0 %5472
    %v5475 = vadd.f32 %v5465, %v5473
    %v5476 = vtanh.pop %v5475
    %5478 = vrot.lane.b32.xlu0 %v5476, 14
    %v5479 = vpop.permute.xlu0 %5478
    %v5481 = vmul.f32 %v5463, %v5479
    %5483 = vrot.lane.b32.xlu0 %v5481, 107
    %v5484 = vpop.permute.xlu0 %5483
    %v5485 = vsel %vm4081, %v5484, 0
    %5487 = vmatprep.subr.mxu0 0.0
    %5488 = vmatpush1.msra.mxu0 0.0
    %5489 = vmatprep.subr.mxu0 0.0
    %5490 = vmatpush1.msra.mxu0 0.0
    %5491 = vmatprep.subr.mxu0 0.0
    %5492 = vmatpush1.msra.mxu0 0.0
    %5493 = vmatprep.subr.mxu0 0.0
    %5494 = vmatpush1.msra.mxu0 0.0
    %5495 = vmatprep.subr.mxu0 0.0
    %5496 = vmatpush1.msra.mxu0 0.0
    %5497 = vmatprep.subr.mxu0 0.0
    %5498 = vmatpush1.msra.mxu0 0.0
    %5499 = vmatprep.subr.mxu0 0.0
    %5500 = vmatpush1.msra.mxu0 0.0
    %5501 = vmatprep.subr.mxu0 0.0
    %5502 = vmatpush1.msra.mxu0 0.0
    %5503 = vmatprep.subr.mxu0 0.0
    %5504 = vmatpush1.msra.mxu0 0.0
    %5505 = vmatprep.subr.mxu0 0.0
    %5506 = vmatpush1.msra.mxu0 0.0
    %5507 = vmatprep.subr.mxu0 0.0
    %5508 = vmatpush1.msra.mxu0 0.0
    %5509 = vmatprep.subr.mxu0 0.0
    %5510 = vmatpush1.msra.mxu0 0.0
    %5511 = vmatprep.subr.mxu0 0.0
    %5512 = vmatpush1.msra.mxu0 0.0
    %5513 = vmatprep.subr.mxu0 0.0
    %5514 = vmatpush1.msra.mxu0 0.0
    %5515 = vmatprep.subr.mxu0 0.0
    %5516 = vmatpush1.msra.mxu0 0.0
    %5517 = vmatprep.subr.mxu0 0.0
    %5518 = vmatpush1.msra.mxu0 %v4085
    %5519 = vmatprep.subr.mxu0 0.0
    %5520 = vmatpush2.msra.mxu0 0.0
    %5521 = vmatprep.subr.mxu0 0.0
    %5522 = vmatpush2.msra.mxu0 0.0
    %5523 = vmatprep.subr.mxu0 0.0
    %5524 = vmatpush2.msra.mxu0 0.0
    %5525 = vmatprep.subr.mxu0 0.0
    %5526 = vmatpush2.msra.mxu0 0.0
    %5527 = vmatprep.subr.mxu0 0.0
    %5528 = vmatpush2.msra.mxu0 0.0
    %5529 = vmatprep.subr.mxu0 0.0
    %5530 = vmatpush2.msra.mxu0 0.0
    %5531 = vmatprep.subr.mxu0 0.0
    %5532 = vmatpush2.msra.mxu0 0.0
    %5533 = vmatprep.subr.mxu0 0.0
    %5534 = vmatpush2.msra.mxu0 0.0
    %5535 = vmatprep.subr.mxu0 0.0
    %5536 = vmatpush2.msra.mxu0 0.0
    %5537 = vmatprep.subr.mxu0 0.0
    %5538 = vmatpush2.msra.mxu0 0.0
    %5539 = vmatprep.subr.mxu0 0.0
    %5540 = vmatpush2.msra.mxu0 0.0
    %5541 = vmatprep.subr.mxu0 0.0
    %5542 = vmatpush2.msra.mxu0 0.0
    %5543 = vmatprep.subr.mxu0 0.0
    %5544 = vmatpush2.msra.mxu0 0.0
    %5545 = vmatprep.subr.mxu0 0.0
    %5546 = vmatpush2.msra.mxu0 0.0
    %5547 = vmatprep.subr.mxu0 0.0
    %5548 = vmatpush2.msra.mxu0 0.0
    %5549 = vmatprep.subr.mxu0 0.0
    %5550 = vmatpush2.msra.mxu0 0.0
    %5551 = vmatprep.mubr.f32.mxu0 0.0
    %5552 = vmatmul.mubr.f32.gmra.mxu0 %v5485
    %v5553 = vpop.f32.mrf.mxu0
    %v5554 = vadd.f32 0.0, %v5553
    %v5555 = vpop.f32.mrf.mxu0
    %5556 = vdwg.mxu0
    %v5557 = vadd.f32 %v4003, %v5554
    %v5558 = vxor.u32 %v5557, 2147483648
    %v5559 = vmul.f32 %v5558, 1.442695
    %v5560 = vpow.pop %v5559
    %v5561 = vadd.f32 %v5560, 1.0
    %v5562 = vrcp.pop %v5561
    %v5563 = vmul.f32 1.0, %v5562
    %v5564 = vtanh.pop %v5557
    %v5565 = vmul.f32 %v5563, %v5475
    %5567 = vrot.lane.b32.xlu0 %v5564, 114
    %v5568 = vpop.permute.xlu0 %5567
    %v5570 = vmul.f32 %v5563, %v5568
    %5572 = vrot.lane.b32.xlu0 %v5570, 7
    %v5573 = vpop.permute.xlu0 %5572
    %v5575 = vadd.f32 %v5565, %v5573
    %v5576 = vtanh.pop %v5575
    %5578 = vrot.lane.b32.xlu0 %v5576, 14
    %v5579 = vpop.permute.xlu0 %5578
    %v5581 = vmul.f32 %v5563, %v5579
    %5583 = vrot.lane.b32.xlu0 %v5581, 107
    %v5584 = vpop.permute.xlu0 %5583
    %v5585 = vsel %vm4081, %v5584, 0
    %5587 = vmatprep.subr.mxu0 0.0
    %5588 = vmatpush1.msra.mxu0 0.0
    %5589 = vmatprep.subr.mxu0 0.0
    %5590 = vmatpush1.msra.mxu0 0.0
    %5591 = vmatprep.subr.mxu0 0.0
    %5592 = vmatpush1.msra.mxu0 0.0
    %5593 = vmatprep.subr.mxu0 0.0
    %5594 = vmatpush1.msra.mxu0 0.0
    %5595 = vmatprep.subr.mxu0 0.0
    %5596 = vmatpush1.msra.mxu0 0.0
    %5597 = vmatprep.subr.mxu0 0.0
    %5598 = vmatpush1.msra.mxu0 0.0
    %5599 = vmatprep.subr.mxu0 0.0
    %5600 = vmatpush1.msra.mxu0 0.0
    %5601 = vmatprep.subr.mxu0 0.0
    %5602 = vmatpush1.msra.mxu0 0.0
    %5603 = vmatprep.subr.mxu0 0.0
    %5604 = vmatpush1.msra.mxu0 0.0
    %5605 = vmatprep.subr.mxu0 0.0
    %5606 = vmatpush1.msra.mxu0 0.0
    %5607 = vmatprep.subr.mxu0 0.0
    %5608 = vmatpush1.msra.mxu0 0.0
    %5609 = vmatprep.subr.mxu0 0.0
    %5610 = vmatpush1.msra.mxu0 0.0
    %5611 = vmatprep.subr.mxu0 0.0
    %5612 = vmatpush1.msra.mxu0 0.0
    %5613 = vmatprep.subr.mxu0 0.0
    %5614 = vmatpush1.msra.mxu0 0.0
    %5615 = vmatprep.subr.mxu0 0.0
    %5616 = vmatpush1.msra.mxu0 0.0
    %5617 = vmatprep.subr.mxu0 0.0
    %5618 = vmatpush1.msra.mxu0 %v4085
    %5619 = vmatprep.subr.mxu0 0.0
    %5620 = vmatpush2.msra.mxu0 0.0
    %5621 = vmatprep.subr.mxu0 0.0
    %5622 = vmatpush2.msra.mxu0 0.0
    %5623 = vmatprep.subr.mxu0 0.0
    %5624 = vmatpush2.msra.mxu0 0.0
    %5625 = vmatprep.subr.mxu0 0.0
    %5626 = vmatpush2.msra.mxu0 0.0
    %5627 = vmatprep.subr.mxu0 0.0
    %5628 = vmatpush2.msra.mxu0 0.0
    %5629 = vmatprep.subr.mxu0 0.0
    %5630 = vmatpush2.msra.mxu0 0.0
    %5631 = vmatprep.subr.mxu0 0.0
    %5632 = vmatpush2.msra.mxu0 0.0
    %5633 = vmatprep.subr.mxu0 0.0
    %5634 = vmatpush2.msra.mxu0 0.0
    %5635 = vmatprep.subr.mxu0 0.0
    %5636 = vmatpush2.msra.mxu0 0.0
    %5637 = vmatprep.subr.mxu0 0.0
    %5638 = vmatpush2.msra.mxu0 0.0
    %5639 = vmatprep.subr.mxu0 0.0
    %5640 = vmatpush2.msra.mxu0 0.0
    %5641 = vmatprep.subr.mxu0 0.0
    %5642 = vmatpush2.msra.mxu0 0.0
    %5643 = vmatprep.subr.mxu0 0.0
    %5644 = vmatpush2.msra.mxu0 0.0
    %5645 = vmatprep.subr.mxu0 0.0
    %5646 = vmatpush2.msra.mxu0 0.0
    %5647 = vmatprep.subr.mxu0 0.0
    %5648 = vmatpush2.msra.mxu0 0.0
    %5649 = vmatprep.subr.mxu0 0.0
    %5650 = vmatpush2.msra.mxu0 0.0
    %5651 = vmatprep.mubr.f32.mxu0 0.0
    %5652 = vmatmul.mubr.f32.gmra.mxu0 %v5585
    %v5653 = vpop.f32.mrf.mxu0
    %v5654 = vadd.f32 0.0, %v5653
    %v5655 = vpop.f32.mrf.mxu0
    %5656 = vdwg.mxu0
    %v5657 = vadd.f32 %v4078, %v5654
    %v5658 = vxor.u32 %v5657, 2147483648
    %v5659 = vmul.f32 %v5658, 1.442695
    %v5660 = vpow.pop %v5659
    %v5661 = vadd.f32 %v5660, 1.0
    %v5662 = vrcp.pop %v5661
    %v5663 = vmul.f32 1.0, %v5662
    %v5664 = vtanh.pop %v5657
    %v5665 = vmul.f32 %v5663, %v5575
    %5667 = vrot.lane.b32.xlu0 %v5664, 114
    %v5668 = vpop.permute.xlu0 %5667
    %v5670 = vmul.f32 %v5663, %v5668
    %5672 = vrot.lane.b32.xlu0 %v5670, 7
    %v5673 = vpop.permute.xlu0 %5672
    %v5675 = vadd.f32 %v5665, %v5673
    %v5676 = vtanh.pop %v5675
    %5678 = vrot.lane.b32.xlu0 %v5676, 14
    %v5679 = vpop.permute.xlu0 %5678
    %v5681 = vmul.f32 %v5663, %v5679
    %v5682 = vld [vmem:[#allocation3] sm:$0x7f]
    %v5683 = vld [vmem:[#allocation2] sm:$0x1]
    %v5685 = vlaneseq
    %v5686 = vshrl.u32 %v5685, 7
    %v5687 = vsub.s32 0, %v5686
    %v5688 = vrot.slane %v5683, %v5687
    %5691 = vrot.lane.b32.xlu0 %v5681, 107
    %v5692 = vpop.permute.xlu0 %5691
    %v5693 = vsel %vm4081, %v5692, 0
    %v5696 = vsel %vm1344, %v5682, 0
    %5698 = vmatprep.subr.mxu0 0.0
    %5699 = vmatpush1.msra.mxu0 0.0
    %5700 = vmatprep.subr.mxu0 0.0
    %5701 = vmatpush1.msra.mxu0 0.0
    %5702 = vmatprep.subr.mxu0 0.0
    %5703 = vmatpush1.msra.mxu0 0.0
    %5704 = vmatprep.subr.mxu0 0.0
    %5705 = vmatpush1.msra.mxu0 0.0
    %5706 = vmatprep.subr.mxu0 0.0
    %5707 = vmatpush1.msra.mxu0 0.0
    %5708 = vmatprep.subr.mxu0 0.0
    %5709 = vmatpush1.msra.mxu0 0.0
    %5710 = vmatprep.subr.mxu0 0.0
    %5711 = vmatpush1.msra.mxu0 0.0
    %5712 = vmatprep.subr.mxu0 0.0
    %5713 = vmatpush1.msra.mxu0 0.0
    %5714 = vmatprep.subr.mxu0 0.0
    %5715 = vmatpush1.msra.mxu0 0.0
    %5716 = vmatprep.subr.mxu0 0.0
    %5717 = vmatpush1.msra.mxu0 0.0
    %5718 = vmatprep.subr.mxu0 0.0
    %5719 = vmatpush1.msra.mxu0 0.0
    %5720 = vmatprep.subr.mxu0 0.0
    %5721 = vmatpush1.msra.mxu0 0.0
    %5722 = vmatprep.subr.mxu0 0.0
    %5723 = vmatpush1.msra.mxu0 0.0
    %5724 = vmatprep.subr.mxu0 0.0
    %5725 = vmatpush1.msra.mxu0 0.0
    %5726 = vmatprep.subr.mxu0 0.0
    %5727 = vmatpush1.msra.mxu0 0.0
    %5728 = vmatprep.subr.mxu0 0.0
    %5729 = vmatpush1.msra.mxu0 %v5696
    %5730 = vmatprep.subr.mxu0 0.0
    %5731 = vmatpush2.msra.mxu0 0.0
    %5732 = vmatprep.subr.mxu0 0.0
    %5733 = vmatpush2.msra.mxu0 0.0
    %5734 = vmatprep.subr.mxu0 0.0
    %5735 = vmatpush2.msra.mxu0 0.0
    %5736 = vmatprep.subr.mxu0 0.0
    %5737 = vmatpush2.msra.mxu0 0.0
    %5738 = vmatprep.subr.mxu0 0.0
    %5739 = vmatpush2.msra.mxu0 0.0
    %5740 = vmatprep.subr.mxu0 0.0
    %5741 = vmatpush2.msra.mxu0 0.0
    %5742 = vmatprep.subr.mxu0 0.0
    %5743 = vmatpush2.msra.mxu0 0.0
    %5744 = vmatprep.subr.mxu0 0.0
    %5745 = vmatpush2.msra.mxu0 0.0
    %5746 = vmatprep.subr.mxu0 0.0
    %5747 = vmatpush2.msra.mxu0 0.0
    %5748 = vmatprep.subr.mxu0 0.0
    %5749 = vmatpush2.msra.mxu0 0.0
    %5750 = vmatprep.subr.mxu0 0.0
    %5751 = vmatpush2.msra.mxu0 0.0
    %5752 = vmatprep.subr.mxu0 0.0
    %5753 = vmatpush2.msra.mxu0 0.0
    %5754 = vmatprep.subr.mxu0 0.0
    %5755 = vmatpush2.msra.mxu0 0.0
    %5756 = vmatprep.subr.mxu0 0.0
    %5757 = vmatpush2.msra.mxu0 0.0
    %5758 = vmatprep.subr.mxu0 0.0
    %5759 = vmatpush2.msra.mxu0 0.0
    %5760 = vmatprep.subr.mxu0 0.0
    %5761 = vmatpush2.msra.mxu0 0.0
    %5762 = vmatprep.mubr.f32.mxu0 0.0
    %5763 = vmatmul.mubr.f32.gmra.mxu0 %v5693
    %v5764 = vpop.f32.mrf.mxu0
    %v5765 = vadd.f32 %v5688, %v5764
    %v5766 = vpop.f32.mrf.mxu0
    %5767 = vdwg.mxu0
    %5769 = vset.pattern.permute.xlu0 5
    %5770 = vperm.xlu0 %5769, %v94
    %v5771 = vpop.permute.xlu0 %5770
    %5774 = vrot.lane.b32.xlu0 %v142, 123
    %v5775 = vpop.permute.xlu0 %5774
    %vm5776 = vcmask 7168
    %v5777 = vsel %vm5776, %v5775, 0
    %v5780 = vsel %vm5776, %v5765, 0
    %5782 = vmatprep.subr.mxu0 0.0
    %5783 = vmatpush1.xpose.msra.mxu0 0.0
    %5784 = vmatprep.subr.mxu0 0.0
    %5785 = vmatpush1.xpose.msra.mxu0 0.0
    %5786 = vmatprep.subr.mxu0 0.0
    %5787 = vmatpush1.xpose.msra.mxu0 0.0
    %5788 = vmatprep.subr.mxu0 0.0
    %5789 = vmatpush1.xpose.msra.mxu0 0.0
    %5790 = vmatprep.subr.mxu0 0.0
    %5791 = vmatpush1.xpose.msra.mxu0 0.0
    %5792 = vmatprep.subr.mxu0 0.0
    %5793 = vmatpush1.xpose.msra.mxu0 0.0
    %5794 = vmatprep.subr.mxu0 0.0
    %5795 = vmatpush1.xpose.msra.mxu0 0.0
    %5796 = vmatprep.subr.mxu0 0.0
    %5797 = vmatpush1.xpose.msra.mxu0 0.0
    %5798 = vmatprep.subr.mxu0 0.0
    %5799 = vmatpush1.xpose.msra.mxu0 0.0
    %5800 = vmatprep.subr.mxu0 0.0
    %5801 = vmatpush1.xpose.msra.mxu0 0.0
    %5802 = vmatprep.subr.mxu0 0.0
    %5803 = vmatpush1.xpose.msra.mxu0 0.0
    %5804 = vmatprep.subr.mxu0 0.0
    %5805 = vmatpush1.xpose.msra.mxu0 0.0
    %5806 = vmatprep.subr.mxu0 0.0
    %5807 = vmatpush1.xpose.msra.mxu0 0.0
    %5808 = vmatprep.subr.mxu0 0.0
    %5809 = vmatpush1.xpose.msra.mxu0 0.0
    %5810 = vmatprep.subr.mxu0 0.0
    %5811 = vmatpush1.xpose.msra.mxu0 0.0
    %5812 = vmatprep.subr.mxu0 0.0
    %5813 = vmatpush1.xpose.msra.mxu0 %v5780
    %5814 = vmatprep.subr.mxu0 0.0
    %5815 = vmatpush2.xpose.msra.mxu0 0.0
    %5816 = vmatprep.subr.mxu0 0.0
    %5817 = vmatpush2.xpose.msra.mxu0 0.0
    %5818 = vmatprep.subr.mxu0 0.0
    %5819 = vmatpush2.xpose.msra.mxu0 0.0
    %5820 = vmatprep.subr.mxu0 0.0
    %5821 = vmatpush2.xpose.msra.mxu0 0.0
    %5822 = vmatprep.subr.mxu0 0.0
    %5823 = vmatpush2.xpose.msra.mxu0 0.0
    %5824 = vmatprep.subr.mxu0 0.0
    %5825 = vmatpush2.xpose.msra.mxu0 0.0
    %5826 = vmatprep.subr.mxu0 0.0
    %5827 = vmatpush2.xpose.msra.mxu0 0.0
    %5828 = vmatprep.subr.mxu0 0.0
    %5829 = vmatpush2.xpose.msra.mxu0 0.0
    %5830 = vmatprep.subr.mxu0 0.0
    %5831 = vmatpush2.xpose.msra.mxu0 0.0
    %5832 = vmatprep.subr.mxu0 0.0
    %5833 = vmatpush2.xpose.msra.mxu0 0.0
    %5834 = vmatprep.subr.mxu0 0.0
    %5835 = vmatpush2.xpose.msra.mxu0 0.0
    %5836 = vmatprep.subr.mxu0 0.0
    %5837 = vmatpush2.xpose.msra.mxu0 0.0
    %5838 = vmatprep.subr.mxu0 0.0
    %5839 = vmatpush2.xpose.msra.mxu0 0.0
    %5840 = vmatprep.subr.mxu0 0.0
    %5841 = vmatpush2.xpose.msra.mxu0 0.0
    %5842 = vmatprep.subr.mxu0 0.0
    %5843 = vmatpush2.xpose.msra.mxu0 0.0
    %5844 = vmatprep.subr.mxu0 0.0
    %5845 = vmatpush2.xpose.msra.mxu0 0.0
    %5846 = vmatprep.mubr.f32.mxu0 0.0
    %5847 = vmatmul.mubr.f32.gmra.mxu0 %v5777
    %v5848 = vpop.f32.mrf.mxu0
    %v5849 = vadd.f32 %v5771, %v5848
    %v5850 = vpop.f32.mrf.mxu0
    %5851 = vdwg.mxu0
    %vm5852 = vcmask 9216
    %5853 = vst.msk [vmem:[#allocation6] sm:$0x3] %vm5852, %v5849
    // Predicated region
    $region42: #{lstm_model_forward.1} parent=1 // pred_check
      _
    $region43: #{lstm_model_forward.1} parent=1 // pred_check_branch
      %5855 = sbr.rel (0) target = $region45
    $region44: #{lstm_model_forward.1} parent=1 // pred_region
      %s5857 = ssub.s32 32, 32
      %5858 = vsyncadd [#allocation5], %s5857
      %s5860 = sshll.u32 [#allocation6], 4
      %s5861 = int_to_ptr.vmem [resolvable:$true] %s5860
      %5863 = dma.vmem_to_hbm [thread:$0]  %s5861, 32, %s9, [#allocation5]
    $region45: #{lstm_model_forward.1} parent=1 // pred_fallthru
      _
    // Predicated region
    $region46: #{lstm_model_forward.1} parent=1 // pred_check
      _
    $region47: #{lstm_model_forward.1} parent=1 // pred_check_branch
      %5865 = sbr.rel (0) target = $region49
    $region48: #{lstm_model_forward.1} parent=1 // pred_region
      %5866 = dma.done [#allocation5], 32
    $region49: #{lstm_model_forward.1} parent=1 // pred_fallthru
      _
    %5867 = vsyncpa [#allocation4], 1
    %5868 = vsyncpa [#allocation5], 1

</llo_original>
